<compile_context>
chip_gen: v7x
topology: tpu7x:2x2x1
jax: 0.10.0
libtpu: 0.0.40
codegen_flags: <defaults>
</compile_context>

<pallas_src>
import jax
import jax.numpy as jnp
from jax.experimental import pallas as pl
from jax.experimental.pallas import tpu as pltpu


def basic_block_kernel(xpad_ref, xres_ref, w1_ref, g1_ref, b1_ref,
                       w2_ref, g2_ref, b2_ref, o_ref, col_ref, ypad_ref):
    # xpad_ref: (N, H+2, W+2, C)   zero-padded input (padding done in wrapper)
    # xres_ref: (N*H*W, C)         flat input, residual source
    # w*_ref:   (9*C, C)           im2col-folded conv weights
    # g*/b*:    (1, C)             BatchNorm affine params
    # o_ref:    (N*H*W, C)         flat output
    # col_ref:  (N*H*W, 9*C)       VMEM scratch: im2col patch matrix
    # ypad_ref: (N, H+2, W+2, C)   VMEM scratch: padded conv2 input
    N, Hp, Wp, C = xpad_ref.shape
    H, W = Hp - 2, Wp - 2
    M = N * H * W
    eps = 1e-5
    inv_m = 1.0 / M

    def im2col(src_ref):
        # Fold the 3x3 taps into the contraction dim: col[:, t*C:(t+1)*C] holds
        # the (dh, dw)-shifted window, so conv == one (M, 9C) @ (9C, C) dot.
        for dh in range(3):
            for dw in range(3):
                t = dh * 3 + dw
                patch = src_ref[:, dh:dh + H, dw:dw + W, :]      # (N, H, W, C)
                col_ref[:, t * C:(t + 1) * C] = patch.reshape(M, C)

    def batchnorm(a, g, b):
        # Training-mode BN; stats in a single fused pass, f32 accumulation.
        s = jnp.sum(a, axis=0, keepdims=True)
        ss = jnp.sum(a * a, axis=0, keepdims=True)
        mean = s * inv_m
        var = ss * inv_m - mean * mean
        scale = g * jax.lax.rsqrt(var + eps)
        shift = b - mean * scale
        return a * scale + shift

    # ---- conv1 (single MXU matmul) + bn1 + relu -----------------------------
    im2col(xpad_ref)
    # TODO(synk): on v6e/v7x the two dots below can be cast to bf16 (keeping
    #             f32 accumulation) for the fast MXU path; kept f32 here so the
    #             result matches the f32 reference within tight tolerance.
    y = jnp.dot(col_ref[...], w1_ref[...], preferred_element_type=jnp.float32)
    y = jnp.maximum(batchnorm(y, g1_ref[...], b1_ref[...]), 0.0)      # (M, C)

    # ---- conv2 input: zero only the 1-pixel halo of the scratch, once -------
    zero_row = jnp.zeros((N, 1, Wp, C), jnp.float32)
    ypad_ref[:, 0:1, :, :] = zero_row
    ypad_ref[:, Hp - 1:Hp, :, :] = zero_row
    zero_col = jnp.zeros((N, Hp, 1, C), jnp.float32)
    ypad_ref[:, :, 0:1, :] = zero_col
    ypad_ref[:, :, Wp - 1:Wp, :] = zero_col
    ypad_ref[:, 1:H + 1, 1:W + 1, :] = y.reshape(N, H, W, C)

    # ---- conv2 (single MXU matmul) + bn2 + residual + relu ------------------
    im2col(ypad_ref)
    z = jnp.dot(col_ref[...], w2_ref[...], preferred_element_type=jnp.float32)
    z = batchnorm(z, g2_ref[...], b2_ref[...])
    o_ref[...] = jnp.maximum(z + xres_ref[...], 0.0)


@jax.jit
def basic_block(x_nhwc, w1, g1, be1, w2, g2, be2):
    N, H, W, C = x_nhwc.shape
    Cout = w1.shape[-1]
    assert C == Cout, "identity residual requires inplanes == planes"
    M = N * H * W

    # Pad once in the wrapper (removes in-kernel zero fills for conv1) and fold
    # the 3x3 HWIO weights into (9*Cin, Cout) im2col matrices.
    x_pad = jnp.pad(x_nhwc, ((0, 0), (1, 1), (1, 1), (0, 0)))
    x_res = x_nhwc.reshape(M, C)
    w1_k = w1.reshape(9 * C, Cout)
    w2_k = w2.reshape(9 * Cout, Cout)

    vec_spec = pl.BlockSpec((1, Cout), lambda i: (0, 0))
    mat_spec = pl.BlockSpec((9 * C, Cout), lambda i: (0, 0))
    out2d = pl.pallas_call(
        basic_block_kernel,
        out_shape=jax.ShapeDtypeStruct((M, Cout), jnp.float32),
        grid_spec=pltpu.PrefetchScalarGridSpec(
            num_scalar_prefetch=0,
            grid=(1,),
            in_specs=[
                pl.BlockSpec((N, H + 2, W + 2, C), lambda i: (0, 0, 0, 0)),
                pl.BlockSpec((M, C), lambda i: (0, 0)),
                mat_spec, vec_spec, vec_spec,
                mat_spec, vec_spec, vec_spec,
            ],
            out_specs=pl.BlockSpec((M, Cout), lambda i: (0, 0)),
            scratch_shapes=[
                pltpu.VMEM((M, 9 * C), jnp.float32),
                pltpu.VMEM((N, H + 2, W + 2, C), jnp.float32),
            ],
        ),
        compiler_params=pltpu.CompilerParams(
            dimension_semantics=("arbitrary",),
            vmem_limit_bytes=32 * 1024 * 1024,
        ),
    )(x_pad, x_res, w1_k, g1, be1, w2_k, g2, be2)
    return out2d.reshape(N, H, W, Cout)


def ref_forward(x, w1, g1, be1, w2, g2, be2, eps=1e-5):
    """Pure-JAX reference (NHWC / HWIO), training-mode BatchNorm."""
    dn = ("NHWC", "HWIO", "NHWC")
    prec = jax.lax.Precision.HIGHEST
    y = jax.lax.conv_general_dilated(x, w1, (1, 1), ((1, 1), (1, 1)),
                                     dimension_numbers=dn, precision=prec)
    m, v = y.mean(axis=(0, 1, 2)), y.var(axis=(0, 1, 2))
    y = jnp.maximum((y - m) / jnp.sqrt(v + eps) * g1 + be1, 0.0)
    z = jax.lax.conv_general_dilated(y, w2, (1, 1), ((1, 1), (1, 1)),
                                     dimension_numbers=dn, precision=prec)
    m2, v2 = z.mean(axis=(0, 1, 2)), z.var(axis=(0, 1, 2))
    z = (z - m2) / jnp.sqrt(v2 + eps) * g2 + be2
    return jnp.maximum(z + x, 0.0)


if __name__ == "__main__":
    # BasicBlock with inplanes = planes = 32, stride = 1, no downsample.
    # PyTorch input would be NCHW = (2, 32, 16, 16).
    N, C, H, W = 2, 32, 16, 16
    key = jax.random.PRNGKey(0)
    kx, kw1, kw2, kg1, kb1, kg2, kb2 = jax.random.split(key, 7)

    x_nchw = jax.random.normal(kx, (N, C, H, W), jnp.float32)
    x_nhwc = jnp.transpose(x_nchw, (0, 2, 3, 1))          # NCHW -> NHWC

    # conv weights: torch is (out, in, 3, 3) -> HWIO (3, 3, in, out)
    w1_oihw = 0.1 * jax.random.normal(kw1, (C, C, 3, 3), jnp.float32)
    w2_oihw = 0.1 * jax.random.normal(kw2, (C, C, 3, 3), jnp.float32)
    w1 = jnp.transpose(w1_oihw, (2, 3, 1, 0))
    w2 = jnp.transpose(w2_oihw, (2, 3, 1, 0))

    # BatchNorm affine parameters (deterministic, non-trivial)
    gamma1 = 1.0 + 0.1 * jax.random.normal(kg1, (C,), jnp.float32)
    beta1 = 0.1 * jax.random.normal(kb1, (C,), jnp.float32)
    gamma2 = 1.0 + 0.1 * jax.random.normal(kg2, (C,), jnp.float32)
    beta2 = 0.1 * jax.random.normal(kb2, (C,), jnp.float32)

    out = basic_block(x_nhwc, w1,
                      gamma1.reshape(1, C), beta1.reshape(1, C),
                      w2,
                      gamma2.reshape(1, C), beta2.reshape(1, C))
    out = jax.block_until_ready(out)

    ref = ref_forward(x_nhwc, w1, gamma1, beta1, w2, gamma2, beta2)
    assert out.shape == (N, H, W, C)
    err = float(jnp.max(jnp.abs(out - ref)))
    assert jnp.allclose(out, ref, atol=1e-4, rtol=1e-4), err

    print("KERNEL_OK")
</pallas_src>

<mosaic_0001>
module attributes {stable_mosaic.version = 11 : i64} {
  func.func @basic_block_kernel(%arg0: i32, %arg1: memref<2x18x18x32xf32, #tpu.memory_space<vmem>>, %arg2: memref<512x32xf32, #tpu.memory_space<vmem>>, %arg3: memref<288x32xf32, #tpu.memory_space<vmem>>, %arg4: memref<1x32xf32, #tpu.memory_space<vmem>>, %arg5: memref<1x32xf32, #tpu.memory_space<vmem>>, %arg6: memref<288x32xf32, #tpu.memory_space<vmem>>, %arg7: memref<1x32xf32, #tpu.memory_space<vmem>>, %arg8: memref<1x32xf32, #tpu.memory_space<vmem>>, %arg9: memref<512x32xf32, #tpu.memory_space<vmem>>, %arg10: memref<512x288xf32, #tpu.memory_space<vmem>>, %arg11: memref<2x18x18x32xf32, #tpu.memory_space<vmem>>) attributes {dimension_semantics = [#tpu.dimension_semantics<arbitrary>], iteration_bounds = array<i64: 1>, scalar_prefetch = 0 : i64, scratch_operands = 2 : i64, tpu.core_type = #tpu.core_type<tc>, window_params = [{pipeline_mode = #tpu.pipeline_mode<synchronous>, transform_indices = @transform_0, window_bounds = array<i64: 2, 18, 18, 32>}, {pipeline_mode = #tpu.pipeline_mode<synchronous>, transform_indices = @transform_1, window_bounds = array<i64: 512, 32>}, {pipeline_mode = #tpu.pipeline_mode<synchronous>, transform_indices = @transform_2, window_bounds = array<i64: 288, 32>}, {pipeline_mode = #tpu.pipeline_mode<synchronous>, transform_indices = @transform_3, window_bounds = array<i64: 1, 32>}, {pipeline_mode = #tpu.pipeline_mode<synchronous>, transform_indices = @transform_4, window_bounds = array<i64: 1, 32>}, {pipeline_mode = #tpu.pipeline_mode<synchronous>, transform_indices = @transform_5, window_bounds = array<i64: 288, 32>}, {pipeline_mode = #tpu.pipeline_mode<synchronous>, transform_indices = @transform_6, window_bounds = array<i64: 1, 32>}, {pipeline_mode = #tpu.pipeline_mode<synchronous>, transform_indices = @transform_7, window_bounds = array<i64: 1, 32>}, {pipeline_mode = #tpu.pipeline_mode<synchronous>, transform_indices = @transform_8, window_bounds = array<i64: 512, 32>}]} {
    %c0 = arith.constant 0 : index
    %c0_0 = arith.constant 0 : index
    %c0_1 = arith.constant 0 : index
    %c0_2 = arith.constant 0 : index
    %0 = vector.load %arg1[%c0, %c0_0, %c0_1, %c0_2] : memref<2x18x18x32xf32, #tpu.memory_space<vmem>>, vector<2x16x16x32xf32>
    %1 = vector.shape_cast %0 : vector<2x16x16x32xf32> to vector<512x32xf32>
    %c0_3 = arith.constant 0 : index
    %c0_4 = arith.constant 0 : index
    %2 = vector.load %arg10[%c0_3, %c0_4] : memref<512x288xf32, #tpu.memory_space<vmem>>, vector<512x32xf32>
    tpu.vector_store %arg10[%c0_3, %c0_4], %1 {strides = array<i32>} : memref<512x288xf32, #tpu.memory_space<vmem>>, vector<512x32xf32>,
    %c0_5 = arith.constant 0 : index
    %c0_6 = arith.constant 0 : index
    %c1 = arith.constant 1 : index
    %c0_7 = arith.constant 0 : index
    %3 = vector.load %arg1[%c0_5, %c0_6, %c1, %c0_7] : memref<2x18x18x32xf32, #tpu.memory_space<vmem>>, vector<2x16x16x32xf32>
    %4 = vector.shape_cast %3 : vector<2x16x16x32xf32> to vector<512x32xf32>
    %c0_8 = arith.constant 0 : index
    %c32 = arith.constant 32 : index
    %5 = vector.load %arg10[%c0_8, %c32] : memref<512x288xf32, #tpu.memory_space<vmem>>, vector<512x32xf32>
    tpu.vector_store %arg10[%c0_8, %c32], %4 {strides = array<i32>} : memref<512x288xf32, #tpu.memory_space<vmem>>, vector<512x32xf32>,
    %c0_9 = arith.constant 0 : index
    %c0_10 = arith.constant 0 : index
    %c2 = arith.constant 2 : index
    %c0_11 = arith.constant 0 : index
    %6 = vector.load %arg1[%c0_9, %c0_10, %c2, %c0_11] : memref<2x18x18x32xf32, #tpu.memory_space<vmem>>, vector<2x16x16x32xf32>
    %7 = vector.shape_cast %6 : vector<2x16x16x32xf32> to vector<512x32xf32>
    %c0_12 = arith.constant 0 : index
    %c64 = arith.constant 64 : index
    %8 = vector.load %arg10[%c0_12, %c64] : memref<512x288xf32, #tpu.memory_space<vmem>>, vector<512x32xf32>
    tpu.vector_store %arg10[%c0_12, %c64], %7 {strides = array<i32>} : memref<512x288xf32, #tpu.memory_space<vmem>>, vector<512x32xf32>,
    %c0_13 = arith.constant 0 : index
    %c1_14 = arith.constant 1 : index
    %c0_15 = arith.constant 0 : index
    %c0_16 = arith.constant 0 : index
    %9 = vector.load %arg1[%c0_13, %c1_14, %c0_15, %c0_16] : memref<2x18x18x32xf32, #tpu.memory_space<vmem>>, vector<2x16x16x32xf32>
    %10 = vector.shape_cast %9 : vector<2x16x16x32xf32> to vector<512x32xf32>
    %c0_17 = arith.constant 0 : index
    %c96 = arith.constant 96 : index
    %11 = vector.load %arg10[%c0_17, %c96] : memref<512x288xf32, #tpu.memory_space<vmem>>, vector<512x32xf32>
    tpu.vector_store %arg10[%c0_17, %c96], %10 {strides = array<i32>} : memref<512x288xf32, #tpu.memory_space<vmem>>, vector<512x32xf32>,
    %c0_18 = arith.constant 0 : index
    %c1_19 = arith.constant 1 : index
    %c1_20 = arith.constant 1 : index
    %c0_21 = arith.constant 0 : index
    %12 = vector.load %arg1[%c0_18, %c1_19, %c1_20, %c0_21] : memref<2x18x18x32xf32, #tpu.memory_space<vmem>>, vector<2x16x16x32xf32>
    %13 = vector.shape_cast %12 : vector<2x16x16x32xf32> to vector<512x32xf32>
    %c0_22 = arith.constant 0 : index
    %c128 = arith.constant 128 : index
    %14 = vector.load %arg10[%c0_22, %c128] : memref<512x288xf32, #tpu.memory_space<vmem>>, vector<512x32xf32>
    tpu.vector_store %arg10[%c0_22, %c128], %13 {strides = array<i32>} : memref<512x288xf32, #tpu.memory_space<vmem>>, vector<512x32xf32>,
    %c0_23 = arith.constant 0 : index
    %c1_24 = arith.constant 1 : index
    %c2_25 = arith.constant 2 : index
    %c0_26 = arith.constant 0 : index
    %15 = vector.load %arg1[%c0_23, %c1_24, %c2_25, %c0_26] : memref<2x18x18x32xf32, #tpu.memory_space<vmem>>, vector<2x16x16x32xf32>
    %16 = vector.shape_cast %15 : vector<2x16x16x32xf32> to vector<512x32xf32>
    %c0_27 = arith.constant 0 : index
    %c160 = arith.constant 160 : index
    %17 = vector.load %arg10[%c0_27, %c160] : memref<512x288xf32, #tpu.memory_space<vmem>>, vector<512x32xf32>
    tpu.vector_store %arg10[%c0_27, %c160], %16 {strides = array<i32>} : memref<512x288xf32, #tpu.memory_space<vmem>>, vector<512x32xf32>,
    %c0_28 = arith.constant 0 : index
    %c2_29 = arith.constant 2 : index
    %c0_30 = arith.constant 0 : index
    %c0_31 = arith.constant 0 : index
    %18 = vector.load %arg1[%c0_28, %c2_29, %c0_30, %c0_31] : memref<2x18x18x32xf32, #tpu.memory_space<vmem>>, vector<2x16x16x32xf32>
    %19 = vector.shape_cast %18 : vector<2x16x16x32xf32> to vector<512x32xf32>
    %c0_32 = arith.constant 0 : index
    %c192 = arith.constant 192 : index
    %20 = vector.load %arg10[%c0_32, %c192] : memref<512x288xf32, #tpu.memory_space<vmem>>, vector<512x32xf32>
    tpu.vector_store %arg10[%c0_32, %c192], %19 {strides = array<i32>} : memref<512x288xf32, #tpu.memory_space<vmem>>, vector<512x32xf32>,
    %c0_33 = arith.constant 0 : index
    %c2_34 = arith.constant 2 : index
    %c1_35 = arith.constant 1 : index
    %c0_36 = arith.constant 0 : index
    %21 = vector.load %arg1[%c0_33, %c2_34, %c1_35, %c0_36] : memref<2x18x18x32xf32, #tpu.memory_space<vmem>>, vector<2x16x16x32xf32>
    %22 = vector.shape_cast %21 : vector<2x16x16x32xf32> to vector<512x32xf32>
    %c0_37 = arith.constant 0 : index
    %c224 = arith.constant 224 : index
    %23 = vector.load %arg10[%c0_37, %c224] : memref<512x288xf32, #tpu.memory_space<vmem>>, vector<512x32xf32>
    tpu.vector_store %arg10[%c0_37, %c224], %22 {strides = array<i32>} : memref<512x288xf32, #tpu.memory_space<vmem>>, vector<512x32xf32>,
    %c0_38 = arith.constant 0 : index
    %c2_39 = arith.constant 2 : index
    %c2_40 = arith.constant 2 : index
    %c0_41 = arith.constant 0 : index
    %24 = vector.load %arg1[%c0_38, %c2_39, %c2_40, %c0_41] : memref<2x18x18x32xf32, #tpu.memory_space<vmem>>, vector<2x16x16x32xf32>
    %25 = vector.shape_cast %24 : vector<2x16x16x32xf32> to vector<512x32xf32>
    %c0_42 = arith.constant 0 : index
    %c256 = arith.constant 256 : index
    %26 = vector.load %arg10[%c0_42, %c256] : memref<512x288xf32, #tpu.memory_space<vmem>>, vector<512x32xf32>
    tpu.vector_store %arg10[%c0_42, %c256], %25 {strides = array<i32>} : memref<512x288xf32, #tpu.memory_space<vmem>>, vector<512x32xf32>,
    %c0_43 = arith.constant 0 : index
    %c0_44 = arith.constant 0 : index
    %27 = vector.load %arg10[%c0_43, %c0_44] : memref<512x288xf32, #tpu.memory_space<vmem>>, vector<512x288xf32>
    %c0_45 = arith.constant 0 : index
    %c0_46 = arith.constant 0 : index
    %28 = vector.load %arg3[%c0_45, %c0_46] : memref<288x32xf32, #tpu.memory_space<vmem>>, vector<288x32xf32>
    %cst = arith.constant dense<0.000000e+00> : vector<512x32xf32>
    %29 = tpu.matmul %27, %28, %cst {dimension_numbers = #tpu.dot_dimension_numbers<[1], [0], [0], [1], [0, 0, 1, 1], [], []>} : vector<512x288xf32>, vector<288x32xf32>, vector<512x32xf32> -> vector<512x32xf32>
    %c0_47 = arith.constant 0 : index
    %c0_48 = arith.constant 0 : index
    %30 = vector.load %arg4[%c0_47, %c0_48] : memref<1x32xf32, #tpu.memory_space<vmem>>, vector<1x32xf32>
    %c0_49 = arith.constant 0 : index
    %c0_50 = arith.constant 0 : index
    %31 = vector.load %arg5[%c0_49, %c0_50] : memref<1x32xf32, #tpu.memory_space<vmem>>, vector<1x32xf32>
    %cst_51 = arith.constant dense<0.000000e+00> : vector<32xf32>
    %32 = vector.multi_reduction <add>, %29, %cst_51 [0] : vector<512x32xf32> to vector<32xf32>
    %33 = vector.shape_cast %32 : vector<32xf32> to vector<1x32xf32>
    %34 = arith.mulf %29, %29 : vector<512x32xf32>
    %cst_52 = arith.constant dense<0.000000e+00> : vector<32xf32>
    %35 = vector.multi_reduction <add>, %34, %cst_52 [0] : vector<512x32xf32> to vector<32xf32>
    %36 = vector.shape_cast %35 : vector<32xf32> to vector<1x32xf32>
    %cst_53 = arith.constant 0.001953125 : f32
    %37 = vector.broadcast %cst_53 : f32 to vector<1x32xf32>
    %38 = arith.mulf %33, %37 : vector<1x32xf32>
    %cst_54 = arith.constant 0.001953125 : f32
    %39 = vector.broadcast %cst_54 : f32 to vector<1x32xf32>
    %40 = arith.mulf %36, %39 : vector<1x32xf32>
    %41 = arith.mulf %38, %38 : vector<1x32xf32>
    %42 = arith.subf %40, %41 : vector<1x32xf32>
    %cst_55 = arith.constant 9.99999974E-6 : f32
    %43 = vector.broadcast %cst_55 : f32 to vector<1x32xf32>
    %44 = arith.addf %42, %43 : vector<1x32xf32>
    %45 = math.rsqrt %44 : vector<1x32xf32>
    %46 = arith.mulf %30, %45 : vector<1x32xf32>
    %47 = arith.mulf %38, %46 : vector<1x32xf32>
    %48 = arith.subf %31, %47 : vector<1x32xf32>
    %49 = vector.broadcast %46 : vector<1x32xf32> to vector<512x32xf32>
    %50 = arith.mulf %29, %49 : vector<512x32xf32>
    %51 = vector.broadcast %48 : vector<1x32xf32> to vector<512x32xf32>
    %52 = arith.addf %50, %51 : vector<512x32xf32>
    %cst_56 = arith.constant 0.000000e+00 : f32
    %53 = vector.broadcast %cst_56 : f32 to vector<512x32xf32>
    %54 = arith.maximumf %52, %53 : vector<512x32xf32>
    %cst_57 = arith.constant 0.000000e+00 : f32
    %55 = vector.broadcast %cst_57 : f32 to vector<2x1x18x32xf32>
    %c0_58 = arith.constant 0 : index
    %c0_59 = arith.constant 0 : index
    %c0_60 = arith.constant 0 : index
    %c0_61 = arith.constant 0 : index
    %56 = vector.load %arg11[%c0_58, %c0_59, %c0_60, %c0_61] : memref<2x18x18x32xf32, #tpu.memory_space<vmem>>, vector<2x1x18x32xf32>
    tpu.vector_store %arg11[%c0_58, %c0_59, %c0_60, %c0_61], %55 {strides = array<i32>} : memref<2x18x18x32xf32, #tpu.memory_space<vmem>>, vector<2x1x18x32xf32>,
    %c0_62 = arith.constant 0 : index
    %c17 = arith.constant 17 : index
    %c0_63 = arith.constant 0 : index
    %c0_64 = arith.constant 0 : index
    %57 = vector.load %arg11[%c0_62, %c17, %c0_63, %c0_64] : memref<2x18x18x32xf32, #tpu.memory_space<vmem>>, vector<2x1x18x32xf32>
    tpu.vector_store %arg11[%c0_62, %c17, %c0_63, %c0_64], %55 {strides = array<i32>} : memref<2x18x18x32xf32, #tpu.memory_space<vmem>>, vector<2x1x18x32xf32>,
    %cst_65 = arith.constant 0.000000e+00 : f32
    %58 = vector.broadcast %cst_65 : f32 to vector<2x18x1x32xf32>
    %c0_66 = arith.constant 0 : index
    %c0_67 = arith.constant 0 : index
    %c0_68 = arith.constant 0 : index
    %c0_69 = arith.constant 0 : index
    %59 = vector.load %arg11[%c0_66, %c0_67, %c0_68, %c0_69] : memref<2x18x18x32xf32, #tpu.memory_space<vmem>>, vector<2x18x1x32xf32>
    tpu.vector_store %arg11[%c0_66, %c0_67, %c0_68, %c0_69], %58 {strides = array<i32>} : memref<2x18x18x32xf32, #tpu.memory_space<vmem>>, vector<2x18x1x32xf32>,
    %c0_70 = arith.constant 0 : index
    %c0_71 = arith.constant 0 : index
    %c17_72 = arith.constant 17 : index
    %c0_73 = arith.constant 0 : index
    %60 = vector.load %arg11[%c0_70, %c0_71, %c17_72, %c0_73] : memref<2x18x18x32xf32, #tpu.memory_space<vmem>>, vector<2x18x1x32xf32>
    tpu.vector_store %arg11[%c0_70, %c0_71, %c17_72, %c0_73], %58 {strides = array<i32>} : memref<2x18x18x32xf32, #tpu.memory_space<vmem>>, vector<2x18x1x32xf32>,
    %61 = vector.shape_cast %54 : vector<512x32xf32> to vector<2x16x16x32xf32>
    %c0_74 = arith.constant 0 : index
    %c1_75 = arith.constant 1 : index
    %c1_76 = arith.constant 1 : index
    %c0_77 = arith.constant 0 : index
    %62 = vector.load %arg11[%c0_74, %c1_75, %c1_76, %c0_77] : memref<2x18x18x32xf32, #tpu.memory_space<vmem>>, vector<2x16x16x32xf32>
    tpu.vector_store %arg11[%c0_74, %c1_75, %c1_76, %c0_77], %61 {strides = array<i32>} : memref<2x18x18x32xf32, #tpu.memory_space<vmem>>, vector<2x16x16x32xf32>,
    %c0_78 = arith.constant 0 : index
    %c0_79 = arith.constant 0 : index
    %c0_80 = arith.constant 0 : index
    %c0_81 = arith.constant 0 : index
    %63 = vector.load %arg11[%c0_78, %c0_79, %c0_80, %c0_81] : memref<2x18x18x32xf32, #tpu.memory_space<vmem>>, vector<2x16x16x32xf32>
    %64 = vector.shape_cast %63 : vector<2x16x16x32xf32> to vector<512x32xf32>
    %c0_82 = arith.constant 0 : index
    %c0_83 = arith.constant 0 : index
    %65 = vector.load %arg10[%c0_82, %c0_83] : memref<512x288xf32, #tpu.memory_space<vmem>>, vector<512x32xf32>
    tpu.vector_store %arg10[%c0_82, %c0_83], %64 {strides = array<i32>} : memref<512x288xf32, #tpu.memory_space<vmem>>, vector<512x32xf32>,
    %c0_84 = arith.constant 0 : index
    %c0_85 = arith.constant 0 : index
    %c1_86 = arith.constant 1 : index
    %c0_87 = arith.constant 0 : index
    %66 = vector.load %arg11[%c0_84, %c0_85, %c1_86, %c0_87] : memref<2x18x18x32xf32, #tpu.memory_space<vmem>>, vector<2x16x16x32xf32>
    %67 = vector.shape_cast %66 : vector<2x16x16x32xf32> to vector<512x32xf32>
    %c0_88 = arith.constant 0 : index
    %c32_89 = arith.constant 32 : index
    %68 = vector.load %arg10[%c0_88, %c32_89] : memref<512x288xf32, #tpu.memory_space<vmem>>, vector<512x32xf32>
    tpu.vector_store %arg10[%c0_88, %c32_89], %67 {strides = array<i32>} : memref<512x288xf32, #tpu.memory_space<vmem>>, vector<512x32xf32>,
    %c0_90 = arith.constant 0 : index
    %c0_91 = arith.constant 0 : index
    %c2_92 = arith.constant 2 : index
    %c0_93 = arith.constant 0 : index
    %69 = vector.load %arg11[%c0_90, %c0_91, %c2_92, %c0_93] : memref<2x18x18x32xf32, #tpu.memory_space<vmem>>, vector<2x16x16x32xf32>
    %70 = vector.shape_cast %69 : vector<2x16x16x32xf32> to vector<512x32xf32>
    %c0_94 = arith.constant 0 : index
    %c64_95 = arith.constant 64 : index
    %71 = vector.load %arg10[%c0_94, %c64_95] : memref<512x288xf32, #tpu.memory_space<vmem>>, vector<512x32xf32>
    tpu.vector_store %arg10[%c0_94, %c64_95], %70 {strides = array<i32>} : memref<512x288xf32, #tpu.memory_space<vmem>>, vector<512x32xf32>,
    %c0_96 = arith.constant 0 : index
    %c1_97 = arith.constant 1 : index
    %c0_98 = arith.constant 0 : index
    %c0_99 = arith.constant 0 : index
    %72 = vector.load %arg11[%c0_96, %c1_97, %c0_98, %c0_99] : memref<2x18x18x32xf32, #tpu.memory_space<vmem>>, vector<2x16x16x32xf32>
    %73 = vector.shape_cast %72 : vector<2x16x16x32xf32> to vector<512x32xf32>
    %c0_100 = arith.constant 0 : index
    %c96_101 = arith.constant 96 : index
    %74 = vector.load %arg10[%c0_100, %c96_101] : memref<512x288xf32, #tpu.memory_space<vmem>>, vector<512x32xf32>
    tpu.vector_store %arg10[%c0_100, %c96_101], %73 {strides = array<i32>} : memref<512x288xf32, #tpu.memory_space<vmem>>, vector<512x32xf32>,
    %c0_102 = arith.constant 0 : index
    %c1_103 = arith.constant 1 : index
    %c1_104 = arith.constant 1 : index
    %c0_105 = arith.constant 0 : index
    %75 = vector.load %arg11[%c0_102, %c1_103, %c1_104, %c0_105] : memref<2x18x18x32xf32, #tpu.memory_space<vmem>>, vector<2x16x16x32xf32>
    %76 = vector.shape_cast %75 : vector<2x16x16x32xf32> to vector<512x32xf32>
    %c0_106 = arith.constant 0 : index
    %c128_107 = arith.constant 128 : index
    %77 = vector.load %arg10[%c0_106, %c128_107] : memref<512x288xf32, #tpu.memory_space<vmem>>, vector<512x32xf32>
    tpu.vector_store %arg10[%c0_106, %c128_107], %76 {strides = array<i32>} : memref<512x288xf32, #tpu.memory_space<vmem>>, vector<512x32xf32>,
    %c0_108 = arith.constant 0 : index
    %c1_109 = arith.constant 1 : index
    %c2_110 = arith.constant 2 : index
    %c0_111 = arith.constant 0 : index
    %78 = vector.load %arg11[%c0_108, %c1_109, %c2_110, %c0_111] : memref<2x18x18x32xf32, #tpu.memory_space<vmem>>, vector<2x16x16x32xf32>
    %79 = vector.shape_cast %78 : vector<2x16x16x32xf32> to vector<512x32xf32>
    %c0_112 = arith.constant 0 : index
    %c160_113 = arith.constant 160 : index
    %80 = vector.load %arg10[%c0_112, %c160_113] : memref<512x288xf32, #tpu.memory_space<vmem>>, vector<512x32xf32>
    tpu.vector_store %arg10[%c0_112, %c160_113], %79 {strides = array<i32>} : memref<512x288xf32, #tpu.memory_space<vmem>>, vector<512x32xf32>,
    %c0_114 = arith.constant 0 : index
    %c2_115 = arith.constant 2 : index
    %c0_116 = arith.constant 0 : index
    %c0_117 = arith.constant 0 : index
    %81 = vector.load %arg11[%c0_114, %c2_115, %c0_116, %c0_117] : memref<2x18x18x32xf32, #tpu.memory_space<vmem>>, vector<2x16x16x32xf32>
    %82 = vector.shape_cast %81 : vector<2x16x16x32xf32> to vector<512x32xf32>
    %c0_118 = arith.constant 0 : index
    %c192_119 = arith.constant 192 : index
    %83 = vector.load %arg10[%c0_118, %c192_119] : memref<512x288xf32, #tpu.memory_space<vmem>>, vector<512x32xf32>
    tpu.vector_store %arg10[%c0_118, %c192_119], %82 {strides = array<i32>} : memref<512x288xf32, #tpu.memory_space<vmem>>, vector<512x32xf32>,
    %c0_120 = arith.constant 0 : index
    %c2_121 = arith.constant 2 : index
    %c1_122 = arith.constant 1 : index
    %c0_123 = arith.constant 0 : index
    %84 = vector.load %arg11[%c0_120, %c2_121, %c1_122, %c0_123] : memref<2x18x18x32xf32, #tpu.memory_space<vmem>>, vector<2x16x16x32xf32>
    %85 = vector.shape_cast %84 : vector<2x16x16x32xf32> to vector<512x32xf32>
    %c0_124 = arith.constant 0 : index
    %c224_125 = arith.constant 224 : index
    %86 = vector.load %arg10[%c0_124, %c224_125] : memref<512x288xf32, #tpu.memory_space<vmem>>, vector<512x32xf32>
    tpu.vector_store %arg10[%c0_124, %c224_125], %85 {strides = array<i32>} : memref<512x288xf32, #tpu.memory_space<vmem>>, vector<512x32xf32>,
    %c0_126 = arith.constant 0 : index
    %c2_127 = arith.constant 2 : index
    %c2_128 = arith.constant 2 : index
    %c0_129 = arith.constant 0 : index
    %87 = vector.load %arg11[%c0_126, %c2_127, %c2_128, %c0_129] : memref<2x18x18x32xf32, #tpu.memory_space<vmem>>, vector<2x16x16x32xf32>
    %88 = vector.shape_cast %87 : vector<2x16x16x32xf32> to vector<512x32xf32>
    %c0_130 = arith.constant 0 : index
    %c256_131 = arith.constant 256 : index
    %89 = vector.load %arg10[%c0_130, %c256_131] : memref<512x288xf32, #tpu.memory_space<vmem>>, vector<512x32xf32>
    tpu.vector_store %arg10[%c0_130, %c256_131], %88 {strides = array<i32>} : memref<512x288xf32, #tpu.memory_space<vmem>>, vector<512x32xf32>,
    %c0_132 = arith.constant 0 : index
    %c0_133 = arith.constant 0 : index
    %90 = vector.load %arg10[%c0_132, %c0_133] : memref<512x288xf32, #tpu.memory_space<vmem>>, vector<512x288xf32>
    %c0_134 = arith.constant 0 : index
    %c0_135 = arith.constant 0 : index
    %91 = vector.load %arg6[%c0_134, %c0_135] : memref<288x32xf32, #tpu.memory_space<vmem>>, vector<288x32xf32>
    %cst_136 = arith.constant dense<0.000000e+00> : vector<512x32xf32>
    %92 = tpu.matmul %90, %91, %cst_136 {dimension_numbers = #tpu.dot_dimension_numbers<[1], [0], [0], [1], [0, 0, 1, 1], [], []>} : vector<512x288xf32>, vector<288x32xf32>, vector<512x32xf32> -> vector<512x32xf32>
    %c0_137 = arith.constant 0 : index
    %c0_138 = arith.constant 0 : index
    %93 = vector.load %arg7[%c0_137, %c0_138] : memref<1x32xf32, #tpu.memory_space<vmem>>, vector<1x32xf32>
    %c0_139 = arith.constant 0 : index
    %c0_140 = arith.constant 0 : index
    %94 = vector.load %arg8[%c0_139, %c0_140] : memref<1x32xf32, #tpu.memory_space<vmem>>, vector<1x32xf32>
    %cst_141 = arith.constant dense<0.000000e+00> : vector<32xf32>
    %95 = vector.multi_reduction <add>, %92, %cst_141 [0] : vector<512x32xf32> to vector<32xf32>
    %96 = vector.shape_cast %95 : vector<32xf32> to vector<1x32xf32>
    %97 = arith.mulf %92, %92 : vector<512x32xf32>
    %cst_142 = arith.constant dense<0.000000e+00> : vector<32xf32>
    %98 = vector.multi_reduction <add>, %97, %cst_142 [0] : vector<512x32xf32> to vector<32xf32>
    %99 = vector.shape_cast %98 : vector<32xf32> to vector<1x32xf32>
    %cst_143 = arith.constant 0.001953125 : f32
    %100 = vector.broadcast %cst_143 : f32 to vector<1x32xf32>
    %101 = arith.mulf %96, %100 : vector<1x32xf32>
    %cst_144 = arith.constant 0.001953125 : f32
    %102 = vector.broadcast %cst_144 : f32 to vector<1x32xf32>
    %103 = arith.mulf %99, %102 : vector<1x32xf32>
    %104 = arith.mulf %101, %101 : vector<1x32xf32>
    %105 = arith.subf %103, %104 : vector<1x32xf32>
    %cst_145 = arith.constant 9.99999974E-6 : f32
    %106 = vector.broadcast %cst_145 : f32 to vector<1x32xf32>
    %107 = arith.addf %105, %106 : vector<1x32xf32>
    %108 = math.rsqrt %107 : vector<1x32xf32>
    %109 = arith.mulf %93, %108 : vector<1x32xf32>
    %110 = arith.mulf %101, %109 : vector<1x32xf32>
    %111 = arith.subf %94, %110 : vector<1x32xf32>
    %112 = vector.broadcast %109 : vector<1x32xf32> to vector<512x32xf32>
    %113 = arith.mulf %92, %112 : vector<512x32xf32>
    %114 = vector.broadcast %111 : vector<1x32xf32> to vector<512x32xf32>
    %115 = arith.addf %113, %114 : vector<512x32xf32>
    %c0_146 = arith.constant 0 : index
    %c0_147 = arith.constant 0 : index
    %116 = vector.load %arg2[%c0_146, %c0_147] : memref<512x32xf32, #tpu.memory_space<vmem>>, vector<512x32xf32>
    %117 = arith.addf %115, %116 : vector<512x32xf32>
    %cst_148 = arith.constant 0.000000e+00 : f32
    %118 = vector.broadcast %cst_148 : f32 to vector<512x32xf32>
    %119 = arith.maximumf %117, %118 : vector<512x32xf32>
    %c0_149 = arith.constant 0 : index
    %c0_150 = arith.constant 0 : index
    %120 = vector.load %arg9[%c0_149, %c0_150] : memref<512x32xf32, #tpu.memory_space<vmem>>, vector<512x32xf32>
    tpu.vector_store %arg9[%c0_149, %c0_150], %119 {strides = array<i32>} : memref<512x32xf32, #tpu.memory_space<vmem>>, vector<512x32xf32>,
    return
  }
  func.func @transform_0(%arg0: i32) -> (i32, i32, i32, i32) {
    %c0_i32 = arith.constant 0 : i32
    %c0_i32_0 = arith.constant 0 : i32
    %c0_i32_1 = arith.constant 0 : i32
    %c0_i32_2 = arith.constant 0 : i32
    %c0_i32_3 = arith.constant 0 : i32
    return %c0_i32, %c0_i32_0, %c0_i32_1, %c0_i32_2 : i32, i32, i32, i32
  }
  func.func @transform_1(%arg0: i32) -> (i32, i32) {
    %c0_i32 = arith.constant 0 : i32
    %c0_i32_0 = arith.constant 0 : i32
    %c0_i32_1 = arith.constant 0 : i32
    return %c0_i32, %c0_i32_0 : i32, i32
  }
  func.func @transform_2(%arg0: i32) -> (i32, i32) {
    %c0_i32 = arith.constant 0 : i32
    %c0_i32_0 = arith.constant 0 : i32
    %c0_i32_1 = arith.constant 0 : i32
    return %c0_i32, %c0_i32_0 : i32, i32
  }
  func.func @transform_3(%arg0: i32) -> (i32, i32) {
    %c0_i32 = arith.constant 0 : i32
    %c0_i32_0 = arith.constant 0 : i32
    %c0_i32_1 = arith.constant 0 : i32
    return %c0_i32, %c0_i32_0 : i32, i32
  }
  func.func @transform_4(%arg0: i32) -> (i32, i32) {
    %c0_i32 = arith.constant 0 : i32
    %c0_i32_0 = arith.constant 0 : i32
    %c0_i32_1 = arith.constant 0 : i32
    return %c0_i32, %c0_i32_0 : i32, i32
  }
  func.func @transform_5(%arg0: i32) -> (i32, i32) {
    %c0_i32 = arith.constant 0 : i32
    %c0_i32_0 = arith.constant 0 : i32
    %c0_i32_1 = arith.constant 0 : i32
    return %c0_i32, %c0_i32_0 : i32, i32
  }
  func.func @transform_6(%arg0: i32) -> (i32, i32) {
    %c0_i32 = arith.constant 0 : i32
    %c0_i32_0 = arith.constant 0 : i32
    %c0_i32_1 = arith.constant 0 : i32
    return %c0_i32, %c0_i32_0 : i32, i32
  }
  func.func @transform_7(%arg0: i32) -> (i32, i32) {
    %c0_i32 = arith.constant 0 : i32
    %c0_i32_0 = arith.constant 0 : i32
    %c0_i32_1 = arith.constant 0 : i32
    return %c0_i32, %c0_i32_0 : i32, i32
  }
  func.func @transform_8(%arg0: i32) -> (i32, i32) {
    %c0_i32 = arith.constant 0 : i32
    %c0_i32_0 = arith.constant 0 : i32
    %c0_i32_1 = arith.constant 0 : i32
    return %c0_i32, %c0_i32_0 : i32, i32
  }
}

</mosaic_0001>

<llo_original>
// kernel: basic_block.1
$region0: #{basic_block.1}
  #allocation0 [shape = 'u32[]', space=smem, size = 0x4, offset = 0x4, fixed_abs, tag = 'smem constant byte address 0x4 - core index']
  #allocation1 [shape = 'u32[144,128]{1,0:T(1,128)}', space=vmem, size = 0x12000, scoped, tag = 'internal scratch']
  #allocation2 [shape = 'f32[512,288]{1,0:T(8,128)}', space=vmem, size = 0xc0000, scoped, tag = 'scratch operand']
  #allocation3 [shape = 'f32[2,18,18,32]{3,2,1,0:T(8,128)}', space=vmem, size = 0x6c000, scoped, tag = 'scratch operand']
  %s0 = inlined_call_operand.vmem [shape: f32[2,18,18,32], index: 0, kind: input, shape index: {}]
  %s1 = inlined_call_operand.vmem [shape: f32[512,32], index: 1, kind: input, shape index: {}]
  %s2 = inlined_call_operand.vmem [shape: f32[288,32], index: 2, kind: input, shape index: {}]
  %s3 = inlined_call_operand.vmem [shape: f32[1,32], index: 3, kind: input, shape index: {}]
  %s4 = inlined_call_operand.vmem [shape: f32[1,32], index: 4, kind: input, shape index: {}]
  %s5 = inlined_call_operand.vmem [shape: f32[288,32], index: 5, kind: input, shape index: {}]
  %s6 = inlined_call_operand.vmem [shape: f32[1,32], index: 6, kind: input, shape index: {}]
  %s7 = inlined_call_operand.vmem [shape: f32[1,32], index: 7, kind: input, shape index: {}]
  %s8 = inlined_call_operand.hbm [shape: f32[512,32], index: 8, kind: output, shape index: {}]
  %s9 = sld [smem:[#allocation0]]
  $region42: #{basic_block.1} parent=0
    _
  %s11 = ssub.s32 1, %s9
  %s12 = scalar_select 0, %s11, %s9
  $region1: #{basic_block.1} parent=0
    #allocation4 [shape = 'u8[262144]{0}', space=vmem, size = 0x40000, scoped, tag = 'output window, operand 0, single buffered']
    #allocation5 [shape = 's32[1]{0}', space=sflag, size = 0x4, scoped, tag = 'scoped memory for basic_block.1']
    %13 = vsyncpa [#allocation5], 0
    // Predicated region
    $region2: #{basic_block.1} parent=1 // pred_check
      _
    $region3: #{basic_block.1} parent=1 // pred_check_branch
      %15 = sbr.rel (0) target = $region5
    $region4: #{basic_block.1} parent=1 // pred_region
      _
    $region5: #{basic_block.1} parent=1 // pred_fallthru
      _
    // Predicated region
    $region6: #{basic_block.1} parent=1 // pred_check
      _
    $region7: #{basic_block.1} parent=1 // pred_check_branch
      %17 = sbr.rel (0) target = $region9
    $region8: #{basic_block.1} parent=1 // pred_region
      _
    $region9: #{basic_block.1} parent=1 // pred_fallthru
      _
    // Predicated region
    $region10: #{basic_block.1} parent=1 // pred_check
      _
    $region11: #{basic_block.1} parent=1 // pred_check_branch
      %19 = sbr.rel (0) target = $region13
    $region12: #{basic_block.1} parent=1 // pred_region
      _
    $region13: #{basic_block.1} parent=1 // pred_fallthru
      _
    // Predicated region
    $region14: #{basic_block.1} parent=1 // pred_check
      _
    $region15: #{basic_block.1} parent=1 // pred_check_branch
      %21 = sbr.rel (0) target = $region17
    $region16: #{basic_block.1} parent=1 // pred_region
      _
    $region17: #{basic_block.1} parent=1 // pred_fallthru
      _
    // Predicated region
    $region18: #{basic_block.1} parent=1 // pred_check
      _
    $region19: #{basic_block.1} parent=1 // pred_check_branch
      %23 = sbr.rel (0) target = $region21
    $region20: #{basic_block.1} parent=1 // pred_region
      _
    $region21: #{basic_block.1} parent=1 // pred_fallthru
      _
    // Predicated region
    $region22: #{basic_block.1} parent=1 // pred_check
      _
    $region23: #{basic_block.1} parent=1 // pred_check_branch
      %25 = sbr.rel (0) target = $region25
    $region24: #{basic_block.1} parent=1 // pred_region
      _
    $region25: #{basic_block.1} parent=1 // pred_fallthru
      _
    // Predicated region
    $region26: #{basic_block.1} parent=1 // pred_check
      _
    $region27: #{basic_block.1} parent=1 // pred_check_branch
      %27 = sbr.rel (0) target = $region29
    $region28: #{basic_block.1} parent=1 // pred_region
      _
    $region29: #{basic_block.1} parent=1 // pred_fallthru
      _
    // Predicated region
    $region30: #{basic_block.1} parent=1 // pred_check
      _
    $region31: #{basic_block.1} parent=1 // pred_check_branch
      %29 = sbr.rel (0) target = $region33
    $region32: #{basic_block.1} parent=1 // pred_region
      _
    $region33: #{basic_block.1} parent=1 // pred_fallthru
      _
    %v30 = vld [vmem:[%s0] sm:$0xff]
    %v31 = vld [vmem:[%s0 + $0x8] sm:$0xff]
    %v32 = vld [vmem:[%s0 + $0x18] sm:$0xff]
    %v33 = vld [vmem:[%s0 + $0x20] sm:$0xff]
    %v34 = vld [vmem:[%s0 + $0x30] sm:$0xff]
    %v35 = vld [vmem:[%s0 + $0x38] sm:$0xff]
    %v36 = vld [vmem:[%s0 + $0x48] sm:$0xff]
    %v37 = vld [vmem:[%s0 + $0x50] sm:$0xff]
    %v38 = vld [vmem:[%s0 + $0x60] sm:$0xff]
    %v39 = vld [vmem:[%s0 + $0x68] sm:$0xff]
    %v40 = vld [vmem:[%s0 + $0x78] sm:$0xff]
    %v41 = vld [vmem:[%s0 + $0x80] sm:$0xff]
    %v42 = vld [vmem:[%s0 + $0x90] sm:$0xff]
    %v43 = vld [vmem:[%s0 + $0x98] sm:$0xff]
    %v44 = vld [vmem:[%s0 + $0xa8] sm:$0xff]
    %v45 = vld [vmem:[%s0 + $0xb0] sm:$0xff]
    %v46 = vld [vmem:[%s0 + $0xc0] sm:$0xff]
    %v47 = vld [vmem:[%s0 + $0xc8] sm:$0xff]
    %v48 = vld [vmem:[%s0 + $0xd8] sm:$0xff]
    %v49 = vld [vmem:[%s0 + $0xe0] sm:$0xff]
    %v50 = vld [vmem:[%s0 + $0xf0] sm:$0xff]
    %v51 = vld [vmem:[%s0 + $0xf8] sm:$0xff]
    %v52 = vld [vmem:[%s0 + $0x108] sm:$0xff]
    %v53 = vld [vmem:[%s0 + $0x110] sm:$0xff]
    %v54 = vld [vmem:[%s0 + $0x120] sm:$0xff]
    %v55 = vld [vmem:[%s0 + $0x128] sm:$0xff]
    %v56 = vld [vmem:[%s0 + $0x138] sm:$0xff]
    %v57 = vld [vmem:[%s0 + $0x140] sm:$0xff]
    %v58 = vld [vmem:[%s0 + $0x150] sm:$0xff]
    %v59 = vld [vmem:[%s0 + $0x158] sm:$0xff]
    %v60 = vld [vmem:[%s0 + $0x168] sm:$0xff]
    %v61 = vld [vmem:[%s0 + $0x170] sm:$0xff]
    %v62 = vld [vmem:[%s0 + $0x1b0] sm:$0xff]
    %v63 = vld [vmem:[%s0 + $0x1b8] sm:$0xff]
    %v64 = vld [vmem:[%s0 + $0x1c8] sm:$0xff]
    %v65 = vld [vmem:[%s0 + $0x1d0] sm:$0xff]
    %v66 = vld [vmem:[%s0 + $0x1e0] sm:$0xff]
    %v67 = vld [vmem:[%s0 + $0x1e8] sm:$0xff]
    %v68 = vld [vmem:[%s0 + $0x1f8] sm:$0xff]
    %v69 = vld [vmem:[%s0 + $0x200] sm:$0xff]
    %v70 = vld [vmem:[%s0 + $0x210] sm:$0xff]
    %v71 = vld [vmem:[%s0 + $0x218] sm:$0xff]
    %v72 = vld [vmem:[%s0 + $0x228] sm:$0xff]
    %v73 = vld [vmem:[%s0 + $0x230] sm:$0xff]
    %v74 = vld [vmem:[%s0 + $0x240] sm:$0xff]
    %v75 = vld [vmem:[%s0 + $0x248] sm:$0xff]
    %v76 = vld [vmem:[%s0 + $0x258] sm:$0xff]
    %v77 = vld [vmem:[%s0 + $0x260] sm:$0xff]
    %v78 = vld [vmem:[%s0 + $0x270] sm:$0xff]
    %v79 = vld [vmem:[%s0 + $0x278] sm:$0xff]
    %v80 = vld [vmem:[%s0 + $0x288] sm:$0xff]
    %v81 = vld [vmem:[%s0 + $0x290] sm:$0xff]
    %v82 = vld [vmem:[%s0 + $0x2a0] sm:$0xff]
    %v83 = vld [vmem:[%s0 + $0x2a8] sm:$0xff]
    %v84 = vld [vmem:[%s0 + $0x2b8] sm:$0xff]
    %v85 = vld [vmem:[%s0 + $0x2c0] sm:$0xff]
    %v86 = vld [vmem:[%s0 + $0x2d0] sm:$0xff]
    %v87 = vld [vmem:[%s0 + $0x2d8] sm:$0xff]
    %v88 = vld [vmem:[%s0 + $0x2e8] sm:$0xff]
    %v89 = vld [vmem:[%s0 + $0x2f0] sm:$0xff]
    %v90 = vld [vmem:[%s0 + $0x300] sm:$0xff]
    %v91 = vld [vmem:[%s0 + $0x308] sm:$0xff]
    %v92 = vld [vmem:[%s0 + $0x318] sm:$0xff]
    %v93 = vld [vmem:[%s0 + $0x320] sm:$0xff]
    %vm94 = vcmask 261120
    %95 = vst.msk [vmem:[#allocation2] sm:$0xff] %vm94, %v30
    %96 = vst.msk [vmem:[#allocation2 + $0x18] sm:$0xff] %vm94, %v31
    %97 = vst.msk [vmem:[#allocation2 + $0x30] sm:$0xff] %vm94, %v32
    %98 = vst.msk [vmem:[#allocation2 + $0x48] sm:$0xff] %vm94, %v33
    %99 = vst.msk [vmem:[#allocation2 + $0x60] sm:$0xff] %vm94, %v34
    %100 = vst.msk [vmem:[#allocation2 + $0x78] sm:$0xff] %vm94, %v35
    %101 = vst.msk [vmem:[#allocation2 + $0x90] sm:$0xff] %vm94, %v36
    %102 = vst.msk [vmem:[#allocation2 + $0xa8] sm:$0xff] %vm94, %v37
    %103 = vst.msk [vmem:[#allocation2 + $0xc0] sm:$0xff] %vm94, %v38
    %104 = vst.msk [vmem:[#allocation2 + $0xd8] sm:$0xff] %vm94, %v39
    %105 = vst.msk [vmem:[#allocation2 + $0xf0] sm:$0xff] %vm94, %v40
    %106 = vst.msk [vmem:[#allocation2 + $0x108] sm:$0xff] %vm94, %v41
    %107 = vst.msk [vmem:[#allocation2 + $0x120] sm:$0xff] %vm94, %v42
    %108 = vst.msk [vmem:[#allocation2 + $0x138] sm:$0xff] %vm94, %v43
    %109 = vst.msk [vmem:[#allocation2 + $0x150] sm:$0xff] %vm94, %v44
    %110 = vst.msk [vmem:[#allocation2 + $0x168] sm:$0xff] %vm94, %v45
    %111 = vst.msk [vmem:[#allocation2 + $0x180] sm:$0xff] %vm94, %v46
    %112 = vst.msk [vmem:[#allocation2 + $0x198] sm:$0xff] %vm94, %v47
    %113 = vst.msk [vmem:[#allocation2 + $0x1b0] sm:$0xff] %vm94, %v48
    %114 = vst.msk [vmem:[#allocation2 + $0x1c8] sm:$0xff] %vm94, %v49
    %115 = vst.msk [vmem:[#allocation2 + $0x1e0] sm:$0xff] %vm94, %v50
    %116 = vst.msk [vmem:[#allocation2 + $0x1f8] sm:$0xff] %vm94, %v51
    %117 = vst.msk [vmem:[#allocation2 + $0x210] sm:$0xff] %vm94, %v52
    %118 = vst.msk [vmem:[#allocation2 + $0x228] sm:$0xff] %vm94, %v53
    %119 = vst.msk [vmem:[#allocation2 + $0x240] sm:$0xff] %vm94, %v54
    %120 = vst.msk [vmem:[#allocation2 + $0x258] sm:$0xff] %vm94, %v55
    %121 = vst.msk [vmem:[#allocation2 + $0x270] sm:$0xff] %vm94, %v56
    %122 = vst.msk [vmem:[#allocation2 + $0x288] sm:$0xff] %vm94, %v57
    %123 = vst.msk [vmem:[#allocation2 + $0x2a0] sm:$0xff] %vm94, %v58
    %124 = vst.msk [vmem:[#allocation2 + $0x2b8] sm:$0xff] %vm94, %v59
    %125 = vst.msk [vmem:[#allocation2 + $0x2d0] sm:$0xff] %vm94, %v60
    %126 = vst.msk [vmem:[#allocation2 + $0x2e8] sm:$0xff] %vm94, %v61
    %127 = vst.msk [vmem:[#allocation2 + $0x300] sm:$0xff] %vm94, %v62
    %128 = vst.msk [vmem:[#allocation2 + $0x318] sm:$0xff] %vm94, %v63
    %129 = vst.msk [vmem:[#allocation2 + $0x330] sm:$0xff] %vm94, %v64
    %130 = vst.msk [vmem:[#allocation2 + $0x348] sm:$0xff] %vm94, %v65
    %131 = vst.msk [vmem:[#allocation2 + $0x360] sm:$0xff] %vm94, %v66
    %132 = vst.msk [vmem:[#allocation2 + $0x378] sm:$0xff] %vm94, %v67
    %133 = vst.msk [vmem:[#allocation2 + $0x390] sm:$0xff] %vm94, %v68
    %134 = vst.msk [vmem:[#allocation2 + $0x3a8] sm:$0xff] %vm94, %v69
    %135 = vst.msk [vmem:[#allocation2 + $0x3c0] sm:$0xff] %vm94, %v70
    %136 = vst.msk [vmem:[#allocation2 + $0x3d8] sm:$0xff] %vm94, %v71
    %137 = vst.msk [vmem:[#allocation2 + $0x3f0] sm:$0xff] %vm94, %v72
    %138 = vst.msk [vmem:[#allocation2 + $0x408] sm:$0xff] %vm94, %v73
    %139 = vst.msk [vmem:[#allocation2 + $0x420] sm:$0xff] %vm94, %v74
    %140 = vst.msk [vmem:[#allocation2 + $0x438] sm:$0xff] %vm94, %v75
    %141 = vst.msk [vmem:[#allocation2 + $0x450] sm:$0xff] %vm94, %v76
    %142 = vst.msk [vmem:[#allocation2 + $0x468] sm:$0xff] %vm94, %v77
    %143 = vst.msk [vmem:[#allocation2 + $0x480] sm:$0xff] %vm94, %v78
    %144 = vst.msk [vmem:[#allocation2 + $0x498] sm:$0xff] %vm94, %v79
    %145 = vst.msk [vmem:[#allocation2 + $0x4b0] sm:$0xff] %vm94, %v80
    %146 = vst.msk [vmem:[#allocation2 + $0x4c8] sm:$0xff] %vm94, %v81
    %147 = vst.msk [vmem:[#allocation2 + $0x4e0] sm:$0xff] %vm94, %v82
    %148 = vst.msk [vmem:[#allocation2 + $0x4f8] sm:$0xff] %vm94, %v83
    %149 = vst.msk [vmem:[#allocation2 + $0x510] sm:$0xff] %vm94, %v84
    %150 = vst.msk [vmem:[#allocation2 + $0x528] sm:$0xff] %vm94, %v85
    %151 = vst.msk [vmem:[#allocation2 + $0x540] sm:$0xff] %vm94, %v86
    %152 = vst.msk [vmem:[#allocation2 + $0x558] sm:$0xff] %vm94, %v87
    %153 = vst.msk [vmem:[#allocation2 + $0x570] sm:$0xff] %vm94, %v88
    %154 = vst.msk [vmem:[#allocation2 + $0x588] sm:$0xff] %vm94, %v89
    %155 = vst.msk [vmem:[#allocation2 + $0x5a0] sm:$0xff] %vm94, %v90
    %156 = vst.msk [vmem:[#allocation2 + $0x5b8] sm:$0xff] %vm94, %v91
    %157 = vst.msk [vmem:[#allocation2 + $0x5d0] sm:$0xff] %vm94, %v92
    %158 = vst.msk [vmem:[#allocation2 + $0x5e8] sm:$0xff] %vm94, %v93
    %v159 = vld [vmem:[%s0 + $0x1] sm:$0xff]
    %v160 = vld [vmem:[%s0 + $0x9] sm:$0xff]
    %v161 = vld [vmem:[%s0 + $0x19] sm:$0xff]
    %v162 = vld [vmem:[%s0 + $0x21] sm:$0xff]
    %v163 = vld [vmem:[%s0 + $0x31] sm:$0xff]
    %v164 = vld [vmem:[%s0 + $0x39] sm:$0xff]
    %v165 = vld [vmem:[%s0 + $0x49] sm:$0xff]
    %v166 = vld [vmem:[%s0 + $0x51] sm:$0xff]
    %v167 = vld [vmem:[%s0 + $0x61] sm:$0xff]
    %v168 = vld [vmem:[%s0 + $0x69] sm:$0xff]
    %v169 = vld [vmem:[%s0 + $0x79] sm:$0xff]
    %v170 = vld [vmem:[%s0 + $0x81] sm:$0xff]
    %v171 = vld [vmem:[%s0 + $0x91] sm:$0xff]
    %v172 = vld [vmem:[%s0 + $0x99] sm:$0xff]
    %v173 = vld [vmem:[%s0 + $0xa9] sm:$0xff]
    %v174 = vld [vmem:[%s0 + $0xb1] sm:$0xff]
    %v175 = vld [vmem:[%s0 + $0xc1] sm:$0xff]
    %v176 = vld [vmem:[%s0 + $0xc9] sm:$0xff]
    %v177 = vld [vmem:[%s0 + $0xd9] sm:$0xff]
    %v178 = vld [vmem:[%s0 + $0xe1] sm:$0xff]
    %v179 = vld [vmem:[%s0 + $0xf1] sm:$0xff]
    %v180 = vld [vmem:[%s0 + $0xf9] sm:$0xff]
    %v181 = vld [vmem:[%s0 + $0x109] sm:$0xff]
    %v182 = vld [vmem:[%s0 + $0x111] sm:$0xff]
    %v183 = vld [vmem:[%s0 + $0x121] sm:$0xff]
    %v184 = vld [vmem:[%s0 + $0x129] sm:$0xff]
    %v185 = vld [vmem:[%s0 + $0x139] sm:$0xff]
    %v186 = vld [vmem:[%s0 + $0x141] sm:$0xff]
    %v187 = vld [vmem:[%s0 + $0x151] sm:$0xff]
    %v188 = vld [vmem:[%s0 + $0x159] sm:$0xff]
    %v189 = vld [vmem:[%s0 + $0x169] sm:$0xff]
    %v190 = vld [vmem:[%s0 + $0x171] sm:$0xff]
    %v191 = vld [vmem:[%s0 + $0x1b1] sm:$0xff]
    %v192 = vld [vmem:[%s0 + $0x1b9] sm:$0xff]
    %v193 = vld [vmem:[%s0 + $0x1c9] sm:$0xff]
    %v194 = vld [vmem:[%s0 + $0x1d1] sm:$0xff]
    %v195 = vld [vmem:[%s0 + $0x1e1] sm:$0xff]
    %v196 = vld [vmem:[%s0 + $0x1e9] sm:$0xff]
    %v197 = vld [vmem:[%s0 + $0x1f9] sm:$0xff]
    %v198 = vld [vmem:[%s0 + $0x201] sm:$0xff]
    %v199 = vld [vmem:[%s0 + $0x211] sm:$0xff]
    %v200 = vld [vmem:[%s0 + $0x219] sm:$0xff]
    %v201 = vld [vmem:[%s0 + $0x229] sm:$0xff]
    %v202 = vld [vmem:[%s0 + $0x231] sm:$0xff]
    %v203 = vld [vmem:[%s0 + $0x241] sm:$0xff]
    %v204 = vld [vmem:[%s0 + $0x249] sm:$0xff]
    %v205 = vld [vmem:[%s0 + $0x259] sm:$0xff]
    %v206 = vld [vmem:[%s0 + $0x261] sm:$0xff]
    %v207 = vld [vmem:[%s0 + $0x271] sm:$0xff]
    %v208 = vld [vmem:[%s0 + $0x279] sm:$0xff]
    %v209 = vld [vmem:[%s0 + $0x289] sm:$0xff]
    %v210 = vld [vmem:[%s0 + $0x291] sm:$0xff]
    %v211 = vld [vmem:[%s0 + $0x2a1] sm:$0xff]
    %v212 = vld [vmem:[%s0 + $0x2a9] sm:$0xff]
    %v213 = vld [vmem:[%s0 + $0x2b9] sm:$0xff]
    %v214 = vld [vmem:[%s0 + $0x2c1] sm:$0xff]
    %v215 = vld [vmem:[%s0 + $0x2d1] sm:$0xff]
    %v216 = vld [vmem:[%s0 + $0x2d9] sm:$0xff]
    %v217 = vld [vmem:[%s0 + $0x2e9] sm:$0xff]
    %v218 = vld [vmem:[%s0 + $0x2f1] sm:$0xff]
    %v219 = vld [vmem:[%s0 + $0x301] sm:$0xff]
    %v220 = vld [vmem:[%s0 + $0x309] sm:$0xff]
    %v221 = vld [vmem:[%s0 + $0x319] sm:$0xff]
    %v222 = vld [vmem:[%s0 + $0x321] sm:$0xff]
    %287 = vrot.lane.b32.xlu0 %v159, 32
    %v288 = vpop.permute.xlu0 %287
    %289 = vrot.lane.b32.xlu0 %v160, 32
    %v290 = vpop.permute.xlu0 %289
    %291 = vrot.lane.b32.xlu0 %v161, 32
    %v292 = vpop.permute.xlu0 %291
    %293 = vrot.lane.b32.xlu0 %v162, 32
    %v294 = vpop.permute.xlu0 %293
    %295 = vrot.lane.b32.xlu0 %v163, 32
    %v296 = vpop.permute.xlu0 %295
    %297 = vrot.lane.b32.xlu0 %v164, 32
    %v298 = vpop.permute.xlu0 %297
    %299 = vrot.lane.b32.xlu0 %v165, 32
    %v300 = vpop.permute.xlu0 %299
    %301 = vrot.lane.b32.xlu0 %v166, 32
    %v302 = vpop.permute.xlu0 %301
    %303 = vrot.lane.b32.xlu0 %v167, 32
    %v304 = vpop.permute.xlu0 %303
    %305 = vrot.lane.b32.xlu0 %v168, 32
    %v306 = vpop.permute.xlu0 %305
    %307 = vrot.lane.b32.xlu0 %v169, 32
    %v308 = vpop.permute.xlu0 %307
    %309 = vrot.lane.b32.xlu0 %v170, 32
    %v310 = vpop.permute.xlu0 %309
    %311 = vrot.lane.b32.xlu0 %v171, 32
    %v312 = vpop.permute.xlu0 %311
    %313 = vrot.lane.b32.xlu0 %v172, 32
    %v314 = vpop.permute.xlu0 %313
    %315 = vrot.lane.b32.xlu0 %v173, 32
    %v316 = vpop.permute.xlu0 %315
    %317 = vrot.lane.b32.xlu0 %v174, 32
    %v318 = vpop.permute.xlu0 %317
    %319 = vrot.lane.b32.xlu0 %v175, 32
    %v320 = vpop.permute.xlu0 %319
    %321 = vrot.lane.b32.xlu0 %v176, 32
    %v322 = vpop.permute.xlu0 %321
    %323 = vrot.lane.b32.xlu0 %v177, 32
    %v324 = vpop.permute.xlu0 %323
    %325 = vrot.lane.b32.xlu0 %v178, 32
    %v326 = vpop.permute.xlu0 %325
    %327 = vrot.lane.b32.xlu0 %v179, 32
    %v328 = vpop.permute.xlu0 %327
    %329 = vrot.lane.b32.xlu0 %v180, 32
    %v330 = vpop.permute.xlu0 %329
    %331 = vrot.lane.b32.xlu0 %v181, 32
    %v332 = vpop.permute.xlu0 %331
    %333 = vrot.lane.b32.xlu0 %v182, 32
    %v334 = vpop.permute.xlu0 %333
    %335 = vrot.lane.b32.xlu0 %v183, 32
    %v336 = vpop.permute.xlu0 %335
    %337 = vrot.lane.b32.xlu0 %v184, 32
    %v338 = vpop.permute.xlu0 %337
    %339 = vrot.lane.b32.xlu0 %v185, 32
    %v340 = vpop.permute.xlu0 %339
    %341 = vrot.lane.b32.xlu0 %v186, 32
    %v342 = vpop.permute.xlu0 %341
    %343 = vrot.lane.b32.xlu0 %v187, 32
    %v344 = vpop.permute.xlu0 %343
    %345 = vrot.lane.b32.xlu0 %v188, 32
    %v346 = vpop.permute.xlu0 %345
    %347 = vrot.lane.b32.xlu0 %v189, 32
    %v348 = vpop.permute.xlu0 %347
    %349 = vrot.lane.b32.xlu0 %v190, 32
    %v350 = vpop.permute.xlu0 %349
    %351 = vrot.lane.b32.xlu0 %v191, 32
    %v352 = vpop.permute.xlu0 %351
    %353 = vrot.lane.b32.xlu0 %v192, 32
    %v354 = vpop.permute.xlu0 %353
    %355 = vrot.lane.b32.xlu0 %v193, 32
    %v356 = vpop.permute.xlu0 %355
    %357 = vrot.lane.b32.xlu0 %v194, 32
    %v358 = vpop.permute.xlu0 %357
    %359 = vrot.lane.b32.xlu0 %v195, 32
    %v360 = vpop.permute.xlu0 %359
    %361 = vrot.lane.b32.xlu0 %v196, 32
    %v362 = vpop.permute.xlu0 %361
    %363 = vrot.lane.b32.xlu0 %v197, 32
    %v364 = vpop.permute.xlu0 %363
    %365 = vrot.lane.b32.xlu0 %v198, 32
    %v366 = vpop.permute.xlu0 %365
    %367 = vrot.lane.b32.xlu0 %v199, 32
    %v368 = vpop.permute.xlu0 %367
    %369 = vrot.lane.b32.xlu0 %v200, 32
    %v370 = vpop.permute.xlu0 %369
    %371 = vrot.lane.b32.xlu0 %v201, 32
    %v372 = vpop.permute.xlu0 %371
    %373 = vrot.lane.b32.xlu0 %v202, 32
    %v374 = vpop.permute.xlu0 %373
    %375 = vrot.lane.b32.xlu0 %v203, 32
    %v376 = vpop.permute.xlu0 %375
    %377 = vrot.lane.b32.xlu0 %v204, 32
    %v378 = vpop.permute.xlu0 %377
    %379 = vrot.lane.b32.xlu0 %v205, 32
    %v380 = vpop.permute.xlu0 %379
    %381 = vrot.lane.b32.xlu0 %v206, 32
    %v382 = vpop.permute.xlu0 %381
    %383 = vrot.lane.b32.xlu0 %v207, 32
    %v384 = vpop.permute.xlu0 %383
    %385 = vrot.lane.b32.xlu0 %v208, 32
    %v386 = vpop.permute.xlu0 %385
    %387 = vrot.lane.b32.xlu0 %v209, 32
    %v388 = vpop.permute.xlu0 %387
    %389 = vrot.lane.b32.xlu0 %v210, 32
    %v390 = vpop.permute.xlu0 %389
    %391 = vrot.lane.b32.xlu0 %v211, 32
    %v392 = vpop.permute.xlu0 %391
    %393 = vrot.lane.b32.xlu0 %v212, 32
    %v394 = vpop.permute.xlu0 %393
    %395 = vrot.lane.b32.xlu0 %v213, 32
    %v396 = vpop.permute.xlu0 %395
    %397 = vrot.lane.b32.xlu0 %v214, 32
    %v398 = vpop.permute.xlu0 %397
    %399 = vrot.lane.b32.xlu0 %v215, 32
    %v400 = vpop.permute.xlu0 %399
    %401 = vrot.lane.b32.xlu0 %v216, 32
    %v402 = vpop.permute.xlu0 %401
    %403 = vrot.lane.b32.xlu0 %v217, 32
    %v404 = vpop.permute.xlu0 %403
    %405 = vrot.lane.b32.xlu0 %v218, 32
    %v406 = vpop.permute.xlu0 %405
    %407 = vrot.lane.b32.xlu0 %v219, 32
    %v408 = vpop.permute.xlu0 %407
    %409 = vrot.lane.b32.xlu0 %v220, 32
    %v410 = vpop.permute.xlu0 %409
    %411 = vrot.lane.b32.xlu0 %v221, 32
    %v412 = vpop.permute.xlu0 %411
    %413 = vrot.lane.b32.xlu0 %v222, 32
    %v414 = vpop.permute.xlu0 %413
    %vm479 = vcmask 523520
    %480 = vst.msk [vmem:[#allocation2] sm:$0xff] %vm479, %v288
    %481 = vst.msk [vmem:[#allocation2 + $0x18] sm:$0xff] %vm479, %v290
    %482 = vst.msk [vmem:[#allocation2 + $0x30] sm:$0xff] %vm479, %v292
    %483 = vst.msk [vmem:[#allocation2 + $0x48] sm:$0xff] %vm479, %v294
    %484 = vst.msk [vmem:[#allocation2 + $0x60] sm:$0xff] %vm479, %v296
    %485 = vst.msk [vmem:[#allocation2 + $0x78] sm:$0xff] %vm479, %v298
    %486 = vst.msk [vmem:[#allocation2 + $0x90] sm:$0xff] %vm479, %v300
    %487 = vst.msk [vmem:[#allocation2 + $0xa8] sm:$0xff] %vm479, %v302
    %488 = vst.msk [vmem:[#allocation2 + $0xc0] sm:$0xff] %vm479, %v304
    %489 = vst.msk [vmem:[#allocation2 + $0xd8] sm:$0xff] %vm479, %v306
    %490 = vst.msk [vmem:[#allocation2 + $0xf0] sm:$0xff] %vm479, %v308
    %491 = vst.msk [vmem:[#allocation2 + $0x108] sm:$0xff] %vm479, %v310
    %492 = vst.msk [vmem:[#allocation2 + $0x120] sm:$0xff] %vm479, %v312
    %493 = vst.msk [vmem:[#allocation2 + $0x138] sm:$0xff] %vm479, %v314
    %494 = vst.msk [vmem:[#allocation2 + $0x150] sm:$0xff] %vm479, %v316
    %495 = vst.msk [vmem:[#allocation2 + $0x168] sm:$0xff] %vm479, %v318
    %496 = vst.msk [vmem:[#allocation2 + $0x180] sm:$0xff] %vm479, %v320
    %497 = vst.msk [vmem:[#allocation2 + $0x198] sm:$0xff] %vm479, %v322
    %498 = vst.msk [vmem:[#allocation2 + $0x1b0] sm:$0xff] %vm479, %v324
    %499 = vst.msk [vmem:[#allocation2 + $0x1c8] sm:$0xff] %vm479, %v326
    %500 = vst.msk [vmem:[#allocation2 + $0x1e0] sm:$0xff] %vm479, %v328
    %501 = vst.msk [vmem:[#allocation2 + $0x1f8] sm:$0xff] %vm479, %v330
    %502 = vst.msk [vmem:[#allocation2 + $0x210] sm:$0xff] %vm479, %v332
    %503 = vst.msk [vmem:[#allocation2 + $0x228] sm:$0xff] %vm479, %v334
    %504 = vst.msk [vmem:[#allocation2 + $0x240] sm:$0xff] %vm479, %v336
    %505 = vst.msk [vmem:[#allocation2 + $0x258] sm:$0xff] %vm479, %v338
    %506 = vst.msk [vmem:[#allocation2 + $0x270] sm:$0xff] %vm479, %v340
    %507 = vst.msk [vmem:[#allocation2 + $0x288] sm:$0xff] %vm479, %v342
    %508 = vst.msk [vmem:[#allocation2 + $0x2a0] sm:$0xff] %vm479, %v344
    %509 = vst.msk [vmem:[#allocation2 + $0x2b8] sm:$0xff] %vm479, %v346
    %510 = vst.msk [vmem:[#allocation2 + $0x2d0] sm:$0xff] %vm479, %v348
    %511 = vst.msk [vmem:[#allocation2 + $0x2e8] sm:$0xff] %vm479, %v350
    %512 = vst.msk [vmem:[#allocation2 + $0x300] sm:$0xff] %vm479, %v352
    %513 = vst.msk [vmem:[#allocation2 + $0x318] sm:$0xff] %vm479, %v354
    %514 = vst.msk [vmem:[#allocation2 + $0x330] sm:$0xff] %vm479, %v356
    %515 = vst.msk [vmem:[#allocation2 + $0x348] sm:$0xff] %vm479, %v358
    %516 = vst.msk [vmem:[#allocation2 + $0x360] sm:$0xff] %vm479, %v360
    %517 = vst.msk [vmem:[#allocation2 + $0x378] sm:$0xff] %vm479, %v362
    %518 = vst.msk [vmem:[#allocation2 + $0x390] sm:$0xff] %vm479, %v364
    %519 = vst.msk [vmem:[#allocation2 + $0x3a8] sm:$0xff] %vm479, %v366
    %520 = vst.msk [vmem:[#allocation2 + $0x3c0] sm:$0xff] %vm479, %v368
    %521 = vst.msk [vmem:[#allocation2 + $0x3d8] sm:$0xff] %vm479, %v370
    %522 = vst.msk [vmem:[#allocation2 + $0x3f0] sm:$0xff] %vm479, %v372
    %523 = vst.msk [vmem:[#allocation2 + $0x408] sm:$0xff] %vm479, %v374
    %524 = vst.msk [vmem:[#allocation2 + $0x420] sm:$0xff] %vm479, %v376
    %525 = vst.msk [vmem:[#allocation2 + $0x438] sm:$0xff] %vm479, %v378
    %526 = vst.msk [vmem:[#allocation2 + $0x450] sm:$0xff] %vm479, %v380
    %527 = vst.msk [vmem:[#allocation2 + $0x468] sm:$0xff] %vm479, %v382
    %528 = vst.msk [vmem:[#allocation2 + $0x480] sm:$0xff] %vm479, %v384
    %529 = vst.msk [vmem:[#allocation2 + $0x498] sm:$0xff] %vm479, %v386
    %530 = vst.msk [vmem:[#allocation2 + $0x4b0] sm:$0xff] %vm479, %v388
    %531 = vst.msk [vmem:[#allocation2 + $0x4c8] sm:$0xff] %vm479, %v390
    %532 = vst.msk [vmem:[#allocation2 + $0x4e0] sm:$0xff] %vm479, %v392
    %533 = vst.msk [vmem:[#allocation2 + $0x4f8] sm:$0xff] %vm479, %v394
    %534 = vst.msk [vmem:[#allocation2 + $0x510] sm:$0xff] %vm479, %v396
    %535 = vst.msk [vmem:[#allocation2 + $0x528] sm:$0xff] %vm479, %v398
    %536 = vst.msk [vmem:[#allocation2 + $0x540] sm:$0xff] %vm479, %v400
    %537 = vst.msk [vmem:[#allocation2 + $0x558] sm:$0xff] %vm479, %v402
    %538 = vst.msk [vmem:[#allocation2 + $0x570] sm:$0xff] %vm479, %v404
    %539 = vst.msk [vmem:[#allocation2 + $0x588] sm:$0xff] %vm479, %v406
    %540 = vst.msk [vmem:[#allocation2 + $0x5a0] sm:$0xff] %vm479, %v408
    %541 = vst.msk [vmem:[#allocation2 + $0x5b8] sm:$0xff] %vm479, %v410
    %542 = vst.msk [vmem:[#allocation2 + $0x5d0] sm:$0xff] %vm479, %v412
    %543 = vst.msk [vmem:[#allocation2 + $0x5e8] sm:$0xff] %vm479, %v414
    %v544 = vld [vmem:[%s0 + $0x2] sm:$0xff]
    %v545 = vld [vmem:[%s0 + $0xa] sm:$0xff]
    %v546 = vld [vmem:[%s0 + $0x1a] sm:$0xff]
    %v547 = vld [vmem:[%s0 + $0x22] sm:$0xff]
    %v548 = vld [vmem:[%s0 + $0x32] sm:$0xff]
    %v549 = vld [vmem:[%s0 + $0x3a] sm:$0xff]
    %v550 = vld [vmem:[%s0 + $0x4a] sm:$0xff]
    %v551 = vld [vmem:[%s0 + $0x52] sm:$0xff]
    %v552 = vld [vmem:[%s0 + $0x62] sm:$0xff]
    %v553 = vld [vmem:[%s0 + $0x6a] sm:$0xff]
    %v554 = vld [vmem:[%s0 + $0x7a] sm:$0xff]
    %v555 = vld [vmem:[%s0 + $0x82] sm:$0xff]
    %v556 = vld [vmem:[%s0 + $0x92] sm:$0xff]
    %v557 = vld [vmem:[%s0 + $0x9a] sm:$0xff]
    %v558 = vld [vmem:[%s0 + $0xaa] sm:$0xff]
    %v559 = vld [vmem:[%s0 + $0xb2] sm:$0xff]
    %v560 = vld [vmem:[%s0 + $0xc2] sm:$0xff]
    %v561 = vld [vmem:[%s0 + $0xca] sm:$0xff]
    %v562 = vld [vmem:[%s0 + $0xda] sm:$0xff]
    %v563 = vld [vmem:[%s0 + $0xe2] sm:$0xff]
    %v564 = vld [vmem:[%s0 + $0xf2] sm:$0xff]
    %v565 = vld [vmem:[%s0 + $0xfa] sm:$0xff]
    %v566 = vld [vmem:[%s0 + $0x10a] sm:$0xff]
    %v567 = vld [vmem:[%s0 + $0x112] sm:$0xff]
    %v568 = vld [vmem:[%s0 + $0x122] sm:$0xff]
    %v569 = vld [vmem:[%s0 + $0x12a] sm:$0xff]
    %v570 = vld [vmem:[%s0 + $0x13a] sm:$0xff]
    %v571 = vld [vmem:[%s0 + $0x142] sm:$0xff]
    %v572 = vld [vmem:[%s0 + $0x152] sm:$0xff]
    %v573 = vld [vmem:[%s0 + $0x15a] sm:$0xff]
    %v574 = vld [vmem:[%s0 + $0x16a] sm:$0xff]
    %v575 = vld [vmem:[%s0 + $0x172] sm:$0xff]
    %v576 = vld [vmem:[%s0 + $0x1b2] sm:$0xff]
    %v577 = vld [vmem:[%s0 + $0x1ba] sm:$0xff]
    %v578 = vld [vmem:[%s0 + $0x1ca] sm:$0xff]
    %v579 = vld [vmem:[%s0 + $0x1d2] sm:$0xff]
    %v580 = vld [vmem:[%s0 + $0x1e2] sm:$0xff]
    %v581 = vld [vmem:[%s0 + $0x1ea] sm:$0xff]
    %v582 = vld [vmem:[%s0 + $0x1fa] sm:$0xff]
    %v583 = vld [vmem:[%s0 + $0x202] sm:$0xff]
    %v584 = vld [vmem:[%s0 + $0x212] sm:$0xff]
    %v585 = vld [vmem:[%s0 + $0x21a] sm:$0xff]
    %v586 = vld [vmem:[%s0 + $0x22a] sm:$0xff]
    %v587 = vld [vmem:[%s0 + $0x232] sm:$0xff]
    %v588 = vld [vmem:[%s0 + $0x242] sm:$0xff]
    %v589 = vld [vmem:[%s0 + $0x24a] sm:$0xff]
    %v590 = vld [vmem:[%s0 + $0x25a] sm:$0xff]
    %v591 = vld [vmem:[%s0 + $0x262] sm:$0xff]
    %v592 = vld [vmem:[%s0 + $0x272] sm:$0xff]
    %v593 = vld [vmem:[%s0 + $0x27a] sm:$0xff]
    %v594 = vld [vmem:[%s0 + $0x28a] sm:$0xff]
    %v595 = vld [vmem:[%s0 + $0x292] sm:$0xff]
    %v596 = vld [vmem:[%s0 + $0x2a2] sm:$0xff]
    %v597 = vld [vmem:[%s0 + $0x2aa] sm:$0xff]
    %v598 = vld [vmem:[%s0 + $0x2ba] sm:$0xff]
    %v599 = vld [vmem:[%s0 + $0x2c2] sm:$0xff]
    %v600 = vld [vmem:[%s0 + $0x2d2] sm:$0xff]
    %v601 = vld [vmem:[%s0 + $0x2da] sm:$0xff]
    %v602 = vld [vmem:[%s0 + $0x2ea] sm:$0xff]
    %v603 = vld [vmem:[%s0 + $0x2f2] sm:$0xff]
    %v604 = vld [vmem:[%s0 + $0x302] sm:$0xff]
    %v605 = vld [vmem:[%s0 + $0x30a] sm:$0xff]
    %v606 = vld [vmem:[%s0 + $0x31a] sm:$0xff]
    %v607 = vld [vmem:[%s0 + $0x322] sm:$0xff]
    %672 = vrot.lane.b32.xlu0 %v544, 64
    %v673 = vpop.permute.xlu0 %672
    %674 = vrot.lane.b32.xlu0 %v545, 64
    %v675 = vpop.permute.xlu0 %674
    %676 = vrot.lane.b32.xlu0 %v546, 64
    %v677 = vpop.permute.xlu0 %676
    %678 = vrot.lane.b32.xlu0 %v547, 64
    %v679 = vpop.permute.xlu0 %678
    %680 = vrot.lane.b32.xlu0 %v548, 64
    %v681 = vpop.permute.xlu0 %680
    %682 = vrot.lane.b32.xlu0 %v549, 64
    %v683 = vpop.permute.xlu0 %682
    %684 = vrot.lane.b32.xlu0 %v550, 64
    %v685 = vpop.permute.xlu0 %684
    %686 = vrot.lane.b32.xlu0 %v551, 64
    %v687 = vpop.permute.xlu0 %686
    %688 = vrot.lane.b32.xlu0 %v552, 64
    %v689 = vpop.permute.xlu0 %688
    %690 = vrot.lane.b32.xlu0 %v553, 64
    %v691 = vpop.permute.xlu0 %690
    %692 = vrot.lane.b32.xlu0 %v554, 64
    %v693 = vpop.permute.xlu0 %692
    %694 = vrot.lane.b32.xlu0 %v555, 64
    %v695 = vpop.permute.xlu0 %694
    %696 = vrot.lane.b32.xlu0 %v556, 64
    %v697 = vpop.permute.xlu0 %696
    %698 = vrot.lane.b32.xlu0 %v557, 64
    %v699 = vpop.permute.xlu0 %698
    %700 = vrot.lane.b32.xlu0 %v558, 64
    %v701 = vpop.permute.xlu0 %700
    %702 = vrot.lane.b32.xlu0 %v559, 64
    %v703 = vpop.permute.xlu0 %702
    %704 = vrot.lane.b32.xlu0 %v560, 64
    %v705 = vpop.permute.xlu0 %704
    %706 = vrot.lane.b32.xlu0 %v561, 64
    %v707 = vpop.permute.xlu0 %706
    %708 = vrot.lane.b32.xlu0 %v562, 64
    %v709 = vpop.permute.xlu0 %708
    %710 = vrot.lane.b32.xlu0 %v563, 64
    %v711 = vpop.permute.xlu0 %710
    %712 = vrot.lane.b32.xlu0 %v564, 64
    %v713 = vpop.permute.xlu0 %712
    %714 = vrot.lane.b32.xlu0 %v565, 64
    %v715 = vpop.permute.xlu0 %714
    %716 = vrot.lane.b32.xlu0 %v566, 64
    %v717 = vpop.permute.xlu0 %716
    %718 = vrot.lane.b32.xlu0 %v567, 64
    %v719 = vpop.permute.xlu0 %718
    %720 = vrot.lane.b32.xlu0 %v568, 64
    %v721 = vpop.permute.xlu0 %720
    %722 = vrot.lane.b32.xlu0 %v569, 64
    %v723 = vpop.permute.xlu0 %722
    %724 = vrot.lane.b32.xlu0 %v570, 64
    %v725 = vpop.permute.xlu0 %724
    %726 = vrot.lane.b32.xlu0 %v571, 64
    %v727 = vpop.permute.xlu0 %726
    %728 = vrot.lane.b32.xlu0 %v572, 64
    %v729 = vpop.permute.xlu0 %728
    %730 = vrot.lane.b32.xlu0 %v573, 64
    %v731 = vpop.permute.xlu0 %730
    %732 = vrot.lane.b32.xlu0 %v574, 64
    %v733 = vpop.permute.xlu0 %732
    %734 = vrot.lane.b32.xlu0 %v575, 64
    %v735 = vpop.permute.xlu0 %734
    %736 = vrot.lane.b32.xlu0 %v576, 64
    %v737 = vpop.permute.xlu0 %736
    %738 = vrot.lane.b32.xlu0 %v577, 64
    %v739 = vpop.permute.xlu0 %738
    %740 = vrot.lane.b32.xlu0 %v578, 64
    %v741 = vpop.permute.xlu0 %740
    %742 = vrot.lane.b32.xlu0 %v579, 64
    %v743 = vpop.permute.xlu0 %742
    %744 = vrot.lane.b32.xlu0 %v580, 64
    %v745 = vpop.permute.xlu0 %744
    %746 = vrot.lane.b32.xlu0 %v581, 64
    %v747 = vpop.permute.xlu0 %746
    %748 = vrot.lane.b32.xlu0 %v582, 64
    %v749 = vpop.permute.xlu0 %748
    %750 = vrot.lane.b32.xlu0 %v583, 64
    %v751 = vpop.permute.xlu0 %750
    %752 = vrot.lane.b32.xlu0 %v584, 64
    %v753 = vpop.permute.xlu0 %752
    %754 = vrot.lane.b32.xlu0 %v585, 64
    %v755 = vpop.permute.xlu0 %754
    %756 = vrot.lane.b32.xlu0 %v586, 64
    %v757 = vpop.permute.xlu0 %756
    %758 = vrot.lane.b32.xlu0 %v587, 64
    %v759 = vpop.permute.xlu0 %758
    %760 = vrot.lane.b32.xlu0 %v588, 64
    %v761 = vpop.permute.xlu0 %760
    %762 = vrot.lane.b32.xlu0 %v589, 64
    %v763 = vpop.permute.xlu0 %762
    %764 = vrot.lane.b32.xlu0 %v590, 64
    %v765 = vpop.permute.xlu0 %764
    %766 = vrot.lane.b32.xlu0 %v591, 64
    %v767 = vpop.permute.xlu0 %766
    %768 = vrot.lane.b32.xlu0 %v592, 64
    %v769 = vpop.permute.xlu0 %768
    %770 = vrot.lane.b32.xlu0 %v593, 64
    %v771 = vpop.permute.xlu0 %770
    %772 = vrot.lane.b32.xlu0 %v594, 64
    %v773 = vpop.permute.xlu0 %772
    %774 = vrot.lane.b32.xlu0 %v595, 64
    %v775 = vpop.permute.xlu0 %774
    %776 = vrot.lane.b32.xlu0 %v596, 64
    %v777 = vpop.permute.xlu0 %776
    %778 = vrot.lane.b32.xlu0 %v597, 64
    %v779 = vpop.permute.xlu0 %778
    %780 = vrot.lane.b32.xlu0 %v598, 64
    %v781 = vpop.permute.xlu0 %780
    %782 = vrot.lane.b32.xlu0 %v599, 64
    %v783 = vpop.permute.xlu0 %782
    %784 = vrot.lane.b32.xlu0 %v600, 64
    %v785 = vpop.permute.xlu0 %784
    %786 = vrot.lane.b32.xlu0 %v601, 64
    %v787 = vpop.permute.xlu0 %786
    %788 = vrot.lane.b32.xlu0 %v602, 64
    %v789 = vpop.permute.xlu0 %788
    %790 = vrot.lane.b32.xlu0 %v603, 64
    %v791 = vpop.permute.xlu0 %790
    %792 = vrot.lane.b32.xlu0 %v604, 64
    %v793 = vpop.permute.xlu0 %792
    %794 = vrot.lane.b32.xlu0 %v605, 64
    %v795 = vpop.permute.xlu0 %794
    %796 = vrot.lane.b32.xlu0 %v606, 64
    %v797 = vpop.permute.xlu0 %796
    %798 = vrot.lane.b32.xlu0 %v607, 64
    %v799 = vpop.permute.xlu0 %798
    %vm864 = vcmask 785920
    %865 = vst.msk [vmem:[#allocation2] sm:$0xff] %vm864, %v673
    %866 = vst.msk [vmem:[#allocation2 + $0x18] sm:$0xff] %vm864, %v675
    %867 = vst.msk [vmem:[#allocation2 + $0x30] sm:$0xff] %vm864, %v677
    %868 = vst.msk [vmem:[#allocation2 + $0x48] sm:$0xff] %vm864, %v679
    %869 = vst.msk [vmem:[#allocation2 + $0x60] sm:$0xff] %vm864, %v681
    %870 = vst.msk [vmem:[#allocation2 + $0x78] sm:$0xff] %vm864, %v683
    %871 = vst.msk [vmem:[#allocation2 + $0x90] sm:$0xff] %vm864, %v685
    %872 = vst.msk [vmem:[#allocation2 + $0xa8] sm:$0xff] %vm864, %v687
    %873 = vst.msk [vmem:[#allocation2 + $0xc0] sm:$0xff] %vm864, %v689
    %874 = vst.msk [vmem:[#allocation2 + $0xd8] sm:$0xff] %vm864, %v691
    %875 = vst.msk [vmem:[#allocation2 + $0xf0] sm:$0xff] %vm864, %v693
    %876 = vst.msk [vmem:[#allocation2 + $0x108] sm:$0xff] %vm864, %v695
    %877 = vst.msk [vmem:[#allocation2 + $0x120] sm:$0xff] %vm864, %v697
    %878 = vst.msk [vmem:[#allocation2 + $0x138] sm:$0xff] %vm864, %v699
    %879 = vst.msk [vmem:[#allocation2 + $0x150] sm:$0xff] %vm864, %v701
    %880 = vst.msk [vmem:[#allocation2 + $0x168] sm:$0xff] %vm864, %v703
    %881 = vst.msk [vmem:[#allocation2 + $0x180] sm:$0xff] %vm864, %v705
    %882 = vst.msk [vmem:[#allocation2 + $0x198] sm:$0xff] %vm864, %v707
    %883 = vst.msk [vmem:[#allocation2 + $0x1b0] sm:$0xff] %vm864, %v709
    %884 = vst.msk [vmem:[#allocation2 + $0x1c8] sm:$0xff] %vm864, %v711
    %885 = vst.msk [vmem:[#allocation2 + $0x1e0] sm:$0xff] %vm864, %v713
    %886 = vst.msk [vmem:[#allocation2 + $0x1f8] sm:$0xff] %vm864, %v715
    %887 = vst.msk [vmem:[#allocation2 + $0x210] sm:$0xff] %vm864, %v717
    %888 = vst.msk [vmem:[#allocation2 + $0x228] sm:$0xff] %vm864, %v719
    %889 = vst.msk [vmem:[#allocation2 + $0x240] sm:$0xff] %vm864, %v721
    %890 = vst.msk [vmem:[#allocation2 + $0x258] sm:$0xff] %vm864, %v723
    %891 = vst.msk [vmem:[#allocation2 + $0x270] sm:$0xff] %vm864, %v725
    %892 = vst.msk [vmem:[#allocation2 + $0x288] sm:$0xff] %vm864, %v727
    %893 = vst.msk [vmem:[#allocation2 + $0x2a0] sm:$0xff] %vm864, %v729
    %894 = vst.msk [vmem:[#allocation2 + $0x2b8] sm:$0xff] %vm864, %v731
    %895 = vst.msk [vmem:[#allocation2 + $0x2d0] sm:$0xff] %vm864, %v733
    %896 = vst.msk [vmem:[#allocation2 + $0x2e8] sm:$0xff] %vm864, %v735
    %897 = vst.msk [vmem:[#allocation2 + $0x300] sm:$0xff] %vm864, %v737
    %898 = vst.msk [vmem:[#allocation2 + $0x318] sm:$0xff] %vm864, %v739
    %899 = vst.msk [vmem:[#allocation2 + $0x330] sm:$0xff] %vm864, %v741
    %900 = vst.msk [vmem:[#allocation2 + $0x348] sm:$0xff] %vm864, %v743
    %901 = vst.msk [vmem:[#allocation2 + $0x360] sm:$0xff] %vm864, %v745
    %902 = vst.msk [vmem:[#allocation2 + $0x378] sm:$0xff] %vm864, %v747
    %903 = vst.msk [vmem:[#allocation2 + $0x390] sm:$0xff] %vm864, %v749
    %904 = vst.msk [vmem:[#allocation2 + $0x3a8] sm:$0xff] %vm864, %v751
    %905 = vst.msk [vmem:[#allocation2 + $0x3c0] sm:$0xff] %vm864, %v753
    %906 = vst.msk [vmem:[#allocation2 + $0x3d8] sm:$0xff] %vm864, %v755
    %907 = vst.msk [vmem:[#allocation2 + $0x3f0] sm:$0xff] %vm864, %v757
    %908 = vst.msk [vmem:[#allocation2 + $0x408] sm:$0xff] %vm864, %v759
    %909 = vst.msk [vmem:[#allocation2 + $0x420] sm:$0xff] %vm864, %v761
    %910 = vst.msk [vmem:[#allocation2 + $0x438] sm:$0xff] %vm864, %v763
    %911 = vst.msk [vmem:[#allocation2 + $0x450] sm:$0xff] %vm864, %v765
    %912 = vst.msk [vmem:[#allocation2 + $0x468] sm:$0xff] %vm864, %v767
    %913 = vst.msk [vmem:[#allocation2 + $0x480] sm:$0xff] %vm864, %v769
    %914 = vst.msk [vmem:[#allocation2 + $0x498] sm:$0xff] %vm864, %v771
    %915 = vst.msk [vmem:[#allocation2 + $0x4b0] sm:$0xff] %vm864, %v773
    %916 = vst.msk [vmem:[#allocation2 + $0x4c8] sm:$0xff] %vm864, %v775
    %917 = vst.msk [vmem:[#allocation2 + $0x4e0] sm:$0xff] %vm864, %v777
    %918 = vst.msk [vmem:[#allocation2 + $0x4f8] sm:$0xff] %vm864, %v779
    %919 = vst.msk [vmem:[#allocation2 + $0x510] sm:$0xff] %vm864, %v781
    %920 = vst.msk [vmem:[#allocation2 + $0x528] sm:$0xff] %vm864, %v783
    %921 = vst.msk [vmem:[#allocation2 + $0x540] sm:$0xff] %vm864, %v785
    %922 = vst.msk [vmem:[#allocation2 + $0x558] sm:$0xff] %vm864, %v787
    %923 = vst.msk [vmem:[#allocation2 + $0x570] sm:$0xff] %vm864, %v789
    %924 = vst.msk [vmem:[#allocation2 + $0x588] sm:$0xff] %vm864, %v791
    %925 = vst.msk [vmem:[#allocation2 + $0x5a0] sm:$0xff] %vm864, %v793
    %926 = vst.msk [vmem:[#allocation2 + $0x5b8] sm:$0xff] %vm864, %v795
    %927 = vst.msk [vmem:[#allocation2 + $0x5d0] sm:$0xff] %vm864, %v797
    %928 = vst.msk [vmem:[#allocation2 + $0x5e8] sm:$0xff] %vm864, %v799
    %s929 = scalar_lea.vmem %s0, 24
    %v930 = vld [vmem:[%s929] sm:$0xff]
    %v931 = vld [vmem:[%s929 + $0x8] sm:$0xff]
    %v932 = vld [vmem:[%s929 + $0x18] sm:$0xff]
    %v933 = vld [vmem:[%s929 + $0x20] sm:$0xff]
    %v934 = vld [vmem:[%s929 + $0x30] sm:$0xff]
    %v935 = vld [vmem:[%s929 + $0x38] sm:$0xff]
    %v936 = vld [vmem:[%s929 + $0x48] sm:$0xff]
    %v937 = vld [vmem:[%s929 + $0x50] sm:$0xff]
    %v938 = vld [vmem:[%s929 + $0x60] sm:$0xff]
    %v939 = vld [vmem:[%s929 + $0x68] sm:$0xff]
    %v940 = vld [vmem:[%s929 + $0x78] sm:$0xff]
    %v941 = vld [vmem:[%s929 + $0x80] sm:$0xff]
    %v942 = vld [vmem:[%s929 + $0x90] sm:$0xff]
    %v943 = vld [vmem:[%s929 + $0x98] sm:$0xff]
    %v944 = vld [vmem:[%s929 + $0xa8] sm:$0xff]
    %v945 = vld [vmem:[%s929 + $0xb0] sm:$0xff]
    %v946 = vld [vmem:[%s929 + $0xc0] sm:$0xff]
    %v947 = vld [vmem:[%s929 + $0xc8] sm:$0xff]
    %v948 = vld [vmem:[%s929 + $0xd8] sm:$0xff]
    %v949 = vld [vmem:[%s929 + $0xe0] sm:$0xff]
    %v950 = vld [vmem:[%s929 + $0xf0] sm:$0xff]
    %v951 = vld [vmem:[%s929 + $0xf8] sm:$0xff]
    %v952 = vld [vmem:[%s929 + $0x108] sm:$0xff]
    %v953 = vld [vmem:[%s929 + $0x110] sm:$0xff]
    %v954 = vld [vmem:[%s929 + $0x120] sm:$0xff]
    %v955 = vld [vmem:[%s929 + $0x128] sm:$0xff]
    %v956 = vld [vmem:[%s929 + $0x138] sm:$0xff]
    %v957 = vld [vmem:[%s929 + $0x140] sm:$0xff]
    %v958 = vld [vmem:[%s929 + $0x150] sm:$0xff]
    %v959 = vld [vmem:[%s929 + $0x158] sm:$0xff]
    %v960 = vld [vmem:[%s929 + $0x168] sm:$0xff]
    %v961 = vld [vmem:[%s929 + $0x170] sm:$0xff]
    %v962 = vld [vmem:[%s929 + $0x1b0] sm:$0xff]
    %v963 = vld [vmem:[%s929 + $0x1b8] sm:$0xff]
    %v964 = vld [vmem:[%s929 + $0x1c8] sm:$0xff]
    %v965 = vld [vmem:[%s929 + $0x1d0] sm:$0xff]
    %v966 = vld [vmem:[%s929 + $0x1e0] sm:$0xff]
    %v967 = vld [vmem:[%s929 + $0x1e8] sm:$0xff]
    %v968 = vld [vmem:[%s929 + $0x1f8] sm:$0xff]
    %v969 = vld [vmem:[%s929 + $0x200] sm:$0xff]
    %v970 = vld [vmem:[%s929 + $0x210] sm:$0xff]
    %v971 = vld [vmem:[%s929 + $0x218] sm:$0xff]
    %v972 = vld [vmem:[%s929 + $0x228] sm:$0xff]
    %v973 = vld [vmem:[%s929 + $0x230] sm:$0xff]
    %v974 = vld [vmem:[%s929 + $0x240] sm:$0xff]
    %v975 = vld [vmem:[%s929 + $0x248] sm:$0xff]
    %v976 = vld [vmem:[%s929 + $0x258] sm:$0xff]
    %v977 = vld [vmem:[%s929 + $0x260] sm:$0xff]
    %v978 = vld [vmem:[%s929 + $0x270] sm:$0xff]
    %v979 = vld [vmem:[%s929 + $0x278] sm:$0xff]
    %v980 = vld [vmem:[%s929 + $0x288] sm:$0xff]
    %v981 = vld [vmem:[%s929 + $0x290] sm:$0xff]
    %v982 = vld [vmem:[%s929 + $0x2a0] sm:$0xff]
    %v983 = vld [vmem:[%s929 + $0x2a8] sm:$0xff]
    %v984 = vld [vmem:[%s929 + $0x2b8] sm:$0xff]
    %v985 = vld [vmem:[%s929 + $0x2c0] sm:$0xff]
    %v986 = vld [vmem:[%s929 + $0x2d0] sm:$0xff]
    %v987 = vld [vmem:[%s929 + $0x2d8] sm:$0xff]
    %v988 = vld [vmem:[%s929 + $0x2e8] sm:$0xff]
    %v989 = vld [vmem:[%s929 + $0x2f0] sm:$0xff]
    %v990 = vld [vmem:[%s929 + $0x300] sm:$0xff]
    %v991 = vld [vmem:[%s929 + $0x308] sm:$0xff]
    %v992 = vld [vmem:[%s929 + $0x318] sm:$0xff]
    %v993 = vld [vmem:[%s929 + $0x320] sm:$0xff]
    %1058 = vrot.lane.b32.xlu0 %v930, 96
    %v1059 = vpop.permute.xlu0 %1058
    %1060 = vrot.lane.b32.xlu0 %v931, 96
    %v1061 = vpop.permute.xlu0 %1060
    %1062 = vrot.lane.b32.xlu0 %v932, 96
    %v1063 = vpop.permute.xlu0 %1062
    %1064 = vrot.lane.b32.xlu0 %v933, 96
    %v1065 = vpop.permute.xlu0 %1064
    %1066 = vrot.lane.b32.xlu0 %v934, 96
    %v1067 = vpop.permute.xlu0 %1066
    %1068 = vrot.lane.b32.xlu0 %v935, 96
    %v1069 = vpop.permute.xlu0 %1068
    %1070 = vrot.lane.b32.xlu0 %v936, 96
    %v1071 = vpop.permute.xlu0 %1070
    %1072 = vrot.lane.b32.xlu0 %v937, 96
    %v1073 = vpop.permute.xlu0 %1072
    %1074 = vrot.lane.b32.xlu0 %v938, 96
    %v1075 = vpop.permute.xlu0 %1074
    %1076 = vrot.lane.b32.xlu0 %v939, 96
    %v1077 = vpop.permute.xlu0 %1076
    %1078 = vrot.lane.b32.xlu0 %v940, 96
    %v1079 = vpop.permute.xlu0 %1078
    %1080 = vrot.lane.b32.xlu0 %v941, 96
    %v1081 = vpop.permute.xlu0 %1080
    %1082 = vrot.lane.b32.xlu0 %v942, 96
    %v1083 = vpop.permute.xlu0 %1082
    %1084 = vrot.lane.b32.xlu0 %v943, 96
    %v1085 = vpop.permute.xlu0 %1084
    %1086 = vrot.lane.b32.xlu0 %v944, 96
    %v1087 = vpop.permute.xlu0 %1086
    %1088 = vrot.lane.b32.xlu0 %v945, 96
    %v1089 = vpop.permute.xlu0 %1088
    %1090 = vrot.lane.b32.xlu0 %v946, 96
    %v1091 = vpop.permute.xlu0 %1090
    %1092 = vrot.lane.b32.xlu0 %v947, 96
    %v1093 = vpop.permute.xlu0 %1092
    %1094 = vrot.lane.b32.xlu0 %v948, 96
    %v1095 = vpop.permute.xlu0 %1094
    %1096 = vrot.lane.b32.xlu0 %v949, 96
    %v1097 = vpop.permute.xlu0 %1096
    %1098 = vrot.lane.b32.xlu0 %v950, 96
    %v1099 = vpop.permute.xlu0 %1098
    %1100 = vrot.lane.b32.xlu0 %v951, 96
    %v1101 = vpop.permute.xlu0 %1100
    %1102 = vrot.lane.b32.xlu0 %v952, 96
    %v1103 = vpop.permute.xlu0 %1102
    %1104 = vrot.lane.b32.xlu0 %v953, 96
    %v1105 = vpop.permute.xlu0 %1104
    %1106 = vrot.lane.b32.xlu0 %v954, 96
    %v1107 = vpop.permute.xlu0 %1106
    %1108 = vrot.lane.b32.xlu0 %v955, 96
    %v1109 = vpop.permute.xlu0 %1108
    %1110 = vrot.lane.b32.xlu0 %v956, 96
    %v1111 = vpop.permute.xlu0 %1110
    %1112 = vrot.lane.b32.xlu0 %v957, 96
    %v1113 = vpop.permute.xlu0 %1112
    %1114 = vrot.lane.b32.xlu0 %v958, 96
    %v1115 = vpop.permute.xlu0 %1114
    %1116 = vrot.lane.b32.xlu0 %v959, 96
    %v1117 = vpop.permute.xlu0 %1116
    %1118 = vrot.lane.b32.xlu0 %v960, 96
    %v1119 = vpop.permute.xlu0 %1118
    %1120 = vrot.lane.b32.xlu0 %v961, 96
    %v1121 = vpop.permute.xlu0 %1120
    %1122 = vrot.lane.b32.xlu0 %v962, 96
    %v1123 = vpop.permute.xlu0 %1122
    %1124 = vrot.lane.b32.xlu0 %v963, 96
    %v1125 = vpop.permute.xlu0 %1124
    %1126 = vrot.lane.b32.xlu0 %v964, 96
    %v1127 = vpop.permute.xlu0 %1126
    %1128 = vrot.lane.b32.xlu0 %v965, 96
    %v1129 = vpop.permute.xlu0 %1128
    %1130 = vrot.lane.b32.xlu0 %v966, 96
    %v1131 = vpop.permute.xlu0 %1130
    %1132 = vrot.lane.b32.xlu0 %v967, 96
    %v1133 = vpop.permute.xlu0 %1132
    %1134 = vrot.lane.b32.xlu0 %v968, 96
    %v1135 = vpop.permute.xlu0 %1134
    %1136 = vrot.lane.b32.xlu0 %v969, 96
    %v1137 = vpop.permute.xlu0 %1136
    %1138 = vrot.lane.b32.xlu0 %v970, 96
    %v1139 = vpop.permute.xlu0 %1138
    %1140 = vrot.lane.b32.xlu0 %v971, 96
    %v1141 = vpop.permute.xlu0 %1140
    %1142 = vrot.lane.b32.xlu0 %v972, 96
    %v1143 = vpop.permute.xlu0 %1142
    %1144 = vrot.lane.b32.xlu0 %v973, 96
    %v1145 = vpop.permute.xlu0 %1144
    %1146 = vrot.lane.b32.xlu0 %v974, 96
    %v1147 = vpop.permute.xlu0 %1146
    %1148 = vrot.lane.b32.xlu0 %v975, 96
    %v1149 = vpop.permute.xlu0 %1148
    %1150 = vrot.lane.b32.xlu0 %v976, 96
    %v1151 = vpop.permute.xlu0 %1150
    %1152 = vrot.lane.b32.xlu0 %v977, 96
    %v1153 = vpop.permute.xlu0 %1152
    %1154 = vrot.lane.b32.xlu0 %v978, 96
    %v1155 = vpop.permute.xlu0 %1154
    %1156 = vrot.lane.b32.xlu0 %v979, 96
    %v1157 = vpop.permute.xlu0 %1156
    %1158 = vrot.lane.b32.xlu0 %v980, 96
    %v1159 = vpop.permute.xlu0 %1158
    %1160 = vrot.lane.b32.xlu0 %v981, 96
    %v1161 = vpop.permute.xlu0 %1160
    %1162 = vrot.lane.b32.xlu0 %v982, 96
    %v1163 = vpop.permute.xlu0 %1162
    %1164 = vrot.lane.b32.xlu0 %v983, 96
    %v1165 = vpop.permute.xlu0 %1164
    %1166 = vrot.lane.b32.xlu0 %v984, 96
    %v1167 = vpop.permute.xlu0 %1166
    %1168 = vrot.lane.b32.xlu0 %v985, 96
    %v1169 = vpop.permute.xlu0 %1168
    %1170 = vrot.lane.b32.xlu0 %v986, 96
    %v1171 = vpop.permute.xlu0 %1170
    %1172 = vrot.lane.b32.xlu0 %v987, 96
    %v1173 = vpop.permute.xlu0 %1172
    %1174 = vrot.lane.b32.xlu0 %v988, 96
    %v1175 = vpop.permute.xlu0 %1174
    %1176 = vrot.lane.b32.xlu0 %v989, 96
    %v1177 = vpop.permute.xlu0 %1176
    %1178 = vrot.lane.b32.xlu0 %v990, 96
    %v1179 = vpop.permute.xlu0 %1178
    %1180 = vrot.lane.b32.xlu0 %v991, 96
    %v1181 = vpop.permute.xlu0 %1180
    %1182 = vrot.lane.b32.xlu0 %v992, 96
    %v1183 = vpop.permute.xlu0 %1182
    %1184 = vrot.lane.b32.xlu0 %v993, 96
    %v1185 = vpop.permute.xlu0 %1184
    %vm1250 = vcmask 1048320
    %1251 = vst.msk [vmem:[#allocation2] sm:$0xff] %vm1250, %v1059
    %1252 = vst.msk [vmem:[#allocation2 + $0x18] sm:$0xff] %vm1250, %v1061
    %1253 = vst.msk [vmem:[#allocation2 + $0x30] sm:$0xff] %vm1250, %v1063
    %1254 = vst.msk [vmem:[#allocation2 + $0x48] sm:$0xff] %vm1250, %v1065
    %1255 = vst.msk [vmem:[#allocation2 + $0x60] sm:$0xff] %vm1250, %v1067
    %1256 = vst.msk [vmem:[#allocation2 + $0x78] sm:$0xff] %vm1250, %v1069
    %1257 = vst.msk [vmem:[#allocation2 + $0x90] sm:$0xff] %vm1250, %v1071
    %1258 = vst.msk [vmem:[#allocation2 + $0xa8] sm:$0xff] %vm1250, %v1073
    %1259 = vst.msk [vmem:[#allocation2 + $0xc0] sm:$0xff] %vm1250, %v1075
    %1260 = vst.msk [vmem:[#allocation2 + $0xd8] sm:$0xff] %vm1250, %v1077
    %1261 = vst.msk [vmem:[#allocation2 + $0xf0] sm:$0xff] %vm1250, %v1079
    %1262 = vst.msk [vmem:[#allocation2 + $0x108] sm:$0xff] %vm1250, %v1081
    %1263 = vst.msk [vmem:[#allocation2 + $0x120] sm:$0xff] %vm1250, %v1083
    %1264 = vst.msk [vmem:[#allocation2 + $0x138] sm:$0xff] %vm1250, %v1085
    %1265 = vst.msk [vmem:[#allocation2 + $0x150] sm:$0xff] %vm1250, %v1087
    %1266 = vst.msk [vmem:[#allocation2 + $0x168] sm:$0xff] %vm1250, %v1089
    %1267 = vst.msk [vmem:[#allocation2 + $0x180] sm:$0xff] %vm1250, %v1091
    %1268 = vst.msk [vmem:[#allocation2 + $0x198] sm:$0xff] %vm1250, %v1093
    %1269 = vst.msk [vmem:[#allocation2 + $0x1b0] sm:$0xff] %vm1250, %v1095
    %1270 = vst.msk [vmem:[#allocation2 + $0x1c8] sm:$0xff] %vm1250, %v1097
    %1271 = vst.msk [vmem:[#allocation2 + $0x1e0] sm:$0xff] %vm1250, %v1099
    %1272 = vst.msk [vmem:[#allocation2 + $0x1f8] sm:$0xff] %vm1250, %v1101
    %1273 = vst.msk [vmem:[#allocation2 + $0x210] sm:$0xff] %vm1250, %v1103
    %1274 = vst.msk [vmem:[#allocation2 + $0x228] sm:$0xff] %vm1250, %v1105
    %1275 = vst.msk [vmem:[#allocation2 + $0x240] sm:$0xff] %vm1250, %v1107
    %1276 = vst.msk [vmem:[#allocation2 + $0x258] sm:$0xff] %vm1250, %v1109
    %1277 = vst.msk [vmem:[#allocation2 + $0x270] sm:$0xff] %vm1250, %v1111
    %1278 = vst.msk [vmem:[#allocation2 + $0x288] sm:$0xff] %vm1250, %v1113
    %1279 = vst.msk [vmem:[#allocation2 + $0x2a0] sm:$0xff] %vm1250, %v1115
    %1280 = vst.msk [vmem:[#allocation2 + $0x2b8] sm:$0xff] %vm1250, %v1117
    %1281 = vst.msk [vmem:[#allocation2 + $0x2d0] sm:$0xff] %vm1250, %v1119
    %1282 = vst.msk [vmem:[#allocation2 + $0x2e8] sm:$0xff] %vm1250, %v1121
    %1283 = vst.msk [vmem:[#allocation2 + $0x300] sm:$0xff] %vm1250, %v1123
    %1284 = vst.msk [vmem:[#allocation2 + $0x318] sm:$0xff] %vm1250, %v1125
    %1285 = vst.msk [vmem:[#allocation2 + $0x330] sm:$0xff] %vm1250, %v1127
    %1286 = vst.msk [vmem:[#allocation2 + $0x348] sm:$0xff] %vm1250, %v1129
    %1287 = vst.msk [vmem:[#allocation2 + $0x360] sm:$0xff] %vm1250, %v1131
    %1288 = vst.msk [vmem:[#allocation2 + $0x378] sm:$0xff] %vm1250, %v1133
    %1289 = vst.msk [vmem:[#allocation2 + $0x390] sm:$0xff] %vm1250, %v1135
    %1290 = vst.msk [vmem:[#allocation2 + $0x3a8] sm:$0xff] %vm1250, %v1137
    %1291 = vst.msk [vmem:[#allocation2 + $0x3c0] sm:$0xff] %vm1250, %v1139
    %1292 = vst.msk [vmem:[#allocation2 + $0x3d8] sm:$0xff] %vm1250, %v1141
    %1293 = vst.msk [vmem:[#allocation2 + $0x3f0] sm:$0xff] %vm1250, %v1143
    %1294 = vst.msk [vmem:[#allocation2 + $0x408] sm:$0xff] %vm1250, %v1145
    %1295 = vst.msk [vmem:[#allocation2 + $0x420] sm:$0xff] %vm1250, %v1147
    %1296 = vst.msk [vmem:[#allocation2 + $0x438] sm:$0xff] %vm1250, %v1149
    %1297 = vst.msk [vmem:[#allocation2 + $0x450] sm:$0xff] %vm1250, %v1151
    %1298 = vst.msk [vmem:[#allocation2 + $0x468] sm:$0xff] %vm1250, %v1153
    %1299 = vst.msk [vmem:[#allocation2 + $0x480] sm:$0xff] %vm1250, %v1155
    %1300 = vst.msk [vmem:[#allocation2 + $0x498] sm:$0xff] %vm1250, %v1157
    %1301 = vst.msk [vmem:[#allocation2 + $0x4b0] sm:$0xff] %vm1250, %v1159
    %1302 = vst.msk [vmem:[#allocation2 + $0x4c8] sm:$0xff] %vm1250, %v1161
    %1303 = vst.msk [vmem:[#allocation2 + $0x4e0] sm:$0xff] %vm1250, %v1163
    %1304 = vst.msk [vmem:[#allocation2 + $0x4f8] sm:$0xff] %vm1250, %v1165
    %1305 = vst.msk [vmem:[#allocation2 + $0x510] sm:$0xff] %vm1250, %v1167
    %1306 = vst.msk [vmem:[#allocation2 + $0x528] sm:$0xff] %vm1250, %v1169
    %1307 = vst.msk [vmem:[#allocation2 + $0x540] sm:$0xff] %vm1250, %v1171
    %1308 = vst.msk [vmem:[#allocation2 + $0x558] sm:$0xff] %vm1250, %v1173
    %1309 = vst.msk [vmem:[#allocation2 + $0x570] sm:$0xff] %vm1250, %v1175
    %1310 = vst.msk [vmem:[#allocation2 + $0x588] sm:$0xff] %vm1250, %v1177
    %1311 = vst.msk [vmem:[#allocation2 + $0x5a0] sm:$0xff] %vm1250, %v1179
    %1312 = vst.msk [vmem:[#allocation2 + $0x5b8] sm:$0xff] %vm1250, %v1181
    %1313 = vst.msk [vmem:[#allocation2 + $0x5d0] sm:$0xff] %vm1250, %v1183
    %1314 = vst.msk [vmem:[#allocation2 + $0x5e8] sm:$0xff] %vm1250, %v1185
    %v1315 = vld [vmem:[%s929 + $0x1] sm:$0xff]
    %v1316 = vld [vmem:[%s929 + $0x9] sm:$0xff]
    %v1317 = vld [vmem:[%s929 + $0x19] sm:$0xff]
    %v1318 = vld [vmem:[%s929 + $0x21] sm:$0xff]
    %v1319 = vld [vmem:[%s929 + $0x31] sm:$0xff]
    %v1320 = vld [vmem:[%s929 + $0x39] sm:$0xff]
    %v1321 = vld [vmem:[%s929 + $0x49] sm:$0xff]
    %v1322 = vld [vmem:[%s929 + $0x51] sm:$0xff]
    %v1323 = vld [vmem:[%s929 + $0x61] sm:$0xff]
    %v1324 = vld [vmem:[%s929 + $0x69] sm:$0xff]
    %v1325 = vld [vmem:[%s929 + $0x79] sm:$0xff]
    %v1326 = vld [vmem:[%s929 + $0x81] sm:$0xff]
    %v1327 = vld [vmem:[%s929 + $0x91] sm:$0xff]
    %v1328 = vld [vmem:[%s929 + $0x99] sm:$0xff]
    %v1329 = vld [vmem:[%s929 + $0xa9] sm:$0xff]
    %v1330 = vld [vmem:[%s929 + $0xb1] sm:$0xff]
    %v1331 = vld [vmem:[%s929 + $0xc1] sm:$0xff]
    %v1332 = vld [vmem:[%s929 + $0xc9] sm:$0xff]
    %v1333 = vld [vmem:[%s929 + $0xd9] sm:$0xff]
    %v1334 = vld [vmem:[%s929 + $0xe1] sm:$0xff]
    %v1335 = vld [vmem:[%s929 + $0xf1] sm:$0xff]
    %v1336 = vld [vmem:[%s929 + $0xf9] sm:$0xff]
    %v1337 = vld [vmem:[%s929 + $0x109] sm:$0xff]
    %v1338 = vld [vmem:[%s929 + $0x111] sm:$0xff]
    %v1339 = vld [vmem:[%s929 + $0x121] sm:$0xff]
    %v1340 = vld [vmem:[%s929 + $0x129] sm:$0xff]
    %v1341 = vld [vmem:[%s929 + $0x139] sm:$0xff]
    %v1342 = vld [vmem:[%s929 + $0x141] sm:$0xff]
    %v1343 = vld [vmem:[%s929 + $0x151] sm:$0xff]
    %v1344 = vld [vmem:[%s929 + $0x159] sm:$0xff]
    %v1345 = vld [vmem:[%s929 + $0x169] sm:$0xff]
    %v1346 = vld [vmem:[%s929 + $0x171] sm:$0xff]
    %v1347 = vld [vmem:[%s929 + $0x1b1] sm:$0xff]
    %v1348 = vld [vmem:[%s929 + $0x1b9] sm:$0xff]
    %v1349 = vld [vmem:[%s929 + $0x1c9] sm:$0xff]
    %v1350 = vld [vmem:[%s929 + $0x1d1] sm:$0xff]
    %v1351 = vld [vmem:[%s929 + $0x1e1] sm:$0xff]
    %v1352 = vld [vmem:[%s929 + $0x1e9] sm:$0xff]
    %v1353 = vld [vmem:[%s929 + $0x1f9] sm:$0xff]
    %v1354 = vld [vmem:[%s929 + $0x201] sm:$0xff]
    %v1355 = vld [vmem:[%s929 + $0x211] sm:$0xff]
    %v1356 = vld [vmem:[%s929 + $0x219] sm:$0xff]
    %v1357 = vld [vmem:[%s929 + $0x229] sm:$0xff]
    %v1358 = vld [vmem:[%s929 + $0x231] sm:$0xff]
    %v1359 = vld [vmem:[%s929 + $0x241] sm:$0xff]
    %v1360 = vld [vmem:[%s929 + $0x249] sm:$0xff]
    %v1361 = vld [vmem:[%s929 + $0x259] sm:$0xff]
    %v1362 = vld [vmem:[%s929 + $0x261] sm:$0xff]
    %v1363 = vld [vmem:[%s929 + $0x271] sm:$0xff]
    %v1364 = vld [vmem:[%s929 + $0x279] sm:$0xff]
    %v1365 = vld [vmem:[%s929 + $0x289] sm:$0xff]
    %v1366 = vld [vmem:[%s929 + $0x291] sm:$0xff]
    %v1367 = vld [vmem:[%s929 + $0x2a1] sm:$0xff]
    %v1368 = vld [vmem:[%s929 + $0x2a9] sm:$0xff]
    %v1369 = vld [vmem:[%s929 + $0x2b9] sm:$0xff]
    %v1370 = vld [vmem:[%s929 + $0x2c1] sm:$0xff]
    %v1371 = vld [vmem:[%s929 + $0x2d1] sm:$0xff]
    %v1372 = vld [vmem:[%s929 + $0x2d9] sm:$0xff]
    %v1373 = vld [vmem:[%s929 + $0x2e9] sm:$0xff]
    %v1374 = vld [vmem:[%s929 + $0x2f1] sm:$0xff]
    %v1375 = vld [vmem:[%s929 + $0x301] sm:$0xff]
    %v1376 = vld [vmem:[%s929 + $0x309] sm:$0xff]
    %v1377 = vld [vmem:[%s929 + $0x319] sm:$0xff]
    %v1378 = vld [vmem:[%s929 + $0x321] sm:$0xff]
    %1379 = vst.msk [vmem:[#allocation2 + $0x8] sm:$0xff] %vm94, %v1315
    %1380 = vst.msk [vmem:[#allocation2 + $0x20] sm:$0xff] %vm94, %v1316
    %1381 = vst.msk [vmem:[#allocation2 + $0x38] sm:$0xff] %vm94, %v1317
    %1382 = vst.msk [vmem:[#allocation2 + $0x50] sm:$0xff] %vm94, %v1318
    %1383 = vst.msk [vmem:[#allocation2 + $0x68] sm:$0xff] %vm94, %v1319
    %1384 = vst.msk [vmem:[#allocation2 + $0x80] sm:$0xff] %vm94, %v1320
    %1385 = vst.msk [vmem:[#allocation2 + $0x98] sm:$0xff] %vm94, %v1321
    %1386 = vst.msk [vmem:[#allocation2 + $0xb0] sm:$0xff] %vm94, %v1322
    %1387 = vst.msk [vmem:[#allocation2 + $0xc8] sm:$0xff] %vm94, %v1323
    %1388 = vst.msk [vmem:[#allocation2 + $0xe0] sm:$0xff] %vm94, %v1324
    %1389 = vst.msk [vmem:[#allocation2 + $0xf8] sm:$0xff] %vm94, %v1325
    %1390 = vst.msk [vmem:[#allocation2 + $0x110] sm:$0xff] %vm94, %v1326
    %1391 = vst.msk [vmem:[#allocation2 + $0x128] sm:$0xff] %vm94, %v1327
    %1392 = vst.msk [vmem:[#allocation2 + $0x140] sm:$0xff] %vm94, %v1328
    %1393 = vst.msk [vmem:[#allocation2 + $0x158] sm:$0xff] %vm94, %v1329
    %1394 = vst.msk [vmem:[#allocation2 + $0x170] sm:$0xff] %vm94, %v1330
    %1395 = vst.msk [vmem:[#allocation2 + $0x188] sm:$0xff] %vm94, %v1331
    %1396 = vst.msk [vmem:[#allocation2 + $0x1a0] sm:$0xff] %vm94, %v1332
    %1397 = vst.msk [vmem:[#allocation2 + $0x1b8] sm:$0xff] %vm94, %v1333
    %1398 = vst.msk [vmem:[#allocation2 + $0x1d0] sm:$0xff] %vm94, %v1334
    %1399 = vst.msk [vmem:[#allocation2 + $0x1e8] sm:$0xff] %vm94, %v1335
    %1400 = vst.msk [vmem:[#allocation2 + $0x200] sm:$0xff] %vm94, %v1336
    %1401 = vst.msk [vmem:[#allocation2 + $0x218] sm:$0xff] %vm94, %v1337
    %1402 = vst.msk [vmem:[#allocation2 + $0x230] sm:$0xff] %vm94, %v1338
    %1403 = vst.msk [vmem:[#allocation2 + $0x248] sm:$0xff] %vm94, %v1339
    %1404 = vst.msk [vmem:[#allocation2 + $0x260] sm:$0xff] %vm94, %v1340
    %1405 = vst.msk [vmem:[#allocation2 + $0x278] sm:$0xff] %vm94, %v1341
    %1406 = vst.msk [vmem:[#allocation2 + $0x290] sm:$0xff] %vm94, %v1342
    %1407 = vst.msk [vmem:[#allocation2 + $0x2a8] sm:$0xff] %vm94, %v1343
    %1408 = vst.msk [vmem:[#allocation2 + $0x2c0] sm:$0xff] %vm94, %v1344
    %1409 = vst.msk [vmem:[#allocation2 + $0x2d8] sm:$0xff] %vm94, %v1345
    %1410 = vst.msk [vmem:[#allocation2 + $0x2f0] sm:$0xff] %vm94, %v1346
    %1411 = vst.msk [vmem:[#allocation2 + $0x308] sm:$0xff] %vm94, %v1347
    %1412 = vst.msk [vmem:[#allocation2 + $0x320] sm:$0xff] %vm94, %v1348
    %1413 = vst.msk [vmem:[#allocation2 + $0x338] sm:$0xff] %vm94, %v1349
    %1414 = vst.msk [vmem:[#allocation2 + $0x350] sm:$0xff] %vm94, %v1350
    %1415 = vst.msk [vmem:[#allocation2 + $0x368] sm:$0xff] %vm94, %v1351
    %1416 = vst.msk [vmem:[#allocation2 + $0x380] sm:$0xff] %vm94, %v1352
    %1417 = vst.msk [vmem:[#allocation2 + $0x398] sm:$0xff] %vm94, %v1353
    %1418 = vst.msk [vmem:[#allocation2 + $0x3b0] sm:$0xff] %vm94, %v1354
    %1419 = vst.msk [vmem:[#allocation2 + $0x3c8] sm:$0xff] %vm94, %v1355
    %1420 = vst.msk [vmem:[#allocation2 + $0x3e0] sm:$0xff] %vm94, %v1356
    %1421 = vst.msk [vmem:[#allocation2 + $0x3f8] sm:$0xff] %vm94, %v1357
    %1422 = vst.msk [vmem:[#allocation2 + $0x410] sm:$0xff] %vm94, %v1358
    %1423 = vst.msk [vmem:[#allocation2 + $0x428] sm:$0xff] %vm94, %v1359
    %1424 = vst.msk [vmem:[#allocation2 + $0x440] sm:$0xff] %vm94, %v1360
    %1425 = vst.msk [vmem:[#allocation2 + $0x458] sm:$0xff] %vm94, %v1361
    %1426 = vst.msk [vmem:[#allocation2 + $0x470] sm:$0xff] %vm94, %v1362
    %1427 = vst.msk [vmem:[#allocation2 + $0x488] sm:$0xff] %vm94, %v1363
    %1428 = vst.msk [vmem:[#allocation2 + $0x4a0] sm:$0xff] %vm94, %v1364
    %1429 = vst.msk [vmem:[#allocation2 + $0x4b8] sm:$0xff] %vm94, %v1365
    %1430 = vst.msk [vmem:[#allocation2 + $0x4d0] sm:$0xff] %vm94, %v1366
    %1431 = vst.msk [vmem:[#allocation2 + $0x4e8] sm:$0xff] %vm94, %v1367
    %1432 = vst.msk [vmem:[#allocation2 + $0x500] sm:$0xff] %vm94, %v1368
    %1433 = vst.msk [vmem:[#allocation2 + $0x518] sm:$0xff] %vm94, %v1369
    %1434 = vst.msk [vmem:[#allocation2 + $0x530] sm:$0xff] %vm94, %v1370
    %1435 = vst.msk [vmem:[#allocation2 + $0x548] sm:$0xff] %vm94, %v1371
    %1436 = vst.msk [vmem:[#allocation2 + $0x560] sm:$0xff] %vm94, %v1372
    %1437 = vst.msk [vmem:[#allocation2 + $0x578] sm:$0xff] %vm94, %v1373
    %1438 = vst.msk [vmem:[#allocation2 + $0x590] sm:$0xff] %vm94, %v1374
    %1439 = vst.msk [vmem:[#allocation2 + $0x5a8] sm:$0xff] %vm94, %v1375
    %1440 = vst.msk [vmem:[#allocation2 + $0x5c0] sm:$0xff] %vm94, %v1376
    %1441 = vst.msk [vmem:[#allocation2 + $0x5d8] sm:$0xff] %vm94, %v1377
    %1442 = vst.msk [vmem:[#allocation2 + $0x5f0] sm:$0xff] %vm94, %v1378
    %v1443 = vld [vmem:[%s929 + $0x2] sm:$0xff]
    %v1444 = vld [vmem:[%s929 + $0xa] sm:$0xff]
    %v1445 = vld [vmem:[%s929 + $0x1a] sm:$0xff]
    %v1446 = vld [vmem:[%s929 + $0x22] sm:$0xff]
    %v1447 = vld [vmem:[%s929 + $0x32] sm:$0xff]
    %v1448 = vld [vmem:[%s929 + $0x3a] sm:$0xff]
    %v1449 = vld [vmem:[%s929 + $0x4a] sm:$0xff]
    %v1450 = vld [vmem:[%s929 + $0x52] sm:$0xff]
    %v1451 = vld [vmem:[%s929 + $0x62] sm:$0xff]
    %v1452 = vld [vmem:[%s929 + $0x6a] sm:$0xff]
    %v1453 = vld [vmem:[%s929 + $0x7a] sm:$0xff]
    %v1454 = vld [vmem:[%s929 + $0x82] sm:$0xff]
    %v1455 = vld [vmem:[%s929 + $0x92] sm:$0xff]
    %v1456 = vld [vmem:[%s929 + $0x9a] sm:$0xff]
    %v1457 = vld [vmem:[%s929 + $0xaa] sm:$0xff]
    %v1458 = vld [vmem:[%s929 + $0xb2] sm:$0xff]
    %v1459 = vld [vmem:[%s929 + $0xc2] sm:$0xff]
    %v1460 = vld [vmem:[%s929 + $0xca] sm:$0xff]
    %v1461 = vld [vmem:[%s929 + $0xda] sm:$0xff]
    %v1462 = vld [vmem:[%s929 + $0xe2] sm:$0xff]
    %v1463 = vld [vmem:[%s929 + $0xf2] sm:$0xff]
    %v1464 = vld [vmem:[%s929 + $0xfa] sm:$0xff]
    %v1465 = vld [vmem:[%s929 + $0x10a] sm:$0xff]
    %v1466 = vld [vmem:[%s929 + $0x112] sm:$0xff]
    %v1467 = vld [vmem:[%s929 + $0x122] sm:$0xff]
    %v1468 = vld [vmem:[%s929 + $0x12a] sm:$0xff]
    %v1469 = vld [vmem:[%s929 + $0x13a] sm:$0xff]
    %v1470 = vld [vmem:[%s929 + $0x142] sm:$0xff]
    %v1471 = vld [vmem:[%s929 + $0x152] sm:$0xff]
    %v1472 = vld [vmem:[%s929 + $0x15a] sm:$0xff]
    %v1473 = vld [vmem:[%s929 + $0x16a] sm:$0xff]
    %v1474 = vld [vmem:[%s929 + $0x172] sm:$0xff]
    %v1475 = vld [vmem:[%s929 + $0x1b2] sm:$0xff]
    %v1476 = vld [vmem:[%s929 + $0x1ba] sm:$0xff]
    %v1477 = vld [vmem:[%s929 + $0x1ca] sm:$0xff]
    %v1478 = vld [vmem:[%s929 + $0x1d2] sm:$0xff]
    %v1479 = vld [vmem:[%s929 + $0x1e2] sm:$0xff]
    %v1480 = vld [vmem:[%s929 + $0x1ea] sm:$0xff]
    %v1481 = vld [vmem:[%s929 + $0x1fa] sm:$0xff]
    %v1482 = vld [vmem:[%s929 + $0x202] sm:$0xff]
    %v1483 = vld [vmem:[%s929 + $0x212] sm:$0xff]
    %v1484 = vld [vmem:[%s929 + $0x21a] sm:$0xff]
    %v1485 = vld [vmem:[%s929 + $0x22a] sm:$0xff]
    %v1486 = vld [vmem:[%s929 + $0x232] sm:$0xff]
    %v1487 = vld [vmem:[%s929 + $0x242] sm:$0xff]
    %v1488 = vld [vmem:[%s929 + $0x24a] sm:$0xff]
    %v1489 = vld [vmem:[%s929 + $0x25a] sm:$0xff]
    %v1490 = vld [vmem:[%s929 + $0x262] sm:$0xff]
    %v1491 = vld [vmem:[%s929 + $0x272] sm:$0xff]
    %v1492 = vld [vmem:[%s929 + $0x27a] sm:$0xff]
    %v1493 = vld [vmem:[%s929 + $0x28a] sm:$0xff]
    %v1494 = vld [vmem:[%s929 + $0x292] sm:$0xff]
    %v1495 = vld [vmem:[%s929 + $0x2a2] sm:$0xff]
    %v1496 = vld [vmem:[%s929 + $0x2aa] sm:$0xff]
    %v1497 = vld [vmem:[%s929 + $0x2ba] sm:$0xff]
    %v1498 = vld [vmem:[%s929 + $0x2c2] sm:$0xff]
    %v1499 = vld [vmem:[%s929 + $0x2d2] sm:$0xff]
    %v1500 = vld [vmem:[%s929 + $0x2da] sm:$0xff]
    %v1501 = vld [vmem:[%s929 + $0x2ea] sm:$0xff]
    %v1502 = vld [vmem:[%s929 + $0x2f2] sm:$0xff]
    %v1503 = vld [vmem:[%s929 + $0x302] sm:$0xff]
    %v1504 = vld [vmem:[%s929 + $0x30a] sm:$0xff]
    %v1505 = vld [vmem:[%s929 + $0x31a] sm:$0xff]
    %v1506 = vld [vmem:[%s929 + $0x322] sm:$0xff]
    %1571 = vrot.lane.b32.xlu0 %v1443, 32
    %v1572 = vpop.permute.xlu0 %1571
    %1573 = vrot.lane.b32.xlu0 %v1444, 32
    %v1574 = vpop.permute.xlu0 %1573
    %1575 = vrot.lane.b32.xlu0 %v1445, 32
    %v1576 = vpop.permute.xlu0 %1575
    %1577 = vrot.lane.b32.xlu0 %v1446, 32
    %v1578 = vpop.permute.xlu0 %1577
    %1579 = vrot.lane.b32.xlu0 %v1447, 32
    %v1580 = vpop.permute.xlu0 %1579
    %1581 = vrot.lane.b32.xlu0 %v1448, 32
    %v1582 = vpop.permute.xlu0 %1581
    %1583 = vrot.lane.b32.xlu0 %v1449, 32
    %v1584 = vpop.permute.xlu0 %1583
    %1585 = vrot.lane.b32.xlu0 %v1450, 32
    %v1586 = vpop.permute.xlu0 %1585
    %1587 = vrot.lane.b32.xlu0 %v1451, 32
    %v1588 = vpop.permute.xlu0 %1587
    %1589 = vrot.lane.b32.xlu0 %v1452, 32
    %v1590 = vpop.permute.xlu0 %1589
    %1591 = vrot.lane.b32.xlu0 %v1453, 32
    %v1592 = vpop.permute.xlu0 %1591
    %1593 = vrot.lane.b32.xlu0 %v1454, 32
    %v1594 = vpop.permute.xlu0 %1593
    %1595 = vrot.lane.b32.xlu0 %v1455, 32
    %v1596 = vpop.permute.xlu0 %1595
    %1597 = vrot.lane.b32.xlu0 %v1456, 32
    %v1598 = vpop.permute.xlu0 %1597
    %1599 = vrot.lane.b32.xlu0 %v1457, 32
    %v1600 = vpop.permute.xlu0 %1599
    %1601 = vrot.lane.b32.xlu0 %v1458, 32
    %v1602 = vpop.permute.xlu0 %1601
    %1603 = vrot.lane.b32.xlu0 %v1459, 32
    %v1604 = vpop.permute.xlu0 %1603
    %1605 = vrot.lane.b32.xlu0 %v1460, 32
    %v1606 = vpop.permute.xlu0 %1605
    %1607 = vrot.lane.b32.xlu0 %v1461, 32
    %v1608 = vpop.permute.xlu0 %1607
    %1609 = vrot.lane.b32.xlu0 %v1462, 32
    %v1610 = vpop.permute.xlu0 %1609
    %1611 = vrot.lane.b32.xlu0 %v1463, 32
    %v1612 = vpop.permute.xlu0 %1611
    %1613 = vrot.lane.b32.xlu0 %v1464, 32
    %v1614 = vpop.permute.xlu0 %1613
    %1615 = vrot.lane.b32.xlu0 %v1465, 32
    %v1616 = vpop.permute.xlu0 %1615
    %1617 = vrot.lane.b32.xlu0 %v1466, 32
    %v1618 = vpop.permute.xlu0 %1617
    %1619 = vrot.lane.b32.xlu0 %v1467, 32
    %v1620 = vpop.permute.xlu0 %1619
    %1621 = vrot.lane.b32.xlu0 %v1468, 32
    %v1622 = vpop.permute.xlu0 %1621
    %1623 = vrot.lane.b32.xlu0 %v1469, 32
    %v1624 = vpop.permute.xlu0 %1623
    %1625 = vrot.lane.b32.xlu0 %v1470, 32
    %v1626 = vpop.permute.xlu0 %1625
    %1627 = vrot.lane.b32.xlu0 %v1471, 32
    %v1628 = vpop.permute.xlu0 %1627
    %1629 = vrot.lane.b32.xlu0 %v1472, 32
    %v1630 = vpop.permute.xlu0 %1629
    %1631 = vrot.lane.b32.xlu0 %v1473, 32
    %v1632 = vpop.permute.xlu0 %1631
    %1633 = vrot.lane.b32.xlu0 %v1474, 32
    %v1634 = vpop.permute.xlu0 %1633
    %1635 = vrot.lane.b32.xlu0 %v1475, 32
    %v1636 = vpop.permute.xlu0 %1635
    %1637 = vrot.lane.b32.xlu0 %v1476, 32
    %v1638 = vpop.permute.xlu0 %1637
    %1639 = vrot.lane.b32.xlu0 %v1477, 32
    %v1640 = vpop.permute.xlu0 %1639
    %1641 = vrot.lane.b32.xlu0 %v1478, 32
    %v1642 = vpop.permute.xlu0 %1641
    %1643 = vrot.lane.b32.xlu0 %v1479, 32
    %v1644 = vpop.permute.xlu0 %1643
    %1645 = vrot.lane.b32.xlu0 %v1480, 32
    %v1646 = vpop.permute.xlu0 %1645
    %1647 = vrot.lane.b32.xlu0 %v1481, 32
    %v1648 = vpop.permute.xlu0 %1647
    %1649 = vrot.lane.b32.xlu0 %v1482, 32
    %v1650 = vpop.permute.xlu0 %1649
    %1651 = vrot.lane.b32.xlu0 %v1483, 32
    %v1652 = vpop.permute.xlu0 %1651
    %1653 = vrot.lane.b32.xlu0 %v1484, 32
    %v1654 = vpop.permute.xlu0 %1653
    %1655 = vrot.lane.b32.xlu0 %v1485, 32
    %v1656 = vpop.permute.xlu0 %1655
    %1657 = vrot.lane.b32.xlu0 %v1486, 32
    %v1658 = vpop.permute.xlu0 %1657
    %1659 = vrot.lane.b32.xlu0 %v1487, 32
    %v1660 = vpop.permute.xlu0 %1659
    %1661 = vrot.lane.b32.xlu0 %v1488, 32
    %v1662 = vpop.permute.xlu0 %1661
    %1663 = vrot.lane.b32.xlu0 %v1489, 32
    %v1664 = vpop.permute.xlu0 %1663
    %1665 = vrot.lane.b32.xlu0 %v1490, 32
    %v1666 = vpop.permute.xlu0 %1665
    %1667 = vrot.lane.b32.xlu0 %v1491, 32
    %v1668 = vpop.permute.xlu0 %1667
    %1669 = vrot.lane.b32.xlu0 %v1492, 32
    %v1670 = vpop.permute.xlu0 %1669
    %1671 = vrot.lane.b32.xlu0 %v1493, 32
    %v1672 = vpop.permute.xlu0 %1671
    %1673 = vrot.lane.b32.xlu0 %v1494, 32
    %v1674 = vpop.permute.xlu0 %1673
    %1675 = vrot.lane.b32.xlu0 %v1495, 32
    %v1676 = vpop.permute.xlu0 %1675
    %1677 = vrot.lane.b32.xlu0 %v1496, 32
    %v1678 = vpop.permute.xlu0 %1677
    %1679 = vrot.lane.b32.xlu0 %v1497, 32
    %v1680 = vpop.permute.xlu0 %1679
    %1681 = vrot.lane.b32.xlu0 %v1498, 32
    %v1682 = vpop.permute.xlu0 %1681
    %1683 = vrot.lane.b32.xlu0 %v1499, 32
    %v1684 = vpop.permute.xlu0 %1683
    %1685 = vrot.lane.b32.xlu0 %v1500, 32
    %v1686 = vpop.permute.xlu0 %1685
    %1687 = vrot.lane.b32.xlu0 %v1501, 32
    %v1688 = vpop.permute.xlu0 %1687
    %1689 = vrot.lane.b32.xlu0 %v1502, 32
    %v1690 = vpop.permute.xlu0 %1689
    %1691 = vrot.lane.b32.xlu0 %v1503, 32
    %v1692 = vpop.permute.xlu0 %1691
    %1693 = vrot.lane.b32.xlu0 %v1504, 32
    %v1694 = vpop.permute.xlu0 %1693
    %1695 = vrot.lane.b32.xlu0 %v1505, 32
    %v1696 = vpop.permute.xlu0 %1695
    %1697 = vrot.lane.b32.xlu0 %v1506, 32
    %v1698 = vpop.permute.xlu0 %1697
    %1763 = vst.msk [vmem:[#allocation2 + $0x8] sm:$0xff] %vm479, %v1572
    %1764 = vst.msk [vmem:[#allocation2 + $0x20] sm:$0xff] %vm479, %v1574
    %1765 = vst.msk [vmem:[#allocation2 + $0x38] sm:$0xff] %vm479, %v1576
    %1766 = vst.msk [vmem:[#allocation2 + $0x50] sm:$0xff] %vm479, %v1578
    %1767 = vst.msk [vmem:[#allocation2 + $0x68] sm:$0xff] %vm479, %v1580
    %1768 = vst.msk [vmem:[#allocation2 + $0x80] sm:$0xff] %vm479, %v1582
    %1769 = vst.msk [vmem:[#allocation2 + $0x98] sm:$0xff] %vm479, %v1584
    %1770 = vst.msk [vmem:[#allocation2 + $0xb0] sm:$0xff] %vm479, %v1586
    %1771 = vst.msk [vmem:[#allocation2 + $0xc8] sm:$0xff] %vm479, %v1588
    %1772 = vst.msk [vmem:[#allocation2 + $0xe0] sm:$0xff] %vm479, %v1590
    %1773 = vst.msk [vmem:[#allocation2 + $0xf8] sm:$0xff] %vm479, %v1592
    %1774 = vst.msk [vmem:[#allocation2 + $0x110] sm:$0xff] %vm479, %v1594
    %1775 = vst.msk [vmem:[#allocation2 + $0x128] sm:$0xff] %vm479, %v1596
    %1776 = vst.msk [vmem:[#allocation2 + $0x140] sm:$0xff] %vm479, %v1598
    %1777 = vst.msk [vmem:[#allocation2 + $0x158] sm:$0xff] %vm479, %v1600
    %1778 = vst.msk [vmem:[#allocation2 + $0x170] sm:$0xff] %vm479, %v1602
    %1779 = vst.msk [vmem:[#allocation2 + $0x188] sm:$0xff] %vm479, %v1604
    %1780 = vst.msk [vmem:[#allocation2 + $0x1a0] sm:$0xff] %vm479, %v1606
    %1781 = vst.msk [vmem:[#allocation2 + $0x1b8] sm:$0xff] %vm479, %v1608
    %1782 = vst.msk [vmem:[#allocation2 + $0x1d0] sm:$0xff] %vm479, %v1610
    %1783 = vst.msk [vmem:[#allocation2 + $0x1e8] sm:$0xff] %vm479, %v1612
    %1784 = vst.msk [vmem:[#allocation2 + $0x200] sm:$0xff] %vm479, %v1614
    %1785 = vst.msk [vmem:[#allocation2 + $0x218] sm:$0xff] %vm479, %v1616
    %1786 = vst.msk [vmem:[#allocation2 + $0x230] sm:$0xff] %vm479, %v1618
    %1787 = vst.msk [vmem:[#allocation2 + $0x248] sm:$0xff] %vm479, %v1620
    %1788 = vst.msk [vmem:[#allocation2 + $0x260] sm:$0xff] %vm479, %v1622
    %1789 = vst.msk [vmem:[#allocation2 + $0x278] sm:$0xff] %vm479, %v1624
    %1790 = vst.msk [vmem:[#allocation2 + $0x290] sm:$0xff] %vm479, %v1626
    %1791 = vst.msk [vmem:[#allocation2 + $0x2a8] sm:$0xff] %vm479, %v1628
    %1792 = vst.msk [vmem:[#allocation2 + $0x2c0] sm:$0xff] %vm479, %v1630
    %1793 = vst.msk [vmem:[#allocation2 + $0x2d8] sm:$0xff] %vm479, %v1632
    %1794 = vst.msk [vmem:[#allocation2 + $0x2f0] sm:$0xff] %vm479, %v1634
    %1795 = vst.msk [vmem:[#allocation2 + $0x308] sm:$0xff] %vm479, %v1636
    %1796 = vst.msk [vmem:[#allocation2 + $0x320] sm:$0xff] %vm479, %v1638
    %1797 = vst.msk [vmem:[#allocation2 + $0x338] sm:$0xff] %vm479, %v1640
    %1798 = vst.msk [vmem:[#allocation2 + $0x350] sm:$0xff] %vm479, %v1642
    %1799 = vst.msk [vmem:[#allocation2 + $0x368] sm:$0xff] %vm479, %v1644
    %1800 = vst.msk [vmem:[#allocation2 + $0x380] sm:$0xff] %vm479, %v1646
    %1801 = vst.msk [vmem:[#allocation2 + $0x398] sm:$0xff] %vm479, %v1648
    %1802 = vst.msk [vmem:[#allocation2 + $0x3b0] sm:$0xff] %vm479, %v1650
    %1803 = vst.msk [vmem:[#allocation2 + $0x3c8] sm:$0xff] %vm479, %v1652
    %1804 = vst.msk [vmem:[#allocation2 + $0x3e0] sm:$0xff] %vm479, %v1654
    %1805 = vst.msk [vmem:[#allocation2 + $0x3f8] sm:$0xff] %vm479, %v1656
    %1806 = vst.msk [vmem:[#allocation2 + $0x410] sm:$0xff] %vm479, %v1658
    %1807 = vst.msk [vmem:[#allocation2 + $0x428] sm:$0xff] %vm479, %v1660
    %1808 = vst.msk [vmem:[#allocation2 + $0x440] sm:$0xff] %vm479, %v1662
    %1809 = vst.msk [vmem:[#allocation2 + $0x458] sm:$0xff] %vm479, %v1664
    %1810 = vst.msk [vmem:[#allocation2 + $0x470] sm:$0xff] %vm479, %v1666
    %1811 = vst.msk [vmem:[#allocation2 + $0x488] sm:$0xff] %vm479, %v1668
    %1812 = vst.msk [vmem:[#allocation2 + $0x4a0] sm:$0xff] %vm479, %v1670
    %1813 = vst.msk [vmem:[#allocation2 + $0x4b8] sm:$0xff] %vm479, %v1672
    %1814 = vst.msk [vmem:[#allocation2 + $0x4d0] sm:$0xff] %vm479, %v1674
    %1815 = vst.msk [vmem:[#allocation2 + $0x4e8] sm:$0xff] %vm479, %v1676
    %1816 = vst.msk [vmem:[#allocation2 + $0x500] sm:$0xff] %vm479, %v1678
    %1817 = vst.msk [vmem:[#allocation2 + $0x518] sm:$0xff] %vm479, %v1680
    %1818 = vst.msk [vmem:[#allocation2 + $0x530] sm:$0xff] %vm479, %v1682
    %1819 = vst.msk [vmem:[#allocation2 + $0x548] sm:$0xff] %vm479, %v1684
    %1820 = vst.msk [vmem:[#allocation2 + $0x560] sm:$0xff] %vm479, %v1686
    %1821 = vst.msk [vmem:[#allocation2 + $0x578] sm:$0xff] %vm479, %v1688
    %1822 = vst.msk [vmem:[#allocation2 + $0x590] sm:$0xff] %vm479, %v1690
    %1823 = vst.msk [vmem:[#allocation2 + $0x5a8] sm:$0xff] %vm479, %v1692
    %1824 = vst.msk [vmem:[#allocation2 + $0x5c0] sm:$0xff] %vm479, %v1694
    %1825 = vst.msk [vmem:[#allocation2 + $0x5d8] sm:$0xff] %vm479, %v1696
    %1826 = vst.msk [vmem:[#allocation2 + $0x5f0] sm:$0xff] %vm479, %v1698
    %s1827 = scalar_lea.vmem %s0, 48
    %v1828 = vld [vmem:[%s1827] sm:$0xff]
    %v1829 = vld [vmem:[%s1827 + $0x8] sm:$0xff]
    %v1830 = vld [vmem:[%s1827 + $0x18] sm:$0xff]
    %v1831 = vld [vmem:[%s1827 + $0x20] sm:$0xff]
    %v1832 = vld [vmem:[%s1827 + $0x30] sm:$0xff]
    %v1833 = vld [vmem:[%s1827 + $0x38] sm:$0xff]
    %v1834 = vld [vmem:[%s1827 + $0x48] sm:$0xff]
    %v1835 = vld [vmem:[%s1827 + $0x50] sm:$0xff]
    %v1836 = vld [vmem:[%s1827 + $0x60] sm:$0xff]
    %v1837 = vld [vmem:[%s1827 + $0x68] sm:$0xff]
    %v1838 = vld [vmem:[%s1827 + $0x78] sm:$0xff]
    %v1839 = vld [vmem:[%s1827 + $0x80] sm:$0xff]
    %v1840 = vld [vmem:[%s1827 + $0x90] sm:$0xff]
    %v1841 = vld [vmem:[%s1827 + $0x98] sm:$0xff]
    %v1842 = vld [vmem:[%s1827 + $0xa8] sm:$0xff]
    %v1843 = vld [vmem:[%s1827 + $0xb0] sm:$0xff]
    %v1844 = vld [vmem:[%s1827 + $0xc0] sm:$0xff]
    %v1845 = vld [vmem:[%s1827 + $0xc8] sm:$0xff]
    %v1846 = vld [vmem:[%s1827 + $0xd8] sm:$0xff]
    %v1847 = vld [vmem:[%s1827 + $0xe0] sm:$0xff]
    %v1848 = vld [vmem:[%s1827 + $0xf0] sm:$0xff]
    %v1849 = vld [vmem:[%s1827 + $0xf8] sm:$0xff]
    %v1850 = vld [vmem:[%s1827 + $0x108] sm:$0xff]
    %v1851 = vld [vmem:[%s1827 + $0x110] sm:$0xff]
    %v1852 = vld [vmem:[%s1827 + $0x120] sm:$0xff]
    %v1853 = vld [vmem:[%s1827 + $0x128] sm:$0xff]
    %v1854 = vld [vmem:[%s1827 + $0x138] sm:$0xff]
    %v1855 = vld [vmem:[%s1827 + $0x140] sm:$0xff]
    %v1856 = vld [vmem:[%s1827 + $0x150] sm:$0xff]
    %v1857 = vld [vmem:[%s1827 + $0x158] sm:$0xff]
    %v1858 = vld [vmem:[%s1827 + $0x168] sm:$0xff]
    %v1859 = vld [vmem:[%s1827 + $0x170] sm:$0xff]
    %v1860 = vld [vmem:[%s1827 + $0x1b0] sm:$0xff]
    %v1861 = vld [vmem:[%s1827 + $0x1b8] sm:$0xff]
    %v1862 = vld [vmem:[%s1827 + $0x1c8] sm:$0xff]
    %v1863 = vld [vmem:[%s1827 + $0x1d0] sm:$0xff]
    %v1864 = vld [vmem:[%s1827 + $0x1e0] sm:$0xff]
    %v1865 = vld [vmem:[%s1827 + $0x1e8] sm:$0xff]
    %v1866 = vld [vmem:[%s1827 + $0x1f8] sm:$0xff]
    %v1867 = vld [vmem:[%s1827 + $0x200] sm:$0xff]
    %v1868 = vld [vmem:[%s1827 + $0x210] sm:$0xff]
    %v1869 = vld [vmem:[%s1827 + $0x218] sm:$0xff]
    %v1870 = vld [vmem:[%s1827 + $0x228] sm:$0xff]
    %v1871 = vld [vmem:[%s1827 + $0x230] sm:$0xff]
    %v1872 = vld [vmem:[%s1827 + $0x240] sm:$0xff]
    %v1873 = vld [vmem:[%s1827 + $0x248] sm:$0xff]
    %v1874 = vld [vmem:[%s1827 + $0x258] sm:$0xff]
    %v1875 = vld [vmem:[%s1827 + $0x260] sm:$0xff]
    %v1876 = vld [vmem:[%s1827 + $0x270] sm:$0xff]
    %v1877 = vld [vmem:[%s1827 + $0x278] sm:$0xff]
    %v1878 = vld [vmem:[%s1827 + $0x288] sm:$0xff]
    %v1879 = vld [vmem:[%s1827 + $0x290] sm:$0xff]
    %v1880 = vld [vmem:[%s1827 + $0x2a0] sm:$0xff]
    %v1881 = vld [vmem:[%s1827 + $0x2a8] sm:$0xff]
    %v1882 = vld [vmem:[%s1827 + $0x2b8] sm:$0xff]
    %v1883 = vld [vmem:[%s1827 + $0x2c0] sm:$0xff]
    %v1884 = vld [vmem:[%s1827 + $0x2d0] sm:$0xff]
    %v1885 = vld [vmem:[%s1827 + $0x2d8] sm:$0xff]
    %v1886 = vld [vmem:[%s1827 + $0x2e8] sm:$0xff]
    %v1887 = vld [vmem:[%s1827 + $0x2f0] sm:$0xff]
    %v1888 = vld [vmem:[%s1827 + $0x300] sm:$0xff]
    %v1889 = vld [vmem:[%s1827 + $0x308] sm:$0xff]
    %v1890 = vld [vmem:[%s1827 + $0x318] sm:$0xff]
    %v1891 = vld [vmem:[%s1827 + $0x320] sm:$0xff]
    %1956 = vrot.lane.b32.xlu0 %v1828, 64
    %v1957 = vpop.permute.xlu0 %1956
    %1958 = vrot.lane.b32.xlu0 %v1829, 64
    %v1959 = vpop.permute.xlu0 %1958
    %1960 = vrot.lane.b32.xlu0 %v1830, 64
    %v1961 = vpop.permute.xlu0 %1960
    %1962 = vrot.lane.b32.xlu0 %v1831, 64
    %v1963 = vpop.permute.xlu0 %1962
    %1964 = vrot.lane.b32.xlu0 %v1832, 64
    %v1965 = vpop.permute.xlu0 %1964
    %1966 = vrot.lane.b32.xlu0 %v1833, 64
    %v1967 = vpop.permute.xlu0 %1966
    %1968 = vrot.lane.b32.xlu0 %v1834, 64
    %v1969 = vpop.permute.xlu0 %1968
    %1970 = vrot.lane.b32.xlu0 %v1835, 64
    %v1971 = vpop.permute.xlu0 %1970
    %1972 = vrot.lane.b32.xlu0 %v1836, 64
    %v1973 = vpop.permute.xlu0 %1972
    %1974 = vrot.lane.b32.xlu0 %v1837, 64
    %v1975 = vpop.permute.xlu0 %1974
    %1976 = vrot.lane.b32.xlu0 %v1838, 64
    %v1977 = vpop.permute.xlu0 %1976
    %1978 = vrot.lane.b32.xlu0 %v1839, 64
    %v1979 = vpop.permute.xlu0 %1978
    %1980 = vrot.lane.b32.xlu0 %v1840, 64
    %v1981 = vpop.permute.xlu0 %1980
    %1982 = vrot.lane.b32.xlu0 %v1841, 64
    %v1983 = vpop.permute.xlu0 %1982
    %1984 = vrot.lane.b32.xlu0 %v1842, 64
    %v1985 = vpop.permute.xlu0 %1984
    %1986 = vrot.lane.b32.xlu0 %v1843, 64
    %v1987 = vpop.permute.xlu0 %1986
    %1988 = vrot.lane.b32.xlu0 %v1844, 64
    %v1989 = vpop.permute.xlu0 %1988
    %1990 = vrot.lane.b32.xlu0 %v1845, 64
    %v1991 = vpop.permute.xlu0 %1990
    %1992 = vrot.lane.b32.xlu0 %v1846, 64
    %v1993 = vpop.permute.xlu0 %1992
    %1994 = vrot.lane.b32.xlu0 %v1847, 64
    %v1995 = vpop.permute.xlu0 %1994
    %1996 = vrot.lane.b32.xlu0 %v1848, 64
    %v1997 = vpop.permute.xlu0 %1996
    %1998 = vrot.lane.b32.xlu0 %v1849, 64
    %v1999 = vpop.permute.xlu0 %1998
    %2000 = vrot.lane.b32.xlu0 %v1850, 64
    %v2001 = vpop.permute.xlu0 %2000
    %2002 = vrot.lane.b32.xlu0 %v1851, 64
    %v2003 = vpop.permute.xlu0 %2002
    %2004 = vrot.lane.b32.xlu0 %v1852, 64
    %v2005 = vpop.permute.xlu0 %2004
    %2006 = vrot.lane.b32.xlu0 %v1853, 64
    %v2007 = vpop.permute.xlu0 %2006
    %2008 = vrot.lane.b32.xlu0 %v1854, 64
    %v2009 = vpop.permute.xlu0 %2008
    %2010 = vrot.lane.b32.xlu0 %v1855, 64
    %v2011 = vpop.permute.xlu0 %2010
    %2012 = vrot.lane.b32.xlu0 %v1856, 64
    %v2013 = vpop.permute.xlu0 %2012
    %2014 = vrot.lane.b32.xlu0 %v1857, 64
    %v2015 = vpop.permute.xlu0 %2014
    %2016 = vrot.lane.b32.xlu0 %v1858, 64
    %v2017 = vpop.permute.xlu0 %2016
    %2018 = vrot.lane.b32.xlu0 %v1859, 64
    %v2019 = vpop.permute.xlu0 %2018
    %2020 = vrot.lane.b32.xlu0 %v1860, 64
    %v2021 = vpop.permute.xlu0 %2020
    %2022 = vrot.lane.b32.xlu0 %v1861, 64
    %v2023 = vpop.permute.xlu0 %2022
    %2024 = vrot.lane.b32.xlu0 %v1862, 64
    %v2025 = vpop.permute.xlu0 %2024
    %2026 = vrot.lane.b32.xlu0 %v1863, 64
    %v2027 = vpop.permute.xlu0 %2026
    %2028 = vrot.lane.b32.xlu0 %v1864, 64
    %v2029 = vpop.permute.xlu0 %2028
    %2030 = vrot.lane.b32.xlu0 %v1865, 64
    %v2031 = vpop.permute.xlu0 %2030
    %2032 = vrot.lane.b32.xlu0 %v1866, 64
    %v2033 = vpop.permute.xlu0 %2032
    %2034 = vrot.lane.b32.xlu0 %v1867, 64
    %v2035 = vpop.permute.xlu0 %2034
    %2036 = vrot.lane.b32.xlu0 %v1868, 64
    %v2037 = vpop.permute.xlu0 %2036
    %2038 = vrot.lane.b32.xlu0 %v1869, 64
    %v2039 = vpop.permute.xlu0 %2038
    %2040 = vrot.lane.b32.xlu0 %v1870, 64
    %v2041 = vpop.permute.xlu0 %2040
    %2042 = vrot.lane.b32.xlu0 %v1871, 64
    %v2043 = vpop.permute.xlu0 %2042
    %2044 = vrot.lane.b32.xlu0 %v1872, 64
    %v2045 = vpop.permute.xlu0 %2044
    %2046 = vrot.lane.b32.xlu0 %v1873, 64
    %v2047 = vpop.permute.xlu0 %2046
    %2048 = vrot.lane.b32.xlu0 %v1874, 64
    %v2049 = vpop.permute.xlu0 %2048
    %2050 = vrot.lane.b32.xlu0 %v1875, 64
    %v2051 = vpop.permute.xlu0 %2050
    %2052 = vrot.lane.b32.xlu0 %v1876, 64
    %v2053 = vpop.permute.xlu0 %2052
    %2054 = vrot.lane.b32.xlu0 %v1877, 64
    %v2055 = vpop.permute.xlu0 %2054
    %2056 = vrot.lane.b32.xlu0 %v1878, 64
    %v2057 = vpop.permute.xlu0 %2056
    %2058 = vrot.lane.b32.xlu0 %v1879, 64
    %v2059 = vpop.permute.xlu0 %2058
    %2060 = vrot.lane.b32.xlu0 %v1880, 64
    %v2061 = vpop.permute.xlu0 %2060
    %2062 = vrot.lane.b32.xlu0 %v1881, 64
    %v2063 = vpop.permute.xlu0 %2062
    %2064 = vrot.lane.b32.xlu0 %v1882, 64
    %v2065 = vpop.permute.xlu0 %2064
    %2066 = vrot.lane.b32.xlu0 %v1883, 64
    %v2067 = vpop.permute.xlu0 %2066
    %2068 = vrot.lane.b32.xlu0 %v1884, 64
    %v2069 = vpop.permute.xlu0 %2068
    %2070 = vrot.lane.b32.xlu0 %v1885, 64
    %v2071 = vpop.permute.xlu0 %2070
    %2072 = vrot.lane.b32.xlu0 %v1886, 64
    %v2073 = vpop.permute.xlu0 %2072
    %2074 = vrot.lane.b32.xlu0 %v1887, 64
    %v2075 = vpop.permute.xlu0 %2074
    %2076 = vrot.lane.b32.xlu0 %v1888, 64
    %v2077 = vpop.permute.xlu0 %2076
    %2078 = vrot.lane.b32.xlu0 %v1889, 64
    %v2079 = vpop.permute.xlu0 %2078
    %2080 = vrot.lane.b32.xlu0 %v1890, 64
    %v2081 = vpop.permute.xlu0 %2080
    %2082 = vrot.lane.b32.xlu0 %v1891, 64
    %v2083 = vpop.permute.xlu0 %2082
    %2148 = vst.msk [vmem:[#allocation2 + $0x8] sm:$0xff] %vm864, %v1957
    %2149 = vst.msk [vmem:[#allocation2 + $0x20] sm:$0xff] %vm864, %v1959
    %2150 = vst.msk [vmem:[#allocation2 + $0x38] sm:$0xff] %vm864, %v1961
    %2151 = vst.msk [vmem:[#allocation2 + $0x50] sm:$0xff] %vm864, %v1963
    %2152 = vst.msk [vmem:[#allocation2 + $0x68] sm:$0xff] %vm864, %v1965
    %2153 = vst.msk [vmem:[#allocation2 + $0x80] sm:$0xff] %vm864, %v1967
    %2154 = vst.msk [vmem:[#allocation2 + $0x98] sm:$0xff] %vm864, %v1969
    %2155 = vst.msk [vmem:[#allocation2 + $0xb0] sm:$0xff] %vm864, %v1971
    %2156 = vst.msk [vmem:[#allocation2 + $0xc8] sm:$0xff] %vm864, %v1973
    %2157 = vst.msk [vmem:[#allocation2 + $0xe0] sm:$0xff] %vm864, %v1975
    %2158 = vst.msk [vmem:[#allocation2 + $0xf8] sm:$0xff] %vm864, %v1977
    %2159 = vst.msk [vmem:[#allocation2 + $0x110] sm:$0xff] %vm864, %v1979
    %2160 = vst.msk [vmem:[#allocation2 + $0x128] sm:$0xff] %vm864, %v1981
    %2161 = vst.msk [vmem:[#allocation2 + $0x140] sm:$0xff] %vm864, %v1983
    %2162 = vst.msk [vmem:[#allocation2 + $0x158] sm:$0xff] %vm864, %v1985
    %2163 = vst.msk [vmem:[#allocation2 + $0x170] sm:$0xff] %vm864, %v1987
    %2164 = vst.msk [vmem:[#allocation2 + $0x188] sm:$0xff] %vm864, %v1989
    %2165 = vst.msk [vmem:[#allocation2 + $0x1a0] sm:$0xff] %vm864, %v1991
    %2166 = vst.msk [vmem:[#allocation2 + $0x1b8] sm:$0xff] %vm864, %v1993
    %2167 = vst.msk [vmem:[#allocation2 + $0x1d0] sm:$0xff] %vm864, %v1995
    %2168 = vst.msk [vmem:[#allocation2 + $0x1e8] sm:$0xff] %vm864, %v1997
    %2169 = vst.msk [vmem:[#allocation2 + $0x200] sm:$0xff] %vm864, %v1999
    %2170 = vst.msk [vmem:[#allocation2 + $0x218] sm:$0xff] %vm864, %v2001
    %2171 = vst.msk [vmem:[#allocation2 + $0x230] sm:$0xff] %vm864, %v2003
    %2172 = vst.msk [vmem:[#allocation2 + $0x248] sm:$0xff] %vm864, %v2005
    %2173 = vst.msk [vmem:[#allocation2 + $0x260] sm:$0xff] %vm864, %v2007
    %2174 = vst.msk [vmem:[#allocation2 + $0x278] sm:$0xff] %vm864, %v2009
    %2175 = vst.msk [vmem:[#allocation2 + $0x290] sm:$0xff] %vm864, %v2011
    %2176 = vst.msk [vmem:[#allocation2 + $0x2a8] sm:$0xff] %vm864, %v2013
    %2177 = vst.msk [vmem:[#allocation2 + $0x2c0] sm:$0xff] %vm864, %v2015
    %2178 = vst.msk [vmem:[#allocation2 + $0x2d8] sm:$0xff] %vm864, %v2017
    %2179 = vst.msk [vmem:[#allocation2 + $0x2f0] sm:$0xff] %vm864, %v2019
    %2180 = vst.msk [vmem:[#allocation2 + $0x308] sm:$0xff] %vm864, %v2021
    %2181 = vst.msk [vmem:[#allocation2 + $0x320] sm:$0xff] %vm864, %v2023
    %2182 = vst.msk [vmem:[#allocation2 + $0x338] sm:$0xff] %vm864, %v2025
    %2183 = vst.msk [vmem:[#allocation2 + $0x350] sm:$0xff] %vm864, %v2027
    %2184 = vst.msk [vmem:[#allocation2 + $0x368] sm:$0xff] %vm864, %v2029
    %2185 = vst.msk [vmem:[#allocation2 + $0x380] sm:$0xff] %vm864, %v2031
    %2186 = vst.msk [vmem:[#allocation2 + $0x398] sm:$0xff] %vm864, %v2033
    %2187 = vst.msk [vmem:[#allocation2 + $0x3b0] sm:$0xff] %vm864, %v2035
    %2188 = vst.msk [vmem:[#allocation2 + $0x3c8] sm:$0xff] %vm864, %v2037
    %2189 = vst.msk [vmem:[#allocation2 + $0x3e0] sm:$0xff] %vm864, %v2039
    %2190 = vst.msk [vmem:[#allocation2 + $0x3f8] sm:$0xff] %vm864, %v2041
    %2191 = vst.msk [vmem:[#allocation2 + $0x410] sm:$0xff] %vm864, %v2043
    %2192 = vst.msk [vmem:[#allocation2 + $0x428] sm:$0xff] %vm864, %v2045
    %2193 = vst.msk [vmem:[#allocation2 + $0x440] sm:$0xff] %vm864, %v2047
    %2194 = vst.msk [vmem:[#allocation2 + $0x458] sm:$0xff] %vm864, %v2049
    %2195 = vst.msk [vmem:[#allocation2 + $0x470] sm:$0xff] %vm864, %v2051
    %2196 = vst.msk [vmem:[#allocation2 + $0x488] sm:$0xff] %vm864, %v2053
    %2197 = vst.msk [vmem:[#allocation2 + $0x4a0] sm:$0xff] %vm864, %v2055
    %2198 = vst.msk [vmem:[#allocation2 + $0x4b8] sm:$0xff] %vm864, %v2057
    %2199 = vst.msk [vmem:[#allocation2 + $0x4d0] sm:$0xff] %vm864, %v2059
    %2200 = vst.msk [vmem:[#allocation2 + $0x4e8] sm:$0xff] %vm864, %v2061
    %2201 = vst.msk [vmem:[#allocation2 + $0x500] sm:$0xff] %vm864, %v2063
    %2202 = vst.msk [vmem:[#allocation2 + $0x518] sm:$0xff] %vm864, %v2065
    %2203 = vst.msk [vmem:[#allocation2 + $0x530] sm:$0xff] %vm864, %v2067
    %2204 = vst.msk [vmem:[#allocation2 + $0x548] sm:$0xff] %vm864, %v2069
    %2205 = vst.msk [vmem:[#allocation2 + $0x560] sm:$0xff] %vm864, %v2071
    %2206 = vst.msk [vmem:[#allocation2 + $0x578] sm:$0xff] %vm864, %v2073
    %2207 = vst.msk [vmem:[#allocation2 + $0x590] sm:$0xff] %vm864, %v2075
    %2208 = vst.msk [vmem:[#allocation2 + $0x5a8] sm:$0xff] %vm864, %v2077
    %2209 = vst.msk [vmem:[#allocation2 + $0x5c0] sm:$0xff] %vm864, %v2079
    %2210 = vst.msk [vmem:[#allocation2 + $0x5d8] sm:$0xff] %vm864, %v2081
    %2211 = vst.msk [vmem:[#allocation2 + $0x5f0] sm:$0xff] %vm864, %v2083
    %v2212 = vld [vmem:[%s1827 + $0x1] sm:$0xff]
    %v2213 = vld [vmem:[%s1827 + $0x9] sm:$0xff]
    %v2214 = vld [vmem:[%s1827 + $0x19] sm:$0xff]
    %v2215 = vld [vmem:[%s1827 + $0x21] sm:$0xff]
    %v2216 = vld [vmem:[%s1827 + $0x31] sm:$0xff]
    %v2217 = vld [vmem:[%s1827 + $0x39] sm:$0xff]
    %v2218 = vld [vmem:[%s1827 + $0x49] sm:$0xff]
    %v2219 = vld [vmem:[%s1827 + $0x51] sm:$0xff]
    %v2220 = vld [vmem:[%s1827 + $0x61] sm:$0xff]
    %v2221 = vld [vmem:[%s1827 + $0x69] sm:$0xff]
    %v2222 = vld [vmem:[%s1827 + $0x79] sm:$0xff]
    %v2223 = vld [vmem:[%s1827 + $0x81] sm:$0xff]
    %v2224 = vld [vmem:[%s1827 + $0x91] sm:$0xff]
    %v2225 = vld [vmem:[%s1827 + $0x99] sm:$0xff]
    %v2226 = vld [vmem:[%s1827 + $0xa9] sm:$0xff]
    %v2227 = vld [vmem:[%s1827 + $0xb1] sm:$0xff]
    %v2228 = vld [vmem:[%s1827 + $0xc1] sm:$0xff]
    %v2229 = vld [vmem:[%s1827 + $0xc9] sm:$0xff]
    %v2230 = vld [vmem:[%s1827 + $0xd9] sm:$0xff]
    %v2231 = vld [vmem:[%s1827 + $0xe1] sm:$0xff]
    %v2232 = vld [vmem:[%s1827 + $0xf1] sm:$0xff]
    %v2233 = vld [vmem:[%s1827 + $0xf9] sm:$0xff]
    %v2234 = vld [vmem:[%s1827 + $0x109] sm:$0xff]
    %v2235 = vld [vmem:[%s1827 + $0x111] sm:$0xff]
    %v2236 = vld [vmem:[%s1827 + $0x121] sm:$0xff]
    %v2237 = vld [vmem:[%s1827 + $0x129] sm:$0xff]
    %v2238 = vld [vmem:[%s1827 + $0x139] sm:$0xff]
    %v2239 = vld [vmem:[%s1827 + $0x141] sm:$0xff]
    %v2240 = vld [vmem:[%s1827 + $0x151] sm:$0xff]
    %v2241 = vld [vmem:[%s1827 + $0x159] sm:$0xff]
    %v2242 = vld [vmem:[%s1827 + $0x169] sm:$0xff]
    %v2243 = vld [vmem:[%s1827 + $0x171] sm:$0xff]
    %v2244 = vld [vmem:[%s1827 + $0x1b1] sm:$0xff]
    %v2245 = vld [vmem:[%s1827 + $0x1b9] sm:$0xff]
    %v2246 = vld [vmem:[%s1827 + $0x1c9] sm:$0xff]
    %v2247 = vld [vmem:[%s1827 + $0x1d1] sm:$0xff]
    %v2248 = vld [vmem:[%s1827 + $0x1e1] sm:$0xff]
    %v2249 = vld [vmem:[%s1827 + $0x1e9] sm:$0xff]
    %v2250 = vld [vmem:[%s1827 + $0x1f9] sm:$0xff]
    %v2251 = vld [vmem:[%s1827 + $0x201] sm:$0xff]
    %v2252 = vld [vmem:[%s1827 + $0x211] sm:$0xff]
    %v2253 = vld [vmem:[%s1827 + $0x219] sm:$0xff]
    %v2254 = vld [vmem:[%s1827 + $0x229] sm:$0xff]
    %v2255 = vld [vmem:[%s1827 + $0x231] sm:$0xff]
    %v2256 = vld [vmem:[%s1827 + $0x241] sm:$0xff]
    %v2257 = vld [vmem:[%s1827 + $0x249] sm:$0xff]
    %v2258 = vld [vmem:[%s1827 + $0x259] sm:$0xff]
    %v2259 = vld [vmem:[%s1827 + $0x261] sm:$0xff]
    %v2260 = vld [vmem:[%s1827 + $0x271] sm:$0xff]
    %v2261 = vld [vmem:[%s1827 + $0x279] sm:$0xff]
    %v2262 = vld [vmem:[%s1827 + $0x289] sm:$0xff]
    %v2263 = vld [vmem:[%s1827 + $0x291] sm:$0xff]
    %v2264 = vld [vmem:[%s1827 + $0x2a1] sm:$0xff]
    %v2265 = vld [vmem:[%s1827 + $0x2a9] sm:$0xff]
    %v2266 = vld [vmem:[%s1827 + $0x2b9] sm:$0xff]
    %v2267 = vld [vmem:[%s1827 + $0x2c1] sm:$0xff]
    %v2268 = vld [vmem:[%s1827 + $0x2d1] sm:$0xff]
    %v2269 = vld [vmem:[%s1827 + $0x2d9] sm:$0xff]
    %v2270 = vld [vmem:[%s1827 + $0x2e9] sm:$0xff]
    %v2271 = vld [vmem:[%s1827 + $0x2f1] sm:$0xff]
    %v2272 = vld [vmem:[%s1827 + $0x301] sm:$0xff]
    %v2273 = vld [vmem:[%s1827 + $0x309] sm:$0xff]
    %v2274 = vld [vmem:[%s1827 + $0x319] sm:$0xff]
    %v2275 = vld [vmem:[%s1827 + $0x321] sm:$0xff]
    %2340 = vrot.lane.b32.xlu0 %v2212, 96
    %v2341 = vpop.permute.xlu0 %2340
    %2342 = vrot.lane.b32.xlu0 %v2213, 96
    %v2343 = vpop.permute.xlu0 %2342
    %2344 = vrot.lane.b32.xlu0 %v2214, 96
    %v2345 = vpop.permute.xlu0 %2344
    %2346 = vrot.lane.b32.xlu0 %v2215, 96
    %v2347 = vpop.permute.xlu0 %2346
    %2348 = vrot.lane.b32.xlu0 %v2216, 96
    %v2349 = vpop.permute.xlu0 %2348
    %2350 = vrot.lane.b32.xlu0 %v2217, 96
    %v2351 = vpop.permute.xlu0 %2350
    %2352 = vrot.lane.b32.xlu0 %v2218, 96
    %v2353 = vpop.permute.xlu0 %2352
    %2354 = vrot.lane.b32.xlu0 %v2219, 96
    %v2355 = vpop.permute.xlu0 %2354
    %2356 = vrot.lane.b32.xlu0 %v2220, 96
    %v2357 = vpop.permute.xlu0 %2356
    %2358 = vrot.lane.b32.xlu0 %v2221, 96
    %v2359 = vpop.permute.xlu0 %2358
    %2360 = vrot.lane.b32.xlu0 %v2222, 96
    %v2361 = vpop.permute.xlu0 %2360
    %2362 = vrot.lane.b32.xlu0 %v2223, 96
    %v2363 = vpop.permute.xlu0 %2362
    %2364 = vrot.lane.b32.xlu0 %v2224, 96
    %v2365 = vpop.permute.xlu0 %2364
    %2366 = vrot.lane.b32.xlu0 %v2225, 96
    %v2367 = vpop.permute.xlu0 %2366
    %2368 = vrot.lane.b32.xlu0 %v2226, 96
    %v2369 = vpop.permute.xlu0 %2368
    %2370 = vrot.lane.b32.xlu0 %v2227, 96
    %v2371 = vpop.permute.xlu0 %2370
    %2372 = vrot.lane.b32.xlu0 %v2228, 96
    %v2373 = vpop.permute.xlu0 %2372
    %2374 = vrot.lane.b32.xlu0 %v2229, 96
    %v2375 = vpop.permute.xlu0 %2374
    %2376 = vrot.lane.b32.xlu0 %v2230, 96
    %v2377 = vpop.permute.xlu0 %2376
    %2378 = vrot.lane.b32.xlu0 %v2231, 96
    %v2379 = vpop.permute.xlu0 %2378
    %2380 = vrot.lane.b32.xlu0 %v2232, 96
    %v2381 = vpop.permute.xlu0 %2380
    %2382 = vrot.lane.b32.xlu0 %v2233, 96
    %v2383 = vpop.permute.xlu0 %2382
    %2384 = vrot.lane.b32.xlu0 %v2234, 96
    %v2385 = vpop.permute.xlu0 %2384
    %2386 = vrot.lane.b32.xlu0 %v2235, 96
    %v2387 = vpop.permute.xlu0 %2386
    %2388 = vrot.lane.b32.xlu0 %v2236, 96
    %v2389 = vpop.permute.xlu0 %2388
    %2390 = vrot.lane.b32.xlu0 %v2237, 96
    %v2391 = vpop.permute.xlu0 %2390
    %2392 = vrot.lane.b32.xlu0 %v2238, 96
    %v2393 = vpop.permute.xlu0 %2392
    %2394 = vrot.lane.b32.xlu0 %v2239, 96
    %v2395 = vpop.permute.xlu0 %2394
    %2396 = vrot.lane.b32.xlu0 %v2240, 96
    %v2397 = vpop.permute.xlu0 %2396
    %2398 = vrot.lane.b32.xlu0 %v2241, 96
    %v2399 = vpop.permute.xlu0 %2398
    %2400 = vrot.lane.b32.xlu0 %v2242, 96
    %v2401 = vpop.permute.xlu0 %2400
    %2402 = vrot.lane.b32.xlu0 %v2243, 96
    %v2403 = vpop.permute.xlu0 %2402
    %2404 = vrot.lane.b32.xlu0 %v2244, 96
    %v2405 = vpop.permute.xlu0 %2404
    %2406 = vrot.lane.b32.xlu0 %v2245, 96
    %v2407 = vpop.permute.xlu0 %2406
    %2408 = vrot.lane.b32.xlu0 %v2246, 96
    %v2409 = vpop.permute.xlu0 %2408
    %2410 = vrot.lane.b32.xlu0 %v2247, 96
    %v2411 = vpop.permute.xlu0 %2410
    %2412 = vrot.lane.b32.xlu0 %v2248, 96
    %v2413 = vpop.permute.xlu0 %2412
    %2414 = vrot.lane.b32.xlu0 %v2249, 96
    %v2415 = vpop.permute.xlu0 %2414
    %2416 = vrot.lane.b32.xlu0 %v2250, 96
    %v2417 = vpop.permute.xlu0 %2416
    %2418 = vrot.lane.b32.xlu0 %v2251, 96
    %v2419 = vpop.permute.xlu0 %2418
    %2420 = vrot.lane.b32.xlu0 %v2252, 96
    %v2421 = vpop.permute.xlu0 %2420
    %2422 = vrot.lane.b32.xlu0 %v2253, 96
    %v2423 = vpop.permute.xlu0 %2422
    %2424 = vrot.lane.b32.xlu0 %v2254, 96
    %v2425 = vpop.permute.xlu0 %2424
    %2426 = vrot.lane.b32.xlu0 %v2255, 96
    %v2427 = vpop.permute.xlu0 %2426
    %2428 = vrot.lane.b32.xlu0 %v2256, 96
    %v2429 = vpop.permute.xlu0 %2428
    %2430 = vrot.lane.b32.xlu0 %v2257, 96
    %v2431 = vpop.permute.xlu0 %2430
    %2432 = vrot.lane.b32.xlu0 %v2258, 96
    %v2433 = vpop.permute.xlu0 %2432
    %2434 = vrot.lane.b32.xlu0 %v2259, 96
    %v2435 = vpop.permute.xlu0 %2434
    %2436 = vrot.lane.b32.xlu0 %v2260, 96
    %v2437 = vpop.permute.xlu0 %2436
    %2438 = vrot.lane.b32.xlu0 %v2261, 96
    %v2439 = vpop.permute.xlu0 %2438
    %2440 = vrot.lane.b32.xlu0 %v2262, 96
    %v2441 = vpop.permute.xlu0 %2440
    %2442 = vrot.lane.b32.xlu0 %v2263, 96
    %v2443 = vpop.permute.xlu0 %2442
    %2444 = vrot.lane.b32.xlu0 %v2264, 96
    %v2445 = vpop.permute.xlu0 %2444
    %2446 = vrot.lane.b32.xlu0 %v2265, 96
    %v2447 = vpop.permute.xlu0 %2446
    %2448 = vrot.lane.b32.xlu0 %v2266, 96
    %v2449 = vpop.permute.xlu0 %2448
    %2450 = vrot.lane.b32.xlu0 %v2267, 96
    %v2451 = vpop.permute.xlu0 %2450
    %2452 = vrot.lane.b32.xlu0 %v2268, 96
    %v2453 = vpop.permute.xlu0 %2452
    %2454 = vrot.lane.b32.xlu0 %v2269, 96
    %v2455 = vpop.permute.xlu0 %2454
    %2456 = vrot.lane.b32.xlu0 %v2270, 96
    %v2457 = vpop.permute.xlu0 %2456
    %2458 = vrot.lane.b32.xlu0 %v2271, 96
    %v2459 = vpop.permute.xlu0 %2458
    %2460 = vrot.lane.b32.xlu0 %v2272, 96
    %v2461 = vpop.permute.xlu0 %2460
    %2462 = vrot.lane.b32.xlu0 %v2273, 96
    %v2463 = vpop.permute.xlu0 %2462
    %2464 = vrot.lane.b32.xlu0 %v2274, 96
    %v2465 = vpop.permute.xlu0 %2464
    %2466 = vrot.lane.b32.xlu0 %v2275, 96
    %v2467 = vpop.permute.xlu0 %2466
    %2532 = vst.msk [vmem:[#allocation2 + $0x8] sm:$0xff] %vm1250, %v2341
    %2533 = vst.msk [vmem:[#allocation2 + $0x20] sm:$0xff] %vm1250, %v2343
    %2534 = vst.msk [vmem:[#allocation2 + $0x38] sm:$0xff] %vm1250, %v2345
    %2535 = vst.msk [vmem:[#allocation2 + $0x50] sm:$0xff] %vm1250, %v2347
    %2536 = vst.msk [vmem:[#allocation2 + $0x68] sm:$0xff] %vm1250, %v2349
    %2537 = vst.msk [vmem:[#allocation2 + $0x80] sm:$0xff] %vm1250, %v2351
    %2538 = vst.msk [vmem:[#allocation2 + $0x98] sm:$0xff] %vm1250, %v2353
    %2539 = vst.msk [vmem:[#allocation2 + $0xb0] sm:$0xff] %vm1250, %v2355
    %2540 = vst.msk [vmem:[#allocation2 + $0xc8] sm:$0xff] %vm1250, %v2357
    %2541 = vst.msk [vmem:[#allocation2 + $0xe0] sm:$0xff] %vm1250, %v2359
    %2542 = vst.msk [vmem:[#allocation2 + $0xf8] sm:$0xff] %vm1250, %v2361
    %2543 = vst.msk [vmem:[#allocation2 + $0x110] sm:$0xff] %vm1250, %v2363
    %2544 = vst.msk [vmem:[#allocation2 + $0x128] sm:$0xff] %vm1250, %v2365
    %2545 = vst.msk [vmem:[#allocation2 + $0x140] sm:$0xff] %vm1250, %v2367
    %2546 = vst.msk [vmem:[#allocation2 + $0x158] sm:$0xff] %vm1250, %v2369
    %2547 = vst.msk [vmem:[#allocation2 + $0x170] sm:$0xff] %vm1250, %v2371
    %2548 = vst.msk [vmem:[#allocation2 + $0x188] sm:$0xff] %vm1250, %v2373
    %2549 = vst.msk [vmem:[#allocation2 + $0x1a0] sm:$0xff] %vm1250, %v2375
    %2550 = vst.msk [vmem:[#allocation2 + $0x1b8] sm:$0xff] %vm1250, %v2377
    %2551 = vst.msk [vmem:[#allocation2 + $0x1d0] sm:$0xff] %vm1250, %v2379
    %2552 = vst.msk [vmem:[#allocation2 + $0x1e8] sm:$0xff] %vm1250, %v2381
    %2553 = vst.msk [vmem:[#allocation2 + $0x200] sm:$0xff] %vm1250, %v2383
    %2554 = vst.msk [vmem:[#allocation2 + $0x218] sm:$0xff] %vm1250, %v2385
    %2555 = vst.msk [vmem:[#allocation2 + $0x230] sm:$0xff] %vm1250, %v2387
    %2556 = vst.msk [vmem:[#allocation2 + $0x248] sm:$0xff] %vm1250, %v2389
    %2557 = vst.msk [vmem:[#allocation2 + $0x260] sm:$0xff] %vm1250, %v2391
    %2558 = vst.msk [vmem:[#allocation2 + $0x278] sm:$0xff] %vm1250, %v2393
    %2559 = vst.msk [vmem:[#allocation2 + $0x290] sm:$0xff] %vm1250, %v2395
    %2560 = vst.msk [vmem:[#allocation2 + $0x2a8] sm:$0xff] %vm1250, %v2397
    %2561 = vst.msk [vmem:[#allocation2 + $0x2c0] sm:$0xff] %vm1250, %v2399
    %2562 = vst.msk [vmem:[#allocation2 + $0x2d8] sm:$0xff] %vm1250, %v2401
    %2563 = vst.msk [vmem:[#allocation2 + $0x2f0] sm:$0xff] %vm1250, %v2403
    %2564 = vst.msk [vmem:[#allocation2 + $0x308] sm:$0xff] %vm1250, %v2405
    %2565 = vst.msk [vmem:[#allocation2 + $0x320] sm:$0xff] %vm1250, %v2407
    %2566 = vst.msk [vmem:[#allocation2 + $0x338] sm:$0xff] %vm1250, %v2409
    %2567 = vst.msk [vmem:[#allocation2 + $0x350] sm:$0xff] %vm1250, %v2411
    %2568 = vst.msk [vmem:[#allocation2 + $0x368] sm:$0xff] %vm1250, %v2413
    %2569 = vst.msk [vmem:[#allocation2 + $0x380] sm:$0xff] %vm1250, %v2415
    %2570 = vst.msk [vmem:[#allocation2 + $0x398] sm:$0xff] %vm1250, %v2417
    %2571 = vst.msk [vmem:[#allocation2 + $0x3b0] sm:$0xff] %vm1250, %v2419
    %2572 = vst.msk [vmem:[#allocation2 + $0x3c8] sm:$0xff] %vm1250, %v2421
    %2573 = vst.msk [vmem:[#allocation2 + $0x3e0] sm:$0xff] %vm1250, %v2423
    %2574 = vst.msk [vmem:[#allocation2 + $0x3f8] sm:$0xff] %vm1250, %v2425
    %2575 = vst.msk [vmem:[#allocation2 + $0x410] sm:$0xff] %vm1250, %v2427
    %2576 = vst.msk [vmem:[#allocation2 + $0x428] sm:$0xff] %vm1250, %v2429
    %2577 = vst.msk [vmem:[#allocation2 + $0x440] sm:$0xff] %vm1250, %v2431
    %2578 = vst.msk [vmem:[#allocation2 + $0x458] sm:$0xff] %vm1250, %v2433
    %2579 = vst.msk [vmem:[#allocation2 + $0x470] sm:$0xff] %vm1250, %v2435
    %2580 = vst.msk [vmem:[#allocation2 + $0x488] sm:$0xff] %vm1250, %v2437
    %2581 = vst.msk [vmem:[#allocation2 + $0x4a0] sm:$0xff] %vm1250, %v2439
    %2582 = vst.msk [vmem:[#allocation2 + $0x4b8] sm:$0xff] %vm1250, %v2441
    %2583 = vst.msk [vmem:[#allocation2 + $0x4d0] sm:$0xff] %vm1250, %v2443
    %2584 = vst.msk [vmem:[#allocation2 + $0x4e8] sm:$0xff] %vm1250, %v2445
    %2585 = vst.msk [vmem:[#allocation2 + $0x500] sm:$0xff] %vm1250, %v2447
    %2586 = vst.msk [vmem:[#allocation2 + $0x518] sm:$0xff] %vm1250, %v2449
    %2587 = vst.msk [vmem:[#allocation2 + $0x530] sm:$0xff] %vm1250, %v2451
    %2588 = vst.msk [vmem:[#allocation2 + $0x548] sm:$0xff] %vm1250, %v2453
    %2589 = vst.msk [vmem:[#allocation2 + $0x560] sm:$0xff] %vm1250, %v2455
    %2590 = vst.msk [vmem:[#allocation2 + $0x578] sm:$0xff] %vm1250, %v2457
    %2591 = vst.msk [vmem:[#allocation2 + $0x590] sm:$0xff] %vm1250, %v2459
    %2592 = vst.msk [vmem:[#allocation2 + $0x5a8] sm:$0xff] %vm1250, %v2461
    %2593 = vst.msk [vmem:[#allocation2 + $0x5c0] sm:$0xff] %vm1250, %v2463
    %2594 = vst.msk [vmem:[#allocation2 + $0x5d8] sm:$0xff] %vm1250, %v2465
    %2595 = vst.msk [vmem:[#allocation2 + $0x5f0] sm:$0xff] %vm1250, %v2467
    %v2596 = vld [vmem:[%s1827 + $0x2] sm:$0xff]
    %v2597 = vld [vmem:[%s1827 + $0xa] sm:$0xff]
    %v2598 = vld [vmem:[%s1827 + $0x1a] sm:$0xff]
    %v2599 = vld [vmem:[%s1827 + $0x22] sm:$0xff]
    %v2600 = vld [vmem:[%s1827 + $0x32] sm:$0xff]
    %v2601 = vld [vmem:[%s1827 + $0x3a] sm:$0xff]
    %v2602 = vld [vmem:[%s1827 + $0x4a] sm:$0xff]
    %v2603 = vld [vmem:[%s1827 + $0x52] sm:$0xff]
    %v2604 = vld [vmem:[%s1827 + $0x62] sm:$0xff]
    %v2605 = vld [vmem:[%s1827 + $0x6a] sm:$0xff]
    %v2606 = vld [vmem:[%s1827 + $0x7a] sm:$0xff]
    %v2607 = vld [vmem:[%s1827 + $0x82] sm:$0xff]
    %v2608 = vld [vmem:[%s1827 + $0x92] sm:$0xff]
    %v2609 = vld [vmem:[%s1827 + $0x9a] sm:$0xff]
    %v2610 = vld [vmem:[%s1827 + $0xaa] sm:$0xff]
    %v2611 = vld [vmem:[%s1827 + $0xb2] sm:$0xff]
    %v2612 = vld [vmem:[%s1827 + $0xc2] sm:$0xff]
    %v2613 = vld [vmem:[%s1827 + $0xca] sm:$0xff]
    %v2614 = vld [vmem:[%s1827 + $0xda] sm:$0xff]
    %v2615 = vld [vmem:[%s1827 + $0xe2] sm:$0xff]
    %v2616 = vld [vmem:[%s1827 + $0xf2] sm:$0xff]
    %v2617 = vld [vmem:[%s1827 + $0xfa] sm:$0xff]
    %v2618 = vld [vmem:[%s1827 + $0x10a] sm:$0xff]
    %v2619 = vld [vmem:[%s1827 + $0x112] sm:$0xff]
    %v2620 = vld [vmem:[%s1827 + $0x122] sm:$0xff]
    %v2621 = vld [vmem:[%s1827 + $0x12a] sm:$0xff]
    %v2622 = vld [vmem:[%s1827 + $0x13a] sm:$0xff]
    %v2623 = vld [vmem:[%s1827 + $0x142] sm:$0xff]
    %v2624 = vld [vmem:[%s1827 + $0x152] sm:$0xff]
    %v2625 = vld [vmem:[%s1827 + $0x15a] sm:$0xff]
    %v2626 = vld [vmem:[%s1827 + $0x16a] sm:$0xff]
    %v2627 = vld [vmem:[%s1827 + $0x172] sm:$0xff]
    %v2628 = vld [vmem:[%s1827 + $0x1b2] sm:$0xff]
    %v2629 = vld [vmem:[%s1827 + $0x1ba] sm:$0xff]
    %v2630 = vld [vmem:[%s1827 + $0x1ca] sm:$0xff]
    %v2631 = vld [vmem:[%s1827 + $0x1d2] sm:$0xff]
    %v2632 = vld [vmem:[%s1827 + $0x1e2] sm:$0xff]
    %v2633 = vld [vmem:[%s1827 + $0x1ea] sm:$0xff]
    %v2634 = vld [vmem:[%s1827 + $0x1fa] sm:$0xff]
    %v2635 = vld [vmem:[%s1827 + $0x202] sm:$0xff]
    %v2636 = vld [vmem:[%s1827 + $0x212] sm:$0xff]
    %v2637 = vld [vmem:[%s1827 + $0x21a] sm:$0xff]
    %v2638 = vld [vmem:[%s1827 + $0x22a] sm:$0xff]
    %v2639 = vld [vmem:[%s1827 + $0x232] sm:$0xff]
    %v2640 = vld [vmem:[%s1827 + $0x242] sm:$0xff]
    %v2641 = vld [vmem:[%s1827 + $0x24a] sm:$0xff]
    %v2642 = vld [vmem:[%s1827 + $0x25a] sm:$0xff]
    %v2643 = vld [vmem:[%s1827 + $0x262] sm:$0xff]
    %v2644 = vld [vmem:[%s1827 + $0x272] sm:$0xff]
    %v2645 = vld [vmem:[%s1827 + $0x27a] sm:$0xff]
    %v2646 = vld [vmem:[%s1827 + $0x28a] sm:$0xff]
    %v2647 = vld [vmem:[%s1827 + $0x292] sm:$0xff]
    %v2648 = vld [vmem:[%s1827 + $0x2a2] sm:$0xff]
    %v2649 = vld [vmem:[%s1827 + $0x2aa] sm:$0xff]
    %v2650 = vld [vmem:[%s1827 + $0x2ba] sm:$0xff]
    %v2651 = vld [vmem:[%s1827 + $0x2c2] sm:$0xff]
    %v2652 = vld [vmem:[%s1827 + $0x2d2] sm:$0xff]
    %v2653 = vld [vmem:[%s1827 + $0x2da] sm:$0xff]
    %v2654 = vld [vmem:[%s1827 + $0x2ea] sm:$0xff]
    %v2655 = vld [vmem:[%s1827 + $0x2f2] sm:$0xff]
    %v2656 = vld [vmem:[%s1827 + $0x302] sm:$0xff]
    %v2657 = vld [vmem:[%s1827 + $0x30a] sm:$0xff]
    %v2658 = vld [vmem:[%s1827 + $0x31a] sm:$0xff]
    %v2659 = vld [vmem:[%s1827 + $0x322] sm:$0xff]
    %2660 = vst.msk [vmem:[#allocation2 + $0x10] sm:$0xff] %vm94, %v2596
    %2661 = vst.msk [vmem:[#allocation2 + $0x28] sm:$0xff] %vm94, %v2597
    %2662 = vst.msk [vmem:[#allocation2 + $0x40] sm:$0xff] %vm94, %v2598
    %2663 = vst.msk [vmem:[#allocation2 + $0x58] sm:$0xff] %vm94, %v2599
    %2664 = vst.msk [vmem:[#allocation2 + $0x70] sm:$0xff] %vm94, %v2600
    %2665 = vst.msk [vmem:[#allocation2 + $0x88] sm:$0xff] %vm94, %v2601
    %2666 = vst.msk [vmem:[#allocation2 + $0xa0] sm:$0xff] %vm94, %v2602
    %2667 = vst.msk [vmem:[#allocation2 + $0xb8] sm:$0xff] %vm94, %v2603
    %2668 = vst.msk [vmem:[#allocation2 + $0xd0] sm:$0xff] %vm94, %v2604
    %2669 = vst.msk [vmem:[#allocation2 + $0xe8] sm:$0xff] %vm94, %v2605
    %2670 = vst.msk [vmem:[#allocation2 + $0x100] sm:$0xff] %vm94, %v2606
    %2671 = vst.msk [vmem:[#allocation2 + $0x118] sm:$0xff] %vm94, %v2607
    %2672 = vst.msk [vmem:[#allocation2 + $0x130] sm:$0xff] %vm94, %v2608
    %2673 = vst.msk [vmem:[#allocation2 + $0x148] sm:$0xff] %vm94, %v2609
    %2674 = vst.msk [vmem:[#allocation2 + $0x160] sm:$0xff] %vm94, %v2610
    %2675 = vst.msk [vmem:[#allocation2 + $0x178] sm:$0xff] %vm94, %v2611
    %2676 = vst.msk [vmem:[#allocation2 + $0x190] sm:$0xff] %vm94, %v2612
    %2677 = vst.msk [vmem:[#allocation2 + $0x1a8] sm:$0xff] %vm94, %v2613
    %2678 = vst.msk [vmem:[#allocation2 + $0x1c0] sm:$0xff] %vm94, %v2614
    %2679 = vst.msk [vmem:[#allocation2 + $0x1d8] sm:$0xff] %vm94, %v2615
    %2680 = vst.msk [vmem:[#allocation2 + $0x1f0] sm:$0xff] %vm94, %v2616
    %2681 = vst.msk [vmem:[#allocation2 + $0x208] sm:$0xff] %vm94, %v2617
    %2682 = vst.msk [vmem:[#allocation2 + $0x220] sm:$0xff] %vm94, %v2618
    %2683 = vst.msk [vmem:[#allocation2 + $0x238] sm:$0xff] %vm94, %v2619
    %2684 = vst.msk [vmem:[#allocation2 + $0x250] sm:$0xff] %vm94, %v2620
    %2685 = vst.msk [vmem:[#allocation2 + $0x268] sm:$0xff] %vm94, %v2621
    %2686 = vst.msk [vmem:[#allocation2 + $0x280] sm:$0xff] %vm94, %v2622
    %2687 = vst.msk [vmem:[#allocation2 + $0x298] sm:$0xff] %vm94, %v2623
    %2688 = vst.msk [vmem:[#allocation2 + $0x2b0] sm:$0xff] %vm94, %v2624
    %2689 = vst.msk [vmem:[#allocation2 + $0x2c8] sm:$0xff] %vm94, %v2625
    %2690 = vst.msk [vmem:[#allocation2 + $0x2e0] sm:$0xff] %vm94, %v2626
    %2691 = vst.msk [vmem:[#allocation2 + $0x2f8] sm:$0xff] %vm94, %v2627
    %2692 = vst.msk [vmem:[#allocation2 + $0x310] sm:$0xff] %vm94, %v2628
    %2693 = vst.msk [vmem:[#allocation2 + $0x328] sm:$0xff] %vm94, %v2629
    %2694 = vst.msk [vmem:[#allocation2 + $0x340] sm:$0xff] %vm94, %v2630
    %2695 = vst.msk [vmem:[#allocation2 + $0x358] sm:$0xff] %vm94, %v2631
    %2696 = vst.msk [vmem:[#allocation2 + $0x370] sm:$0xff] %vm94, %v2632
    %2697 = vst.msk [vmem:[#allocation2 + $0x388] sm:$0xff] %vm94, %v2633
    %2698 = vst.msk [vmem:[#allocation2 + $0x3a0] sm:$0xff] %vm94, %v2634
    %2699 = vst.msk [vmem:[#allocation2 + $0x3b8] sm:$0xff] %vm94, %v2635
    %2700 = vst.msk [vmem:[#allocation2 + $0x3d0] sm:$0xff] %vm94, %v2636
    %2701 = vst.msk [vmem:[#allocation2 + $0x3e8] sm:$0xff] %vm94, %v2637
    %2702 = vst.msk [vmem:[#allocation2 + $0x400] sm:$0xff] %vm94, %v2638
    %2703 = vst.msk [vmem:[#allocation2 + $0x418] sm:$0xff] %vm94, %v2639
    %2704 = vst.msk [vmem:[#allocation2 + $0x430] sm:$0xff] %vm94, %v2640
    %2705 = vst.msk [vmem:[#allocation2 + $0x448] sm:$0xff] %vm94, %v2641
    %2706 = vst.msk [vmem:[#allocation2 + $0x460] sm:$0xff] %vm94, %v2642
    %2707 = vst.msk [vmem:[#allocation2 + $0x478] sm:$0xff] %vm94, %v2643
    %2708 = vst.msk [vmem:[#allocation2 + $0x490] sm:$0xff] %vm94, %v2644
    %2709 = vst.msk [vmem:[#allocation2 + $0x4a8] sm:$0xff] %vm94, %v2645
    %2710 = vst.msk [vmem:[#allocation2 + $0x4c0] sm:$0xff] %vm94, %v2646
    %2711 = vst.msk [vmem:[#allocation2 + $0x4d8] sm:$0xff] %vm94, %v2647
    %2712 = vst.msk [vmem:[#allocation2 + $0x4f0] sm:$0xff] %vm94, %v2648
    %2713 = vst.msk [vmem:[#allocation2 + $0x508] sm:$0xff] %vm94, %v2649
    %2714 = vst.msk [vmem:[#allocation2 + $0x520] sm:$0xff] %vm94, %v2650
    %2715 = vst.msk [vmem:[#allocation2 + $0x538] sm:$0xff] %vm94, %v2651
    %2716 = vst.msk [vmem:[#allocation2 + $0x550] sm:$0xff] %vm94, %v2652
    %2717 = vst.msk [vmem:[#allocation2 + $0x568] sm:$0xff] %vm94, %v2653
    %2718 = vst.msk [vmem:[#allocation2 + $0x580] sm:$0xff] %vm94, %v2654
    %2719 = vst.msk [vmem:[#allocation2 + $0x598] sm:$0xff] %vm94, %v2655
    %2720 = vst.msk [vmem:[#allocation2 + $0x5b0] sm:$0xff] %vm94, %v2656
    %2721 = vst.msk [vmem:[#allocation2 + $0x5c8] sm:$0xff] %vm94, %v2657
    %2722 = vst.msk [vmem:[#allocation2 + $0x5e0] sm:$0xff] %vm94, %v2658
    %2723 = vst.msk [vmem:[#allocation2 + $0x5f8] sm:$0xff] %vm94, %v2659
    %v2724 = vld [vmem:[#allocation2] sm:$0xff]
    %v2725 = vld [vmem:[#allocation2 + $0x8] sm:$0xff]
    %v2726 = vld [vmem:[#allocation2 + $0x10] sm:$0xff]
    %v2727 = vld [vmem:[#allocation2 + $0x18] sm:$0xff]
    %v2728 = vld [vmem:[#allocation2 + $0x20] sm:$0xff]
    %v2729 = vld [vmem:[#allocation2 + $0x28] sm:$0xff]
    %v2730 = vld [vmem:[#allocation2 + $0x30] sm:$0xff]
    %v2731 = vld [vmem:[#allocation2 + $0x38] sm:$0xff]
    %v2732 = vld [vmem:[#allocation2 + $0x40] sm:$0xff]
    %v2733 = vld [vmem:[#allocation2 + $0x48] sm:$0xff]
    %v2734 = vld [vmem:[#allocation2 + $0x50] sm:$0xff]
    %v2735 = vld [vmem:[#allocation2 + $0x58] sm:$0xff]
    %v2736 = vld [vmem:[#allocation2 + $0x60] sm:$0xff]
    %v2737 = vld [vmem:[#allocation2 + $0x68] sm:$0xff]
    %v2738 = vld [vmem:[#allocation2 + $0x70] sm:$0xff]
    %v2739 = vld [vmem:[#allocation2 + $0x78] sm:$0xff]
    %v2740 = vld [vmem:[#allocation2 + $0x80] sm:$0xff]
    %v2741 = vld [vmem:[#allocation2 + $0x88] sm:$0xff]
    %v2742 = vld [vmem:[#allocation2 + $0x90] sm:$0xff]
    %v2743 = vld [vmem:[#allocation2 + $0x98] sm:$0xff]
    %v2744 = vld [vmem:[#allocation2 + $0xa0] sm:$0xff]
    %v2745 = vld [vmem:[#allocation2 + $0xa8] sm:$0xff]
    %v2746 = vld [vmem:[#allocation2 + $0xb0] sm:$0xff]
    %v2747 = vld [vmem:[#allocation2 + $0xb8] sm:$0xff]
    %v2748 = vld [vmem:[#allocation2 + $0xc0] sm:$0xff]
    %v2749 = vld [vmem:[#allocation2 + $0xc8] sm:$0xff]
    %v2750 = vld [vmem:[#allocation2 + $0xd0] sm:$0xff]
    %v2751 = vld [vmem:[#allocation2 + $0xd8] sm:$0xff]
    %v2752 = vld [vmem:[#allocation2 + $0xe0] sm:$0xff]
    %v2753 = vld [vmem:[#allocation2 + $0xe8] sm:$0xff]
    %v2754 = vld [vmem:[#allocation2 + $0xf0] sm:$0xff]
    %v2755 = vld [vmem:[#allocation2 + $0xf8] sm:$0xff]
    %v2756 = vld [vmem:[#allocation2 + $0x100] sm:$0xff]
    %v2757 = vld [vmem:[#allocation2 + $0x108] sm:$0xff]
    %v2758 = vld [vmem:[#allocation2 + $0x110] sm:$0xff]
    %v2759 = vld [vmem:[#allocation2 + $0x118] sm:$0xff]
    %v2760 = vld [vmem:[#allocation2 + $0x120] sm:$0xff]
    %v2761 = vld [vmem:[#allocation2 + $0x128] sm:$0xff]
    %v2762 = vld [vmem:[#allocation2 + $0x130] sm:$0xff]
    %v2763 = vld [vmem:[#allocation2 + $0x138] sm:$0xff]
    %v2764 = vld [vmem:[#allocation2 + $0x140] sm:$0xff]
    %v2765 = vld [vmem:[#allocation2 + $0x148] sm:$0xff]
    %v2766 = vld [vmem:[#allocation2 + $0x150] sm:$0xff]
    %v2767 = vld [vmem:[#allocation2 + $0x158] sm:$0xff]
    %v2768 = vld [vmem:[#allocation2 + $0x160] sm:$0xff]
    %v2769 = vld [vmem:[#allocation2 + $0x168] sm:$0xff]
    %v2770 = vld [vmem:[#allocation2 + $0x170] sm:$0xff]
    %v2771 = vld [vmem:[#allocation2 + $0x178] sm:$0xff]
    %v2772 = vld [vmem:[#allocation2 + $0x180] sm:$0xff]
    %v2773 = vld [vmem:[#allocation2 + $0x188] sm:$0xff]
    %v2774 = vld [vmem:[#allocation2 + $0x190] sm:$0xff]
    %v2775 = vld [vmem:[#allocation2 + $0x198] sm:$0xff]
    %v2776 = vld [vmem:[#allocation2 + $0x1a0] sm:$0xff]
    %v2777 = vld [vmem:[#allocation2 + $0x1a8] sm:$0xff]
    %v2778 = vld [vmem:[#allocation2 + $0x1b0] sm:$0xff]
    %v2779 = vld [vmem:[#allocation2 + $0x1b8] sm:$0xff]
    %v2780 = vld [vmem:[#allocation2 + $0x1c0] sm:$0xff]
    %v2781 = vld [vmem:[#allocation2 + $0x1c8] sm:$0xff]
    %v2782 = vld [vmem:[#allocation2 + $0x1d0] sm:$0xff]
    %v2783 = vld [vmem:[#allocation2 + $0x1d8] sm:$0xff]
    %v2784 = vld [vmem:[#allocation2 + $0x1e0] sm:$0xff]
    %v2785 = vld [vmem:[#allocation2 + $0x1e8] sm:$0xff]
    %v2786 = vld [vmem:[#allocation2 + $0x1f0] sm:$0xff]
    %v2787 = vld [vmem:[#allocation2 + $0x1f8] sm:$0xff]
    %v2788 = vld [vmem:[#allocation2 + $0x200] sm:$0xff]
    %v2789 = vld [vmem:[#allocation2 + $0x208] sm:$0xff]
    %v2790 = vld [vmem:[#allocation2 + $0x210] sm:$0xff]
    %v2791 = vld [vmem:[#allocation2 + $0x218] sm:$0xff]
    %v2792 = vld [vmem:[#allocation2 + $0x220] sm:$0xff]
    %v2793 = vld [vmem:[#allocation2 + $0x228] sm:$0xff]
    %v2794 = vld [vmem:[#allocation2 + $0x230] sm:$0xff]
    %v2795 = vld [vmem:[#allocation2 + $0x238] sm:$0xff]
    %v2796 = vld [vmem:[#allocation2 + $0x240] sm:$0xff]
    %v2797 = vld [vmem:[#allocation2 + $0x248] sm:$0xff]
    %v2798 = vld [vmem:[#allocation2 + $0x250] sm:$0xff]
    %v2799 = vld [vmem:[#allocation2 + $0x258] sm:$0xff]
    %v2800 = vld [vmem:[#allocation2 + $0x260] sm:$0xff]
    %v2801 = vld [vmem:[#allocation2 + $0x268] sm:$0xff]
    %v2802 = vld [vmem:[#allocation2 + $0x270] sm:$0xff]
    %v2803 = vld [vmem:[#allocation2 + $0x278] sm:$0xff]
    %v2804 = vld [vmem:[#allocation2 + $0x280] sm:$0xff]
    %v2805 = vld [vmem:[#allocation2 + $0x288] sm:$0xff]
    %v2806 = vld [vmem:[#allocation2 + $0x290] sm:$0xff]
    %v2807 = vld [vmem:[#allocation2 + $0x298] sm:$0xff]
    %v2808 = vld [vmem:[#allocation2 + $0x2a0] sm:$0xff]
    %v2809 = vld [vmem:[#allocation2 + $0x2a8] sm:$0xff]
    %v2810 = vld [vmem:[#allocation2 + $0x2b0] sm:$0xff]
    %v2811 = vld [vmem:[#allocation2 + $0x2b8] sm:$0xff]
    %v2812 = vld [vmem:[#allocation2 + $0x2c0] sm:$0xff]
    %v2813 = vld [vmem:[#allocation2 + $0x2c8] sm:$0xff]
    %v2814 = vld [vmem:[#allocation2 + $0x2d0] sm:$0xff]
    %v2815 = vld [vmem:[#allocation2 + $0x2d8] sm:$0xff]
    %v2816 = vld [vmem:[#allocation2 + $0x2e0] sm:$0xff]
    %v2817 = vld [vmem:[#allocation2 + $0x2e8] sm:$0xff]
    %v2818 = vld [vmem:[#allocation2 + $0x2f0] sm:$0xff]
    %v2819 = vld [vmem:[#allocation2 + $0x2f8] sm:$0xff]
    %v2820 = vld [vmem:[#allocation2 + $0x300] sm:$0xff]
    %v2821 = vld [vmem:[#allocation2 + $0x308] sm:$0xff]
    %v2822 = vld [vmem:[#allocation2 + $0x310] sm:$0xff]
    %v2823 = vld [vmem:[#allocation2 + $0x318] sm:$0xff]
    %v2824 = vld [vmem:[#allocation2 + $0x320] sm:$0xff]
    %v2825 = vld [vmem:[#allocation2 + $0x328] sm:$0xff]
    %v2826 = vld [vmem:[#allocation2 + $0x330] sm:$0xff]
    %v2827 = vld [vmem:[#allocation2 + $0x338] sm:$0xff]
    %v2828 = vld [vmem:[#allocation2 + $0x340] sm:$0xff]
    %v2829 = vld [vmem:[#allocation2 + $0x348] sm:$0xff]
    %v2830 = vld [vmem:[#allocation2 + $0x350] sm:$0xff]
    %v2831 = vld [vmem:[#allocation2 + $0x358] sm:$0xff]
    %v2832 = vld [vmem:[#allocation2 + $0x360] sm:$0xff]
    %v2833 = vld [vmem:[#allocation2 + $0x368] sm:$0xff]
    %v2834 = vld [vmem:[#allocation2 + $0x370] sm:$0xff]
    %v2835 = vld [vmem:[#allocation2 + $0x378] sm:$0xff]
    %v2836 = vld [vmem:[#allocation2 + $0x380] sm:$0xff]
    %v2837 = vld [vmem:[#allocation2 + $0x388] sm:$0xff]
    %v2838 = vld [vmem:[#allocation2 + $0x390] sm:$0xff]
    %v2839 = vld [vmem:[#allocation2 + $0x398] sm:$0xff]
    %v2840 = vld [vmem:[#allocation2 + $0x3a0] sm:$0xff]
    %v2841 = vld [vmem:[#allocation2 + $0x3a8] sm:$0xff]
    %v2842 = vld [vmem:[#allocation2 + $0x3b0] sm:$0xff]
    %v2843 = vld [vmem:[#allocation2 + $0x3b8] sm:$0xff]
    %v2844 = vld [vmem:[#allocation2 + $0x3c0] sm:$0xff]
    %v2845 = vld [vmem:[#allocation2 + $0x3c8] sm:$0xff]
    %v2846 = vld [vmem:[#allocation2 + $0x3d0] sm:$0xff]
    %v2847 = vld [vmem:[#allocation2 + $0x3d8] sm:$0xff]
    %v2848 = vld [vmem:[#allocation2 + $0x3e0] sm:$0xff]
    %v2849 = vld [vmem:[#allocation2 + $0x3e8] sm:$0xff]
    %v2850 = vld [vmem:[#allocation2 + $0x3f0] sm:$0xff]
    %v2851 = vld [vmem:[#allocation2 + $0x3f8] sm:$0xff]
    %v2852 = vld [vmem:[#allocation2 + $0x400] sm:$0xff]
    %v2853 = vld [vmem:[#allocation2 + $0x408] sm:$0xff]
    %v2854 = vld [vmem:[#allocation2 + $0x410] sm:$0xff]
    %v2855 = vld [vmem:[#allocation2 + $0x418] sm:$0xff]
    %v2856 = vld [vmem:[#allocation2 + $0x420] sm:$0xff]
    %v2857 = vld [vmem:[#allocation2 + $0x428] sm:$0xff]
    %v2858 = vld [vmem:[#allocation2 + $0x430] sm:$0xff]
    %v2859 = vld [vmem:[#allocation2 + $0x438] sm:$0xff]
    %v2860 = vld [vmem:[#allocation2 + $0x440] sm:$0xff]
    %v2861 = vld [vmem:[#allocation2 + $0x448] sm:$0xff]
    %v2862 = vld [vmem:[#allocation2 + $0x450] sm:$0xff]
    %v2863 = vld [vmem:[#allocation2 + $0x458] sm:$0xff]
    %v2864 = vld [vmem:[#allocation2 + $0x460] sm:$0xff]
    %v2865 = vld [vmem:[#allocation2 + $0x468] sm:$0xff]
    %v2866 = vld [vmem:[#allocation2 + $0x470] sm:$0xff]
    %v2867 = vld [vmem:[#allocation2 + $0x478] sm:$0xff]
    %v2868 = vld [vmem:[#allocation2 + $0x480] sm:$0xff]
    %v2869 = vld [vmem:[#allocation2 + $0x488] sm:$0xff]
    %v2870 = vld [vmem:[#allocation2 + $0x490] sm:$0xff]
    %v2871 = vld [vmem:[#allocation2 + $0x498] sm:$0xff]
    %v2872 = vld [vmem:[#allocation2 + $0x4a0] sm:$0xff]
    %v2873 = vld [vmem:[#allocation2 + $0x4a8] sm:$0xff]
    %v2874 = vld [vmem:[#allocation2 + $0x4b0] sm:$0xff]
    %v2875 = vld [vmem:[#allocation2 + $0x4b8] sm:$0xff]
    %v2876 = vld [vmem:[#allocation2 + $0x4c0] sm:$0xff]
    %v2877 = vld [vmem:[#allocation2 + $0x4c8] sm:$0xff]
    %v2878 = vld [vmem:[#allocation2 + $0x4d0] sm:$0xff]
    %v2879 = vld [vmem:[#allocation2 + $0x4d8] sm:$0xff]
    %v2880 = vld [vmem:[#allocation2 + $0x4e0] sm:$0xff]
    %v2881 = vld [vmem:[#allocation2 + $0x4e8] sm:$0xff]
    %v2882 = vld [vmem:[#allocation2 + $0x4f0] sm:$0xff]
    %v2883 = vld [vmem:[#allocation2 + $0x4f8] sm:$0xff]
    %v2884 = vld [vmem:[#allocation2 + $0x500] sm:$0xff]
    %v2885 = vld [vmem:[#allocation2 + $0x508] sm:$0xff]
    %v2886 = vld [vmem:[#allocation2 + $0x510] sm:$0xff]
    %v2887 = vld [vmem:[#allocation2 + $0x518] sm:$0xff]
    %v2888 = vld [vmem:[#allocation2 + $0x520] sm:$0xff]
    %v2889 = vld [vmem:[#allocation2 + $0x528] sm:$0xff]
    %v2890 = vld [vmem:[#allocation2 + $0x530] sm:$0xff]
    %v2891 = vld [vmem:[#allocation2 + $0x538] sm:$0xff]
    %v2892 = vld [vmem:[#allocation2 + $0x540] sm:$0xff]
    %v2893 = vld [vmem:[#allocation2 + $0x548] sm:$0xff]
    %v2894 = vld [vmem:[#allocation2 + $0x550] sm:$0xff]
    %v2895 = vld [vmem:[#allocation2 + $0x558] sm:$0xff]
    %v2896 = vld [vmem:[#allocation2 + $0x560] sm:$0xff]
    %v2897 = vld [vmem:[#allocation2 + $0x568] sm:$0xff]
    %v2898 = vld [vmem:[#allocation2 + $0x570] sm:$0xff]
    %v2899 = vld [vmem:[#allocation2 + $0x578] sm:$0xff]
    %v2900 = vld [vmem:[#allocation2 + $0x580] sm:$0xff]
    %v2901 = vld [vmem:[#allocation2 + $0x588] sm:$0xff]
    %v2902 = vld [vmem:[#allocation2 + $0x590] sm:$0xff]
    %v2903 = vld [vmem:[#allocation2 + $0x598] sm:$0xff]
    %v2904 = vld [vmem:[#allocation2 + $0x5a0] sm:$0xff]
    %v2905 = vld [vmem:[#allocation2 + $0x5a8] sm:$0xff]
    %v2906 = vld [vmem:[#allocation2 + $0x5b0] sm:$0xff]
    %v2907 = vld [vmem:[#allocation2 + $0x5b8] sm:$0xff]
    %v2908 = vld [vmem:[#allocation2 + $0x5c0] sm:$0xff]
    %v2909 = vld [vmem:[#allocation2 + $0x5c8] sm:$0xff]
    %v2910 = vld [vmem:[#allocation2 + $0x5d0] sm:$0xff]
    %v2911 = vld [vmem:[#allocation2 + $0x5d8] sm:$0xff]
    %v2912 = vld [vmem:[#allocation2 + $0x5e0] sm:$0xff]
    %v2913 = vld [vmem:[#allocation2 + $0x5e8] sm:$0xff]
    %v2914 = vld [vmem:[#allocation2 + $0x5f0] sm:$0xff]
    %v2915 = vld [vmem:[#allocation2 + $0x5f8] sm:$0xff]
    %v2916 = vld [vmem:[%s2] sm:$0xff]
    %v2917 = vld [vmem:[%s2 + $0x8] sm:$0xff]
    %v2918 = vld [vmem:[%s2 + $0x10] sm:$0xff]
    %v2919 = vld [vmem:[%s2 + $0x18] sm:$0xff]
    %v2920 = vld [vmem:[%s2 + $0x20] sm:$0xff]
    %v2921 = vld [vmem:[%s2 + $0x28] sm:$0xff]
    %v2922 = vld [vmem:[%s2 + $0x30] sm:$0xff]
    %v2923 = vld [vmem:[%s2 + $0x38] sm:$0xff]
    %v2924 = vld [vmem:[%s2 + $0x40] sm:$0xff]
    %v2925 = vld [vmem:[%s2 + $0x48] sm:$0xff]
    %v2926 = vld [vmem:[%s2 + $0x50] sm:$0xff]
    %v2927 = vld [vmem:[%s2 + $0x58] sm:$0xff]
    %v2928 = vld [vmem:[%s2 + $0x60] sm:$0xff]
    %v2929 = vld [vmem:[%s2 + $0x68] sm:$0xff]
    %v2930 = vld [vmem:[%s2 + $0x70] sm:$0xff]
    %v2931 = vld [vmem:[%s2 + $0x78] sm:$0xff]
    %v2932 = vld [vmem:[%s2 + $0x80] sm:$0xff]
    %v2933 = vld [vmem:[%s2 + $0x88] sm:$0xff]
    %v2934 = vld [vmem:[%s2 + $0x90] sm:$0xff]
    %v2935 = vld [vmem:[%s2 + $0x98] sm:$0xff]
    %v2936 = vld [vmem:[%s2 + $0xa0] sm:$0xff]
    %v2937 = vld [vmem:[%s2 + $0xa8] sm:$0xff]
    %v2938 = vld [vmem:[%s2 + $0xb0] sm:$0xff]
    %v2939 = vld [vmem:[%s2 + $0xb8] sm:$0xff]
    %v2940 = vld [vmem:[%s2 + $0xc0] sm:$0xff]
    %v2941 = vld [vmem:[%s2 + $0xc8] sm:$0xff]
    %v2942 = vld [vmem:[%s2 + $0xd0] sm:$0xff]
    %v2943 = vld [vmem:[%s2 + $0xd8] sm:$0xff]
    %v2944 = vld [vmem:[%s2 + $0xe0] sm:$0xff]
    %v2945 = vld [vmem:[%s2 + $0xe8] sm:$0xff]
    %v2946 = vld [vmem:[%s2 + $0xf0] sm:$0xff]
    %v2947 = vld [vmem:[%s2 + $0xf8] sm:$0xff]
    %v2948 = vld [vmem:[%s2 + $0x100] sm:$0xff]
    %v2949 = vld [vmem:[%s2 + $0x108] sm:$0xff]
    %v2950 = vld [vmem:[%s2 + $0x110] sm:$0xff]
    %v2951 = vld [vmem:[%s2 + $0x118] sm:$0xff]
    %v2953 = vsel %vm94, %v2726, 0
    %v2956 = vsel %vm94, %v2729, 0
    %v2959 = vsel %vm94, %v2732, 0
    %v2962 = vsel %vm94, %v2735, 0
    %v2965 = vsel %vm94, %v2738, 0
    %v2968 = vsel %vm94, %v2741, 0
    %v2971 = vsel %vm94, %v2744, 0
    %v2974 = vsel %vm94, %v2747, 0
    %v2977 = vsel %vm94, %v2750, 0
    %v2980 = vsel %vm94, %v2753, 0
    %v2983 = vsel %vm94, %v2756, 0
    %v2986 = vsel %vm94, %v2759, 0
    %v2989 = vsel %vm94, %v2762, 0
    %v2992 = vsel %vm94, %v2765, 0
    %v2995 = vsel %vm94, %v2768, 0
    %v2998 = vsel %vm94, %v2771, 0
    %v3001 = vsel %vm94, %v2774, 0
    %v3004 = vsel %vm94, %v2777, 0
    %v3007 = vsel %vm94, %v2780, 0
    %v3010 = vsel %vm94, %v2783, 0
    %v3013 = vsel %vm94, %v2786, 0
    %v3016 = vsel %vm94, %v2789, 0
    %v3019 = vsel %vm94, %v2792, 0
    %v3022 = vsel %vm94, %v2795, 0
    %v3025 = vsel %vm94, %v2798, 0
    %v3028 = vsel %vm94, %v2801, 0
    %v3031 = vsel %vm94, %v2804, 0
    %v3034 = vsel %vm94, %v2807, 0
    %v3037 = vsel %vm94, %v2810, 0
    %v3040 = vsel %vm94, %v2813, 0
    %v3043 = vsel %vm94, %v2816, 0
    %v3046 = vsel %vm94, %v2819, 0
    %v3049 = vsel %vm94, %v2822, 0
    %v3052 = vsel %vm94, %v2825, 0
    %v3055 = vsel %vm94, %v2828, 0
    %v3058 = vsel %vm94, %v2831, 0
    %v3061 = vsel %vm94, %v2834, 0
    %v3064 = vsel %vm94, %v2837, 0
    %v3067 = vsel %vm94, %v2840, 0
    %v3070 = vsel %vm94, %v2843, 0
    %v3073 = vsel %vm94, %v2846, 0
    %v3076 = vsel %vm94, %v2849, 0
    %v3079 = vsel %vm94, %v2852, 0
    %v3082 = vsel %vm94, %v2855, 0
    %v3085 = vsel %vm94, %v2858, 0
    %v3088 = vsel %vm94, %v2861, 0
    %v3091 = vsel %vm94, %v2864, 0
    %v3094 = vsel %vm94, %v2867, 0
    %v3097 = vsel %vm94, %v2870, 0
    %v3100 = vsel %vm94, %v2873, 0
    %v3103 = vsel %vm94, %v2876, 0
    %v3106 = vsel %vm94, %v2879, 0
    %v3109 = vsel %vm94, %v2882, 0
    %v3112 = vsel %vm94, %v2885, 0
    %v3115 = vsel %vm94, %v2888, 0
    %v3118 = vsel %vm94, %v2891, 0
    %v3121 = vsel %vm94, %v2894, 0
    %v3124 = vsel %vm94, %v2897, 0
    %v3127 = vsel %vm94, %v2900, 0
    %v3130 = vsel %vm94, %v2903, 0
    %v3133 = vsel %vm94, %v2906, 0
    %v3136 = vsel %vm94, %v2909, 0
    %v3139 = vsel %vm94, %v2912, 0
    %v3142 = vsel %vm94, %v2915, 0
    %3144 = vmatprep.subr.mxu0 0.0
    %3145 = vmatpush1.msra.mxu0 %v2916
    %3146 = vmatprep.subr.mxu0 0.0
    %3147 = vmatpush1.msra.mxu0 %v2917
    %3148 = vmatprep.subr.mxu0 0.0
    %3149 = vmatpush1.msra.mxu0 %v2918
    %3150 = vmatprep.subr.mxu0 0.0
    %3151 = vmatpush1.msra.mxu0 %v2919
    %3152 = vmatprep.subr.mxu0 0.0
    %3153 = vmatpush1.msra.mxu0 %v2920
    %3154 = vmatprep.subr.mxu0 0.0
    %3155 = vmatpush1.msra.mxu0 %v2921
    %3156 = vmatprep.subr.mxu0 0.0
    %3157 = vmatpush1.msra.mxu0 %v2922
    %3158 = vmatprep.subr.mxu0 0.0
    %3159 = vmatpush1.msra.mxu0 %v2923
    %3160 = vmatprep.subr.mxu0 0.0
    %3161 = vmatpush1.msra.mxu0 %v2924
    %3162 = vmatprep.subr.mxu0 0.0
    %3163 = vmatpush1.msra.mxu0 %v2925
    %3164 = vmatprep.subr.mxu0 0.0
    %3165 = vmatpush1.msra.mxu0 %v2926
    %3166 = vmatprep.subr.mxu0 0.0
    %3167 = vmatpush1.msra.mxu0 %v2927
    %3168 = vmatprep.subr.mxu0 0.0
    %3169 = vmatpush1.msra.mxu0 %v2928
    %3170 = vmatprep.subr.mxu0 0.0
    %3171 = vmatpush1.msra.mxu0 %v2929
    %3172 = vmatprep.subr.mxu0 0.0
    %3173 = vmatpush1.msra.mxu0 %v2930
    %3174 = vmatprep.subr.mxu0 0.0
    %3175 = vmatpush1.msra.mxu0 %v2931
    %3176 = vmatprep.subr.mxu0 0.0
    %3177 = vmatpush1.msra.mxu0 %v2932
    %3178 = vmatprep.subr.mxu0 0.0
    %3179 = vmatpush1.msra.mxu0 %v2933
    %3180 = vmatprep.subr.mxu0 0.0
    %3181 = vmatpush1.msra.mxu0 %v2934
    %3182 = vmatprep.subr.mxu0 0.0
    %3183 = vmatpush1.msra.mxu0 %v2935
    %3184 = vmatprep.subr.mxu0 0.0
    %3185 = vmatpush1.msra.mxu0 %v2936
    %3186 = vmatprep.subr.mxu0 0.0
    %3187 = vmatpush1.msra.mxu0 %v2937
    %3188 = vmatprep.subr.mxu0 0.0
    %3189 = vmatpush1.msra.mxu0 %v2938
    %3190 = vmatprep.subr.mxu0 0.0
    %3191 = vmatpush1.msra.mxu0 %v2939
    %3192 = vmatprep.subr.mxu0 0.0
    %3193 = vmatpush1.msra.mxu0 %v2940
    %3194 = vmatprep.subr.mxu0 0.0
    %3195 = vmatpush1.msra.mxu0 %v2941
    %3196 = vmatprep.subr.mxu0 0.0
    %3197 = vmatpush1.msra.mxu0 %v2942
    %3198 = vmatprep.subr.mxu0 0.0
    %3199 = vmatpush1.msra.mxu0 %v2943
    %3200 = vmatprep.subr.mxu0 0.0
    %3201 = vmatpush1.msra.mxu0 %v2944
    %3202 = vmatprep.subr.mxu0 0.0
    %3203 = vmatpush1.msra.mxu0 %v2945
    %3204 = vmatprep.subr.mxu0 0.0
    %3205 = vmatpush1.msra.mxu0 %v2946
    %3206 = vmatprep.subr.mxu0 0.0
    %3207 = vmatpush1.msra.mxu0 %v2947
    %3208 = vmatprep.mubr.f32.mxu0 %v2725
    %3209 = vmatmul.mubr.f32.gmra.mrb[0].mxu0 %v2724
    %v3210 = vpop.f32.mrb[0].mxu0
    %v3211 = vadd.f32 0.0, %v3210
    %v3212 = vpop.f32.mrb[0].mxu0
    %3213 = vmatprep.mubr.f32.mxu0 %v2728
    %3214 = vmatmul.mubr.f32.gmra.mrb[0].mxu0 %v2727
    %v3215 = vpop.f32.mrb[0].mxu0
    %v3216 = vadd.f32 0.0, %v3215
    %v3217 = vpop.f32.mrb[0].mxu0
    %3218 = vmatprep.mubr.f32.mxu0 %v2731
    %3219 = vmatmul.mubr.f32.gmra.mrb[0].mxu0 %v2730
    %v3220 = vpop.f32.mrb[0].mxu0
    %v3221 = vadd.f32 0.0, %v3220
    %v3222 = vpop.f32.mrb[0].mxu0
    %3223 = vmatprep.mubr.f32.mxu0 %v2734
    %3224 = vmatmul.mubr.f32.gmra.mrb[0].mxu0 %v2733
    %v3225 = vpop.f32.mrb[0].mxu0
    %v3226 = vadd.f32 0.0, %v3225
    %v3227 = vpop.f32.mrb[0].mxu0
    %3228 = vmatprep.mubr.f32.mxu0 %v2737
    %3229 = vmatmul.mubr.f32.gmra.mrb[0].mxu0 %v2736
    %v3230 = vpop.f32.mrb[0].mxu0
    %v3231 = vadd.f32 0.0, %v3230
    %v3232 = vpop.f32.mrb[0].mxu0
    %3233 = vmatprep.mubr.f32.mxu0 %v2740
    %3234 = vmatmul.mubr.f32.gmra.mrb[0].mxu0 %v2739
    %v3235 = vpop.f32.mrb[0].mxu0
    %v3236 = vadd.f32 0.0, %v3235
    %v3237 = vpop.f32.mrb[0].mxu0
    %3238 = vmatprep.mubr.f32.mxu0 %v2743
    %3239 = vmatmul.mubr.f32.gmra.mrb[0].mxu0 %v2742
    %v3240 = vpop.f32.mrb[0].mxu0
    %v3241 = vadd.f32 0.0, %v3240
    %v3242 = vpop.f32.mrb[0].mxu0
    %3243 = vmatprep.mubr.f32.mxu0 %v2746
    %3244 = vmatmul.mubr.f32.gmra.mrb[0].mxu0 %v2745
    %v3245 = vpop.f32.mrb[0].mxu0
    %v3246 = vadd.f32 0.0, %v3245
    %v3247 = vpop.f32.mrb[0].mxu0
    %3248 = vmatprep.mubr.f32.mxu0 %v2749
    %3249 = vmatmul.mubr.f32.gmra.mrb[0].mxu0 %v2748
    %v3250 = vpop.f32.mrb[0].mxu0
    %v3251 = vadd.f32 0.0, %v3250
    %v3252 = vpop.f32.mrb[0].mxu0
    %3253 = vmatprep.mubr.f32.mxu0 %v2752
    %3254 = vmatmul.mubr.f32.gmra.mrb[0].mxu0 %v2751
    %v3255 = vpop.f32.mrb[0].mxu0
    %v3256 = vadd.f32 0.0, %v3255
    %v3257 = vpop.f32.mrb[0].mxu0
    %3258 = vmatprep.mubr.f32.mxu0 %v2755
    %3259 = vmatmul.mubr.f32.gmra.mrb[0].mxu0 %v2754
    %v3260 = vpop.f32.mrb[0].mxu0
    %v3261 = vadd.f32 0.0, %v3260
    %v3262 = vpop.f32.mrb[0].mxu0
    %3263 = vmatprep.mubr.f32.mxu0 %v2758
    %3264 = vmatmul.mubr.f32.gmra.mrb[0].mxu0 %v2757
    %v3265 = vpop.f32.mrb[0].mxu0
    %v3266 = vadd.f32 0.0, %v3265
    %v3267 = vpop.f32.mrb[0].mxu0
    %3268 = vmatprep.mubr.f32.mxu0 %v2761
    %3269 = vmatmul.mubr.f32.gmra.mrb[0].mxu0 %v2760
    %v3270 = vpop.f32.mrb[0].mxu0
    %v3271 = vadd.f32 0.0, %v3270
    %v3272 = vpop.f32.mrb[0].mxu0
    %3273 = vmatprep.mubr.f32.mxu0 %v2764
    %3274 = vmatmul.mubr.f32.gmra.mrb[0].mxu0 %v2763
    %v3275 = vpop.f32.mrb[0].mxu0
    %v3276 = vadd.f32 0.0, %v3275
    %v3277 = vpop.f32.mrb[0].mxu0
    %3278 = vmatprep.mubr.f32.mxu0 %v2767
    %3279 = vmatmul.mubr.f32.gmra.mrb[0].mxu0 %v2766
    %v3280 = vpop.f32.mrb[0].mxu0
    %v3281 = vadd.f32 0.0, %v3280
    %v3282 = vpop.f32.mrb[0].mxu0
    %3283 = vmatprep.mubr.f32.mxu0 %v2770
    %3284 = vmatmul.mubr.f32.gmra.mrb[0].mxu0 %v2769
    %v3285 = vpop.f32.mrb[0].mxu0
    %v3286 = vadd.f32 0.0, %v3285
    %v3287 = vpop.f32.mrb[0].mxu0
    %3288 = vmatprep.mubr.f32.mxu0 %v2773
    %3289 = vmatmul.mubr.f32.gmra.mrb[0].mxu0 %v2772
    %v3290 = vpop.f32.mrb[0].mxu0
    %v3291 = vadd.f32 0.0, %v3290
    %v3292 = vpop.f32.mrb[0].mxu0
    %3293 = vmatprep.mubr.f32.mxu0 %v2776
    %3294 = vmatmul.mubr.f32.gmra.mrb[0].mxu0 %v2775
    %v3295 = vpop.f32.mrb[0].mxu0
    %v3296 = vadd.f32 0.0, %v3295
    %v3297 = vpop.f32.mrb[0].mxu0
    %3298 = vmatprep.mubr.f32.mxu0 %v2779
    %3299 = vmatmul.mubr.f32.gmra.mrb[0].mxu0 %v2778
    %v3300 = vpop.f32.mrb[0].mxu0
    %v3301 = vadd.f32 0.0, %v3300
    %v3302 = vpop.f32.mrb[0].mxu0
    %3303 = vmatprep.mubr.f32.mxu0 %v2782
    %3304 = vmatmul.mubr.f32.gmra.mrb[0].mxu0 %v2781
    %v3305 = vpop.f32.mrb[0].mxu0
    %v3306 = vadd.f32 0.0, %v3305
    %v3307 = vpop.f32.mrb[0].mxu0
    %3308 = vmatprep.mubr.f32.mxu0 %v2785
    %3309 = vmatmul.mubr.f32.gmra.mrb[0].mxu0 %v2784
    %v3310 = vpop.f32.mrb[0].mxu0
    %v3311 = vadd.f32 0.0, %v3310
    %v3312 = vpop.f32.mrb[0].mxu0
    %3313 = vmatprep.mubr.f32.mxu0 %v2788
    %3314 = vmatmul.mubr.f32.gmra.mrb[0].mxu0 %v2787
    %v3315 = vpop.f32.mrb[0].mxu0
    %v3316 = vadd.f32 0.0, %v3315
    %v3317 = vpop.f32.mrb[0].mxu0
    %3318 = vmatprep.mubr.f32.mxu0 %v2791
    %3319 = vmatmul.mubr.f32.gmra.mrb[0].mxu0 %v2790
    %v3320 = vpop.f32.mrb[0].mxu0
    %v3321 = vadd.f32 0.0, %v3320
    %v3322 = vpop.f32.mrb[0].mxu0
    %3323 = vmatprep.mubr.f32.mxu0 %v2794
    %3324 = vmatmul.mubr.f32.gmra.mrb[0].mxu0 %v2793
    %v3325 = vpop.f32.mrb[0].mxu0
    %v3326 = vadd.f32 0.0, %v3325
    %v3327 = vpop.f32.mrb[0].mxu0
    %3328 = vmatprep.mubr.f32.mxu0 %v2797
    %3329 = vmatmul.mubr.f32.gmra.mrb[0].mxu0 %v2796
    %v3330 = vpop.f32.mrb[0].mxu0
    %v3331 = vadd.f32 0.0, %v3330
    %v3332 = vpop.f32.mrb[0].mxu0
    %3333 = vmatprep.mubr.f32.mxu0 %v2800
    %3334 = vmatmul.mubr.f32.gmra.mrb[0].mxu0 %v2799
    %v3335 = vpop.f32.mrb[0].mxu0
    %v3336 = vadd.f32 0.0, %v3335
    %v3337 = vpop.f32.mrb[0].mxu0
    %3338 = vmatprep.mubr.f32.mxu0 %v2803
    %3339 = vmatmul.mubr.f32.gmra.mrb[0].mxu0 %v2802
    %v3340 = vpop.f32.mrb[0].mxu0
    %v3341 = vadd.f32 0.0, %v3340
    %v3342 = vpop.f32.mrb[0].mxu0
    %3343 = vmatprep.mubr.f32.mxu0 %v2806
    %3344 = vmatmul.mubr.f32.gmra.mrb[0].mxu0 %v2805
    %v3345 = vpop.f32.mrb[0].mxu0
    %v3346 = vadd.f32 0.0, %v3345
    %v3347 = vpop.f32.mrb[0].mxu0
    %3348 = vmatprep.mubr.f32.mxu0 %v2809
    %3349 = vmatmul.mubr.f32.gmra.mrb[0].mxu0 %v2808
    %v3350 = vpop.f32.mrb[0].mxu0
    %v3351 = vadd.f32 0.0, %v3350
    %v3352 = vpop.f32.mrb[0].mxu0
    %3353 = vmatprep.mubr.f32.mxu0 %v2812
    %3354 = vmatmul.mubr.f32.gmra.mrb[0].mxu0 %v2811
    %v3355 = vpop.f32.mrb[0].mxu0
    %v3356 = vadd.f32 0.0, %v3355
    %v3357 = vpop.f32.mrb[0].mxu0
    %3358 = vmatprep.mubr.f32.mxu0 %v2815
    %3359 = vmatmul.mubr.f32.gmra.mrb[0].mxu0 %v2814
    %v3360 = vpop.f32.mrb[0].mxu0
    %v3361 = vadd.f32 0.0, %v3360
    %v3362 = vpop.f32.mrb[0].mxu0
    %3363 = vmatprep.mubr.f32.mxu0 %v2818
    %3364 = vmatmul.mubr.f32.gmra.mrb[0].mxu0 %v2817
    %v3365 = vpop.f32.mrb[0].mxu0
    %v3366 = vadd.f32 0.0, %v3365
    %v3367 = vpop.f32.mrb[0].mxu0
    %3368 = vmatprep.mubr.f32.mxu0 %v2821
    %3369 = vmatmul.mubr.f32.gmra.mrb[0].mxu0 %v2820
    %v3370 = vpop.f32.mrb[0].mxu0
    %v3371 = vadd.f32 0.0, %v3370
    %v3372 = vpop.f32.mrb[0].mxu0
    %3373 = vmatprep.mubr.f32.mxu0 %v2824
    %3374 = vmatmul.mubr.f32.gmra.mrb[0].mxu0 %v2823
    %v3375 = vpop.f32.mrb[0].mxu0
    %v3376 = vadd.f32 0.0, %v3375
    %v3377 = vpop.f32.mrb[0].mxu0
    %3378 = vmatprep.mubr.f32.mxu0 %v2827
    %3379 = vmatmul.mubr.f32.gmra.mrb[0].mxu0 %v2826
    %v3380 = vpop.f32.mrb[0].mxu0
    %v3381 = vadd.f32 0.0, %v3380
    %v3382 = vpop.f32.mrb[0].mxu0
    %3383 = vmatprep.mubr.f32.mxu0 %v2830
    %3384 = vmatmul.mubr.f32.gmra.mrb[0].mxu0 %v2829
    %v3385 = vpop.f32.mrb[0].mxu0
    %v3386 = vadd.f32 0.0, %v3385
    %v3387 = vpop.f32.mrb[0].mxu0
    %3388 = vmatprep.mubr.f32.mxu0 %v2833
    %3389 = vmatmul.mubr.f32.gmra.mrb[0].mxu0 %v2832
    %v3390 = vpop.f32.mrb[0].mxu0
    %v3391 = vadd.f32 0.0, %v3390
    %v3392 = vpop.f32.mrb[0].mxu0
    %3393 = vmatprep.mubr.f32.mxu0 %v2836
    %3394 = vmatmul.mubr.f32.gmra.mrb[0].mxu0 %v2835
    %v3395 = vpop.f32.mrb[0].mxu0
    %v3396 = vadd.f32 0.0, %v3395
    %v3397 = vpop.f32.mrb[0].mxu0
    %3398 = vmatprep.mubr.f32.mxu0 %v2839
    %3399 = vmatmul.mubr.f32.gmra.mrb[0].mxu0 %v2838
    %v3400 = vpop.f32.mrb[0].mxu0
    %v3401 = vadd.f32 0.0, %v3400
    %v3402 = vpop.f32.mrb[0].mxu0
    %3403 = vmatprep.mubr.f32.mxu0 %v2842
    %3404 = vmatmul.mubr.f32.gmra.mrb[0].mxu0 %v2841
    %v3405 = vpop.f32.mrb[0].mxu0
    %v3406 = vadd.f32 0.0, %v3405
    %v3407 = vpop.f32.mrb[0].mxu0
    %3408 = vmatprep.mubr.f32.mxu0 %v2845
    %3409 = vmatmul.mubr.f32.gmra.mrb[0].mxu0 %v2844
    %v3410 = vpop.f32.mrb[0].mxu0
    %v3411 = vadd.f32 0.0, %v3410
    %v3412 = vpop.f32.mrb[0].mxu0
    %3413 = vmatprep.mubr.f32.mxu0 %v2848
    %3414 = vmatmul.mubr.f32.gmra.mrb[0].mxu0 %v2847
    %v3415 = vpop.f32.mrb[0].mxu0
    %v3416 = vadd.f32 0.0, %v3415
    %v3417 = vpop.f32.mrb[0].mxu0
    %3418 = vmatprep.mubr.f32.mxu0 %v2851
    %3419 = vmatmul.mubr.f32.gmra.mrb[0].mxu0 %v2850
    %v3420 = vpop.f32.mrb[0].mxu0
    %v3421 = vadd.f32 0.0, %v3420
    %v3422 = vpop.f32.mrb[0].mxu0
    %3423 = vmatprep.mubr.f32.mxu0 %v2854
    %3424 = vmatmul.mubr.f32.gmra.mrb[0].mxu0 %v2853
    %v3425 = vpop.f32.mrb[0].mxu0
    %v3426 = vadd.f32 0.0, %v3425
    %v3427 = vpop.f32.mrb[0].mxu0
    %3428 = vmatprep.mubr.f32.mxu0 %v2857
    %3429 = vmatmul.mubr.f32.gmra.mrb[0].mxu0 %v2856
    %v3430 = vpop.f32.mrb[0].mxu0
    %v3431 = vadd.f32 0.0, %v3430
    %v3432 = vpop.f32.mrb[0].mxu0
    %3433 = vmatprep.mubr.f32.mxu0 %v2860
    %3434 = vmatmul.mubr.f32.gmra.mrb[0].mxu0 %v2859
    %v3435 = vpop.f32.mrb[0].mxu0
    %v3436 = vadd.f32 0.0, %v3435
    %v3437 = vpop.f32.mrb[0].mxu0
    %3438 = vmatprep.mubr.f32.mxu0 %v2863
    %3439 = vmatmul.mubr.f32.gmra.mrb[0].mxu0 %v2862
    %v3440 = vpop.f32.mrb[0].mxu0
    %v3441 = vadd.f32 0.0, %v3440
    %v3442 = vpop.f32.mrb[0].mxu0
    %3443 = vmatprep.mubr.f32.mxu0 %v2866
    %3444 = vmatmul.mubr.f32.gmra.mrb[0].mxu0 %v2865
    %v3445 = vpop.f32.mrb[0].mxu0
    %v3446 = vadd.f32 0.0, %v3445
    %v3447 = vpop.f32.mrb[0].mxu0
    %3448 = vmatprep.mubr.f32.mxu0 %v2869
    %3449 = vmatmul.mubr.f32.gmra.mrb[0].mxu0 %v2868
    %v3450 = vpop.f32.mrb[0].mxu0
    %v3451 = vadd.f32 0.0, %v3450
    %v3452 = vpop.f32.mrb[0].mxu0
    %3453 = vmatprep.mubr.f32.mxu0 %v2872
    %3454 = vmatmul.mubr.f32.gmra.mrb[0].mxu0 %v2871
    %v3455 = vpop.f32.mrb[0].mxu0
    %v3456 = vadd.f32 0.0, %v3455
    %v3457 = vpop.f32.mrb[0].mxu0
    %3458 = vmatprep.mubr.f32.mxu0 %v2875
    %3459 = vmatmul.mubr.f32.gmra.mrb[0].mxu0 %v2874
    %v3460 = vpop.f32.mrb[0].mxu0
    %v3461 = vadd.f32 0.0, %v3460
    %v3462 = vpop.f32.mrb[0].mxu0
    %3463 = vmatprep.mubr.f32.mxu0 %v2878
    %3464 = vmatmul.mubr.f32.gmra.mrb[0].mxu0 %v2877
    %v3465 = vpop.f32.mrb[0].mxu0
    %v3466 = vadd.f32 0.0, %v3465
    %v3467 = vpop.f32.mrb[0].mxu0
    %3468 = vmatprep.mubr.f32.mxu0 %v2881
    %3469 = vmatmul.mubr.f32.gmra.mrb[0].mxu0 %v2880
    %v3470 = vpop.f32.mrb[0].mxu0
    %v3471 = vadd.f32 0.0, %v3470
    %v3472 = vpop.f32.mrb[0].mxu0
    %3473 = vmatprep.mubr.f32.mxu0 %v2884
    %3474 = vmatmul.mubr.f32.gmra.mrb[0].mxu0 %v2883
    %v3475 = vpop.f32.mrb[0].mxu0
    %v3476 = vadd.f32 0.0, %v3475
    %v3477 = vpop.f32.mrb[0].mxu0
    %3478 = vmatprep.mubr.f32.mxu0 %v2887
    %3479 = vmatmul.mubr.f32.gmra.mrb[0].mxu0 %v2886
    %v3480 = vpop.f32.mrb[0].mxu0
    %v3481 = vadd.f32 0.0, %v3480
    %v3482 = vpop.f32.mrb[0].mxu0
    %3483 = vmatprep.mubr.f32.mxu0 %v2890
    %3484 = vmatmul.mubr.f32.gmra.mrb[0].mxu0 %v2889
    %v3485 = vpop.f32.mrb[0].mxu0
    %v3486 = vadd.f32 0.0, %v3485
    %v3487 = vpop.f32.mrb[0].mxu0
    %3488 = vmatprep.mubr.f32.mxu0 %v2893
    %3489 = vmatmul.mubr.f32.gmra.mrb[0].mxu0 %v2892
    %v3490 = vpop.f32.mrb[0].mxu0
    %v3491 = vadd.f32 0.0, %v3490
    %v3492 = vpop.f32.mrb[0].mxu0
    %3493 = vmatprep.mubr.f32.mxu0 %v2896
    %3494 = vmatmul.mubr.f32.gmra.mrb[0].mxu0 %v2895
    %v3495 = vpop.f32.mrb[0].mxu0
    %v3496 = vadd.f32 0.0, %v3495
    %v3497 = vpop.f32.mrb[0].mxu0
    %3498 = vmatprep.mubr.f32.mxu0 %v2899
    %3499 = vmatmul.mubr.f32.gmra.mrb[0].mxu0 %v2898
    %v3500 = vpop.f32.mrb[0].mxu0
    %v3501 = vadd.f32 0.0, %v3500
    %v3502 = vpop.f32.mrb[0].mxu0
    %3503 = vmatprep.mubr.f32.mxu0 %v2902
    %3504 = vmatmul.mubr.f32.gmra.mrb[0].mxu0 %v2901
    %v3505 = vpop.f32.mrb[0].mxu0
    %v3506 = vadd.f32 0.0, %v3505
    %v3507 = vpop.f32.mrb[0].mxu0
    %3508 = vmatprep.mubr.f32.mxu0 %v2905
    %3509 = vmatmul.mubr.f32.gmra.mrb[0].mxu0 %v2904
    %v3510 = vpop.f32.mrb[0].mxu0
    %v3511 = vadd.f32 0.0, %v3510
    %v3512 = vpop.f32.mrb[0].mxu0
    %3513 = vmatprep.mubr.f32.mxu0 %v2908
    %3514 = vmatmul.mubr.f32.gmra.mrb[0].mxu0 %v2907
    %v3515 = vpop.f32.mrb[0].mxu0
    %v3516 = vadd.f32 0.0, %v3515
    %v3517 = vpop.f32.mrb[0].mxu0
    %3518 = vmatprep.mubr.f32.mxu0 %v2911
    %3519 = vmatmul.mubr.f32.gmra.mrb[0].mxu0 %v2910
    %v3520 = vpop.f32.mrb[0].mxu0
    %v3521 = vadd.f32 0.0, %v3520
    %v3522 = vpop.f32.mrb[0].mxu0
    %3523 = vmatprep.mubr.f32.mxu0 %v2914
    %3524 = vmatmul.mubr.f32.gmra.mrb[0].mxu0 %v2913
    %v3525 = vpop.f32.mrb[0].mxu0
    %v3526 = vadd.f32 0.0, %v3525
    %v3527 = vpop.f32.mrb[0].mxu0
    %3528 = vdwg.mxu0
    %3529 = vmatprep.subr.mxu0 0.0
    %3530 = vmatpush1.msra.mxu0 %v2948
    %3531 = vmatprep.subr.mxu0 0.0
    %3532 = vmatpush1.msra.mxu0 %v2949
    %3533 = vmatprep.subr.mxu0 0.0
    %3534 = vmatpush1.msra.mxu0 %v2950
    %3535 = vmatprep.subr.mxu0 0.0
    %3536 = vmatpush1.msra.mxu0 %v2951
    %3537 = vmatprep.subr.mxu0 0.0
    %3538 = vmatpush1.msra.mxu0 0.0
    %3539 = vmatprep.subr.mxu0 0.0
    %3540 = vmatpush1.msra.mxu0 0.0
    %3541 = vmatprep.subr.mxu0 0.0
    %3542 = vmatpush1.msra.mxu0 0.0
    %3543 = vmatprep.subr.mxu0 0.0
    %3544 = vmatpush1.msra.mxu0 0.0
    %3545 = vmatprep.subr.mxu0 0.0
    %3546 = vmatpush1.msra.mxu0 0.0
    %3547 = vmatprep.subr.mxu0 0.0
    %3548 = vmatpush1.msra.mxu0 0.0
    %3549 = vmatprep.subr.mxu0 0.0
    %3550 = vmatpush1.msra.mxu0 0.0
    %3551 = vmatprep.subr.mxu0 0.0
    %3552 = vmatpush1.msra.mxu0 0.0
    %3553 = vmatprep.subr.mxu0 0.0
    %3554 = vmatpush1.msra.mxu0 0.0
    %3555 = vmatprep.subr.mxu0 0.0
    %3556 = vmatpush1.msra.mxu0 0.0
    %3557 = vmatprep.subr.mxu0 0.0
    %3558 = vmatpush1.msra.mxu0 0.0
    %3559 = vmatprep.subr.mxu0 0.0
    %3560 = vmatpush1.msra.mxu0 0.0
    %3561 = vmatprep.subr.mxu0 0.0
    %3562 = vmatpush1.msra.mxu0 0.0
    %3563 = vmatprep.subr.mxu0 0.0
    %3564 = vmatpush1.msra.mxu0 0.0
    %3565 = vmatprep.subr.mxu0 0.0
    %3566 = vmatpush1.msra.mxu0 0.0
    %3567 = vmatprep.subr.mxu0 0.0
    %3568 = vmatpush1.msra.mxu0 0.0
    %3569 = vmatprep.subr.mxu0 0.0
    %3570 = vmatpush1.msra.mxu0 0.0
    %3571 = vmatprep.subr.mxu0 0.0
    %3572 = vmatpush1.msra.mxu0 0.0
    %3573 = vmatprep.subr.mxu0 0.0
    %3574 = vmatpush1.msra.mxu0 0.0
    %3575 = vmatprep.subr.mxu0 0.0
    %3576 = vmatpush1.msra.mxu0 0.0
    %3577 = vmatprep.subr.mxu0 0.0
    %3578 = vmatpush1.msra.mxu0 0.0
    %3579 = vmatprep.subr.mxu0 0.0
    %3580 = vmatpush1.msra.mxu0 0.0
    %3581 = vmatprep.subr.mxu0 0.0
    %3582 = vmatpush1.msra.mxu0 0.0
    %3583 = vmatprep.subr.mxu0 0.0
    %3584 = vmatpush1.msra.mxu0 0.0
    %3585 = vmatprep.subr.mxu0 0.0
    %3586 = vmatpush1.msra.mxu0 0.0
    %3587 = vmatprep.subr.mxu0 0.0
    %3588 = vmatpush1.msra.mxu0 0.0
    %3589 = vmatprep.subr.mxu0 0.0
    %3590 = vmatpush1.msra.mxu0 0.0
    %3591 = vmatprep.subr.mxu0 0.0
    %3592 = vmatpush1.msra.mxu0 0.0
    %3593 = vmatprep.mubr.f32.mxu0 0.0
    %3594 = vmatmul.mubr.f32.gmra.mrb[0].mxu0 %v2953
    %v3595 = vpop.f32.mrb[0].mxu0
    %v3596 = vadd.f32 %v3211, %v3595
    %v3597 = vpop.f32.mrb[0].mxu0
    %3598 = vmatprep.mubr.f32.mxu0 0.0
    %3599 = vmatmul.mubr.f32.gmra.mrb[0].mxu0 %v2956
    %v3600 = vpop.f32.mrb[0].mxu0
    %v3601 = vadd.f32 %v3216, %v3600
    %v3602 = vpop.f32.mrb[0].mxu0
    %3603 = vmatprep.mubr.f32.mxu0 0.0
    %3604 = vmatmul.mubr.f32.gmra.mrb[0].mxu0 %v2959
    %v3605 = vpop.f32.mrb[0].mxu0
    %v3606 = vadd.f32 %v3221, %v3605
    %v3607 = vpop.f32.mrb[0].mxu0
    %3608 = vmatprep.mubr.f32.mxu0 0.0
    %3609 = vmatmul.mubr.f32.gmra.mrb[0].mxu0 %v2962
    %v3610 = vpop.f32.mrb[0].mxu0
    %v3611 = vadd.f32 %v3226, %v3610
    %v3612 = vpop.f32.mrb[0].mxu0
    %3613 = vmatprep.mubr.f32.mxu0 0.0
    %3614 = vmatmul.mubr.f32.gmra.mrb[0].mxu0 %v2965
    %v3615 = vpop.f32.mrb[0].mxu0
    %v3616 = vadd.f32 %v3231, %v3615
    %v3617 = vpop.f32.mrb[0].mxu0
    %3618 = vmatprep.mubr.f32.mxu0 0.0
    %3619 = vmatmul.mubr.f32.gmra.mrb[0].mxu0 %v2968
    %v3620 = vpop.f32.mrb[0].mxu0
    %v3621 = vadd.f32 %v3236, %v3620
    %v3622 = vpop.f32.mrb[0].mxu0
    %3623 = vmatprep.mubr.f32.mxu0 0.0
    %3624 = vmatmul.mubr.f32.gmra.mrb[0].mxu0 %v2971
    %v3625 = vpop.f32.mrb[0].mxu0
    %v3626 = vadd.f32 %v3241, %v3625
    %v3627 = vpop.f32.mrb[0].mxu0
    %3628 = vmatprep.mubr.f32.mxu0 0.0
    %3629 = vmatmul.mubr.f32.gmra.mrb[0].mxu0 %v2974
    %v3630 = vpop.f32.mrb[0].mxu0
    %v3631 = vadd.f32 %v3246, %v3630
    %v3632 = vpop.f32.mrb[0].mxu0
    %3633 = vmatprep.mubr.f32.mxu0 0.0
    %3634 = vmatmul.mubr.f32.gmra.mrb[0].mxu0 %v2977
    %v3635 = vpop.f32.mrb[0].mxu0
    %v3636 = vadd.f32 %v3251, %v3635
    %v3637 = vpop.f32.mrb[0].mxu0
    %3638 = vmatprep.mubr.f32.mxu0 0.0
    %3639 = vmatmul.mubr.f32.gmra.mrb[0].mxu0 %v2980
    %v3640 = vpop.f32.mrb[0].mxu0
    %v3641 = vadd.f32 %v3256, %v3640
    %v3642 = vpop.f32.mrb[0].mxu0
    %3643 = vmatprep.mubr.f32.mxu0 0.0
    %3644 = vmatmul.mubr.f32.gmra.mrb[0].mxu0 %v2983
    %v3645 = vpop.f32.mrb[0].mxu0
    %v3646 = vadd.f32 %v3261, %v3645
    %v3647 = vpop.f32.mrb[0].mxu0
    %3648 = vmatprep.mubr.f32.mxu0 0.0
    %3649 = vmatmul.mubr.f32.gmra.mrb[0].mxu0 %v2986
    %v3650 = vpop.f32.mrb[0].mxu0
    %v3651 = vadd.f32 %v3266, %v3650
    %v3652 = vpop.f32.mrb[0].mxu0
    %3653 = vmatprep.mubr.f32.mxu0 0.0
    %3654 = vmatmul.mubr.f32.gmra.mrb[0].mxu0 %v2989
    %v3655 = vpop.f32.mrb[0].mxu0
    %v3656 = vadd.f32 %v3271, %v3655
    %v3657 = vpop.f32.mrb[0].mxu0
    %3658 = vmatprep.mubr.f32.mxu0 0.0
    %3659 = vmatmul.mubr.f32.gmra.mrb[0].mxu0 %v2992
    %v3660 = vpop.f32.mrb[0].mxu0
    %v3661 = vadd.f32 %v3276, %v3660
    %v3662 = vpop.f32.mrb[0].mxu0
    %3663 = vmatprep.mubr.f32.mxu0 0.0
    %3664 = vmatmul.mubr.f32.gmra.mrb[0].mxu0 %v2995
    %v3665 = vpop.f32.mrb[0].mxu0
    %v3666 = vadd.f32 %v3281, %v3665
    %v3667 = vpop.f32.mrb[0].mxu0
    %3668 = vmatprep.mubr.f32.mxu0 0.0
    %3669 = vmatmul.mubr.f32.gmra.mrb[0].mxu0 %v2998
    %v3670 = vpop.f32.mrb[0].mxu0
    %v3671 = vadd.f32 %v3286, %v3670
    %v3672 = vpop.f32.mrb[0].mxu0
    %3673 = vmatprep.mubr.f32.mxu0 0.0
    %3674 = vmatmul.mubr.f32.gmra.mrb[0].mxu0 %v3001
    %v3675 = vpop.f32.mrb[0].mxu0
    %v3676 = vadd.f32 %v3291, %v3675
    %v3677 = vpop.f32.mrb[0].mxu0
    %3678 = vmatprep.mubr.f32.mxu0 0.0
    %3679 = vmatmul.mubr.f32.gmra.mrb[0].mxu0 %v3004
    %v3680 = vpop.f32.mrb[0].mxu0
    %v3681 = vadd.f32 %v3296, %v3680
    %v3682 = vpop.f32.mrb[0].mxu0
    %3683 = vmatprep.mubr.f32.mxu0 0.0
    %3684 = vmatmul.mubr.f32.gmra.mrb[0].mxu0 %v3007
    %v3685 = vpop.f32.mrb[0].mxu0
    %v3686 = vadd.f32 %v3301, %v3685
    %v3687 = vpop.f32.mrb[0].mxu0
    %3688 = vmatprep.mubr.f32.mxu0 0.0
    %3689 = vmatmul.mubr.f32.gmra.mrb[0].mxu0 %v3010
    %v3690 = vpop.f32.mrb[0].mxu0
    %v3691 = vadd.f32 %v3306, %v3690
    %v3692 = vpop.f32.mrb[0].mxu0
    %3693 = vmatprep.mubr.f32.mxu0 0.0
    %3694 = vmatmul.mubr.f32.gmra.mrb[0].mxu0 %v3013
    %v3695 = vpop.f32.mrb[0].mxu0
    %v3696 = vadd.f32 %v3311, %v3695
    %v3697 = vpop.f32.mrb[0].mxu0
    %3698 = vmatprep.mubr.f32.mxu0 0.0
    %3699 = vmatmul.mubr.f32.gmra.mrb[0].mxu0 %v3016
    %v3700 = vpop.f32.mrb[0].mxu0
    %v3701 = vadd.f32 %v3316, %v3700
    %v3702 = vpop.f32.mrb[0].mxu0
    %3703 = vmatprep.mubr.f32.mxu0 0.0
    %3704 = vmatmul.mubr.f32.gmra.mrb[0].mxu0 %v3019
    %v3705 = vpop.f32.mrb[0].mxu0
    %v3706 = vadd.f32 %v3321, %v3705
    %v3707 = vpop.f32.mrb[0].mxu0
    %3708 = vmatprep.mubr.f32.mxu0 0.0
    %3709 = vmatmul.mubr.f32.gmra.mrb[0].mxu0 %v3022
    %v3710 = vpop.f32.mrb[0].mxu0
    %v3711 = vadd.f32 %v3326, %v3710
    %v3712 = vpop.f32.mrb[0].mxu0
    %3713 = vmatprep.mubr.f32.mxu0 0.0
    %3714 = vmatmul.mubr.f32.gmra.mrb[0].mxu0 %v3025
    %v3715 = vpop.f32.mrb[0].mxu0
    %v3716 = vadd.f32 %v3331, %v3715
    %v3717 = vpop.f32.mrb[0].mxu0
    %3718 = vmatprep.mubr.f32.mxu0 0.0
    %3719 = vmatmul.mubr.f32.gmra.mrb[0].mxu0 %v3028
    %v3720 = vpop.f32.mrb[0].mxu0
    %v3721 = vadd.f32 %v3336, %v3720
    %v3722 = vpop.f32.mrb[0].mxu0
    %3723 = vmatprep.mubr.f32.mxu0 0.0
    %3724 = vmatmul.mubr.f32.gmra.mrb[0].mxu0 %v3031
    %v3725 = vpop.f32.mrb[0].mxu0
    %v3726 = vadd.f32 %v3341, %v3725
    %v3727 = vpop.f32.mrb[0].mxu0
    %3728 = vmatprep.mubr.f32.mxu0 0.0
    %3729 = vmatmul.mubr.f32.gmra.mrb[0].mxu0 %v3034
    %v3730 = vpop.f32.mrb[0].mxu0
    %v3731 = vadd.f32 %v3346, %v3730
    %v3732 = vpop.f32.mrb[0].mxu0
    %3733 = vmatprep.mubr.f32.mxu0 0.0
    %3734 = vmatmul.mubr.f32.gmra.mrb[0].mxu0 %v3037
    %v3735 = vpop.f32.mrb[0].mxu0
    %v3736 = vadd.f32 %v3351, %v3735
    %v3737 = vpop.f32.mrb[0].mxu0
    %3738 = vmatprep.mubr.f32.mxu0 0.0
    %3739 = vmatmul.mubr.f32.gmra.mrb[0].mxu0 %v3040
    %v3740 = vpop.f32.mrb[0].mxu0
    %v3741 = vadd.f32 %v3356, %v3740
    %v3742 = vpop.f32.mrb[0].mxu0
    %3743 = vmatprep.mubr.f32.mxu0 0.0
    %3744 = vmatmul.mubr.f32.gmra.mrb[0].mxu0 %v3043
    %v3745 = vpop.f32.mrb[0].mxu0
    %v3746 = vadd.f32 %v3361, %v3745
    %v3747 = vpop.f32.mrb[0].mxu0
    %3748 = vmatprep.mubr.f32.mxu0 0.0
    %3749 = vmatmul.mubr.f32.gmra.mrb[0].mxu0 %v3046
    %v3750 = vpop.f32.mrb[0].mxu0
    %v3751 = vadd.f32 %v3366, %v3750
    %v3752 = vpop.f32.mrb[0].mxu0
    %3753 = vmatprep.mubr.f32.mxu0 0.0
    %3754 = vmatmul.mubr.f32.gmra.mrb[0].mxu0 %v3049
    %v3755 = vpop.f32.mrb[0].mxu0
    %v3756 = vadd.f32 %v3371, %v3755
    %v3757 = vpop.f32.mrb[0].mxu0
    %3758 = vmatprep.mubr.f32.mxu0 0.0
    %3759 = vmatmul.mubr.f32.gmra.mrb[0].mxu0 %v3052
    %v3760 = vpop.f32.mrb[0].mxu0
    %v3761 = vadd.f32 %v3376, %v3760
    %v3762 = vpop.f32.mrb[0].mxu0
    %3763 = vmatprep.mubr.f32.mxu0 0.0
    %3764 = vmatmul.mubr.f32.gmra.mrb[0].mxu0 %v3055
    %v3765 = vpop.f32.mrb[0].mxu0
    %v3766 = vadd.f32 %v3381, %v3765
    %v3767 = vpop.f32.mrb[0].mxu0
    %3768 = vmatprep.mubr.f32.mxu0 0.0
    %3769 = vmatmul.mubr.f32.gmra.mrb[0].mxu0 %v3058
    %v3770 = vpop.f32.mrb[0].mxu0
    %v3771 = vadd.f32 %v3386, %v3770
    %v3772 = vpop.f32.mrb[0].mxu0
    %3773 = vmatprep.mubr.f32.mxu0 0.0
    %3774 = vmatmul.mubr.f32.gmra.mrb[0].mxu0 %v3061
    %v3775 = vpop.f32.mrb[0].mxu0
    %v3776 = vadd.f32 %v3391, %v3775
    %v3777 = vpop.f32.mrb[0].mxu0
    %3778 = vmatprep.mubr.f32.mxu0 0.0
    %3779 = vmatmul.mubr.f32.gmra.mrb[0].mxu0 %v3064
    %v3780 = vpop.f32.mrb[0].mxu0
    %v3781 = vadd.f32 %v3396, %v3780
    %v3782 = vpop.f32.mrb[0].mxu0
    %3783 = vmatprep.mubr.f32.mxu0 0.0
    %3784 = vmatmul.mubr.f32.gmra.mrb[0].mxu0 %v3067
    %v3785 = vpop.f32.mrb[0].mxu0
    %v3786 = vadd.f32 %v3401, %v3785
    %v3787 = vpop.f32.mrb[0].mxu0
    %3788 = vmatprep.mubr.f32.mxu0 0.0
    %3789 = vmatmul.mubr.f32.gmra.mrb[0].mxu0 %v3070
    %v3790 = vpop.f32.mrb[0].mxu0
    %v3791 = vadd.f32 %v3406, %v3790
    %v3792 = vpop.f32.mrb[0].mxu0
    %3793 = vmatprep.mubr.f32.mxu0 0.0
    %3794 = vmatmul.mubr.f32.gmra.mrb[0].mxu0 %v3073
    %v3795 = vpop.f32.mrb[0].mxu0
    %v3796 = vadd.f32 %v3411, %v3795
    %v3797 = vpop.f32.mrb[0].mxu0
    %3798 = vmatprep.mubr.f32.mxu0 0.0
    %3799 = vmatmul.mubr.f32.gmra.mrb[0].mxu0 %v3076
    %v3800 = vpop.f32.mrb[0].mxu0
    %v3801 = vadd.f32 %v3416, %v3800
    %v3802 = vpop.f32.mrb[0].mxu0
    %3803 = vmatprep.mubr.f32.mxu0 0.0
    %3804 = vmatmul.mubr.f32.gmra.mrb[0].mxu0 %v3079
    %v3805 = vpop.f32.mrb[0].mxu0
    %v3806 = vadd.f32 %v3421, %v3805
    %v3807 = vpop.f32.mrb[0].mxu0
    %3808 = vmatprep.mubr.f32.mxu0 0.0
    %3809 = vmatmul.mubr.f32.gmra.mrb[0].mxu0 %v3082
    %v3810 = vpop.f32.mrb[0].mxu0
    %v3811 = vadd.f32 %v3426, %v3810
    %v3812 = vpop.f32.mrb[0].mxu0
    %3813 = vmatprep.mubr.f32.mxu0 0.0
    %3814 = vmatmul.mubr.f32.gmra.mrb[0].mxu0 %v3085
    %v3815 = vpop.f32.mrb[0].mxu0
    %v3816 = vadd.f32 %v3431, %v3815
    %v3817 = vpop.f32.mrb[0].mxu0
    %3818 = vmatprep.mubr.f32.mxu0 0.0
    %3819 = vmatmul.mubr.f32.gmra.mrb[0].mxu0 %v3088
    %v3820 = vpop.f32.mrb[0].mxu0
    %v3821 = vadd.f32 %v3436, %v3820
    %v3822 = vpop.f32.mrb[0].mxu0
    %3823 = vmatprep.mubr.f32.mxu0 0.0
    %3824 = vmatmul.mubr.f32.gmra.mrb[0].mxu0 %v3091
    %v3825 = vpop.f32.mrb[0].mxu0
    %v3826 = vadd.f32 %v3441, %v3825
    %v3827 = vpop.f32.mrb[0].mxu0
    %3828 = vmatprep.mubr.f32.mxu0 0.0
    %3829 = vmatmul.mubr.f32.gmra.mrb[0].mxu0 %v3094
    %v3830 = vpop.f32.mrb[0].mxu0
    %v3831 = vadd.f32 %v3446, %v3830
    %v3832 = vpop.f32.mrb[0].mxu0
    %3833 = vmatprep.mubr.f32.mxu0 0.0
    %3834 = vmatmul.mubr.f32.gmra.mrb[0].mxu0 %v3097
    %v3835 = vpop.f32.mrb[0].mxu0
    %v3836 = vadd.f32 %v3451, %v3835
    %v3837 = vpop.f32.mrb[0].mxu0
    %3838 = vmatprep.mubr.f32.mxu0 0.0
    %3839 = vmatmul.mubr.f32.gmra.mrb[0].mxu0 %v3100
    %v3840 = vpop.f32.mrb[0].mxu0
    %v3841 = vadd.f32 %v3456, %v3840
    %v3842 = vpop.f32.mrb[0].mxu0
    %3843 = vmatprep.mubr.f32.mxu0 0.0
    %3844 = vmatmul.mubr.f32.gmra.mrb[0].mxu0 %v3103
    %v3845 = vpop.f32.mrb[0].mxu0
    %v3846 = vadd.f32 %v3461, %v3845
    %v3847 = vpop.f32.mrb[0].mxu0
    %3848 = vmatprep.mubr.f32.mxu0 0.0
    %3849 = vmatmul.mubr.f32.gmra.mrb[0].mxu0 %v3106
    %v3850 = vpop.f32.mrb[0].mxu0
    %v3851 = vadd.f32 %v3466, %v3850
    %v3852 = vpop.f32.mrb[0].mxu0
    %3853 = vmatprep.mubr.f32.mxu0 0.0
    %3854 = vmatmul.mubr.f32.gmra.mrb[0].mxu0 %v3109
    %v3855 = vpop.f32.mrb[0].mxu0
    %v3856 = vadd.f32 %v3471, %v3855
    %v3857 = vpop.f32.mrb[0].mxu0
    %3858 = vmatprep.mubr.f32.mxu0 0.0
    %3859 = vmatmul.mubr.f32.gmra.mrb[0].mxu0 %v3112
    %v3860 = vpop.f32.mrb[0].mxu0
    %v3861 = vadd.f32 %v3476, %v3860
    %v3862 = vpop.f32.mrb[0].mxu0
    %3863 = vmatprep.mubr.f32.mxu0 0.0
    %3864 = vmatmul.mubr.f32.gmra.mrb[0].mxu0 %v3115
    %v3865 = vpop.f32.mrb[0].mxu0
    %v3866 = vadd.f32 %v3481, %v3865
    %v3867 = vpop.f32.mrb[0].mxu0
    %3868 = vmatprep.mubr.f32.mxu0 0.0
    %3869 = vmatmul.mubr.f32.gmra.mrb[0].mxu0 %v3118
    %v3870 = vpop.f32.mrb[0].mxu0
    %v3871 = vadd.f32 %v3486, %v3870
    %v3872 = vpop.f32.mrb[0].mxu0
    %3873 = vmatprep.mubr.f32.mxu0 0.0
    %3874 = vmatmul.mubr.f32.gmra.mrb[0].mxu0 %v3121
    %v3875 = vpop.f32.mrb[0].mxu0
    %v3876 = vadd.f32 %v3491, %v3875
    %v3877 = vpop.f32.mrb[0].mxu0
    %3878 = vmatprep.mubr.f32.mxu0 0.0
    %3879 = vmatmul.mubr.f32.gmra.mrb[0].mxu0 %v3124
    %v3880 = vpop.f32.mrb[0].mxu0
    %v3881 = vadd.f32 %v3496, %v3880
    %v3882 = vpop.f32.mrb[0].mxu0
    %3883 = vmatprep.mubr.f32.mxu0 0.0
    %3884 = vmatmul.mubr.f32.gmra.mrb[0].mxu0 %v3127
    %v3885 = vpop.f32.mrb[0].mxu0
    %v3886 = vadd.f32 %v3501, %v3885
    %v3887 = vpop.f32.mrb[0].mxu0
    %3888 = vmatprep.mubr.f32.mxu0 0.0
    %3889 = vmatmul.mubr.f32.gmra.mrb[0].mxu0 %v3130
    %v3890 = vpop.f32.mrb[0].mxu0
    %v3891 = vadd.f32 %v3506, %v3890
    %v3892 = vpop.f32.mrb[0].mxu0
    %3893 = vmatprep.mubr.f32.mxu0 0.0
    %3894 = vmatmul.mubr.f32.gmra.mrb[0].mxu0 %v3133
    %v3895 = vpop.f32.mrb[0].mxu0
    %v3896 = vadd.f32 %v3511, %v3895
    %v3897 = vpop.f32.mrb[0].mxu0
    %3898 = vmatprep.mubr.f32.mxu0 0.0
    %3899 = vmatmul.mubr.f32.gmra.mrb[0].mxu0 %v3136
    %v3900 = vpop.f32.mrb[0].mxu0
    %v3901 = vadd.f32 %v3516, %v3900
    %v3902 = vpop.f32.mrb[0].mxu0
    %3903 = vmatprep.mubr.f32.mxu0 0.0
    %3904 = vmatmul.mubr.f32.gmra.mrb[0].mxu0 %v3139
    %v3905 = vpop.f32.mrb[0].mxu0
    %v3906 = vadd.f32 %v3521, %v3905
    %v3907 = vpop.f32.mrb[0].mxu0
    %3908 = vmatprep.mubr.f32.mxu0 0.0
    %3909 = vmatmul.mubr.f32.gmra.mrb[0].mxu0 %v3142
    %v3910 = vpop.f32.mrb[0].mxu0
    %v3911 = vadd.f32 %v3526, %v3910
    %v3912 = vpop.f32.mrb[0].mxu0
    %3913 = vdwg.mxu0
    %v3914 = vld [vmem:[%s3] sm:$0x1]
    %v3915 = vld [vmem:[%s4] sm:$0x1]
    %v3916 = vsel %vm94, %v3596, 0.0
    %v3917 = vsel %vm94, %v3601, 0.0
    %v3918 = vadd.f32 %v3916, %v3917
    %v3919 = vsel %vm94, %v3606, 0.0
    %v3920 = vadd.f32 %v3918, %v3919
    %v3921 = vsel %vm94, %v3611, 0.0
    %v3922 = vadd.f32 %v3920, %v3921
    %v3923 = vsel %vm94, %v3616, 0.0
    %v3924 = vadd.f32 %v3922, %v3923
    %v3925 = vsel %vm94, %v3621, 0.0
    %v3926 = vadd.f32 %v3924, %v3925
    %v3927 = vsel %vm94, %v3626, 0.0
    %v3928 = vadd.f32 %v3926, %v3927
    %v3929 = vsel %vm94, %v3631, 0.0
    %v3930 = vadd.f32 %v3928, %v3929
    %v3931 = vsel %vm94, %v3636, 0.0
    %v3932 = vadd.f32 %v3930, %v3931
    %v3933 = vsel %vm94, %v3641, 0.0
    %v3934 = vadd.f32 %v3932, %v3933
    %v3935 = vsel %vm94, %v3646, 0.0
    %v3936 = vadd.f32 %v3934, %v3935
    %v3937 = vsel %vm94, %v3651, 0.0
    %v3938 = vadd.f32 %v3936, %v3937
    %v3939 = vsel %vm94, %v3656, 0.0
    %v3940 = vadd.f32 %v3938, %v3939
    %v3941 = vsel %vm94, %v3661, 0.0
    %v3942 = vadd.f32 %v3940, %v3941
    %v3943 = vsel %vm94, %v3666, 0.0
    %v3944 = vadd.f32 %v3942, %v3943
    %v3945 = vsel %vm94, %v3671, 0.0
    %v3946 = vadd.f32 %v3944, %v3945
    %v3947 = vsel %vm94, %v3676, 0.0
    %v3948 = vadd.f32 %v3946, %v3947
    %v3949 = vsel %vm94, %v3681, 0.0
    %v3950 = vadd.f32 %v3948, %v3949
    %v3951 = vsel %vm94, %v3686, 0.0
    %v3952 = vadd.f32 %v3950, %v3951
    %v3953 = vsel %vm94, %v3691, 0.0
    %v3954 = vadd.f32 %v3952, %v3953
    %v3955 = vsel %vm94, %v3696, 0.0
    %v3956 = vadd.f32 %v3954, %v3955
    %v3957 = vsel %vm94, %v3701, 0.0
    %v3958 = vadd.f32 %v3956, %v3957
    %v3959 = vsel %vm94, %v3706, 0.0
    %v3960 = vadd.f32 %v3958, %v3959
    %v3961 = vsel %vm94, %v3711, 0.0
    %v3962 = vadd.f32 %v3960, %v3961
    %v3963 = vsel %vm94, %v3716, 0.0
    %v3964 = vadd.f32 %v3962, %v3963
    %v3965 = vsel %vm94, %v3721, 0.0
    %v3966 = vadd.f32 %v3964, %v3965
    %v3967 = vsel %vm94, %v3726, 0.0
    %v3968 = vadd.f32 %v3966, %v3967
    %v3969 = vsel %vm94, %v3731, 0.0
    %v3970 = vadd.f32 %v3968, %v3969
    %v3971 = vsel %vm94, %v3736, 0.0
    %v3972 = vadd.f32 %v3970, %v3971
    %v3973 = vsel %vm94, %v3741, 0.0
    %v3974 = vadd.f32 %v3972, %v3973
    %v3975 = vsel %vm94, %v3746, 0.0
    %v3976 = vadd.f32 %v3974, %v3975
    %v3977 = vsel %vm94, %v3751, 0.0
    %v3978 = vadd.f32 %v3976, %v3977
    %v3979 = vsel %vm94, %v3756, 0.0
    %v3980 = vadd.f32 %v3978, %v3979
    %v3981 = vsel %vm94, %v3761, 0.0
    %v3982 = vadd.f32 %v3980, %v3981
    %v3983 = vsel %vm94, %v3766, 0.0
    %v3984 = vadd.f32 %v3982, %v3983
    %v3985 = vsel %vm94, %v3771, 0.0
    %v3986 = vadd.f32 %v3984, %v3985
    %v3987 = vsel %vm94, %v3776, 0.0
    %v3988 = vadd.f32 %v3986, %v3987
    %v3989 = vsel %vm94, %v3781, 0.0
    %v3990 = vadd.f32 %v3988, %v3989
    %v3991 = vsel %vm94, %v3786, 0.0
    %v3992 = vadd.f32 %v3990, %v3991
    %v3993 = vsel %vm94, %v3791, 0.0
    %v3994 = vadd.f32 %v3992, %v3993
    %v3995 = vsel %vm94, %v3796, 0.0
    %v3996 = vadd.f32 %v3994, %v3995
    %v3997 = vsel %vm94, %v3801, 0.0
    %v3998 = vadd.f32 %v3996, %v3997
    %v3999 = vsel %vm94, %v3806, 0.0
    %v4000 = vadd.f32 %v3998, %v3999
    %v4001 = vsel %vm94, %v3811, 0.0
    %v4002 = vadd.f32 %v4000, %v4001
    %v4003 = vsel %vm94, %v3816, 0.0
    %v4004 = vadd.f32 %v4002, %v4003
    %v4005 = vsel %vm94, %v3821, 0.0
    %v4006 = vadd.f32 %v4004, %v4005
    %v4007 = vsel %vm94, %v3826, 0.0
    %v4008 = vadd.f32 %v4006, %v4007
    %v4009 = vsel %vm94, %v3831, 0.0
    %v4010 = vadd.f32 %v4008, %v4009
    %v4011 = vsel %vm94, %v3836, 0.0
    %v4012 = vadd.f32 %v4010, %v4011
    %v4013 = vsel %vm94, %v3841, 0.0
    %v4014 = vadd.f32 %v4012, %v4013
    %v4015 = vsel %vm94, %v3846, 0.0
    %v4016 = vadd.f32 %v4014, %v4015
    %v4017 = vsel %vm94, %v3851, 0.0
    %v4018 = vadd.f32 %v4016, %v4017
    %v4019 = vsel %vm94, %v3856, 0.0
    %v4020 = vadd.f32 %v4018, %v4019
    %v4021 = vsel %vm94, %v3861, 0.0
    %v4022 = vadd.f32 %v4020, %v4021
    %v4023 = vsel %vm94, %v3866, 0.0
    %v4024 = vadd.f32 %v4022, %v4023
    %v4025 = vsel %vm94, %v3871, 0.0
    %v4026 = vadd.f32 %v4024, %v4025
    %v4027 = vsel %vm94, %v3876, 0.0
    %v4028 = vadd.f32 %v4026, %v4027
    %v4029 = vsel %vm94, %v3881, 0.0
    %v4030 = vadd.f32 %v4028, %v4029
    %v4031 = vsel %vm94, %v3886, 0.0
    %v4032 = vadd.f32 %v4030, %v4031
    %v4033 = vsel %vm94, %v3891, 0.0
    %v4034 = vadd.f32 %v4032, %v4033
    %v4035 = vsel %vm94, %v3896, 0.0
    %v4036 = vadd.f32 %v4034, %v4035
    %v4037 = vsel %vm94, %v3901, 0.0
    %v4038 = vadd.f32 %v4036, %v4037
    %v4039 = vsel %vm94, %v3906, 0.0
    %v4040 = vadd.f32 %v4038, %v4039
    %v4041 = vsel %vm94, %v3911, 0.0
    %v4042 = vadd.f32 %v4040, %v4041
    %v4043 = vrot.slane %v4042, 4
    %v4044 = vadd.f32 %v4042, %v4043
    %v4045 = vrot.slane %v4044, 2
    %v4046 = vadd.f32 %v4044, %v4045
    %v4047 = vrot.slane %v4046, 1
    %v4048 = vadd.f32 %v4046, %v4047
    %v4049 = vmul.f32 %v3596, %v3596
    %v4050 = vmul.f32 %v3601, %v3601
    %v4051 = vmul.f32 %v3606, %v3606
    %v4052 = vmul.f32 %v3611, %v3611
    %v4053 = vmul.f32 %v3616, %v3616
    %v4054 = vmul.f32 %v3621, %v3621
    %v4055 = vmul.f32 %v3626, %v3626
    %v4056 = vmul.f32 %v3631, %v3631
    %v4057 = vmul.f32 %v3636, %v3636
    %v4058 = vmul.f32 %v3641, %v3641
    %v4059 = vmul.f32 %v3646, %v3646
    %v4060 = vmul.f32 %v3651, %v3651
    %v4061 = vmul.f32 %v3656, %v3656
    %v4062 = vmul.f32 %v3661, %v3661
    %v4063 = vmul.f32 %v3666, %v3666
    %v4064 = vmul.f32 %v3671, %v3671
    %v4065 = vmul.f32 %v3676, %v3676
    %v4066 = vmul.f32 %v3681, %v3681
    %v4067 = vmul.f32 %v3686, %v3686
    %v4068 = vmul.f32 %v3691, %v3691
    %v4069 = vmul.f32 %v3696, %v3696
    %v4070 = vmul.f32 %v3701, %v3701
    %v4071 = vmul.f32 %v3706, %v3706
    %v4072 = vmul.f32 %v3711, %v3711
    %v4073 = vmul.f32 %v3716, %v3716
    %v4074 = vmul.f32 %v3721, %v3721
    %v4075 = vmul.f32 %v3726, %v3726
    %v4076 = vmul.f32 %v3731, %v3731
    %v4077 = vmul.f32 %v3736, %v3736
    %v4078 = vmul.f32 %v3741, %v3741
    %v4079 = vmul.f32 %v3746, %v3746
    %v4080 = vmul.f32 %v3751, %v3751
    %v4081 = vmul.f32 %v3756, %v3756
    %v4082 = vmul.f32 %v3761, %v3761
    %v4083 = vmul.f32 %v3766, %v3766
    %v4084 = vmul.f32 %v3771, %v3771
    %v4085 = vmul.f32 %v3776, %v3776
    %v4086 = vmul.f32 %v3781, %v3781
    %v4087 = vmul.f32 %v3786, %v3786
    %v4088 = vmul.f32 %v3791, %v3791
    %v4089 = vmul.f32 %v3796, %v3796
    %v4090 = vmul.f32 %v3801, %v3801
    %v4091 = vmul.f32 %v3806, %v3806
    %v4092 = vmul.f32 %v3811, %v3811
    %v4093 = vmul.f32 %v3816, %v3816
    %v4094 = vmul.f32 %v3821, %v3821
    %v4095 = vmul.f32 %v3826, %v3826
    %v4096 = vmul.f32 %v3831, %v3831
    %v4097 = vmul.f32 %v3836, %v3836
    %v4098 = vmul.f32 %v3841, %v3841
    %v4099 = vmul.f32 %v3846, %v3846
    %v4100 = vmul.f32 %v3851, %v3851
    %v4101 = vmul.f32 %v3856, %v3856
    %v4102 = vmul.f32 %v3861, %v3861
    %v4103 = vmul.f32 %v3866, %v3866
    %v4104 = vmul.f32 %v3871, %v3871
    %v4105 = vmul.f32 %v3876, %v3876
    %v4106 = vmul.f32 %v3881, %v3881
    %v4107 = vmul.f32 %v3886, %v3886
    %v4108 = vmul.f32 %v3891, %v3891
    %v4109 = vmul.f32 %v3896, %v3896
    %v4110 = vmul.f32 %v3901, %v3901
    %v4111 = vmul.f32 %v3906, %v3906
    %v4112 = vmul.f32 %v3911, %v3911
    %v4113 = vsel %vm94, %v4049, 0.0
    %v4114 = vsel %vm94, %v4050, 0.0
    %v4115 = vadd.f32 %v4113, %v4114
    %v4116 = vsel %vm94, %v4051, 0.0
    %v4117 = vadd.f32 %v4115, %v4116
    %v4118 = vsel %vm94, %v4052, 0.0
    %v4119 = vadd.f32 %v4117, %v4118
    %v4120 = vsel %vm94, %v4053, 0.0
    %v4121 = vadd.f32 %v4119, %v4120
    %v4122 = vsel %vm94, %v4054, 0.0
    %v4123 = vadd.f32 %v4121, %v4122
    %v4124 = vsel %vm94, %v4055, 0.0
    %v4125 = vadd.f32 %v4123, %v4124
    %v4126 = vsel %vm94, %v4056, 0.0
    %v4127 = vadd.f32 %v4125, %v4126
    %v4128 = vsel %vm94, %v4057, 0.0
    %v4129 = vadd.f32 %v4127, %v4128
    %v4130 = vsel %vm94, %v4058, 0.0
    %v4131 = vadd.f32 %v4129, %v4130
    %v4132 = vsel %vm94, %v4059, 0.0
    %v4133 = vadd.f32 %v4131, %v4132
    %v4134 = vsel %vm94, %v4060, 0.0
    %v4135 = vadd.f32 %v4133, %v4134
    %v4136 = vsel %vm94, %v4061, 0.0
    %v4137 = vadd.f32 %v4135, %v4136
    %v4138 = vsel %vm94, %v4062, 0.0
    %v4139 = vadd.f32 %v4137, %v4138
    %v4140 = vsel %vm94, %v4063, 0.0
    %v4141 = vadd.f32 %v4139, %v4140
    %v4142 = vsel %vm94, %v4064, 0.0
    %v4143 = vadd.f32 %v4141, %v4142
    %v4144 = vsel %vm94, %v4065, 0.0
    %v4145 = vadd.f32 %v4143, %v4144
    %v4146 = vsel %vm94, %v4066, 0.0
    %v4147 = vadd.f32 %v4145, %v4146
    %v4148 = vsel %vm94, %v4067, 0.0
    %v4149 = vadd.f32 %v4147, %v4148
    %v4150 = vsel %vm94, %v4068, 0.0
    %v4151 = vadd.f32 %v4149, %v4150
    %v4152 = vsel %vm94, %v4069, 0.0
    %v4153 = vadd.f32 %v4151, %v4152
    %v4154 = vsel %vm94, %v4070, 0.0
    %v4155 = vadd.f32 %v4153, %v4154
    %v4156 = vsel %vm94, %v4071, 0.0
    %v4157 = vadd.f32 %v4155, %v4156
    %v4158 = vsel %vm94, %v4072, 0.0
    %v4159 = vadd.f32 %v4157, %v4158
    %v4160 = vsel %vm94, %v4073, 0.0
    %v4161 = vadd.f32 %v4159, %v4160
    %v4162 = vsel %vm94, %v4074, 0.0
    %v4163 = vadd.f32 %v4161, %v4162
    %v4164 = vsel %vm94, %v4075, 0.0
    %v4165 = vadd.f32 %v4163, %v4164
    %v4166 = vsel %vm94, %v4076, 0.0
    %v4167 = vadd.f32 %v4165, %v4166
    %v4168 = vsel %vm94, %v4077, 0.0
    %v4169 = vadd.f32 %v4167, %v4168
    %v4170 = vsel %vm94, %v4078, 0.0
    %v4171 = vadd.f32 %v4169, %v4170
    %v4172 = vsel %vm94, %v4079, 0.0
    %v4173 = vadd.f32 %v4171, %v4172
    %v4174 = vsel %vm94, %v4080, 0.0
    %v4175 = vadd.f32 %v4173, %v4174
    %v4176 = vsel %vm94, %v4081, 0.0
    %v4177 = vadd.f32 %v4175, %v4176
    %v4178 = vsel %vm94, %v4082, 0.0
    %v4179 = vadd.f32 %v4177, %v4178
    %v4180 = vsel %vm94, %v4083, 0.0
    %v4181 = vadd.f32 %v4179, %v4180
    %v4182 = vsel %vm94, %v4084, 0.0
    %v4183 = vadd.f32 %v4181, %v4182
    %v4184 = vsel %vm94, %v4085, 0.0
    %v4185 = vadd.f32 %v4183, %v4184
    %v4186 = vsel %vm94, %v4086, 0.0
    %v4187 = vadd.f32 %v4185, %v4186
    %v4188 = vsel %vm94, %v4087, 0.0
    %v4189 = vadd.f32 %v4187, %v4188
    %v4190 = vsel %vm94, %v4088, 0.0
    %v4191 = vadd.f32 %v4189, %v4190
    %v4192 = vsel %vm94, %v4089, 0.0
    %v4193 = vadd.f32 %v4191, %v4192
    %v4194 = vsel %vm94, %v4090, 0.0
    %v4195 = vadd.f32 %v4193, %v4194
    %v4196 = vsel %vm94, %v4091, 0.0
    %v4197 = vadd.f32 %v4195, %v4196
    %v4198 = vsel %vm94, %v4092, 0.0
    %v4199 = vadd.f32 %v4197, %v4198
    %v4200 = vsel %vm94, %v4093, 0.0
    %v4201 = vadd.f32 %v4199, %v4200
    %v4202 = vsel %vm94, %v4094, 0.0
    %v4203 = vadd.f32 %v4201, %v4202
    %v4204 = vsel %vm94, %v4095, 0.0
    %v4205 = vadd.f32 %v4203, %v4204
    %v4206 = vsel %vm94, %v4096, 0.0
    %v4207 = vadd.f32 %v4205, %v4206
    %v4208 = vsel %vm94, %v4097, 0.0
    %v4209 = vadd.f32 %v4207, %v4208
    %v4210 = vsel %vm94, %v4098, 0.0
    %v4211 = vadd.f32 %v4209, %v4210
    %v4212 = vsel %vm94, %v4099, 0.0
    %v4213 = vadd.f32 %v4211, %v4212
    %v4214 = vsel %vm94, %v4100, 0.0
    %v4215 = vadd.f32 %v4213, %v4214
    %v4216 = vsel %vm94, %v4101, 0.0
    %v4217 = vadd.f32 %v4215, %v4216
    %v4218 = vsel %vm94, %v4102, 0.0
    %v4219 = vadd.f32 %v4217, %v4218
    %v4220 = vsel %vm94, %v4103, 0.0
    %v4221 = vadd.f32 %v4219, %v4220
    %v4222 = vsel %vm94, %v4104, 0.0
    %v4223 = vadd.f32 %v4221, %v4222
    %v4224 = vsel %vm94, %v4105, 0.0
    %v4225 = vadd.f32 %v4223, %v4224
    %v4226 = vsel %vm94, %v4106, 0.0
    %v4227 = vadd.f32 %v4225, %v4226
    %v4228 = vsel %vm94, %v4107, 0.0
    %v4229 = vadd.f32 %v4227, %v4228
    %v4230 = vsel %vm94, %v4108, 0.0
    %v4231 = vadd.f32 %v4229, %v4230
    %v4232 = vsel %vm94, %v4109, 0.0
    %v4233 = vadd.f32 %v4231, %v4232
    %v4234 = vsel %vm94, %v4110, 0.0
    %v4235 = vadd.f32 %v4233, %v4234
    %v4236 = vsel %vm94, %v4111, 0.0
    %v4237 = vadd.f32 %v4235, %v4236
    %v4238 = vsel %vm94, %v4112, 0.0
    %v4239 = vadd.f32 %v4237, %v4238
    %v4240 = vrot.slane %v4239, 4
    %v4241 = vadd.f32 %v4239, %v4240
    %v4242 = vrot.slane %v4241, 2
    %v4243 = vadd.f32 %v4241, %v4242
    %v4244 = vrot.slane %v4243, 1
    %v4245 = vadd.f32 %v4243, %v4244
    %v4246 = vmul.f32 %v4048, 0.001953125
    %v4247 = vmul.f32 %v4245, 0.001953125
    %v4248 = vmul.f32 %v4246, %v4246
    %v4249 = vsub.f32 %v4247, %v4248
    %v4250 = vadd.f32 %v4249, 1e-05
    %v4251 = vrsqrt.pop %v4250
    %v4252 = vmul.f32 %v3914, %v4251
    %v4253 = vmul.f32 %v4246, %v4252
    %v4254 = vsub.f32 %v3915, %v4253
    %v4256 = vlaneseq
    %v4257 = vshrl.u32 %v4256, 7
    %v4258 = vsub.s32 0, %v4257
    %v4259 = vrot.slane %v4252, %v4258
    %v4261 = vmul.f32 %v3596, %v4259
    %v4262 = vmul.f32 %v3601, %v4259
    %v4263 = vmul.f32 %v3606, %v4259
    %v4264 = vmul.f32 %v3611, %v4259
    %v4265 = vmul.f32 %v3616, %v4259
    %v4266 = vmul.f32 %v3621, %v4259
    %v4267 = vmul.f32 %v3626, %v4259
    %v4268 = vmul.f32 %v3631, %v4259
    %v4269 = vmul.f32 %v3636, %v4259
    %v4270 = vmul.f32 %v3641, %v4259
    %v4271 = vmul.f32 %v3646, %v4259
    %v4272 = vmul.f32 %v3651, %v4259
    %v4273 = vmul.f32 %v3656, %v4259
    %v4274 = vmul.f32 %v3661, %v4259
    %v4275 = vmul.f32 %v3666, %v4259
    %v4276 = vmul.f32 %v3671, %v4259
    %v4277 = vmul.f32 %v3676, %v4259
    %v4278 = vmul.f32 %v3681, %v4259
    %v4279 = vmul.f32 %v3686, %v4259
    %v4280 = vmul.f32 %v3691, %v4259
    %v4281 = vmul.f32 %v3696, %v4259
    %v4282 = vmul.f32 %v3701, %v4259
    %v4283 = vmul.f32 %v3706, %v4259
    %v4284 = vmul.f32 %v3711, %v4259
    %v4285 = vmul.f32 %v3716, %v4259
    %v4286 = vmul.f32 %v3721, %v4259
    %v4287 = vmul.f32 %v3726, %v4259
    %v4288 = vmul.f32 %v3731, %v4259
    %v4289 = vmul.f32 %v3736, %v4259
    %v4290 = vmul.f32 %v3741, %v4259
    %v4291 = vmul.f32 %v3746, %v4259
    %v4292 = vmul.f32 %v3751, %v4259
    %v4293 = vmul.f32 %v3756, %v4259
    %v4294 = vmul.f32 %v3761, %v4259
    %v4295 = vmul.f32 %v3766, %v4259
    %v4296 = vmul.f32 %v3771, %v4259
    %v4297 = vmul.f32 %v3776, %v4259
    %v4298 = vmul.f32 %v3781, %v4259
    %v4299 = vmul.f32 %v3786, %v4259
    %v4300 = vmul.f32 %v3791, %v4259
    %v4301 = vmul.f32 %v3796, %v4259
    %v4302 = vmul.f32 %v3801, %v4259
    %v4303 = vmul.f32 %v3806, %v4259
    %v4304 = vmul.f32 %v3811, %v4259
    %v4305 = vmul.f32 %v3816, %v4259
    %v4306 = vmul.f32 %v3821, %v4259
    %v4307 = vmul.f32 %v3826, %v4259
    %v4308 = vmul.f32 %v3831, %v4259
    %v4309 = vmul.f32 %v3836, %v4259
    %v4310 = vmul.f32 %v3841, %v4259
    %v4311 = vmul.f32 %v3846, %v4259
    %v4312 = vmul.f32 %v3851, %v4259
    %v4313 = vmul.f32 %v3856, %v4259
    %v4314 = vmul.f32 %v3861, %v4259
    %v4315 = vmul.f32 %v3866, %v4259
    %v4316 = vmul.f32 %v3871, %v4259
    %v4317 = vmul.f32 %v3876, %v4259
    %v4318 = vmul.f32 %v3881, %v4259
    %v4319 = vmul.f32 %v3886, %v4259
    %v4320 = vmul.f32 %v3891, %v4259
    %v4321 = vmul.f32 %v3896, %v4259
    %v4322 = vmul.f32 %v3901, %v4259
    %v4323 = vmul.f32 %v3906, %v4259
    %v4324 = vmul.f32 %v3911, %v4259
    %v4326 = vlaneseq
    %v4327 = vshrl.u32 %v4326, 7
    %v4328 = vsub.s32 0, %v4327
    %v4329 = vrot.slane %v4254, %v4328
    %v4331 = vadd.f32 %v4261, %v4329
    %v4332 = vadd.f32 %v4262, %v4329
    %v4333 = vadd.f32 %v4263, %v4329
    %v4334 = vadd.f32 %v4264, %v4329
    %v4335 = vadd.f32 %v4265, %v4329
    %v4336 = vadd.f32 %v4266, %v4329
    %v4337 = vadd.f32 %v4267, %v4329
    %v4338 = vadd.f32 %v4268, %v4329
    %v4339 = vadd.f32 %v4269, %v4329
    %v4340 = vadd.f32 %v4270, %v4329
    %v4341 = vadd.f32 %v4271, %v4329
    %v4342 = vadd.f32 %v4272, %v4329
    %v4343 = vadd.f32 %v4273, %v4329
    %v4344 = vadd.f32 %v4274, %v4329
    %v4345 = vadd.f32 %v4275, %v4329
    %v4346 = vadd.f32 %v4276, %v4329
    %v4347 = vadd.f32 %v4277, %v4329
    %v4348 = vadd.f32 %v4278, %v4329
    %v4349 = vadd.f32 %v4279, %v4329
    %v4350 = vadd.f32 %v4280, %v4329
    %v4351 = vadd.f32 %v4281, %v4329
    %v4352 = vadd.f32 %v4282, %v4329
    %v4353 = vadd.f32 %v4283, %v4329
    %v4354 = vadd.f32 %v4284, %v4329
    %v4355 = vadd.f32 %v4285, %v4329
    %v4356 = vadd.f32 %v4286, %v4329
    %v4357 = vadd.f32 %v4287, %v4329
    %v4358 = vadd.f32 %v4288, %v4329
    %v4359 = vadd.f32 %v4289, %v4329
    %v4360 = vadd.f32 %v4290, %v4329
    %v4361 = vadd.f32 %v4291, %v4329
    %v4362 = vadd.f32 %v4292, %v4329
    %v4363 = vadd.f32 %v4293, %v4329
    %v4364 = vadd.f32 %v4294, %v4329
    %v4365 = vadd.f32 %v4295, %v4329
    %v4366 = vadd.f32 %v4296, %v4329
    %v4367 = vadd.f32 %v4297, %v4329
    %v4368 = vadd.f32 %v4298, %v4329
    %v4369 = vadd.f32 %v4299, %v4329
    %v4370 = vadd.f32 %v4300, %v4329
    %v4371 = vadd.f32 %v4301, %v4329
    %v4372 = vadd.f32 %v4302, %v4329
    %v4373 = vadd.f32 %v4303, %v4329
    %v4374 = vadd.f32 %v4304, %v4329
    %v4375 = vadd.f32 %v4305, %v4329
    %v4376 = vadd.f32 %v4306, %v4329
    %v4377 = vadd.f32 %v4307, %v4329
    %v4378 = vadd.f32 %v4308, %v4329
    %v4379 = vadd.f32 %v4309, %v4329
    %v4380 = vadd.f32 %v4310, %v4329
    %v4381 = vadd.f32 %v4311, %v4329
    %v4382 = vadd.f32 %v4312, %v4329
    %v4383 = vadd.f32 %v4313, %v4329
    %v4384 = vadd.f32 %v4314, %v4329
    %v4385 = vadd.f32 %v4315, %v4329
    %v4386 = vadd.f32 %v4316, %v4329
    %v4387 = vadd.f32 %v4317, %v4329
    %v4388 = vadd.f32 %v4318, %v4329
    %v4389 = vadd.f32 %v4319, %v4329
    %v4390 = vadd.f32 %v4320, %v4329
    %v4391 = vadd.f32 %v4321, %v4329
    %v4392 = vadd.f32 %v4322, %v4329
    %v4393 = vadd.f32 %v4323, %v4329
    %v4394 = vadd.f32 %v4324, %v4329
    %v4395 = vmax.f32 %v4331, 0.0
    %v4396 = vmax.f32 %v4332, 0.0
    %v4397 = vmax.f32 %v4333, 0.0
    %v4398 = vmax.f32 %v4334, 0.0
    %v4399 = vmax.f32 %v4335, 0.0
    %v4400 = vmax.f32 %v4336, 0.0
    %v4401 = vmax.f32 %v4337, 0.0
    %v4402 = vmax.f32 %v4338, 0.0
    %v4403 = vmax.f32 %v4339, 0.0
    %v4404 = vmax.f32 %v4340, 0.0
    %v4405 = vmax.f32 %v4341, 0.0
    %v4406 = vmax.f32 %v4342, 0.0
    %v4407 = vmax.f32 %v4343, 0.0
    %v4408 = vmax.f32 %v4344, 0.0
    %v4409 = vmax.f32 %v4345, 0.0
    %v4410 = vmax.f32 %v4346, 0.0
    %v4411 = vmax.f32 %v4347, 0.0
    %v4412 = vmax.f32 %v4348, 0.0
    %v4413 = vmax.f32 %v4349, 0.0
    %v4414 = vmax.f32 %v4350, 0.0
    %v4415 = vmax.f32 %v4351, 0.0
    %v4416 = vmax.f32 %v4352, 0.0
    %v4417 = vmax.f32 %v4353, 0.0
    %v4418 = vmax.f32 %v4354, 0.0
    %v4419 = vmax.f32 %v4355, 0.0
    %v4420 = vmax.f32 %v4356, 0.0
    %v4421 = vmax.f32 %v4357, 0.0
    %v4422 = vmax.f32 %v4358, 0.0
    %v4423 = vmax.f32 %v4359, 0.0
    %v4424 = vmax.f32 %v4360, 0.0
    %v4425 = vmax.f32 %v4361, 0.0
    %v4426 = vmax.f32 %v4362, 0.0
    %v4427 = vmax.f32 %v4363, 0.0
    %v4428 = vmax.f32 %v4364, 0.0
    %v4429 = vmax.f32 %v4365, 0.0
    %v4430 = vmax.f32 %v4366, 0.0
    %v4431 = vmax.f32 %v4367, 0.0
    %v4432 = vmax.f32 %v4368, 0.0
    %v4433 = vmax.f32 %v4369, 0.0
    %v4434 = vmax.f32 %v4370, 0.0
    %v4435 = vmax.f32 %v4371, 0.0
    %v4436 = vmax.f32 %v4372, 0.0
    %v4437 = vmax.f32 %v4373, 0.0
    %v4438 = vmax.f32 %v4374, 0.0
    %v4439 = vmax.f32 %v4375, 0.0
    %v4440 = vmax.f32 %v4376, 0.0
    %v4441 = vmax.f32 %v4377, 0.0
    %v4442 = vmax.f32 %v4378, 0.0
    %v4443 = vmax.f32 %v4379, 0.0
    %v4444 = vmax.f32 %v4380, 0.0
    %v4445 = vmax.f32 %v4381, 0.0
    %v4446 = vmax.f32 %v4382, 0.0
    %v4447 = vmax.f32 %v4383, 0.0
    %v4448 = vmax.f32 %v4384, 0.0
    %v4449 = vmax.f32 %v4385, 0.0
    %v4450 = vmax.f32 %v4386, 0.0
    %v4451 = vmax.f32 %v4387, 0.0
    %v4452 = vmax.f32 %v4388, 0.0
    %v4453 = vmax.f32 %v4389, 0.0
    %v4454 = vmax.f32 %v4390, 0.0
    %v4455 = vmax.f32 %v4391, 0.0
    %v4456 = vmax.f32 %v4392, 0.0
    %v4457 = vmax.f32 %v4393, 0.0
    %v4458 = vmax.f32 %v4394, 0.0
    %4459 = vst.msk [vmem:[#allocation3] sm:$0xff] %vm94, 0.0
    %4460 = vst.msk [vmem:[#allocation3 + $0x8] sm:$0xff] %vm94, 0.0
    %vm4461 = vcmask 254976
    %4462 = vst.msk [vmem:[#allocation3 + $0x10] sm:$0x3] %vm4461, 0.0
    %4463 = vst.msk [vmem:[#allocation3 + $0x1b0] sm:$0xff] %vm94, 0.0
    %4464 = vst.msk [vmem:[#allocation3 + $0x1b8] sm:$0xff] %vm94, 0.0
    %4465 = vst.msk [vmem:[#allocation3 + $0x1c0] sm:$0x3] %vm4461, 0.0
    %s4466 = scalar_lea.vmem [#allocation3], 408
    %4467 = vst.msk [vmem:[%s4466] sm:$0xff] %vm94, 0.0
    %4468 = vst.msk [vmem:[%s4466 + $0x8] sm:$0xff] %vm94, 0.0
    %4469 = vst.msk [vmem:[%s4466 + $0x10] sm:$0x3] %vm4461, 0.0
    %4470 = vst.msk [vmem:[%s4466 + $0x1b0] sm:$0xff] %vm94, 0.0
    %4471 = vst.msk [vmem:[%s4466 + $0x1b8] sm:$0xff] %vm94, 0.0
    %4472 = vst.msk [vmem:[%s4466 + $0x1c0] sm:$0x3] %vm4461, 0.0
    %vm4473 = vcmask 253952
    %4474 = vst.msk [vmem:[#allocation3] sm:$0x1] %vm4473, 0.0
    %4475 = vst.msk [vmem:[#allocation3 + $0x18] sm:$0x1] %vm4473, 0.0
    %4476 = vst.msk [vmem:[#allocation3 + $0x30] sm:$0x1] %vm4473, 0.0
    %4477 = vst.msk [vmem:[#allocation3 + $0x48] sm:$0x1] %vm4473, 0.0
    %4478 = vst.msk [vmem:[#allocation3 + $0x60] sm:$0x1] %vm4473, 0.0
    %4479 = vst.msk [vmem:[#allocation3 + $0x78] sm:$0x1] %vm4473, 0.0
    %4480 = vst.msk [vmem:[#allocation3 + $0x90] sm:$0x1] %vm4473, 0.0
    %4481 = vst.msk [vmem:[#allocation3 + $0xa8] sm:$0x1] %vm4473, 0.0
    %4482 = vst.msk [vmem:[#allocation3 + $0xc0] sm:$0x1] %vm4473, 0.0
    %4483 = vst.msk [vmem:[#allocation3 + $0xd8] sm:$0x1] %vm4473, 0.0
    %4484 = vst.msk [vmem:[#allocation3 + $0xf0] sm:$0x1] %vm4473, 0.0
    %4485 = vst.msk [vmem:[#allocation3 + $0x108] sm:$0x1] %vm4473, 0.0
    %4486 = vst.msk [vmem:[#allocation3 + $0x120] sm:$0x1] %vm4473, 0.0
    %4487 = vst.msk [vmem:[#allocation3 + $0x138] sm:$0x1] %vm4473, 0.0
    %4488 = vst.msk [vmem:[#allocation3 + $0x150] sm:$0x1] %vm4473, 0.0
    %4489 = vst.msk [vmem:[#allocation3 + $0x168] sm:$0x1] %vm4473, 0.0
    %4490 = vst.msk [vmem:[#allocation3 + $0x180] sm:$0x1] %vm4473, 0.0
    %4491 = vst.msk [vmem:[#allocation3 + $0x198] sm:$0x1] %vm4473, 0.0
    %4492 = vst.msk [vmem:[#allocation3 + $0x1b0] sm:$0x1] %vm4473, 0.0
    %4493 = vst.msk [vmem:[#allocation3 + $0x1c8] sm:$0x1] %vm4473, 0.0
    %4494 = vst.msk [vmem:[#allocation3 + $0x1e0] sm:$0x1] %vm4473, 0.0
    %4495 = vst.msk [vmem:[#allocation3 + $0x1f8] sm:$0x1] %vm4473, 0.0
    %4496 = vst.msk [vmem:[#allocation3 + $0x210] sm:$0x1] %vm4473, 0.0
    %4497 = vst.msk [vmem:[#allocation3 + $0x228] sm:$0x1] %vm4473, 0.0
    %4498 = vst.msk [vmem:[#allocation3 + $0x240] sm:$0x1] %vm4473, 0.0
    %4499 = vst.msk [vmem:[#allocation3 + $0x258] sm:$0x1] %vm4473, 0.0
    %4500 = vst.msk [vmem:[#allocation3 + $0x270] sm:$0x1] %vm4473, 0.0
    %4501 = vst.msk [vmem:[#allocation3 + $0x288] sm:$0x1] %vm4473, 0.0
    %4502 = vst.msk [vmem:[#allocation3 + $0x2a0] sm:$0x1] %vm4473, 0.0
    %4503 = vst.msk [vmem:[#allocation3 + $0x2b8] sm:$0x1] %vm4473, 0.0
    %4504 = vst.msk [vmem:[#allocation3 + $0x2d0] sm:$0x1] %vm4473, 0.0
    %4505 = vst.msk [vmem:[#allocation3 + $0x2e8] sm:$0x1] %vm4473, 0.0
    %4506 = vst.msk [vmem:[#allocation3 + $0x300] sm:$0x1] %vm4473, 0.0
    %4507 = vst.msk [vmem:[#allocation3 + $0x318] sm:$0x1] %vm4473, 0.0
    %4508 = vst.msk [vmem:[#allocation3 + $0x330] sm:$0x1] %vm4473, 0.0
    %4509 = vst.msk [vmem:[#allocation3 + $0x348] sm:$0x1] %vm4473, 0.0
    %4510 = vst.msk [vmem:[#allocation3 + $0x11] sm:$0x1] %vm4473, 0.0
    %4511 = vst.msk [vmem:[#allocation3 + $0x29] sm:$0x1] %vm4473, 0.0
    %4512 = vst.msk [vmem:[#allocation3 + $0x41] sm:$0x1] %vm4473, 0.0
    %4513 = vst.msk [vmem:[#allocation3 + $0x59] sm:$0x1] %vm4473, 0.0
    %4514 = vst.msk [vmem:[#allocation3 + $0x71] sm:$0x1] %vm4473, 0.0
    %4515 = vst.msk [vmem:[#allocation3 + $0x89] sm:$0x1] %vm4473, 0.0
    %4516 = vst.msk [vmem:[#allocation3 + $0xa1] sm:$0x1] %vm4473, 0.0
    %4517 = vst.msk [vmem:[#allocation3 + $0xb9] sm:$0x1] %vm4473, 0.0
    %4518 = vst.msk [vmem:[#allocation3 + $0xd1] sm:$0x1] %vm4473, 0.0
    %4519 = vst.msk [vmem:[#allocation3 + $0xe9] sm:$0x1] %vm4473, 0.0
    %4520 = vst.msk [vmem:[#allocation3 + $0x101] sm:$0x1] %vm4473, 0.0
    %4521 = vst.msk [vmem:[#allocation3 + $0x119] sm:$0x1] %vm4473, 0.0
    %4522 = vst.msk [vmem:[#allocation3 + $0x131] sm:$0x1] %vm4473, 0.0
    %4523 = vst.msk [vmem:[#allocation3 + $0x149] sm:$0x1] %vm4473, 0.0
    %4524 = vst.msk [vmem:[#allocation3 + $0x161] sm:$0x1] %vm4473, 0.0
    %4525 = vst.msk [vmem:[#allocation3 + $0x179] sm:$0x1] %vm4473, 0.0
    %4526 = vst.msk [vmem:[#allocation3 + $0x191] sm:$0x1] %vm4473, 0.0
    %4527 = vst.msk [vmem:[#allocation3 + $0x1a9] sm:$0x1] %vm4473, 0.0
    %4528 = vst.msk [vmem:[#allocation3 + $0x1c1] sm:$0x1] %vm4473, 0.0
    %4529 = vst.msk [vmem:[#allocation3 + $0x1d9] sm:$0x1] %vm4473, 0.0
    %4530 = vst.msk [vmem:[#allocation3 + $0x1f1] sm:$0x1] %vm4473, 0.0
    %4531 = vst.msk [vmem:[#allocation3 + $0x209] sm:$0x1] %vm4473, 0.0
    %4532 = vst.msk [vmem:[#allocation3 + $0x221] sm:$0x1] %vm4473, 0.0
    %4533 = vst.msk [vmem:[#allocation3 + $0x239] sm:$0x1] %vm4473, 0.0
    %4534 = vst.msk [vmem:[#allocation3 + $0x251] sm:$0x1] %vm4473, 0.0
    %4535 = vst.msk [vmem:[#allocation3 + $0x269] sm:$0x1] %vm4473, 0.0
    %4536 = vst.msk [vmem:[#allocation3 + $0x281] sm:$0x1] %vm4473, 0.0
    %4537 = vst.msk [vmem:[#allocation3 + $0x299] sm:$0x1] %vm4473, 0.0
    %4538 = vst.msk [vmem:[#allocation3 + $0x2b1] sm:$0x1] %vm4473, 0.0
    %4539 = vst.msk [vmem:[#allocation3 + $0x2c9] sm:$0x1] %vm4473, 0.0
    %4540 = vst.msk [vmem:[#allocation3 + $0x2e1] sm:$0x1] %vm4473, 0.0
    %4541 = vst.msk [vmem:[#allocation3 + $0x2f9] sm:$0x1] %vm4473, 0.0
    %4542 = vst.msk [vmem:[#allocation3 + $0x311] sm:$0x1] %vm4473, 0.0
    %4543 = vst.msk [vmem:[#allocation3 + $0x329] sm:$0x1] %vm4473, 0.0
    %4544 = vst.msk [vmem:[#allocation3 + $0x341] sm:$0x1] %vm4473, 0.0
    %4545 = vst.msk [vmem:[#allocation3 + $0x359] sm:$0x1] %vm4473, 0.0
    %s4546 = scalar_lea.vmem [#allocation3], 24
    %4547 = vst.msk [vmem:[%s4546 + $0x1] sm:$0xff] %vm94, %v4395
    %4548 = vst.msk [vmem:[%s4546 + $0x9] sm:$0xff] %vm94, %v4396
    %4549 = vst.msk [vmem:[%s4546 + $0x19] sm:$0xff] %vm94, %v4397
    %4550 = vst.msk [vmem:[%s4546 + $0x21] sm:$0xff] %vm94, %v4398
    %4551 = vst.msk [vmem:[%s4546 + $0x31] sm:$0xff] %vm94, %v4399
    %4552 = vst.msk [vmem:[%s4546 + $0x39] sm:$0xff] %vm94, %v4400
    %4553 = vst.msk [vmem:[%s4546 + $0x49] sm:$0xff] %vm94, %v4401
    %4554 = vst.msk [vmem:[%s4546 + $0x51] sm:$0xff] %vm94, %v4402
    %4555 = vst.msk [vmem:[%s4546 + $0x61] sm:$0xff] %vm94, %v4403
    %4556 = vst.msk [vmem:[%s4546 + $0x69] sm:$0xff] %vm94, %v4404
    %4557 = vst.msk [vmem:[%s4546 + $0x79] sm:$0xff] %vm94, %v4405
    %4558 = vst.msk [vmem:[%s4546 + $0x81] sm:$0xff] %vm94, %v4406
    %4559 = vst.msk [vmem:[%s4546 + $0x91] sm:$0xff] %vm94, %v4407
    %4560 = vst.msk [vmem:[%s4546 + $0x99] sm:$0xff] %vm94, %v4408
    %4561 = vst.msk [vmem:[%s4546 + $0xa9] sm:$0xff] %vm94, %v4409
    %4562 = vst.msk [vmem:[%s4546 + $0xb1] sm:$0xff] %vm94, %v4410
    %4563 = vst.msk [vmem:[%s4546 + $0xc1] sm:$0xff] %vm94, %v4411
    %4564 = vst.msk [vmem:[%s4546 + $0xc9] sm:$0xff] %vm94, %v4412
    %4565 = vst.msk [vmem:[%s4546 + $0xd9] sm:$0xff] %vm94, %v4413
    %4566 = vst.msk [vmem:[%s4546 + $0xe1] sm:$0xff] %vm94, %v4414
    %4567 = vst.msk [vmem:[%s4546 + $0xf1] sm:$0xff] %vm94, %v4415
    %4568 = vst.msk [vmem:[%s4546 + $0xf9] sm:$0xff] %vm94, %v4416
    %4569 = vst.msk [vmem:[%s4546 + $0x109] sm:$0xff] %vm94, %v4417
    %4570 = vst.msk [vmem:[%s4546 + $0x111] sm:$0xff] %vm94, %v4418
    %4571 = vst.msk [vmem:[%s4546 + $0x121] sm:$0xff] %vm94, %v4419
    %4572 = vst.msk [vmem:[%s4546 + $0x129] sm:$0xff] %vm94, %v4420
    %4573 = vst.msk [vmem:[%s4546 + $0x139] sm:$0xff] %vm94, %v4421
    %4574 = vst.msk [vmem:[%s4546 + $0x141] sm:$0xff] %vm94, %v4422
    %4575 = vst.msk [vmem:[%s4546 + $0x151] sm:$0xff] %vm94, %v4423
    %4576 = vst.msk [vmem:[%s4546 + $0x159] sm:$0xff] %vm94, %v4424
    %4577 = vst.msk [vmem:[%s4546 + $0x169] sm:$0xff] %vm94, %v4425
    %4578 = vst.msk [vmem:[%s4546 + $0x171] sm:$0xff] %vm94, %v4426
    %4579 = vst.msk [vmem:[%s4546 + $0x1b1] sm:$0xff] %vm94, %v4427
    %4580 = vst.msk [vmem:[%s4546 + $0x1b9] sm:$0xff] %vm94, %v4428
    %4581 = vst.msk [vmem:[%s4546 + $0x1c9] sm:$0xff] %vm94, %v4429
    %4582 = vst.msk [vmem:[%s4546 + $0x1d1] sm:$0xff] %vm94, %v4430
    %4583 = vst.msk [vmem:[%s4546 + $0x1e1] sm:$0xff] %vm94, %v4431
    %4584 = vst.msk [vmem:[%s4546 + $0x1e9] sm:$0xff] %vm94, %v4432
    %4585 = vst.msk [vmem:[%s4546 + $0x1f9] sm:$0xff] %vm94, %v4433
    %4586 = vst.msk [vmem:[%s4546 + $0x201] sm:$0xff] %vm94, %v4434
    %4587 = vst.msk [vmem:[%s4546 + $0x211] sm:$0xff] %vm94, %v4435
    %4588 = vst.msk [vmem:[%s4546 + $0x219] sm:$0xff] %vm94, %v4436
    %4589 = vst.msk [vmem:[%s4546 + $0x229] sm:$0xff] %vm94, %v4437
    %4590 = vst.msk [vmem:[%s4546 + $0x231] sm:$0xff] %vm94, %v4438
    %4591 = vst.msk [vmem:[%s4546 + $0x241] sm:$0xff] %vm94, %v4439
    %4592 = vst.msk [vmem:[%s4546 + $0x249] sm:$0xff] %vm94, %v4440
    %4593 = vst.msk [vmem:[%s4546 + $0x259] sm:$0xff] %vm94, %v4441
    %4594 = vst.msk [vmem:[%s4546 + $0x261] sm:$0xff] %vm94, %v4442
    %4595 = vst.msk [vmem:[%s4546 + $0x271] sm:$0xff] %vm94, %v4443
    %4596 = vst.msk [vmem:[%s4546 + $0x279] sm:$0xff] %vm94, %v4444
    %4597 = vst.msk [vmem:[%s4546 + $0x289] sm:$0xff] %vm94, %v4445
    %4598 = vst.msk [vmem:[%s4546 + $0x291] sm:$0xff] %vm94, %v4446
    %4599 = vst.msk [vmem:[%s4546 + $0x2a1] sm:$0xff] %vm94, %v4447
    %4600 = vst.msk [vmem:[%s4546 + $0x2a9] sm:$0xff] %vm94, %v4448
    %4601 = vst.msk [vmem:[%s4546 + $0x2b9] sm:$0xff] %vm94, %v4449
    %4602 = vst.msk [vmem:[%s4546 + $0x2c1] sm:$0xff] %vm94, %v4450
    %4603 = vst.msk [vmem:[%s4546 + $0x2d1] sm:$0xff] %vm94, %v4451
    %4604 = vst.msk [vmem:[%s4546 + $0x2d9] sm:$0xff] %vm94, %v4452
    %4605 = vst.msk [vmem:[%s4546 + $0x2e9] sm:$0xff] %vm94, %v4453
    %4606 = vst.msk [vmem:[%s4546 + $0x2f1] sm:$0xff] %vm94, %v4454
    %4607 = vst.msk [vmem:[%s4546 + $0x301] sm:$0xff] %vm94, %v4455
    %4608 = vst.msk [vmem:[%s4546 + $0x309] sm:$0xff] %vm94, %v4456
    %4609 = vst.msk [vmem:[%s4546 + $0x319] sm:$0xff] %vm94, %v4457
    %4610 = vst.msk [vmem:[%s4546 + $0x321] sm:$0xff] %vm94, %v4458
    %v4611 = vld [vmem:[#allocation3] sm:$0xff]
    %v4612 = vld [vmem:[#allocation3 + $0x8] sm:$0xff]
    %v4613 = vld [vmem:[#allocation3 + $0x18] sm:$0xff]
    %v4614 = vld [vmem:[#allocation3 + $0x20] sm:$0xff]
    %v4615 = vld [vmem:[#allocation3 + $0x30] sm:$0xff]
    %v4616 = vld [vmem:[#allocation3 + $0x38] sm:$0xff]
    %v4617 = vld [vmem:[#allocation3 + $0x48] sm:$0xff]
    %v4618 = vld [vmem:[#allocation3 + $0x50] sm:$0xff]
    %v4619 = vld [vmem:[#allocation3 + $0x60] sm:$0xff]
    %v4620 = vld [vmem:[#allocation3 + $0x68] sm:$0xff]
    %v4621 = vld [vmem:[#allocation3 + $0x78] sm:$0xff]
    %v4622 = vld [vmem:[#allocation3 + $0x80] sm:$0xff]
    %v4623 = vld [vmem:[#allocation3 + $0x90] sm:$0xff]
    %v4624 = vld [vmem:[#allocation3 + $0x98] sm:$0xff]
    %v4625 = vld [vmem:[#allocation3 + $0xa8] sm:$0xff]
    %v4626 = vld [vmem:[#allocation3 + $0xb0] sm:$0xff]
    %v4627 = vld [vmem:[#allocation3 + $0xc0] sm:$0xff]
    %v4628 = vld [vmem:[#allocation3 + $0xc8] sm:$0xff]
    %v4629 = vld [vmem:[#allocation3 + $0xd8] sm:$0xff]
    %v4630 = vld [vmem:[#allocation3 + $0xe0] sm:$0xff]
    %v4631 = vld [vmem:[#allocation3 + $0xf0] sm:$0xff]
    %v4632 = vld [vmem:[#allocation3 + $0xf8] sm:$0xff]
    %v4633 = vld [vmem:[#allocation3 + $0x108] sm:$0xff]
    %v4634 = vld [vmem:[#allocation3 + $0x110] sm:$0xff]
    %v4635 = vld [vmem:[#allocation3 + $0x120] sm:$0xff]
    %v4636 = vld [vmem:[#allocation3 + $0x128] sm:$0xff]
    %v4637 = vld [vmem:[#allocation3 + $0x138] sm:$0xff]
    %v4638 = vld [vmem:[#allocation3 + $0x140] sm:$0xff]
    %v4639 = vld [vmem:[#allocation3 + $0x150] sm:$0xff]
    %v4640 = vld [vmem:[#allocation3 + $0x158] sm:$0xff]
    %v4641 = vld [vmem:[#allocation3 + $0x168] sm:$0xff]
    %v4642 = vld [vmem:[#allocation3 + $0x170] sm:$0xff]
    %v4643 = vld [vmem:[#allocation3 + $0x1b0] sm:$0xff]
    %v4644 = vld [vmem:[#allocation3 + $0x1b8] sm:$0xff]
    %v4645 = vld [vmem:[#allocation3 + $0x1c8] sm:$0xff]
    %v4646 = vld [vmem:[#allocation3 + $0x1d0] sm:$0xff]
    %v4647 = vld [vmem:[#allocation3 + $0x1e0] sm:$0xff]
    %v4648 = vld [vmem:[#allocation3 + $0x1e8] sm:$0xff]
    %v4649 = vld [vmem:[#allocation3 + $0x1f8] sm:$0xff]
    %v4650 = vld [vmem:[#allocation3 + $0x200] sm:$0xff]
    %v4651 = vld [vmem:[#allocation3 + $0x210] sm:$0xff]
    %v4652 = vld [vmem:[#allocation3 + $0x218] sm:$0xff]
    %v4653 = vld [vmem:[#allocation3 + $0x228] sm:$0xff]
    %v4654 = vld [vmem:[#allocation3 + $0x230] sm:$0xff]
    %v4655 = vld [vmem:[#allocation3 + $0x240] sm:$0xff]
    %v4656 = vld [vmem:[#allocation3 + $0x248] sm:$0xff]
    %v4657 = vld [vmem:[#allocation3 + $0x258] sm:$0xff]
    %v4658 = vld [vmem:[#allocation3 + $0x260] sm:$0xff]
    %v4659 = vld [vmem:[#allocation3 + $0x270] sm:$0xff]
    %v4660 = vld [vmem:[#allocation3 + $0x278] sm:$0xff]
    %v4661 = vld [vmem:[#allocation3 + $0x288] sm:$0xff]
    %v4662 = vld [vmem:[#allocation3 + $0x290] sm:$0xff]
    %v4663 = vld [vmem:[#allocation3 + $0x2a0] sm:$0xff]
    %v4664 = vld [vmem:[#allocation3 + $0x2a8] sm:$0xff]
    %v4665 = vld [vmem:[#allocation3 + $0x2b8] sm:$0xff]
    %v4666 = vld [vmem:[#allocation3 + $0x2c0] sm:$0xff]
    %v4667 = vld [vmem:[#allocation3 + $0x2d0] sm:$0xff]
    %v4668 = vld [vmem:[#allocation3 + $0x2d8] sm:$0xff]
    %v4669 = vld [vmem:[#allocation3 + $0x2e8] sm:$0xff]
    %v4670 = vld [vmem:[#allocation3 + $0x2f0] sm:$0xff]
    %v4671 = vld [vmem:[#allocation3 + $0x300] sm:$0xff]
    %v4672 = vld [vmem:[#allocation3 + $0x308] sm:$0xff]
    %v4673 = vld [vmem:[#allocation3 + $0x318] sm:$0xff]
    %v4674 = vld [vmem:[#allocation3 + $0x320] sm:$0xff]
    %4675 = vst.msk [vmem:[#allocation2] sm:$0xff] %vm94, %v4611
    %4676 = vst.msk [vmem:[#allocation2 + $0x18] sm:$0xff] %vm94, %v4612
    %4677 = vst.msk [vmem:[#allocation2 + $0x30] sm:$0xff] %vm94, %v4613
    %4678 = vst.msk [vmem:[#allocation2 + $0x48] sm:$0xff] %vm94, %v4614
    %4679 = vst.msk [vmem:[#allocation2 + $0x60] sm:$0xff] %vm94, %v4615
    %4680 = vst.msk [vmem:[#allocation2 + $0x78] sm:$0xff] %vm94, %v4616
    %4681 = vst.msk [vmem:[#allocation2 + $0x90] sm:$0xff] %vm94, %v4617
    %4682 = vst.msk [vmem:[#allocation2 + $0xa8] sm:$0xff] %vm94, %v4618
    %4683 = vst.msk [vmem:[#allocation2 + $0xc0] sm:$0xff] %vm94, %v4619
    %4684 = vst.msk [vmem:[#allocation2 + $0xd8] sm:$0xff] %vm94, %v4620
    %4685 = vst.msk [vmem:[#allocation2 + $0xf0] sm:$0xff] %vm94, %v4621
    %4686 = vst.msk [vmem:[#allocation2 + $0x108] sm:$0xff] %vm94, %v4622
    %4687 = vst.msk [vmem:[#allocation2 + $0x120] sm:$0xff] %vm94, %v4623
    %4688 = vst.msk [vmem:[#allocation2 + $0x138] sm:$0xff] %vm94, %v4624
    %4689 = vst.msk [vmem:[#allocation2 + $0x150] sm:$0xff] %vm94, %v4625
    %4690 = vst.msk [vmem:[#allocation2 + $0x168] sm:$0xff] %vm94, %v4626
    %4691 = vst.msk [vmem:[#allocation2 + $0x180] sm:$0xff] %vm94, %v4627
    %4692 = vst.msk [vmem:[#allocation2 + $0x198] sm:$0xff] %vm94, %v4628
    %4693 = vst.msk [vmem:[#allocation2 + $0x1b0] sm:$0xff] %vm94, %v4629
    %4694 = vst.msk [vmem:[#allocation2 + $0x1c8] sm:$0xff] %vm94, %v4630
    %4695 = vst.msk [vmem:[#allocation2 + $0x1e0] sm:$0xff] %vm94, %v4631
    %4696 = vst.msk [vmem:[#allocation2 + $0x1f8] sm:$0xff] %vm94, %v4632
    %4697 = vst.msk [vmem:[#allocation2 + $0x210] sm:$0xff] %vm94, %v4633
    %4698 = vst.msk [vmem:[#allocation2 + $0x228] sm:$0xff] %vm94, %v4634
    %4699 = vst.msk [vmem:[#allocation2 + $0x240] sm:$0xff] %vm94, %v4635
    %4700 = vst.msk [vmem:[#allocation2 + $0x258] sm:$0xff] %vm94, %v4636
    %4701 = vst.msk [vmem:[#allocation2 + $0x270] sm:$0xff] %vm94, %v4637
    %4702 = vst.msk [vmem:[#allocation2 + $0x288] sm:$0xff] %vm94, %v4638
    %4703 = vst.msk [vmem:[#allocation2 + $0x2a0] sm:$0xff] %vm94, %v4639
    %4704 = vst.msk [vmem:[#allocation2 + $0x2b8] sm:$0xff] %vm94, %v4640
    %4705 = vst.msk [vmem:[#allocation2 + $0x2d0] sm:$0xff] %vm94, %v4641
    %4706 = vst.msk [vmem:[#allocation2 + $0x2e8] sm:$0xff] %vm94, %v4642
    %4707 = vst.msk [vmem:[#allocation2 + $0x300] sm:$0xff] %vm94, %v4643
    %4708 = vst.msk [vmem:[#allocation2 + $0x318] sm:$0xff] %vm94, %v4644
    %4709 = vst.msk [vmem:[#allocation2 + $0x330] sm:$0xff] %vm94, %v4645
    %4710 = vst.msk [vmem:[#allocation2 + $0x348] sm:$0xff] %vm94, %v4646
    %4711 = vst.msk [vmem:[#allocation2 + $0x360] sm:$0xff] %vm94, %v4647
    %4712 = vst.msk [vmem:[#allocation2 + $0x378] sm:$0xff] %vm94, %v4648
    %4713 = vst.msk [vmem:[#allocation2 + $0x390] sm:$0xff] %vm94, %v4649
    %4714 = vst.msk [vmem:[#allocation2 + $0x3a8] sm:$0xff] %vm94, %v4650
    %4715 = vst.msk [vmem:[#allocation2 + $0x3c0] sm:$0xff] %vm94, %v4651
    %4716 = vst.msk [vmem:[#allocation2 + $0x3d8] sm:$0xff] %vm94, %v4652
    %4717 = vst.msk [vmem:[#allocation2 + $0x3f0] sm:$0xff] %vm94, %v4653
    %4718 = vst.msk [vmem:[#allocation2 + $0x408] sm:$0xff] %vm94, %v4654
    %4719 = vst.msk [vmem:[#allocation2 + $0x420] sm:$0xff] %vm94, %v4655
    %4720 = vst.msk [vmem:[#allocation2 + $0x438] sm:$0xff] %vm94, %v4656
    %4721 = vst.msk [vmem:[#allocation2 + $0x450] sm:$0xff] %vm94, %v4657
    %4722 = vst.msk [vmem:[#allocation2 + $0x468] sm:$0xff] %vm94, %v4658
    %4723 = vst.msk [vmem:[#allocation2 + $0x480] sm:$0xff] %vm94, %v4659
    %4724 = vst.msk [vmem:[#allocation2 + $0x498] sm:$0xff] %vm94, %v4660
    %4725 = vst.msk [vmem:[#allocation2 + $0x4b0] sm:$0xff] %vm94, %v4661
    %4726 = vst.msk [vmem:[#allocation2 + $0x4c8] sm:$0xff] %vm94, %v4662
    %4727 = vst.msk [vmem:[#allocation2 + $0x4e0] sm:$0xff] %vm94, %v4663
    %4728 = vst.msk [vmem:[#allocation2 + $0x4f8] sm:$0xff] %vm94, %v4664
    %4729 = vst.msk [vmem:[#allocation2 + $0x510] sm:$0xff] %vm94, %v4665
    %4730 = vst.msk [vmem:[#allocation2 + $0x528] sm:$0xff] %vm94, %v4666
    %4731 = vst.msk [vmem:[#allocation2 + $0x540] sm:$0xff] %vm94, %v4667
    %4732 = vst.msk [vmem:[#allocation2 + $0x558] sm:$0xff] %vm94, %v4668
    %4733 = vst.msk [vmem:[#allocation2 + $0x570] sm:$0xff] %vm94, %v4669
    %4734 = vst.msk [vmem:[#allocation2 + $0x588] sm:$0xff] %vm94, %v4670
    %4735 = vst.msk [vmem:[#allocation2 + $0x5a0] sm:$0xff] %vm94, %v4671
    %4736 = vst.msk [vmem:[#allocation2 + $0x5b8] sm:$0xff] %vm94, %v4672
    %4737 = vst.msk [vmem:[#allocation2 + $0x5d0] sm:$0xff] %vm94, %v4673
    %4738 = vst.msk [vmem:[#allocation2 + $0x5e8] sm:$0xff] %vm94, %v4674
    %v4739 = vld [vmem:[#allocation3 + $0x1] sm:$0xff]
    %v4740 = vld [vmem:[#allocation3 + $0x9] sm:$0xff]
    %v4741 = vld [vmem:[#allocation3 + $0x19] sm:$0xff]
    %v4742 = vld [vmem:[#allocation3 + $0x21] sm:$0xff]
    %v4743 = vld [vmem:[#allocation3 + $0x31] sm:$0xff]
    %v4744 = vld [vmem:[#allocation3 + $0x39] sm:$0xff]
    %v4745 = vld [vmem:[#allocation3 + $0x49] sm:$0xff]
    %v4746 = vld [vmem:[#allocation3 + $0x51] sm:$0xff]
    %v4747 = vld [vmem:[#allocation3 + $0x61] sm:$0xff]
    %v4748 = vld [vmem:[#allocation3 + $0x69] sm:$0xff]
    %v4749 = vld [vmem:[#allocation3 + $0x79] sm:$0xff]
    %v4750 = vld [vmem:[#allocation3 + $0x81] sm:$0xff]
    %v4751 = vld [vmem:[#allocation3 + $0x91] sm:$0xff]
    %v4752 = vld [vmem:[#allocation3 + $0x99] sm:$0xff]
    %v4753 = vld [vmem:[#allocation3 + $0xa9] sm:$0xff]
    %v4754 = vld [vmem:[#allocation3 + $0xb1] sm:$0xff]
    %v4755 = vld [vmem:[#allocation3 + $0xc1] sm:$0xff]
    %v4756 = vld [vmem:[#allocation3 + $0xc9] sm:$0xff]
    %v4757 = vld [vmem:[#allocation3 + $0xd9] sm:$0xff]
    %v4758 = vld [vmem:[#allocation3 + $0xe1] sm:$0xff]
    %v4759 = vld [vmem:[#allocation3 + $0xf1] sm:$0xff]
    %v4760 = vld [vmem:[#allocation3 + $0xf9] sm:$0xff]
    %v4761 = vld [vmem:[#allocation3 + $0x109] sm:$0xff]
    %v4762 = vld [vmem:[#allocation3 + $0x111] sm:$0xff]
    %v4763 = vld [vmem:[#allocation3 + $0x121] sm:$0xff]
    %v4764 = vld [vmem:[#allocation3 + $0x129] sm:$0xff]
    %v4765 = vld [vmem:[#allocation3 + $0x139] sm:$0xff]
    %v4766 = vld [vmem:[#allocation3 + $0x141] sm:$0xff]
    %v4767 = vld [vmem:[#allocation3 + $0x151] sm:$0xff]
    %v4768 = vld [vmem:[#allocation3 + $0x159] sm:$0xff]
    %v4769 = vld [vmem:[#allocation3 + $0x169] sm:$0xff]
    %v4770 = vld [vmem:[#allocation3 + $0x171] sm:$0xff]
    %v4771 = vld [vmem:[#allocation3 + $0x1b1] sm:$0xff]
    %v4772 = vld [vmem:[#allocation3 + $0x1b9] sm:$0xff]
    %v4773 = vld [vmem:[#allocation3 + $0x1c9] sm:$0xff]
    %v4774 = vld [vmem:[#allocation3 + $0x1d1] sm:$0xff]
    %v4775 = vld [vmem:[#allocation3 + $0x1e1] sm:$0xff]
    %v4776 = vld [vmem:[#allocation3 + $0x1e9] sm:$0xff]
    %v4777 = vld [vmem:[#allocation3 + $0x1f9] sm:$0xff]
    %v4778 = vld [vmem:[#allocation3 + $0x201] sm:$0xff]
    %v4779 = vld [vmem:[#allocation3 + $0x211] sm:$0xff]
    %v4780 = vld [vmem:[#allocation3 + $0x219] sm:$0xff]
    %v4781 = vld [vmem:[#allocation3 + $0x229] sm:$0xff]
    %v4782 = vld [vmem:[#allocation3 + $0x231] sm:$0xff]
    %v4783 = vld [vmem:[#allocation3 + $0x241] sm:$0xff]
    %v4784 = vld [vmem:[#allocation3 + $0x249] sm:$0xff]
    %v4785 = vld [vmem:[#allocation3 + $0x259] sm:$0xff]
    %v4786 = vld [vmem:[#allocation3 + $0x261] sm:$0xff]
    %v4787 = vld [vmem:[#allocation3 + $0x271] sm:$0xff]
    %v4788 = vld [vmem:[#allocation3 + $0x279] sm:$0xff]
    %v4789 = vld [vmem:[#allocation3 + $0x289] sm:$0xff]
    %v4790 = vld [vmem:[#allocation3 + $0x291] sm:$0xff]
    %v4791 = vld [vmem:[#allocation3 + $0x2a1] sm:$0xff]
    %v4792 = vld [vmem:[#allocation3 + $0x2a9] sm:$0xff]
    %v4793 = vld [vmem:[#allocation3 + $0x2b9] sm:$0xff]
    %v4794 = vld [vmem:[#allocation3 + $0x2c1] sm:$0xff]
    %v4795 = vld [vmem:[#allocation3 + $0x2d1] sm:$0xff]
    %v4796 = vld [vmem:[#allocation3 + $0x2d9] sm:$0xff]
    %v4797 = vld [vmem:[#allocation3 + $0x2e9] sm:$0xff]
    %v4798 = vld [vmem:[#allocation3 + $0x2f1] sm:$0xff]
    %v4799 = vld [vmem:[#allocation3 + $0x301] sm:$0xff]
    %v4800 = vld [vmem:[#allocation3 + $0x309] sm:$0xff]
    %v4801 = vld [vmem:[#allocation3 + $0x319] sm:$0xff]
    %v4802 = vld [vmem:[#allocation3 + $0x321] sm:$0xff]
    %4867 = vrot.lane.b32.xlu0 %v4739, 32
    %v4868 = vpop.permute.xlu0 %4867
    %4869 = vrot.lane.b32.xlu0 %v4740, 32
    %v4870 = vpop.permute.xlu0 %4869
    %4871 = vrot.lane.b32.xlu0 %v4741, 32
    %v4872 = vpop.permute.xlu0 %4871
    %4873 = vrot.lane.b32.xlu0 %v4742, 32
    %v4874 = vpop.permute.xlu0 %4873
    %4875 = vrot.lane.b32.xlu0 %v4743, 32
    %v4876 = vpop.permute.xlu0 %4875
    %4877 = vrot.lane.b32.xlu0 %v4744, 32
    %v4878 = vpop.permute.xlu0 %4877
    %4879 = vrot.lane.b32.xlu0 %v4745, 32
    %v4880 = vpop.permute.xlu0 %4879
    %4881 = vrot.lane.b32.xlu0 %v4746, 32
    %v4882 = vpop.permute.xlu0 %4881
    %4883 = vrot.lane.b32.xlu0 %v4747, 32
    %v4884 = vpop.permute.xlu0 %4883
    %4885 = vrot.lane.b32.xlu0 %v4748, 32
    %v4886 = vpop.permute.xlu0 %4885
    %4887 = vrot.lane.b32.xlu0 %v4749, 32
    %v4888 = vpop.permute.xlu0 %4887
    %4889 = vrot.lane.b32.xlu0 %v4750, 32
    %v4890 = vpop.permute.xlu0 %4889
    %4891 = vrot.lane.b32.xlu0 %v4751, 32
    %v4892 = vpop.permute.xlu0 %4891
    %4893 = vrot.lane.b32.xlu0 %v4752, 32
    %v4894 = vpop.permute.xlu0 %4893
    %4895 = vrot.lane.b32.xlu0 %v4753, 32
    %v4896 = vpop.permute.xlu0 %4895
    %4897 = vrot.lane.b32.xlu0 %v4754, 32
    %v4898 = vpop.permute.xlu0 %4897
    %4899 = vrot.lane.b32.xlu0 %v4755, 32
    %v4900 = vpop.permute.xlu0 %4899
    %4901 = vrot.lane.b32.xlu0 %v4756, 32
    %v4902 = vpop.permute.xlu0 %4901
    %4903 = vrot.lane.b32.xlu0 %v4757, 32
    %v4904 = vpop.permute.xlu0 %4903
    %4905 = vrot.lane.b32.xlu0 %v4758, 32
    %v4906 = vpop.permute.xlu0 %4905
    %4907 = vrot.lane.b32.xlu0 %v4759, 32
    %v4908 = vpop.permute.xlu0 %4907
    %4909 = vrot.lane.b32.xlu0 %v4760, 32
    %v4910 = vpop.permute.xlu0 %4909
    %4911 = vrot.lane.b32.xlu0 %v4761, 32
    %v4912 = vpop.permute.xlu0 %4911
    %4913 = vrot.lane.b32.xlu0 %v4762, 32
    %v4914 = vpop.permute.xlu0 %4913
    %4915 = vrot.lane.b32.xlu0 %v4763, 32
    %v4916 = vpop.permute.xlu0 %4915
    %4917 = vrot.lane.b32.xlu0 %v4764, 32
    %v4918 = vpop.permute.xlu0 %4917
    %4919 = vrot.lane.b32.xlu0 %v4765, 32
    %v4920 = vpop.permute.xlu0 %4919
    %4921 = vrot.lane.b32.xlu0 %v4766, 32
    %v4922 = vpop.permute.xlu0 %4921
    %4923 = vrot.lane.b32.xlu0 %v4767, 32
    %v4924 = vpop.permute.xlu0 %4923
    %4925 = vrot.lane.b32.xlu0 %v4768, 32
    %v4926 = vpop.permute.xlu0 %4925
    %4927 = vrot.lane.b32.xlu0 %v4769, 32
    %v4928 = vpop.permute.xlu0 %4927
    %4929 = vrot.lane.b32.xlu0 %v4770, 32
    %v4930 = vpop.permute.xlu0 %4929
    %4931 = vrot.lane.b32.xlu0 %v4771, 32
    %v4932 = vpop.permute.xlu0 %4931
    %4933 = vrot.lane.b32.xlu0 %v4772, 32
    %v4934 = vpop.permute.xlu0 %4933
    %4935 = vrot.lane.b32.xlu0 %v4773, 32
    %v4936 = vpop.permute.xlu0 %4935
    %4937 = vrot.lane.b32.xlu0 %v4774, 32
    %v4938 = vpop.permute.xlu0 %4937
    %4939 = vrot.lane.b32.xlu0 %v4775, 32
    %v4940 = vpop.permute.xlu0 %4939
    %4941 = vrot.lane.b32.xlu0 %v4776, 32
    %v4942 = vpop.permute.xlu0 %4941
    %4943 = vrot.lane.b32.xlu0 %v4777, 32
    %v4944 = vpop.permute.xlu0 %4943
    %4945 = vrot.lane.b32.xlu0 %v4778, 32
    %v4946 = vpop.permute.xlu0 %4945
    %4947 = vrot.lane.b32.xlu0 %v4779, 32
    %v4948 = vpop.permute.xlu0 %4947
    %4949 = vrot.lane.b32.xlu0 %v4780, 32
    %v4950 = vpop.permute.xlu0 %4949
    %4951 = vrot.lane.b32.xlu0 %v4781, 32
    %v4952 = vpop.permute.xlu0 %4951
    %4953 = vrot.lane.b32.xlu0 %v4782, 32
    %v4954 = vpop.permute.xlu0 %4953
    %4955 = vrot.lane.b32.xlu0 %v4783, 32
    %v4956 = vpop.permute.xlu0 %4955
    %4957 = vrot.lane.b32.xlu0 %v4784, 32
    %v4958 = vpop.permute.xlu0 %4957
    %4959 = vrot.lane.b32.xlu0 %v4785, 32
    %v4960 = vpop.permute.xlu0 %4959
    %4961 = vrot.lane.b32.xlu0 %v4786, 32
    %v4962 = vpop.permute.xlu0 %4961
    %4963 = vrot.lane.b32.xlu0 %v4787, 32
    %v4964 = vpop.permute.xlu0 %4963
    %4965 = vrot.lane.b32.xlu0 %v4788, 32
    %v4966 = vpop.permute.xlu0 %4965
    %4967 = vrot.lane.b32.xlu0 %v4789, 32
    %v4968 = vpop.permute.xlu0 %4967
    %4969 = vrot.lane.b32.xlu0 %v4790, 32
    %v4970 = vpop.permute.xlu0 %4969
    %4971 = vrot.lane.b32.xlu0 %v4791, 32
    %v4972 = vpop.permute.xlu0 %4971
    %4973 = vrot.lane.b32.xlu0 %v4792, 32
    %v4974 = vpop.permute.xlu0 %4973
    %4975 = vrot.lane.b32.xlu0 %v4793, 32
    %v4976 = vpop.permute.xlu0 %4975
    %4977 = vrot.lane.b32.xlu0 %v4794, 32
    %v4978 = vpop.permute.xlu0 %4977
    %4979 = vrot.lane.b32.xlu0 %v4795, 32
    %v4980 = vpop.permute.xlu0 %4979
    %4981 = vrot.lane.b32.xlu0 %v4796, 32
    %v4982 = vpop.permute.xlu0 %4981
    %4983 = vrot.lane.b32.xlu0 %v4797, 32
    %v4984 = vpop.permute.xlu0 %4983
    %4985 = vrot.lane.b32.xlu0 %v4798, 32
    %v4986 = vpop.permute.xlu0 %4985
    %4987 = vrot.lane.b32.xlu0 %v4799, 32
    %v4988 = vpop.permute.xlu0 %4987
    %4989 = vrot.lane.b32.xlu0 %v4800, 32
    %v4990 = vpop.permute.xlu0 %4989
    %4991 = vrot.lane.b32.xlu0 %v4801, 32
    %v4992 = vpop.permute.xlu0 %4991
    %4993 = vrot.lane.b32.xlu0 %v4802, 32
    %v4994 = vpop.permute.xlu0 %4993
    %5059 = vst.msk [vmem:[#allocation2] sm:$0xff] %vm479, %v4868
    %5060 = vst.msk [vmem:[#allocation2 + $0x18] sm:$0xff] %vm479, %v4870
    %5061 = vst.msk [vmem:[#allocation2 + $0x30] sm:$0xff] %vm479, %v4872
    %5062 = vst.msk [vmem:[#allocation2 + $0x48] sm:$0xff] %vm479, %v4874
    %5063 = vst.msk [vmem:[#allocation2 + $0x60] sm:$0xff] %vm479, %v4876
    %5064 = vst.msk [vmem:[#allocation2 + $0x78] sm:$0xff] %vm479, %v4878
    %5065 = vst.msk [vmem:[#allocation2 + $0x90] sm:$0xff] %vm479, %v4880
    %5066 = vst.msk [vmem:[#allocation2 + $0xa8] sm:$0xff] %vm479, %v4882
    %5067 = vst.msk [vmem:[#allocation2 + $0xc0] sm:$0xff] %vm479, %v4884
    %5068 = vst.msk [vmem:[#allocation2 + $0xd8] sm:$0xff] %vm479, %v4886
    %5069 = vst.msk [vmem:[#allocation2 + $0xf0] sm:$0xff] %vm479, %v4888
    %5070 = vst.msk [vmem:[#allocation2 + $0x108] sm:$0xff] %vm479, %v4890
    %5071 = vst.msk [vmem:[#allocation2 + $0x120] sm:$0xff] %vm479, %v4892
    %5072 = vst.msk [vmem:[#allocation2 + $0x138] sm:$0xff] %vm479, %v4894
    %5073 = vst.msk [vmem:[#allocation2 + $0x150] sm:$0xff] %vm479, %v4896
    %5074 = vst.msk [vmem:[#allocation2 + $0x168] sm:$0xff] %vm479, %v4898
    %5075 = vst.msk [vmem:[#allocation2 + $0x180] sm:$0xff] %vm479, %v4900
    %5076 = vst.msk [vmem:[#allocation2 + $0x198] sm:$0xff] %vm479, %v4902
    %5077 = vst.msk [vmem:[#allocation2 + $0x1b0] sm:$0xff] %vm479, %v4904
    %5078 = vst.msk [vmem:[#allocation2 + $0x1c8] sm:$0xff] %vm479, %v4906
    %5079 = vst.msk [vmem:[#allocation2 + $0x1e0] sm:$0xff] %vm479, %v4908
    %5080 = vst.msk [vmem:[#allocation2 + $0x1f8] sm:$0xff] %vm479, %v4910
    %5081 = vst.msk [vmem:[#allocation2 + $0x210] sm:$0xff] %vm479, %v4912
    %5082 = vst.msk [vmem:[#allocation2 + $0x228] sm:$0xff] %vm479, %v4914
    %5083 = vst.msk [vmem:[#allocation2 + $0x240] sm:$0xff] %vm479, %v4916
    %5084 = vst.msk [vmem:[#allocation2 + $0x258] sm:$0xff] %vm479, %v4918
    %5085 = vst.msk [vmem:[#allocation2 + $0x270] sm:$0xff] %vm479, %v4920
    %5086 = vst.msk [vmem:[#allocation2 + $0x288] sm:$0xff] %vm479, %v4922
    %5087 = vst.msk [vmem:[#allocation2 + $0x2a0] sm:$0xff] %vm479, %v4924
    %5088 = vst.msk [vmem:[#allocation2 + $0x2b8] sm:$0xff] %vm479, %v4926
    %5089 = vst.msk [vmem:[#allocation2 + $0x2d0] sm:$0xff] %vm479, %v4928
    %5090 = vst.msk [vmem:[#allocation2 + $0x2e8] sm:$0xff] %vm479, %v4930
    %5091 = vst.msk [vmem:[#allocation2 + $0x300] sm:$0xff] %vm479, %v4932
    %5092 = vst.msk [vmem:[#allocation2 + $0x318] sm:$0xff] %vm479, %v4934
    %5093 = vst.msk [vmem:[#allocation2 + $0x330] sm:$0xff] %vm479, %v4936
    %5094 = vst.msk [vmem:[#allocation2 + $0x348] sm:$0xff] %vm479, %v4938
    %5095 = vst.msk [vmem:[#allocation2 + $0x360] sm:$0xff] %vm479, %v4940
    %5096 = vst.msk [vmem:[#allocation2 + $0x378] sm:$0xff] %vm479, %v4942
    %5097 = vst.msk [vmem:[#allocation2 + $0x390] sm:$0xff] %vm479, %v4944
    %5098 = vst.msk [vmem:[#allocation2 + $0x3a8] sm:$0xff] %vm479, %v4946
    %5099 = vst.msk [vmem:[#allocation2 + $0x3c0] sm:$0xff] %vm479, %v4948
    %5100 = vst.msk [vmem:[#allocation2 + $0x3d8] sm:$0xff] %vm479, %v4950
    %5101 = vst.msk [vmem:[#allocation2 + $0x3f0] sm:$0xff] %vm479, %v4952
    %5102 = vst.msk [vmem:[#allocation2 + $0x408] sm:$0xff] %vm479, %v4954
    %5103 = vst.msk [vmem:[#allocation2 + $0x420] sm:$0xff] %vm479, %v4956
    %5104 = vst.msk [vmem:[#allocation2 + $0x438] sm:$0xff] %vm479, %v4958
    %5105 = vst.msk [vmem:[#allocation2 + $0x450] sm:$0xff] %vm479, %v4960
    %5106 = vst.msk [vmem:[#allocation2 + $0x468] sm:$0xff] %vm479, %v4962
    %5107 = vst.msk [vmem:[#allocation2 + $0x480] sm:$0xff] %vm479, %v4964
    %5108 = vst.msk [vmem:[#allocation2 + $0x498] sm:$0xff] %vm479, %v4966
    %5109 = vst.msk [vmem:[#allocation2 + $0x4b0] sm:$0xff] %vm479, %v4968
    %5110 = vst.msk [vmem:[#allocation2 + $0x4c8] sm:$0xff] %vm479, %v4970
    %5111 = vst.msk [vmem:[#allocation2 + $0x4e0] sm:$0xff] %vm479, %v4972
    %5112 = vst.msk [vmem:[#allocation2 + $0x4f8] sm:$0xff] %vm479, %v4974
    %5113 = vst.msk [vmem:[#allocation2 + $0x510] sm:$0xff] %vm479, %v4976
    %5114 = vst.msk [vmem:[#allocation2 + $0x528] sm:$0xff] %vm479, %v4978
    %5115 = vst.msk [vmem:[#allocation2 + $0x540] sm:$0xff] %vm479, %v4980
    %5116 = vst.msk [vmem:[#allocation2 + $0x558] sm:$0xff] %vm479, %v4982
    %5117 = vst.msk [vmem:[#allocation2 + $0x570] sm:$0xff] %vm479, %v4984
    %5118 = vst.msk [vmem:[#allocation2 + $0x588] sm:$0xff] %vm479, %v4986
    %5119 = vst.msk [vmem:[#allocation2 + $0x5a0] sm:$0xff] %vm479, %v4988
    %5120 = vst.msk [vmem:[#allocation2 + $0x5b8] sm:$0xff] %vm479, %v4990
    %5121 = vst.msk [vmem:[#allocation2 + $0x5d0] sm:$0xff] %vm479, %v4992
    %5122 = vst.msk [vmem:[#allocation2 + $0x5e8] sm:$0xff] %vm479, %v4994
    %v5123 = vld [vmem:[#allocation3 + $0x2] sm:$0xff]
    %v5124 = vld [vmem:[#allocation3 + $0xa] sm:$0xff]
    %v5125 = vld [vmem:[#allocation3 + $0x1a] sm:$0xff]
    %v5126 = vld [vmem:[#allocation3 + $0x22] sm:$0xff]
    %v5127 = vld [vmem:[#allocation3 + $0x32] sm:$0xff]
    %v5128 = vld [vmem:[#allocation3 + $0x3a] sm:$0xff]
    %v5129 = vld [vmem:[#allocation3 + $0x4a] sm:$0xff]
    %v5130 = vld [vmem:[#allocation3 + $0x52] sm:$0xff]
    %v5131 = vld [vmem:[#allocation3 + $0x62] sm:$0xff]
    %v5132 = vld [vmem:[#allocation3 + $0x6a] sm:$0xff]
    %v5133 = vld [vmem:[#allocation3 + $0x7a] sm:$0xff]
    %v5134 = vld [vmem:[#allocation3 + $0x82] sm:$0xff]
    %v5135 = vld [vmem:[#allocation3 + $0x92] sm:$0xff]
    %v5136 = vld [vmem:[#allocation3 + $0x9a] sm:$0xff]
    %v5137 = vld [vmem:[#allocation3 + $0xaa] sm:$0xff]
    %v5138 = vld [vmem:[#allocation3 + $0xb2] sm:$0xff]
    %v5139 = vld [vmem:[#allocation3 + $0xc2] sm:$0xff]
    %v5140 = vld [vmem:[#allocation3 + $0xca] sm:$0xff]
    %v5141 = vld [vmem:[#allocation3 + $0xda] sm:$0xff]
    %v5142 = vld [vmem:[#allocation3 + $0xe2] sm:$0xff]
    %v5143 = vld [vmem:[#allocation3 + $0xf2] sm:$0xff]
    %v5144 = vld [vmem:[#allocation3 + $0xfa] sm:$0xff]
    %v5145 = vld [vmem:[#allocation3 + $0x10a] sm:$0xff]
    %v5146 = vld [vmem:[#allocation3 + $0x112] sm:$0xff]
    %v5147 = vld [vmem:[#allocation3 + $0x122] sm:$0xff]
    %v5148 = vld [vmem:[#allocation3 + $0x12a] sm:$0xff]
    %v5149 = vld [vmem:[#allocation3 + $0x13a] sm:$0xff]
    %v5150 = vld [vmem:[#allocation3 + $0x142] sm:$0xff]
    %v5151 = vld [vmem:[#allocation3 + $0x152] sm:$0xff]
    %v5152 = vld [vmem:[#allocation3 + $0x15a] sm:$0xff]
    %v5153 = vld [vmem:[#allocation3 + $0x16a] sm:$0xff]
    %v5154 = vld [vmem:[#allocation3 + $0x172] sm:$0xff]
    %v5155 = vld [vmem:[#allocation3 + $0x1b2] sm:$0xff]
    %v5156 = vld [vmem:[#allocation3 + $0x1ba] sm:$0xff]
    %v5157 = vld [vmem:[#allocation3 + $0x1ca] sm:$0xff]
    %v5158 = vld [vmem:[#allocation3 + $0x1d2] sm:$0xff]
    %v5159 = vld [vmem:[#allocation3 + $0x1e2] sm:$0xff]
    %v5160 = vld [vmem:[#allocation3 + $0x1ea] sm:$0xff]
    %v5161 = vld [vmem:[#allocation3 + $0x1fa] sm:$0xff]
    %v5162 = vld [vmem:[#allocation3 + $0x202] sm:$0xff]
    %v5163 = vld [vmem:[#allocation3 + $0x212] sm:$0xff]
    %v5164 = vld [vmem:[#allocation3 + $0x21a] sm:$0xff]
    %v5165 = vld [vmem:[#allocation3 + $0x22a] sm:$0xff]
    %v5166 = vld [vmem:[#allocation3 + $0x232] sm:$0xff]
    %v5167 = vld [vmem:[#allocation3 + $0x242] sm:$0xff]
    %v5168 = vld [vmem:[#allocation3 + $0x24a] sm:$0xff]
    %v5169 = vld [vmem:[#allocation3 + $0x25a] sm:$0xff]
    %v5170 = vld [vmem:[#allocation3 + $0x262] sm:$0xff]
    %v5171 = vld [vmem:[#allocation3 + $0x272] sm:$0xff]
    %v5172 = vld [vmem:[#allocation3 + $0x27a] sm:$0xff]
    %v5173 = vld [vmem:[#allocation3 + $0x28a] sm:$0xff]
    %v5174 = vld [vmem:[#allocation3 + $0x292] sm:$0xff]
    %v5175 = vld [vmem:[#allocation3 + $0x2a2] sm:$0xff]
    %v5176 = vld [vmem:[#allocation3 + $0x2aa] sm:$0xff]
    %v5177 = vld [vmem:[#allocation3 + $0x2ba] sm:$0xff]
    %v5178 = vld [vmem:[#allocation3 + $0x2c2] sm:$0xff]
    %v5179 = vld [vmem:[#allocation3 + $0x2d2] sm:$0xff]
    %v5180 = vld [vmem:[#allocation3 + $0x2da] sm:$0xff]
    %v5181 = vld [vmem:[#allocation3 + $0x2ea] sm:$0xff]
    %v5182 = vld [vmem:[#allocation3 + $0x2f2] sm:$0xff]
    %v5183 = vld [vmem:[#allocation3 + $0x302] sm:$0xff]
    %v5184 = vld [vmem:[#allocation3 + $0x30a] sm:$0xff]
    %v5185 = vld [vmem:[#allocation3 + $0x31a] sm:$0xff]
    %v5186 = vld [vmem:[#allocation3 + $0x322] sm:$0xff]
    %5251 = vrot.lane.b32.xlu0 %v5123, 64
    %v5252 = vpop.permute.xlu0 %5251
    %5253 = vrot.lane.b32.xlu0 %v5124, 64
    %v5254 = vpop.permute.xlu0 %5253
    %5255 = vrot.lane.b32.xlu0 %v5125, 64
    %v5256 = vpop.permute.xlu0 %5255
    %5257 = vrot.lane.b32.xlu0 %v5126, 64
    %v5258 = vpop.permute.xlu0 %5257
    %5259 = vrot.lane.b32.xlu0 %v5127, 64
    %v5260 = vpop.permute.xlu0 %5259
    %5261 = vrot.lane.b32.xlu0 %v5128, 64
    %v5262 = vpop.permute.xlu0 %5261
    %5263 = vrot.lane.b32.xlu0 %v5129, 64
    %v5264 = vpop.permute.xlu0 %5263
    %5265 = vrot.lane.b32.xlu0 %v5130, 64
    %v5266 = vpop.permute.xlu0 %5265
    %5267 = vrot.lane.b32.xlu0 %v5131, 64
    %v5268 = vpop.permute.xlu0 %5267
    %5269 = vrot.lane.b32.xlu0 %v5132, 64
    %v5270 = vpop.permute.xlu0 %5269
    %5271 = vrot.lane.b32.xlu0 %v5133, 64
    %v5272 = vpop.permute.xlu0 %5271
    %5273 = vrot.lane.b32.xlu0 %v5134, 64
    %v5274 = vpop.permute.xlu0 %5273
    %5275 = vrot.lane.b32.xlu0 %v5135, 64
    %v5276 = vpop.permute.xlu0 %5275
    %5277 = vrot.lane.b32.xlu0 %v5136, 64
    %v5278 = vpop.permute.xlu0 %5277
    %5279 = vrot.lane.b32.xlu0 %v5137, 64
    %v5280 = vpop.permute.xlu0 %5279
    %5281 = vrot.lane.b32.xlu0 %v5138, 64
    %v5282 = vpop.permute.xlu0 %5281
    %5283 = vrot.lane.b32.xlu0 %v5139, 64
    %v5284 = vpop.permute.xlu0 %5283
    %5285 = vrot.lane.b32.xlu0 %v5140, 64
    %v5286 = vpop.permute.xlu0 %5285
    %5287 = vrot.lane.b32.xlu0 %v5141, 64
    %v5288 = vpop.permute.xlu0 %5287
    %5289 = vrot.lane.b32.xlu0 %v5142, 64
    %v5290 = vpop.permute.xlu0 %5289
    %5291 = vrot.lane.b32.xlu0 %v5143, 64
    %v5292 = vpop.permute.xlu0 %5291
    %5293 = vrot.lane.b32.xlu0 %v5144, 64
    %v5294 = vpop.permute.xlu0 %5293
    %5295 = vrot.lane.b32.xlu0 %v5145, 64
    %v5296 = vpop.permute.xlu0 %5295
    %5297 = vrot.lane.b32.xlu0 %v5146, 64
    %v5298 = vpop.permute.xlu0 %5297
    %5299 = vrot.lane.b32.xlu0 %v5147, 64
    %v5300 = vpop.permute.xlu0 %5299
    %5301 = vrot.lane.b32.xlu0 %v5148, 64
    %v5302 = vpop.permute.xlu0 %5301
    %5303 = vrot.lane.b32.xlu0 %v5149, 64
    %v5304 = vpop.permute.xlu0 %5303
    %5305 = vrot.lane.b32.xlu0 %v5150, 64
    %v5306 = vpop.permute.xlu0 %5305
    %5307 = vrot.lane.b32.xlu0 %v5151, 64
    %v5308 = vpop.permute.xlu0 %5307
    %5309 = vrot.lane.b32.xlu0 %v5152, 64
    %v5310 = vpop.permute.xlu0 %5309
    %5311 = vrot.lane.b32.xlu0 %v5153, 64
    %v5312 = vpop.permute.xlu0 %5311
    %5313 = vrot.lane.b32.xlu0 %v5154, 64
    %v5314 = vpop.permute.xlu0 %5313
    %5315 = vrot.lane.b32.xlu0 %v5155, 64
    %v5316 = vpop.permute.xlu0 %5315
    %5317 = vrot.lane.b32.xlu0 %v5156, 64
    %v5318 = vpop.permute.xlu0 %5317
    %5319 = vrot.lane.b32.xlu0 %v5157, 64
    %v5320 = vpop.permute.xlu0 %5319
    %5321 = vrot.lane.b32.xlu0 %v5158, 64
    %v5322 = vpop.permute.xlu0 %5321
    %5323 = vrot.lane.b32.xlu0 %v5159, 64
    %v5324 = vpop.permute.xlu0 %5323
    %5325 = vrot.lane.b32.xlu0 %v5160, 64
    %v5326 = vpop.permute.xlu0 %5325
    %5327 = vrot.lane.b32.xlu0 %v5161, 64
    %v5328 = vpop.permute.xlu0 %5327
    %5329 = vrot.lane.b32.xlu0 %v5162, 64
    %v5330 = vpop.permute.xlu0 %5329
    %5331 = vrot.lane.b32.xlu0 %v5163, 64
    %v5332 = vpop.permute.xlu0 %5331
    %5333 = vrot.lane.b32.xlu0 %v5164, 64
    %v5334 = vpop.permute.xlu0 %5333
    %5335 = vrot.lane.b32.xlu0 %v5165, 64
    %v5336 = vpop.permute.xlu0 %5335
    %5337 = vrot.lane.b32.xlu0 %v5166, 64
    %v5338 = vpop.permute.xlu0 %5337
    %5339 = vrot.lane.b32.xlu0 %v5167, 64
    %v5340 = vpop.permute.xlu0 %5339
    %5341 = vrot.lane.b32.xlu0 %v5168, 64
    %v5342 = vpop.permute.xlu0 %5341
    %5343 = vrot.lane.b32.xlu0 %v5169, 64
    %v5344 = vpop.permute.xlu0 %5343
    %5345 = vrot.lane.b32.xlu0 %v5170, 64
    %v5346 = vpop.permute.xlu0 %5345
    %5347 = vrot.lane.b32.xlu0 %v5171, 64
    %v5348 = vpop.permute.xlu0 %5347
    %5349 = vrot.lane.b32.xlu0 %v5172, 64
    %v5350 = vpop.permute.xlu0 %5349
    %5351 = vrot.lane.b32.xlu0 %v5173, 64
    %v5352 = vpop.permute.xlu0 %5351
    %5353 = vrot.lane.b32.xlu0 %v5174, 64
    %v5354 = vpop.permute.xlu0 %5353
    %5355 = vrot.lane.b32.xlu0 %v5175, 64
    %v5356 = vpop.permute.xlu0 %5355
    %5357 = vrot.lane.b32.xlu0 %v5176, 64
    %v5358 = vpop.permute.xlu0 %5357
    %5359 = vrot.lane.b32.xlu0 %v5177, 64
    %v5360 = vpop.permute.xlu0 %5359
    %5361 = vrot.lane.b32.xlu0 %v5178, 64
    %v5362 = vpop.permute.xlu0 %5361
    %5363 = vrot.lane.b32.xlu0 %v5179, 64
    %v5364 = vpop.permute.xlu0 %5363
    %5365 = vrot.lane.b32.xlu0 %v5180, 64
    %v5366 = vpop.permute.xlu0 %5365
    %5367 = vrot.lane.b32.xlu0 %v5181, 64
    %v5368 = vpop.permute.xlu0 %5367
    %5369 = vrot.lane.b32.xlu0 %v5182, 64
    %v5370 = vpop.permute.xlu0 %5369
    %5371 = vrot.lane.b32.xlu0 %v5183, 64
    %v5372 = vpop.permute.xlu0 %5371
    %5373 = vrot.lane.b32.xlu0 %v5184, 64
    %v5374 = vpop.permute.xlu0 %5373
    %5375 = vrot.lane.b32.xlu0 %v5185, 64
    %v5376 = vpop.permute.xlu0 %5375
    %5377 = vrot.lane.b32.xlu0 %v5186, 64
    %v5378 = vpop.permute.xlu0 %5377
    %5443 = vst.msk [vmem:[#allocation2] sm:$0xff] %vm864, %v5252
    %5444 = vst.msk [vmem:[#allocation2 + $0x18] sm:$0xff] %vm864, %v5254
    %5445 = vst.msk [vmem:[#allocation2 + $0x30] sm:$0xff] %vm864, %v5256
    %5446 = vst.msk [vmem:[#allocation2 + $0x48] sm:$0xff] %vm864, %v5258
    %5447 = vst.msk [vmem:[#allocation2 + $0x60] sm:$0xff] %vm864, %v5260
    %5448 = vst.msk [vmem:[#allocation2 + $0x78] sm:$0xff] %vm864, %v5262
    %5449 = vst.msk [vmem:[#allocation2 + $0x90] sm:$0xff] %vm864, %v5264
    %5450 = vst.msk [vmem:[#allocation2 + $0xa8] sm:$0xff] %vm864, %v5266
    %5451 = vst.msk [vmem:[#allocation2 + $0xc0] sm:$0xff] %vm864, %v5268
    %5452 = vst.msk [vmem:[#allocation2 + $0xd8] sm:$0xff] %vm864, %v5270
    %5453 = vst.msk [vmem:[#allocation2 + $0xf0] sm:$0xff] %vm864, %v5272
    %5454 = vst.msk [vmem:[#allocation2 + $0x108] sm:$0xff] %vm864, %v5274
    %5455 = vst.msk [vmem:[#allocation2 + $0x120] sm:$0xff] %vm864, %v5276
    %5456 = vst.msk [vmem:[#allocation2 + $0x138] sm:$0xff] %vm864, %v5278
    %5457 = vst.msk [vmem:[#allocation2 + $0x150] sm:$0xff] %vm864, %v5280
    %5458 = vst.msk [vmem:[#allocation2 + $0x168] sm:$0xff] %vm864, %v5282
    %5459 = vst.msk [vmem:[#allocation2 + $0x180] sm:$0xff] %vm864, %v5284
    %5460 = vst.msk [vmem:[#allocation2 + $0x198] sm:$0xff] %vm864, %v5286
    %5461 = vst.msk [vmem:[#allocation2 + $0x1b0] sm:$0xff] %vm864, %v5288
    %5462 = vst.msk [vmem:[#allocation2 + $0x1c8] sm:$0xff] %vm864, %v5290
    %5463 = vst.msk [vmem:[#allocation2 + $0x1e0] sm:$0xff] %vm864, %v5292
    %5464 = vst.msk [vmem:[#allocation2 + $0x1f8] sm:$0xff] %vm864, %v5294
    %5465 = vst.msk [vmem:[#allocation2 + $0x210] sm:$0xff] %vm864, %v5296
    %5466 = vst.msk [vmem:[#allocation2 + $0x228] sm:$0xff] %vm864, %v5298
    %5467 = vst.msk [vmem:[#allocation2 + $0x240] sm:$0xff] %vm864, %v5300
    %5468 = vst.msk [vmem:[#allocation2 + $0x258] sm:$0xff] %vm864, %v5302
    %5469 = vst.msk [vmem:[#allocation2 + $0x270] sm:$0xff] %vm864, %v5304
    %5470 = vst.msk [vmem:[#allocation2 + $0x288] sm:$0xff] %vm864, %v5306
    %5471 = vst.msk [vmem:[#allocation2 + $0x2a0] sm:$0xff] %vm864, %v5308
    %5472 = vst.msk [vmem:[#allocation2 + $0x2b8] sm:$0xff] %vm864, %v5310
    %5473 = vst.msk [vmem:[#allocation2 + $0x2d0] sm:$0xff] %vm864, %v5312
    %5474 = vst.msk [vmem:[#allocation2 + $0x2e8] sm:$0xff] %vm864, %v5314
    %5475 = vst.msk [vmem:[#allocation2 + $0x300] sm:$0xff] %vm864, %v5316
    %5476 = vst.msk [vmem:[#allocation2 + $0x318] sm:$0xff] %vm864, %v5318
    %5477 = vst.msk [vmem:[#allocation2 + $0x330] sm:$0xff] %vm864, %v5320
    %5478 = vst.msk [vmem:[#allocation2 + $0x348] sm:$0xff] %vm864, %v5322
    %5479 = vst.msk [vmem:[#allocation2 + $0x360] sm:$0xff] %vm864, %v5324
    %5480 = vst.msk [vmem:[#allocation2 + $0x378] sm:$0xff] %vm864, %v5326
    %5481 = vst.msk [vmem:[#allocation2 + $0x390] sm:$0xff] %vm864, %v5328
    %5482 = vst.msk [vmem:[#allocation2 + $0x3a8] sm:$0xff] %vm864, %v5330
    %5483 = vst.msk [vmem:[#allocation2 + $0x3c0] sm:$0xff] %vm864, %v5332
    %5484 = vst.msk [vmem:[#allocation2 + $0x3d8] sm:$0xff] %vm864, %v5334
    %5485 = vst.msk [vmem:[#allocation2 + $0x3f0] sm:$0xff] %vm864, %v5336
    %5486 = vst.msk [vmem:[#allocation2 + $0x408] sm:$0xff] %vm864, %v5338
    %5487 = vst.msk [vmem:[#allocation2 + $0x420] sm:$0xff] %vm864, %v5340
    %5488 = vst.msk [vmem:[#allocation2 + $0x438] sm:$0xff] %vm864, %v5342
    %5489 = vst.msk [vmem:[#allocation2 + $0x450] sm:$0xff] %vm864, %v5344
    %5490 = vst.msk [vmem:[#allocation2 + $0x468] sm:$0xff] %vm864, %v5346
    %5491 = vst.msk [vmem:[#allocation2 + $0x480] sm:$0xff] %vm864, %v5348
    %5492 = vst.msk [vmem:[#allocation2 + $0x498] sm:$0xff] %vm864, %v5350
    %5493 = vst.msk [vmem:[#allocation2 + $0x4b0] sm:$0xff] %vm864, %v5352
    %5494 = vst.msk [vmem:[#allocation2 + $0x4c8] sm:$0xff] %vm864, %v5354
    %5495 = vst.msk [vmem:[#allocation2 + $0x4e0] sm:$0xff] %vm864, %v5356
    %5496 = vst.msk [vmem:[#allocation2 + $0x4f8] sm:$0xff] %vm864, %v5358
    %5497 = vst.msk [vmem:[#allocation2 + $0x510] sm:$0xff] %vm864, %v5360
    %5498 = vst.msk [vmem:[#allocation2 + $0x528] sm:$0xff] %vm864, %v5362
    %5499 = vst.msk [vmem:[#allocation2 + $0x540] sm:$0xff] %vm864, %v5364
    %5500 = vst.msk [vmem:[#allocation2 + $0x558] sm:$0xff] %vm864, %v5366
    %5501 = vst.msk [vmem:[#allocation2 + $0x570] sm:$0xff] %vm864, %v5368
    %5502 = vst.msk [vmem:[#allocation2 + $0x588] sm:$0xff] %vm864, %v5370
    %5503 = vst.msk [vmem:[#allocation2 + $0x5a0] sm:$0xff] %vm864, %v5372
    %5504 = vst.msk [vmem:[#allocation2 + $0x5b8] sm:$0xff] %vm864, %v5374
    %5505 = vst.msk [vmem:[#allocation2 + $0x5d0] sm:$0xff] %vm864, %v5376
    %5506 = vst.msk [vmem:[#allocation2 + $0x5e8] sm:$0xff] %vm864, %v5378
    %v5507 = vld [vmem:[%s4546] sm:$0xff]
    %v5508 = vld [vmem:[%s4546 + $0x8] sm:$0xff]
    %v5509 = vld [vmem:[%s4546 + $0x18] sm:$0xff]
    %v5510 = vld [vmem:[%s4546 + $0x20] sm:$0xff]
    %v5511 = vld [vmem:[%s4546 + $0x30] sm:$0xff]
    %v5512 = vld [vmem:[%s4546 + $0x38] sm:$0xff]
    %v5513 = vld [vmem:[%s4546 + $0x48] sm:$0xff]
    %v5514 = vld [vmem:[%s4546 + $0x50] sm:$0xff]
    %v5515 = vld [vmem:[%s4546 + $0x60] sm:$0xff]
    %v5516 = vld [vmem:[%s4546 + $0x68] sm:$0xff]
    %v5517 = vld [vmem:[%s4546 + $0x78] sm:$0xff]
    %v5518 = vld [vmem:[%s4546 + $0x80] sm:$0xff]
    %v5519 = vld [vmem:[%s4546 + $0x90] sm:$0xff]
    %v5520 = vld [vmem:[%s4546 + $0x98] sm:$0xff]
    %v5521 = vld [vmem:[%s4546 + $0xa8] sm:$0xff]
    %v5522 = vld [vmem:[%s4546 + $0xb0] sm:$0xff]
    %v5523 = vld [vmem:[%s4546 + $0xc0] sm:$0xff]
    %v5524 = vld [vmem:[%s4546 + $0xc8] sm:$0xff]
    %v5525 = vld [vmem:[%s4546 + $0xd8] sm:$0xff]
    %v5526 = vld [vmem:[%s4546 + $0xe0] sm:$0xff]
    %v5527 = vld [vmem:[%s4546 + $0xf0] sm:$0xff]
    %v5528 = vld [vmem:[%s4546 + $0xf8] sm:$0xff]
    %v5529 = vld [vmem:[%s4546 + $0x108] sm:$0xff]
    %v5530 = vld [vmem:[%s4546 + $0x110] sm:$0xff]
    %v5531 = vld [vmem:[%s4546 + $0x120] sm:$0xff]
    %v5532 = vld [vmem:[%s4546 + $0x128] sm:$0xff]
    %v5533 = vld [vmem:[%s4546 + $0x138] sm:$0xff]
    %v5534 = vld [vmem:[%s4546 + $0x140] sm:$0xff]
    %v5535 = vld [vmem:[%s4546 + $0x150] sm:$0xff]
    %v5536 = vld [vmem:[%s4546 + $0x158] sm:$0xff]
    %v5537 = vld [vmem:[%s4546 + $0x168] sm:$0xff]
    %v5538 = vld [vmem:[%s4546 + $0x170] sm:$0xff]
    %v5539 = vld [vmem:[%s4546 + $0x1b0] sm:$0xff]
    %v5540 = vld [vmem:[%s4546 + $0x1b8] sm:$0xff]
    %v5541 = vld [vmem:[%s4546 + $0x1c8] sm:$0xff]
    %v5542 = vld [vmem:[%s4546 + $0x1d0] sm:$0xff]
    %v5543 = vld [vmem:[%s4546 + $0x1e0] sm:$0xff]
    %v5544 = vld [vmem:[%s4546 + $0x1e8] sm:$0xff]
    %v5545 = vld [vmem:[%s4546 + $0x1f8] sm:$0xff]
    %v5546 = vld [vmem:[%s4546 + $0x200] sm:$0xff]
    %v5547 = vld [vmem:[%s4546 + $0x210] sm:$0xff]
    %v5548 = vld [vmem:[%s4546 + $0x218] sm:$0xff]
    %v5549 = vld [vmem:[%s4546 + $0x228] sm:$0xff]
    %v5550 = vld [vmem:[%s4546 + $0x230] sm:$0xff]
    %v5551 = vld [vmem:[%s4546 + $0x240] sm:$0xff]
    %v5552 = vld [vmem:[%s4546 + $0x248] sm:$0xff]
    %v5553 = vld [vmem:[%s4546 + $0x258] sm:$0xff]
    %v5554 = vld [vmem:[%s4546 + $0x260] sm:$0xff]
    %v5555 = vld [vmem:[%s4546 + $0x270] sm:$0xff]
    %v5556 = vld [vmem:[%s4546 + $0x278] sm:$0xff]
    %v5557 = vld [vmem:[%s4546 + $0x288] sm:$0xff]
    %v5558 = vld [vmem:[%s4546 + $0x290] sm:$0xff]
    %v5559 = vld [vmem:[%s4546 + $0x2a0] sm:$0xff]
    %v5560 = vld [vmem:[%s4546 + $0x2a8] sm:$0xff]
    %v5561 = vld [vmem:[%s4546 + $0x2b8] sm:$0xff]
    %v5562 = vld [vmem:[%s4546 + $0x2c0] sm:$0xff]
    %v5563 = vld [vmem:[%s4546 + $0x2d0] sm:$0xff]
    %v5564 = vld [vmem:[%s4546 + $0x2d8] sm:$0xff]
    %v5565 = vld [vmem:[%s4546 + $0x2e8] sm:$0xff]
    %v5566 = vld [vmem:[%s4546 + $0x2f0] sm:$0xff]
    %v5567 = vld [vmem:[%s4546 + $0x300] sm:$0xff]
    %v5568 = vld [vmem:[%s4546 + $0x308] sm:$0xff]
    %v5569 = vld [vmem:[%s4546 + $0x318] sm:$0xff]
    %v5570 = vld [vmem:[%s4546 + $0x320] sm:$0xff]
    %5635 = vrot.lane.b32.xlu0 %v5507, 96
    %v5636 = vpop.permute.xlu0 %5635
    %5637 = vrot.lane.b32.xlu0 %v5508, 96
    %v5638 = vpop.permute.xlu0 %5637
    %5639 = vrot.lane.b32.xlu0 %v5509, 96
    %v5640 = vpop.permute.xlu0 %5639
    %5641 = vrot.lane.b32.xlu0 %v5510, 96
    %v5642 = vpop.permute.xlu0 %5641
    %5643 = vrot.lane.b32.xlu0 %v5511, 96
    %v5644 = vpop.permute.xlu0 %5643
    %5645 = vrot.lane.b32.xlu0 %v5512, 96
    %v5646 = vpop.permute.xlu0 %5645
    %5647 = vrot.lane.b32.xlu0 %v5513, 96
    %v5648 = vpop.permute.xlu0 %5647
    %5649 = vrot.lane.b32.xlu0 %v5514, 96
    %v5650 = vpop.permute.xlu0 %5649
    %5651 = vrot.lane.b32.xlu0 %v5515, 96
    %v5652 = vpop.permute.xlu0 %5651
    %5653 = vrot.lane.b32.xlu0 %v5516, 96
    %v5654 = vpop.permute.xlu0 %5653
    %5655 = vrot.lane.b32.xlu0 %v5517, 96
    %v5656 = vpop.permute.xlu0 %5655
    %5657 = vrot.lane.b32.xlu0 %v5518, 96
    %v5658 = vpop.permute.xlu0 %5657
    %5659 = vrot.lane.b32.xlu0 %v5519, 96
    %v5660 = vpop.permute.xlu0 %5659
    %5661 = vrot.lane.b32.xlu0 %v5520, 96
    %v5662 = vpop.permute.xlu0 %5661
    %5663 = vrot.lane.b32.xlu0 %v5521, 96
    %v5664 = vpop.permute.xlu0 %5663
    %5665 = vrot.lane.b32.xlu0 %v5522, 96
    %v5666 = vpop.permute.xlu0 %5665
    %5667 = vrot.lane.b32.xlu0 %v5523, 96
    %v5668 = vpop.permute.xlu0 %5667
    %5669 = vrot.lane.b32.xlu0 %v5524, 96
    %v5670 = vpop.permute.xlu0 %5669
    %5671 = vrot.lane.b32.xlu0 %v5525, 96
    %v5672 = vpop.permute.xlu0 %5671
    %5673 = vrot.lane.b32.xlu0 %v5526, 96
    %v5674 = vpop.permute.xlu0 %5673
    %5675 = vrot.lane.b32.xlu0 %v5527, 96
    %v5676 = vpop.permute.xlu0 %5675
    %5677 = vrot.lane.b32.xlu0 %v5528, 96
    %v5678 = vpop.permute.xlu0 %5677
    %5679 = vrot.lane.b32.xlu0 %v5529, 96
    %v5680 = vpop.permute.xlu0 %5679
    %5681 = vrot.lane.b32.xlu0 %v5530, 96
    %v5682 = vpop.permute.xlu0 %5681
    %5683 = vrot.lane.b32.xlu0 %v5531, 96
    %v5684 = vpop.permute.xlu0 %5683
    %5685 = vrot.lane.b32.xlu0 %v5532, 96
    %v5686 = vpop.permute.xlu0 %5685
    %5687 = vrot.lane.b32.xlu0 %v5533, 96
    %v5688 = vpop.permute.xlu0 %5687
    %5689 = vrot.lane.b32.xlu0 %v5534, 96
    %v5690 = vpop.permute.xlu0 %5689
    %5691 = vrot.lane.b32.xlu0 %v5535, 96
    %v5692 = vpop.permute.xlu0 %5691
    %5693 = vrot.lane.b32.xlu0 %v5536, 96
    %v5694 = vpop.permute.xlu0 %5693
    %5695 = vrot.lane.b32.xlu0 %v5537, 96
    %v5696 = vpop.permute.xlu0 %5695
    %5697 = vrot.lane.b32.xlu0 %v5538, 96
    %v5698 = vpop.permute.xlu0 %5697
    %5699 = vrot.lane.b32.xlu0 %v5539, 96
    %v5700 = vpop.permute.xlu0 %5699
    %5701 = vrot.lane.b32.xlu0 %v5540, 96
    %v5702 = vpop.permute.xlu0 %5701
    %5703 = vrot.lane.b32.xlu0 %v5541, 96
    %v5704 = vpop.permute.xlu0 %5703
    %5705 = vrot.lane.b32.xlu0 %v5542, 96
    %v5706 = vpop.permute.xlu0 %5705
    %5707 = vrot.lane.b32.xlu0 %v5543, 96
    %v5708 = vpop.permute.xlu0 %5707
    %5709 = vrot.lane.b32.xlu0 %v5544, 96
    %v5710 = vpop.permute.xlu0 %5709
    %5711 = vrot.lane.b32.xlu0 %v5545, 96
    %v5712 = vpop.permute.xlu0 %5711
    %5713 = vrot.lane.b32.xlu0 %v5546, 96
    %v5714 = vpop.permute.xlu0 %5713
    %5715 = vrot.lane.b32.xlu0 %v5547, 96
    %v5716 = vpop.permute.xlu0 %5715
    %5717 = vrot.lane.b32.xlu0 %v5548, 96
    %v5718 = vpop.permute.xlu0 %5717
    %5719 = vrot.lane.b32.xlu0 %v5549, 96
    %v5720 = vpop.permute.xlu0 %5719
    %5721 = vrot.lane.b32.xlu0 %v5550, 96
    %v5722 = vpop.permute.xlu0 %5721
    %5723 = vrot.lane.b32.xlu0 %v5551, 96
    %v5724 = vpop.permute.xlu0 %5723
    %5725 = vrot.lane.b32.xlu0 %v5552, 96
    %v5726 = vpop.permute.xlu0 %5725
    %5727 = vrot.lane.b32.xlu0 %v5553, 96
    %v5728 = vpop.permute.xlu0 %5727
    %5729 = vrot.lane.b32.xlu0 %v5554, 96
    %v5730 = vpop.permute.xlu0 %5729
    %5731 = vrot.lane.b32.xlu0 %v5555, 96
    %v5732 = vpop.permute.xlu0 %5731
    %5733 = vrot.lane.b32.xlu0 %v5556, 96
    %v5734 = vpop.permute.xlu0 %5733
    %5735 = vrot.lane.b32.xlu0 %v5557, 96
    %v5736 = vpop.permute.xlu0 %5735
    %5737 = vrot.lane.b32.xlu0 %v5558, 96
    %v5738 = vpop.permute.xlu0 %5737
    %5739 = vrot.lane.b32.xlu0 %v5559, 96
    %v5740 = vpop.permute.xlu0 %5739
    %5741 = vrot.lane.b32.xlu0 %v5560, 96
    %v5742 = vpop.permute.xlu0 %5741
    %5743 = vrot.lane.b32.xlu0 %v5561, 96
    %v5744 = vpop.permute.xlu0 %5743
    %5745 = vrot.lane.b32.xlu0 %v5562, 96
    %v5746 = vpop.permute.xlu0 %5745
    %5747 = vrot.lane.b32.xlu0 %v5563, 96
    %v5748 = vpop.permute.xlu0 %5747
    %5749 = vrot.lane.b32.xlu0 %v5564, 96
    %v5750 = vpop.permute.xlu0 %5749
    %5751 = vrot.lane.b32.xlu0 %v5565, 96
    %v5752 = vpop.permute.xlu0 %5751
    %5753 = vrot.lane.b32.xlu0 %v5566, 96
    %v5754 = vpop.permute.xlu0 %5753
    %5755 = vrot.lane.b32.xlu0 %v5567, 96
    %v5756 = vpop.permute.xlu0 %5755
    %5757 = vrot.lane.b32.xlu0 %v5568, 96
    %v5758 = vpop.permute.xlu0 %5757
    %5759 = vrot.lane.b32.xlu0 %v5569, 96
    %v5760 = vpop.permute.xlu0 %5759
    %5761 = vrot.lane.b32.xlu0 %v5570, 96
    %v5762 = vpop.permute.xlu0 %5761
    %5827 = vst.msk [vmem:[#allocation2] sm:$0xff] %vm1250, %v5636
    %5828 = vst.msk [vmem:[#allocation2 + $0x18] sm:$0xff] %vm1250, %v5638
    %5829 = vst.msk [vmem:[#allocation2 + $0x30] sm:$0xff] %vm1250, %v5640
    %5830 = vst.msk [vmem:[#allocation2 + $0x48] sm:$0xff] %vm1250, %v5642
    %5831 = vst.msk [vmem:[#allocation2 + $0x60] sm:$0xff] %vm1250, %v5644
    %5832 = vst.msk [vmem:[#allocation2 + $0x78] sm:$0xff] %vm1250, %v5646
    %5833 = vst.msk [vmem:[#allocation2 + $0x90] sm:$0xff] %vm1250, %v5648
    %5834 = vst.msk [vmem:[#allocation2 + $0xa8] sm:$0xff] %vm1250, %v5650
    %5835 = vst.msk [vmem:[#allocation2 + $0xc0] sm:$0xff] %vm1250, %v5652
    %5836 = vst.msk [vmem:[#allocation2 + $0xd8] sm:$0xff] %vm1250, %v5654
    %5837 = vst.msk [vmem:[#allocation2 + $0xf0] sm:$0xff] %vm1250, %v5656
    %5838 = vst.msk [vmem:[#allocation2 + $0x108] sm:$0xff] %vm1250, %v5658
    %5839 = vst.msk [vmem:[#allocation2 + $0x120] sm:$0xff] %vm1250, %v5660
    %5840 = vst.msk [vmem:[#allocation2 + $0x138] sm:$0xff] %vm1250, %v5662
    %5841 = vst.msk [vmem:[#allocation2 + $0x150] sm:$0xff] %vm1250, %v5664
    %5842 = vst.msk [vmem:[#allocation2 + $0x168] sm:$0xff] %vm1250, %v5666
    %5843 = vst.msk [vmem:[#allocation2 + $0x180] sm:$0xff] %vm1250, %v5668
    %5844 = vst.msk [vmem:[#allocation2 + $0x198] sm:$0xff] %vm1250, %v5670
    %5845 = vst.msk [vmem:[#allocation2 + $0x1b0] sm:$0xff] %vm1250, %v5672
    %5846 = vst.msk [vmem:[#allocation2 + $0x1c8] sm:$0xff] %vm1250, %v5674
    %5847 = vst.msk [vmem:[#allocation2 + $0x1e0] sm:$0xff] %vm1250, %v5676
    %5848 = vst.msk [vmem:[#allocation2 + $0x1f8] sm:$0xff] %vm1250, %v5678
    %5849 = vst.msk [vmem:[#allocation2 + $0x210] sm:$0xff] %vm1250, %v5680
    %5850 = vst.msk [vmem:[#allocation2 + $0x228] sm:$0xff] %vm1250, %v5682
    %5851 = vst.msk [vmem:[#allocation2 + $0x240] sm:$0xff] %vm1250, %v5684
    %5852 = vst.msk [vmem:[#allocation2 + $0x258] sm:$0xff] %vm1250, %v5686
    %5853 = vst.msk [vmem:[#allocation2 + $0x270] sm:$0xff] %vm1250, %v5688
    %5854 = vst.msk [vmem:[#allocation2 + $0x288] sm:$0xff] %vm1250, %v5690
    %5855 = vst.msk [vmem:[#allocation2 + $0x2a0] sm:$0xff] %vm1250, %v5692
    %5856 = vst.msk [vmem:[#allocation2 + $0x2b8] sm:$0xff] %vm1250, %v5694
    %5857 = vst.msk [vmem:[#allocation2 + $0x2d0] sm:$0xff] %vm1250, %v5696
    %5858 = vst.msk [vmem:[#allocation2 + $0x2e8] sm:$0xff] %vm1250, %v5698
    %5859 = vst.msk [vmem:[#allocation2 + $0x300] sm:$0xff] %vm1250, %v5700
    %5860 = vst.msk [vmem:[#allocation2 + $0x318] sm:$0xff] %vm1250, %v5702
    %5861 = vst.msk [vmem:[#allocation2 + $0x330] sm:$0xff] %vm1250, %v5704
    %5862 = vst.msk [vmem:[#allocation2 + $0x348] sm:$0xff] %vm1250, %v5706
    %5863 = vst.msk [vmem:[#allocation2 + $0x360] sm:$0xff] %vm1250, %v5708
    %5864 = vst.msk [vmem:[#allocation2 + $0x378] sm:$0xff] %vm1250, %v5710
    %5865 = vst.msk [vmem:[#allocation2 + $0x390] sm:$0xff] %vm1250, %v5712
    %5866 = vst.msk [vmem:[#allocation2 + $0x3a8] sm:$0xff] %vm1250, %v5714
    %5867 = vst.msk [vmem:[#allocation2 + $0x3c0] sm:$0xff] %vm1250, %v5716
    %5868 = vst.msk [vmem:[#allocation2 + $0x3d8] sm:$0xff] %vm1250, %v5718
    %5869 = vst.msk [vmem:[#allocation2 + $0x3f0] sm:$0xff] %vm1250, %v5720
    %5870 = vst.msk [vmem:[#allocation2 + $0x408] sm:$0xff] %vm1250, %v5722
    %5871 = vst.msk [vmem:[#allocation2 + $0x420] sm:$0xff] %vm1250, %v5724
    %5872 = vst.msk [vmem:[#allocation2 + $0x438] sm:$0xff] %vm1250, %v5726
    %5873 = vst.msk [vmem:[#allocation2 + $0x450] sm:$0xff] %vm1250, %v5728
    %5874 = vst.msk [vmem:[#allocation2 + $0x468] sm:$0xff] %vm1250, %v5730
    %5875 = vst.msk [vmem:[#allocation2 + $0x480] sm:$0xff] %vm1250, %v5732
    %5876 = vst.msk [vmem:[#allocation2 + $0x498] sm:$0xff] %vm1250, %v5734
    %5877 = vst.msk [vmem:[#allocation2 + $0x4b0] sm:$0xff] %vm1250, %v5736
    %5878 = vst.msk [vmem:[#allocation2 + $0x4c8] sm:$0xff] %vm1250, %v5738
    %5879 = vst.msk [vmem:[#allocation2 + $0x4e0] sm:$0xff] %vm1250, %v5740
    %5880 = vst.msk [vmem:[#allocation2 + $0x4f8] sm:$0xff] %vm1250, %v5742
    %5881 = vst.msk [vmem:[#allocation2 + $0x510] sm:$0xff] %vm1250, %v5744
    %5882 = vst.msk [vmem:[#allocation2 + $0x528] sm:$0xff] %vm1250, %v5746
    %5883 = vst.msk [vmem:[#allocation2 + $0x540] sm:$0xff] %vm1250, %v5748
    %5884 = vst.msk [vmem:[#allocation2 + $0x558] sm:$0xff] %vm1250, %v5750
    %5885 = vst.msk [vmem:[#allocation2 + $0x570] sm:$0xff] %vm1250, %v5752
    %5886 = vst.msk [vmem:[#allocation2 + $0x588] sm:$0xff] %vm1250, %v5754
    %5887 = vst.msk [vmem:[#allocation2 + $0x5a0] sm:$0xff] %vm1250, %v5756
    %5888 = vst.msk [vmem:[#allocation2 + $0x5b8] sm:$0xff] %vm1250, %v5758
    %5889 = vst.msk [vmem:[#allocation2 + $0x5d0] sm:$0xff] %vm1250, %v5760
    %5890 = vst.msk [vmem:[#allocation2 + $0x5e8] sm:$0xff] %vm1250, %v5762
    %v5891 = vld [vmem:[%s4546 + $0x1] sm:$0xff]
    %v5892 = vld [vmem:[%s4546 + $0x9] sm:$0xff]
    %v5893 = vld [vmem:[%s4546 + $0x19] sm:$0xff]
    %v5894 = vld [vmem:[%s4546 + $0x21] sm:$0xff]
    %v5895 = vld [vmem:[%s4546 + $0x31] sm:$0xff]
    %v5896 = vld [vmem:[%s4546 + $0x39] sm:$0xff]
    %v5897 = vld [vmem:[%s4546 + $0x49] sm:$0xff]
    %v5898 = vld [vmem:[%s4546 + $0x51] sm:$0xff]
    %v5899 = vld [vmem:[%s4546 + $0x61] sm:$0xff]
    %v5900 = vld [vmem:[%s4546 + $0x69] sm:$0xff]
    %v5901 = vld [vmem:[%s4546 + $0x79] sm:$0xff]
    %v5902 = vld [vmem:[%s4546 + $0x81] sm:$0xff]
    %v5903 = vld [vmem:[%s4546 + $0x91] sm:$0xff]
    %v5904 = vld [vmem:[%s4546 + $0x99] sm:$0xff]
    %v5905 = vld [vmem:[%s4546 + $0xa9] sm:$0xff]
    %v5906 = vld [vmem:[%s4546 + $0xb1] sm:$0xff]
    %v5907 = vld [vmem:[%s4546 + $0xc1] sm:$0xff]
    %v5908 = vld [vmem:[%s4546 + $0xc9] sm:$0xff]
    %v5909 = vld [vmem:[%s4546 + $0xd9] sm:$0xff]
    %v5910 = vld [vmem:[%s4546 + $0xe1] sm:$0xff]
    %v5911 = vld [vmem:[%s4546 + $0xf1] sm:$0xff]
    %v5912 = vld [vmem:[%s4546 + $0xf9] sm:$0xff]
    %v5913 = vld [vmem:[%s4546 + $0x109] sm:$0xff]
    %v5914 = vld [vmem:[%s4546 + $0x111] sm:$0xff]
    %v5915 = vld [vmem:[%s4546 + $0x121] sm:$0xff]
    %v5916 = vld [vmem:[%s4546 + $0x129] sm:$0xff]
    %v5917 = vld [vmem:[%s4546 + $0x139] sm:$0xff]
    %v5918 = vld [vmem:[%s4546 + $0x141] sm:$0xff]
    %v5919 = vld [vmem:[%s4546 + $0x151] sm:$0xff]
    %v5920 = vld [vmem:[%s4546 + $0x159] sm:$0xff]
    %v5921 = vld [vmem:[%s4546 + $0x169] sm:$0xff]
    %v5922 = vld [vmem:[%s4546 + $0x171] sm:$0xff]
    %v5923 = vld [vmem:[%s4546 + $0x1b1] sm:$0xff]
    %v5924 = vld [vmem:[%s4546 + $0x1b9] sm:$0xff]
    %v5925 = vld [vmem:[%s4546 + $0x1c9] sm:$0xff]
    %v5926 = vld [vmem:[%s4546 + $0x1d1] sm:$0xff]
    %v5927 = vld [vmem:[%s4546 + $0x1e1] sm:$0xff]
    %v5928 = vld [vmem:[%s4546 + $0x1e9] sm:$0xff]
    %v5929 = vld [vmem:[%s4546 + $0x1f9] sm:$0xff]
    %v5930 = vld [vmem:[%s4546 + $0x201] sm:$0xff]
    %v5931 = vld [vmem:[%s4546 + $0x211] sm:$0xff]
    %v5932 = vld [vmem:[%s4546 + $0x219] sm:$0xff]
    %v5933 = vld [vmem:[%s4546 + $0x229] sm:$0xff]
    %v5934 = vld [vmem:[%s4546 + $0x231] sm:$0xff]
    %v5935 = vld [vmem:[%s4546 + $0x241] sm:$0xff]
    %v5936 = vld [vmem:[%s4546 + $0x249] sm:$0xff]
    %v5937 = vld [vmem:[%s4546 + $0x259] sm:$0xff]
    %v5938 = vld [vmem:[%s4546 + $0x261] sm:$0xff]
    %v5939 = vld [vmem:[%s4546 + $0x271] sm:$0xff]
    %v5940 = vld [vmem:[%s4546 + $0x279] sm:$0xff]
    %v5941 = vld [vmem:[%s4546 + $0x289] sm:$0xff]
    %v5942 = vld [vmem:[%s4546 + $0x291] sm:$0xff]
    %v5943 = vld [vmem:[%s4546 + $0x2a1] sm:$0xff]
    %v5944 = vld [vmem:[%s4546 + $0x2a9] sm:$0xff]
    %v5945 = vld [vmem:[%s4546 + $0x2b9] sm:$0xff]
    %v5946 = vld [vmem:[%s4546 + $0x2c1] sm:$0xff]
    %v5947 = vld [vmem:[%s4546 + $0x2d1] sm:$0xff]
    %v5948 = vld [vmem:[%s4546 + $0x2d9] sm:$0xff]
    %v5949 = vld [vmem:[%s4546 + $0x2e9] sm:$0xff]
    %v5950 = vld [vmem:[%s4546 + $0x2f1] sm:$0xff]
    %v5951 = vld [vmem:[%s4546 + $0x301] sm:$0xff]
    %v5952 = vld [vmem:[%s4546 + $0x309] sm:$0xff]
    %v5953 = vld [vmem:[%s4546 + $0x319] sm:$0xff]
    %v5954 = vld [vmem:[%s4546 + $0x321] sm:$0xff]
    %5955 = vst.msk [vmem:[#allocation2 + $0x8] sm:$0xff] %vm94, %v5891
    %5956 = vst.msk [vmem:[#allocation2 + $0x20] sm:$0xff] %vm94, %v5892
    %5957 = vst.msk [vmem:[#allocation2 + $0x38] sm:$0xff] %vm94, %v5893
    %5958 = vst.msk [vmem:[#allocation2 + $0x50] sm:$0xff] %vm94, %v5894
    %5959 = vst.msk [vmem:[#allocation2 + $0x68] sm:$0xff] %vm94, %v5895
    %5960 = vst.msk [vmem:[#allocation2 + $0x80] sm:$0xff] %vm94, %v5896
    %5961 = vst.msk [vmem:[#allocation2 + $0x98] sm:$0xff] %vm94, %v5897
    %5962 = vst.msk [vmem:[#allocation2 + $0xb0] sm:$0xff] %vm94, %v5898
    %5963 = vst.msk [vmem:[#allocation2 + $0xc8] sm:$0xff] %vm94, %v5899
    %5964 = vst.msk [vmem:[#allocation2 + $0xe0] sm:$0xff] %vm94, %v5900
    %5965 = vst.msk [vmem:[#allocation2 + $0xf8] sm:$0xff] %vm94, %v5901
    %5966 = vst.msk [vmem:[#allocation2 + $0x110] sm:$0xff] %vm94, %v5902
    %5967 = vst.msk [vmem:[#allocation2 + $0x128] sm:$0xff] %vm94, %v5903
    %5968 = vst.msk [vmem:[#allocation2 + $0x140] sm:$0xff] %vm94, %v5904
    %5969 = vst.msk [vmem:[#allocation2 + $0x158] sm:$0xff] %vm94, %v5905
    %5970 = vst.msk [vmem:[#allocation2 + $0x170] sm:$0xff] %vm94, %v5906
    %5971 = vst.msk [vmem:[#allocation2 + $0x188] sm:$0xff] %vm94, %v5907
    %5972 = vst.msk [vmem:[#allocation2 + $0x1a0] sm:$0xff] %vm94, %v5908
    %5973 = vst.msk [vmem:[#allocation2 + $0x1b8] sm:$0xff] %vm94, %v5909
    %5974 = vst.msk [vmem:[#allocation2 + $0x1d0] sm:$0xff] %vm94, %v5910
    %5975 = vst.msk [vmem:[#allocation2 + $0x1e8] sm:$0xff] %vm94, %v5911
    %5976 = vst.msk [vmem:[#allocation2 + $0x200] sm:$0xff] %vm94, %v5912
    %5977 = vst.msk [vmem:[#allocation2 + $0x218] sm:$0xff] %vm94, %v5913
    %5978 = vst.msk [vmem:[#allocation2 + $0x230] sm:$0xff] %vm94, %v5914
    %5979 = vst.msk [vmem:[#allocation2 + $0x248] sm:$0xff] %vm94, %v5915
    %5980 = vst.msk [vmem:[#allocation2 + $0x260] sm:$0xff] %vm94, %v5916
    %5981 = vst.msk [vmem:[#allocation2 + $0x278] sm:$0xff] %vm94, %v5917
    %5982 = vst.msk [vmem:[#allocation2 + $0x290] sm:$0xff] %vm94, %v5918
    %5983 = vst.msk [vmem:[#allocation2 + $0x2a8] sm:$0xff] %vm94, %v5919
    %5984 = vst.msk [vmem:[#allocation2 + $0x2c0] sm:$0xff] %vm94, %v5920
    %5985 = vst.msk [vmem:[#allocation2 + $0x2d8] sm:$0xff] %vm94, %v5921
    %5986 = vst.msk [vmem:[#allocation2 + $0x2f0] sm:$0xff] %vm94, %v5922
    %5987 = vst.msk [vmem:[#allocation2 + $0x308] sm:$0xff] %vm94, %v5923
    %5988 = vst.msk [vmem:[#allocation2 + $0x320] sm:$0xff] %vm94, %v5924
    %5989 = vst.msk [vmem:[#allocation2 + $0x338] sm:$0xff] %vm94, %v5925
    %5990 = vst.msk [vmem:[#allocation2 + $0x350] sm:$0xff] %vm94, %v5926
    %5991 = vst.msk [vmem:[#allocation2 + $0x368] sm:$0xff] %vm94, %v5927
    %5992 = vst.msk [vmem:[#allocation2 + $0x380] sm:$0xff] %vm94, %v5928
    %5993 = vst.msk [vmem:[#allocation2 + $0x398] sm:$0xff] %vm94, %v5929
    %5994 = vst.msk [vmem:[#allocation2 + $0x3b0] sm:$0xff] %vm94, %v5930
    %5995 = vst.msk [vmem:[#allocation2 + $0x3c8] sm:$0xff] %vm94, %v5931
    %5996 = vst.msk [vmem:[#allocation2 + $0x3e0] sm:$0xff] %vm94, %v5932
    %5997 = vst.msk [vmem:[#allocation2 + $0x3f8] sm:$0xff] %vm94, %v5933
    %5998 = vst.msk [vmem:[#allocation2 + $0x410] sm:$0xff] %vm94, %v5934
    %5999 = vst.msk [vmem:[#allocation2 + $0x428] sm:$0xff] %vm94, %v5935
    %6000 = vst.msk [vmem:[#allocation2 + $0x440] sm:$0xff] %vm94, %v5936
    %6001 = vst.msk [vmem:[#allocation2 + $0x458] sm:$0xff] %vm94, %v5937
    %6002 = vst.msk [vmem:[#allocation2 + $0x470] sm:$0xff] %vm94, %v5938
    %6003 = vst.msk [vmem:[#allocation2 + $0x488] sm:$0xff] %vm94, %v5939
    %6004 = vst.msk [vmem:[#allocation2 + $0x4a0] sm:$0xff] %vm94, %v5940
    %6005 = vst.msk [vmem:[#allocation2 + $0x4b8] sm:$0xff] %vm94, %v5941
    %6006 = vst.msk [vmem:[#allocation2 + $0x4d0] sm:$0xff] %vm94, %v5942
    %6007 = vst.msk [vmem:[#allocation2 + $0x4e8] sm:$0xff] %vm94, %v5943
    %6008 = vst.msk [vmem:[#allocation2 + $0x500] sm:$0xff] %vm94, %v5944
    %6009 = vst.msk [vmem:[#allocation2 + $0x518] sm:$0xff] %vm94, %v5945
    %6010 = vst.msk [vmem:[#allocation2 + $0x530] sm:$0xff] %vm94, %v5946
    %6011 = vst.msk [vmem:[#allocation2 + $0x548] sm:$0xff] %vm94, %v5947
    %6012 = vst.msk [vmem:[#allocation2 + $0x560] sm:$0xff] %vm94, %v5948
    %6013 = vst.msk [vmem:[#allocation2 + $0x578] sm:$0xff] %vm94, %v5949
    %6014 = vst.msk [vmem:[#allocation2 + $0x590] sm:$0xff] %vm94, %v5950
    %6015 = vst.msk [vmem:[#allocation2 + $0x5a8] sm:$0xff] %vm94, %v5951
    %6016 = vst.msk [vmem:[#allocation2 + $0x5c0] sm:$0xff] %vm94, %v5952
    %6017 = vst.msk [vmem:[#allocation2 + $0x5d8] sm:$0xff] %vm94, %v5953
    %6018 = vst.msk [vmem:[#allocation2 + $0x5f0] sm:$0xff] %vm94, %v5954
    %v6019 = vld [vmem:[%s4546 + $0x2] sm:$0xff]
    %v6020 = vld [vmem:[%s4546 + $0xa] sm:$0xff]
    %v6021 = vld [vmem:[%s4546 + $0x1a] sm:$0xff]
    %v6022 = vld [vmem:[%s4546 + $0x22] sm:$0xff]
    %v6023 = vld [vmem:[%s4546 + $0x32] sm:$0xff]
    %v6024 = vld [vmem:[%s4546 + $0x3a] sm:$0xff]
    %v6025 = vld [vmem:[%s4546 + $0x4a] sm:$0xff]
    %v6026 = vld [vmem:[%s4546 + $0x52] sm:$0xff]
    %v6027 = vld [vmem:[%s4546 + $0x62] sm:$0xff]
    %v6028 = vld [vmem:[%s4546 + $0x6a] sm:$0xff]
    %v6029 = vld [vmem:[%s4546 + $0x7a] sm:$0xff]
    %v6030 = vld [vmem:[%s4546 + $0x82] sm:$0xff]
    %v6031 = vld [vmem:[%s4546 + $0x92] sm:$0xff]
    %v6032 = vld [vmem:[%s4546 + $0x9a] sm:$0xff]
    %v6033 = vld [vmem:[%s4546 + $0xaa] sm:$0xff]
    %v6034 = vld [vmem:[%s4546 + $0xb2] sm:$0xff]
    %v6035 = vld [vmem:[%s4546 + $0xc2] sm:$0xff]
    %v6036 = vld [vmem:[%s4546 + $0xca] sm:$0xff]
    %v6037 = vld [vmem:[%s4546 + $0xda] sm:$0xff]
    %v6038 = vld [vmem:[%s4546 + $0xe2] sm:$0xff]
    %v6039 = vld [vmem:[%s4546 + $0xf2] sm:$0xff]
    %v6040 = vld [vmem:[%s4546 + $0xfa] sm:$0xff]
    %v6041 = vld [vmem:[%s4546 + $0x10a] sm:$0xff]
    %v6042 = vld [vmem:[%s4546 + $0x112] sm:$0xff]
    %v6043 = vld [vmem:[%s4546 + $0x122] sm:$0xff]
    %v6044 = vld [vmem:[%s4546 + $0x12a] sm:$0xff]
    %v6045 = vld [vmem:[%s4546 + $0x13a] sm:$0xff]
    %v6046 = vld [vmem:[%s4546 + $0x142] sm:$0xff]
    %v6047 = vld [vmem:[%s4546 + $0x152] sm:$0xff]
    %v6048 = vld [vmem:[%s4546 + $0x15a] sm:$0xff]
    %v6049 = vld [vmem:[%s4546 + $0x16a] sm:$0xff]
    %v6050 = vld [vmem:[%s4546 + $0x172] sm:$0xff]
    %v6051 = vld [vmem:[%s4546 + $0x1b2] sm:$0xff]
    %v6052 = vld [vmem:[%s4546 + $0x1ba] sm:$0xff]
    %v6053 = vld [vmem:[%s4546 + $0x1ca] sm:$0xff]
    %v6054 = vld [vmem:[%s4546 + $0x1d2] sm:$0xff]
    %v6055 = vld [vmem:[%s4546 + $0x1e2] sm:$0xff]
    %v6056 = vld [vmem:[%s4546 + $0x1ea] sm:$0xff]
    %v6057 = vld [vmem:[%s4546 + $0x1fa] sm:$0xff]
    %v6058 = vld [vmem:[%s4546 + $0x202] sm:$0xff]
    %v6059 = vld [vmem:[%s4546 + $0x212] sm:$0xff]
    %v6060 = vld [vmem:[%s4546 + $0x21a] sm:$0xff]
    %v6061 = vld [vmem:[%s4546 + $0x22a] sm:$0xff]
    %v6062 = vld [vmem:[%s4546 + $0x232] sm:$0xff]
    %v6063 = vld [vmem:[%s4546 + $0x242] sm:$0xff]
    %v6064 = vld [vmem:[%s4546 + $0x24a] sm:$0xff]
    %v6065 = vld [vmem:[%s4546 + $0x25a] sm:$0xff]
    %v6066 = vld [vmem:[%s4546 + $0x262] sm:$0xff]
    %v6067 = vld [vmem:[%s4546 + $0x272] sm:$0xff]
    %v6068 = vld [vmem:[%s4546 + $0x27a] sm:$0xff]
    %v6069 = vld [vmem:[%s4546 + $0x28a] sm:$0xff]
    %v6070 = vld [vmem:[%s4546 + $0x292] sm:$0xff]
    %v6071 = vld [vmem:[%s4546 + $0x2a2] sm:$0xff]
    %v6072 = vld [vmem:[%s4546 + $0x2aa] sm:$0xff]
    %v6073 = vld [vmem:[%s4546 + $0x2ba] sm:$0xff]
    %v6074 = vld [vmem:[%s4546 + $0x2c2] sm:$0xff]
    %v6075 = vld [vmem:[%s4546 + $0x2d2] sm:$0xff]
    %v6076 = vld [vmem:[%s4546 + $0x2da] sm:$0xff]
    %v6077 = vld [vmem:[%s4546 + $0x2ea] sm:$0xff]
    %v6078 = vld [vmem:[%s4546 + $0x2f2] sm:$0xff]
    %v6079 = vld [vmem:[%s4546 + $0x302] sm:$0xff]
    %v6080 = vld [vmem:[%s4546 + $0x30a] sm:$0xff]
    %v6081 = vld [vmem:[%s4546 + $0x31a] sm:$0xff]
    %v6082 = vld [vmem:[%s4546 + $0x322] sm:$0xff]
    %6147 = vrot.lane.b32.xlu0 %v6019, 32
    %v6148 = vpop.permute.xlu0 %6147
    %6149 = vrot.lane.b32.xlu0 %v6020, 32
    %v6150 = vpop.permute.xlu0 %6149
    %6151 = vrot.lane.b32.xlu0 %v6021, 32
    %v6152 = vpop.permute.xlu0 %6151
    %6153 = vrot.lane.b32.xlu0 %v6022, 32
    %v6154 = vpop.permute.xlu0 %6153
    %6155 = vrot.lane.b32.xlu0 %v6023, 32
    %v6156 = vpop.permute.xlu0 %6155
    %6157 = vrot.lane.b32.xlu0 %v6024, 32
    %v6158 = vpop.permute.xlu0 %6157
    %6159 = vrot.lane.b32.xlu0 %v6025, 32
    %v6160 = vpop.permute.xlu0 %6159
    %6161 = vrot.lane.b32.xlu0 %v6026, 32
    %v6162 = vpop.permute.xlu0 %6161
    %6163 = vrot.lane.b32.xlu0 %v6027, 32
    %v6164 = vpop.permute.xlu0 %6163
    %6165 = vrot.lane.b32.xlu0 %v6028, 32
    %v6166 = vpop.permute.xlu0 %6165
    %6167 = vrot.lane.b32.xlu0 %v6029, 32
    %v6168 = vpop.permute.xlu0 %6167
    %6169 = vrot.lane.b32.xlu0 %v6030, 32
    %v6170 = vpop.permute.xlu0 %6169
    %6171 = vrot.lane.b32.xlu0 %v6031, 32
    %v6172 = vpop.permute.xlu0 %6171
    %6173 = vrot.lane.b32.xlu0 %v6032, 32
    %v6174 = vpop.permute.xlu0 %6173
    %6175 = vrot.lane.b32.xlu0 %v6033, 32
    %v6176 = vpop.permute.xlu0 %6175
    %6177 = vrot.lane.b32.xlu0 %v6034, 32
    %v6178 = vpop.permute.xlu0 %6177
    %6179 = vrot.lane.b32.xlu0 %v6035, 32
    %v6180 = vpop.permute.xlu0 %6179
    %6181 = vrot.lane.b32.xlu0 %v6036, 32
    %v6182 = vpop.permute.xlu0 %6181
    %6183 = vrot.lane.b32.xlu0 %v6037, 32
    %v6184 = vpop.permute.xlu0 %6183
    %6185 = vrot.lane.b32.xlu0 %v6038, 32
    %v6186 = vpop.permute.xlu0 %6185
    %6187 = vrot.lane.b32.xlu0 %v6039, 32
    %v6188 = vpop.permute.xlu0 %6187
    %6189 = vrot.lane.b32.xlu0 %v6040, 32
    %v6190 = vpop.permute.xlu0 %6189
    %6191 = vrot.lane.b32.xlu0 %v6041, 32
    %v6192 = vpop.permute.xlu0 %6191
    %6193 = vrot.lane.b32.xlu0 %v6042, 32
    %v6194 = vpop.permute.xlu0 %6193
    %6195 = vrot.lane.b32.xlu0 %v6043, 32
    %v6196 = vpop.permute.xlu0 %6195
    %6197 = vrot.lane.b32.xlu0 %v6044, 32
    %v6198 = vpop.permute.xlu0 %6197
    %6199 = vrot.lane.b32.xlu0 %v6045, 32
    %v6200 = vpop.permute.xlu0 %6199
    %6201 = vrot.lane.b32.xlu0 %v6046, 32
    %v6202 = vpop.permute.xlu0 %6201
    %6203 = vrot.lane.b32.xlu0 %v6047, 32
    %v6204 = vpop.permute.xlu0 %6203
    %6205 = vrot.lane.b32.xlu0 %v6048, 32
    %v6206 = vpop.permute.xlu0 %6205
    %6207 = vrot.lane.b32.xlu0 %v6049, 32
    %v6208 = vpop.permute.xlu0 %6207
    %6209 = vrot.lane.b32.xlu0 %v6050, 32
    %v6210 = vpop.permute.xlu0 %6209
    %6211 = vrot.lane.b32.xlu0 %v6051, 32
    %v6212 = vpop.permute.xlu0 %6211
    %6213 = vrot.lane.b32.xlu0 %v6052, 32
    %v6214 = vpop.permute.xlu0 %6213
    %6215 = vrot.lane.b32.xlu0 %v6053, 32
    %v6216 = vpop.permute.xlu0 %6215
    %6217 = vrot.lane.b32.xlu0 %v6054, 32
    %v6218 = vpop.permute.xlu0 %6217
    %6219 = vrot.lane.b32.xlu0 %v6055, 32
    %v6220 = vpop.permute.xlu0 %6219
    %6221 = vrot.lane.b32.xlu0 %v6056, 32
    %v6222 = vpop.permute.xlu0 %6221
    %6223 = vrot.lane.b32.xlu0 %v6057, 32
    %v6224 = vpop.permute.xlu0 %6223
    %6225 = vrot.lane.b32.xlu0 %v6058, 32
    %v6226 = vpop.permute.xlu0 %6225
    %6227 = vrot.lane.b32.xlu0 %v6059, 32
    %v6228 = vpop.permute.xlu0 %6227
    %6229 = vrot.lane.b32.xlu0 %v6060, 32
    %v6230 = vpop.permute.xlu0 %6229
    %6231 = vrot.lane.b32.xlu0 %v6061, 32
    %v6232 = vpop.permute.xlu0 %6231
    %6233 = vrot.lane.b32.xlu0 %v6062, 32
    %v6234 = vpop.permute.xlu0 %6233
    %6235 = vrot.lane.b32.xlu0 %v6063, 32
    %v6236 = vpop.permute.xlu0 %6235
    %6237 = vrot.lane.b32.xlu0 %v6064, 32
    %v6238 = vpop.permute.xlu0 %6237
    %6239 = vrot.lane.b32.xlu0 %v6065, 32
    %v6240 = vpop.permute.xlu0 %6239
    %6241 = vrot.lane.b32.xlu0 %v6066, 32
    %v6242 = vpop.permute.xlu0 %6241
    %6243 = vrot.lane.b32.xlu0 %v6067, 32
    %v6244 = vpop.permute.xlu0 %6243
    %6245 = vrot.lane.b32.xlu0 %v6068, 32
    %v6246 = vpop.permute.xlu0 %6245
    %6247 = vrot.lane.b32.xlu0 %v6069, 32
    %v6248 = vpop.permute.xlu0 %6247
    %6249 = vrot.lane.b32.xlu0 %v6070, 32
    %v6250 = vpop.permute.xlu0 %6249
    %6251 = vrot.lane.b32.xlu0 %v6071, 32
    %v6252 = vpop.permute.xlu0 %6251
    %6253 = vrot.lane.b32.xlu0 %v6072, 32
    %v6254 = vpop.permute.xlu0 %6253
    %6255 = vrot.lane.b32.xlu0 %v6073, 32
    %v6256 = vpop.permute.xlu0 %6255
    %6257 = vrot.lane.b32.xlu0 %v6074, 32
    %v6258 = vpop.permute.xlu0 %6257
    %6259 = vrot.lane.b32.xlu0 %v6075, 32
    %v6260 = vpop.permute.xlu0 %6259
    %6261 = vrot.lane.b32.xlu0 %v6076, 32
    %v6262 = vpop.permute.xlu0 %6261
    %6263 = vrot.lane.b32.xlu0 %v6077, 32
    %v6264 = vpop.permute.xlu0 %6263
    %6265 = vrot.lane.b32.xlu0 %v6078, 32
    %v6266 = vpop.permute.xlu0 %6265
    %6267 = vrot.lane.b32.xlu0 %v6079, 32
    %v6268 = vpop.permute.xlu0 %6267
    %6269 = vrot.lane.b32.xlu0 %v6080, 32
    %v6270 = vpop.permute.xlu0 %6269
    %6271 = vrot.lane.b32.xlu0 %v6081, 32
    %v6272 = vpop.permute.xlu0 %6271
    %6273 = vrot.lane.b32.xlu0 %v6082, 32
    %v6274 = vpop.permute.xlu0 %6273
    %6339 = vst.msk [vmem:[#allocation2 + $0x8] sm:$0xff] %vm479, %v6148
    %6340 = vst.msk [vmem:[#allocation2 + $0x20] sm:$0xff] %vm479, %v6150
    %6341 = vst.msk [vmem:[#allocation2 + $0x38] sm:$0xff] %vm479, %v6152
    %6342 = vst.msk [vmem:[#allocation2 + $0x50] sm:$0xff] %vm479, %v6154
    %6343 = vst.msk [vmem:[#allocation2 + $0x68] sm:$0xff] %vm479, %v6156
    %6344 = vst.msk [vmem:[#allocation2 + $0x80] sm:$0xff] %vm479, %v6158
    %6345 = vst.msk [vmem:[#allocation2 + $0x98] sm:$0xff] %vm479, %v6160
    %6346 = vst.msk [vmem:[#allocation2 + $0xb0] sm:$0xff] %vm479, %v6162
    %6347 = vst.msk [vmem:[#allocation2 + $0xc8] sm:$0xff] %vm479, %v6164
    %6348 = vst.msk [vmem:[#allocation2 + $0xe0] sm:$0xff] %vm479, %v6166
    %6349 = vst.msk [vmem:[#allocation2 + $0xf8] sm:$0xff] %vm479, %v6168
    %6350 = vst.msk [vmem:[#allocation2 + $0x110] sm:$0xff] %vm479, %v6170
    %6351 = vst.msk [vmem:[#allocation2 + $0x128] sm:$0xff] %vm479, %v6172
    %6352 = vst.msk [vmem:[#allocation2 + $0x140] sm:$0xff] %vm479, %v6174
    %6353 = vst.msk [vmem:[#allocation2 + $0x158] sm:$0xff] %vm479, %v6176
    %6354 = vst.msk [vmem:[#allocation2 + $0x170] sm:$0xff] %vm479, %v6178
    %6355 = vst.msk [vmem:[#allocation2 + $0x188] sm:$0xff] %vm479, %v6180
    %6356 = vst.msk [vmem:[#allocation2 + $0x1a0] sm:$0xff] %vm479, %v6182
    %6357 = vst.msk [vmem:[#allocation2 + $0x1b8] sm:$0xff] %vm479, %v6184
    %6358 = vst.msk [vmem:[#allocation2 + $0x1d0] sm:$0xff] %vm479, %v6186
    %6359 = vst.msk [vmem:[#allocation2 + $0x1e8] sm:$0xff] %vm479, %v6188
    %6360 = vst.msk [vmem:[#allocation2 + $0x200] sm:$0xff] %vm479, %v6190
    %6361 = vst.msk [vmem:[#allocation2 + $0x218] sm:$0xff] %vm479, %v6192
    %6362 = vst.msk [vmem:[#allocation2 + $0x230] sm:$0xff] %vm479, %v6194
    %6363 = vst.msk [vmem:[#allocation2 + $0x248] sm:$0xff] %vm479, %v6196
    %6364 = vst.msk [vmem:[#allocation2 + $0x260] sm:$0xff] %vm479, %v6198
    %6365 = vst.msk [vmem:[#allocation2 + $0x278] sm:$0xff] %vm479, %v6200
    %6366 = vst.msk [vmem:[#allocation2 + $0x290] sm:$0xff] %vm479, %v6202
    %6367 = vst.msk [vmem:[#allocation2 + $0x2a8] sm:$0xff] %vm479, %v6204
    %6368 = vst.msk [vmem:[#allocation2 + $0x2c0] sm:$0xff] %vm479, %v6206
    %6369 = vst.msk [vmem:[#allocation2 + $0x2d8] sm:$0xff] %vm479, %v6208
    %6370 = vst.msk [vmem:[#allocation2 + $0x2f0] sm:$0xff] %vm479, %v6210
    %6371 = vst.msk [vmem:[#allocation2 + $0x308] sm:$0xff] %vm479, %v6212
    %6372 = vst.msk [vmem:[#allocation2 + $0x320] sm:$0xff] %vm479, %v6214
    %6373 = vst.msk [vmem:[#allocation2 + $0x338] sm:$0xff] %vm479, %v6216
    %6374 = vst.msk [vmem:[#allocation2 + $0x350] sm:$0xff] %vm479, %v6218
    %6375 = vst.msk [vmem:[#allocation2 + $0x368] sm:$0xff] %vm479, %v6220
    %6376 = vst.msk [vmem:[#allocation2 + $0x380] sm:$0xff] %vm479, %v6222
    %6377 = vst.msk [vmem:[#allocation2 + $0x398] sm:$0xff] %vm479, %v6224
    %6378 = vst.msk [vmem:[#allocation2 + $0x3b0] sm:$0xff] %vm479, %v6226
    %6379 = vst.msk [vmem:[#allocation2 + $0x3c8] sm:$0xff] %vm479, %v6228
    %6380 = vst.msk [vmem:[#allocation2 + $0x3e0] sm:$0xff] %vm479, %v6230
    %6381 = vst.msk [vmem:[#allocation2 + $0x3f8] sm:$0xff] %vm479, %v6232
    %6382 = vst.msk [vmem:[#allocation2 + $0x410] sm:$0xff] %vm479, %v6234
    %6383 = vst.msk [vmem:[#allocation2 + $0x428] sm:$0xff] %vm479, %v6236
    %6384 = vst.msk [vmem:[#allocation2 + $0x440] sm:$0xff] %vm479, %v6238
    %6385 = vst.msk [vmem:[#allocation2 + $0x458] sm:$0xff] %vm479, %v6240
    %6386 = vst.msk [vmem:[#allocation2 + $0x470] sm:$0xff] %vm479, %v6242
    %6387 = vst.msk [vmem:[#allocation2 + $0x488] sm:$0xff] %vm479, %v6244
    %6388 = vst.msk [vmem:[#allocation2 + $0x4a0] sm:$0xff] %vm479, %v6246
    %6389 = vst.msk [vmem:[#allocation2 + $0x4b8] sm:$0xff] %vm479, %v6248
    %6390 = vst.msk [vmem:[#allocation2 + $0x4d0] sm:$0xff] %vm479, %v6250
    %6391 = vst.msk [vmem:[#allocation2 + $0x4e8] sm:$0xff] %vm479, %v6252
    %6392 = vst.msk [vmem:[#allocation2 + $0x500] sm:$0xff] %vm479, %v6254
    %6393 = vst.msk [vmem:[#allocation2 + $0x518] sm:$0xff] %vm479, %v6256
    %6394 = vst.msk [vmem:[#allocation2 + $0x530] sm:$0xff] %vm479, %v6258
    %6395 = vst.msk [vmem:[#allocation2 + $0x548] sm:$0xff] %vm479, %v6260
    %6396 = vst.msk [vmem:[#allocation2 + $0x560] sm:$0xff] %vm479, %v6262
    %6397 = vst.msk [vmem:[#allocation2 + $0x578] sm:$0xff] %vm479, %v6264
    %6398 = vst.msk [vmem:[#allocation2 + $0x590] sm:$0xff] %vm479, %v6266
    %6399 = vst.msk [vmem:[#allocation2 + $0x5a8] sm:$0xff] %vm479, %v6268
    %6400 = vst.msk [vmem:[#allocation2 + $0x5c0] sm:$0xff] %vm479, %v6270
    %6401 = vst.msk [vmem:[#allocation2 + $0x5d8] sm:$0xff] %vm479, %v6272
    %6402 = vst.msk [vmem:[#allocation2 + $0x5f0] sm:$0xff] %vm479, %v6274
    %s6403 = scalar_lea.vmem [#allocation3], 48
    %v6404 = vld [vmem:[%s6403] sm:$0xff]
    %v6405 = vld [vmem:[%s6403 + $0x8] sm:$0xff]
    %v6406 = vld [vmem:[%s6403 + $0x18] sm:$0xff]
    %v6407 = vld [vmem:[%s6403 + $0x20] sm:$0xff]
    %v6408 = vld [vmem:[%s6403 + $0x30] sm:$0xff]
    %v6409 = vld [vmem:[%s6403 + $0x38] sm:$0xff]
    %v6410 = vld [vmem:[%s6403 + $0x48] sm:$0xff]
    %v6411 = vld [vmem:[%s6403 + $0x50] sm:$0xff]
    %v6412 = vld [vmem:[%s6403 + $0x60] sm:$0xff]
    %v6413 = vld [vmem:[%s6403 + $0x68] sm:$0xff]
    %v6414 = vld [vmem:[%s6403 + $0x78] sm:$0xff]
    %v6415 = vld [vmem:[%s6403 + $0x80] sm:$0xff]
    %v6416 = vld [vmem:[%s6403 + $0x90] sm:$0xff]
    %v6417 = vld [vmem:[%s6403 + $0x98] sm:$0xff]
    %v6418 = vld [vmem:[%s6403 + $0xa8] sm:$0xff]
    %v6419 = vld [vmem:[%s6403 + $0xb0] sm:$0xff]
    %v6420 = vld [vmem:[%s6403 + $0xc0] sm:$0xff]
    %v6421 = vld [vmem:[%s6403 + $0xc8] sm:$0xff]
    %v6422 = vld [vmem:[%s6403 + $0xd8] sm:$0xff]
    %v6423 = vld [vmem:[%s6403 + $0xe0] sm:$0xff]
    %v6424 = vld [vmem:[%s6403 + $0xf0] sm:$0xff]
    %v6425 = vld [vmem:[%s6403 + $0xf8] sm:$0xff]
    %v6426 = vld [vmem:[%s6403 + $0x108] sm:$0xff]
    %v6427 = vld [vmem:[%s6403 + $0x110] sm:$0xff]
    %v6428 = vld [vmem:[%s6403 + $0x120] sm:$0xff]
    %v6429 = vld [vmem:[%s6403 + $0x128] sm:$0xff]
    %v6430 = vld [vmem:[%s6403 + $0x138] sm:$0xff]
    %v6431 = vld [vmem:[%s6403 + $0x140] sm:$0xff]
    %v6432 = vld [vmem:[%s6403 + $0x150] sm:$0xff]
    %v6433 = vld [vmem:[%s6403 + $0x158] sm:$0xff]
    %v6434 = vld [vmem:[%s6403 + $0x168] sm:$0xff]
    %v6435 = vld [vmem:[%s6403 + $0x170] sm:$0xff]
    %v6436 = vld [vmem:[%s6403 + $0x1b0] sm:$0xff]
    %v6437 = vld [vmem:[%s6403 + $0x1b8] sm:$0xff]
    %v6438 = vld [vmem:[%s6403 + $0x1c8] sm:$0xff]
    %v6439 = vld [vmem:[%s6403 + $0x1d0] sm:$0xff]
    %v6440 = vld [vmem:[%s6403 + $0x1e0] sm:$0xff]
    %v6441 = vld [vmem:[%s6403 + $0x1e8] sm:$0xff]
    %v6442 = vld [vmem:[%s6403 + $0x1f8] sm:$0xff]
    %v6443 = vld [vmem:[%s6403 + $0x200] sm:$0xff]
    %v6444 = vld [vmem:[%s6403 + $0x210] sm:$0xff]
    %v6445 = vld [vmem:[%s6403 + $0x218] sm:$0xff]
    %v6446 = vld [vmem:[%s6403 + $0x228] sm:$0xff]
    %v6447 = vld [vmem:[%s6403 + $0x230] sm:$0xff]
    %v6448 = vld [vmem:[%s6403 + $0x240] sm:$0xff]
    %v6449 = vld [vmem:[%s6403 + $0x248] sm:$0xff]
    %v6450 = vld [vmem:[%s6403 + $0x258] sm:$0xff]
    %v6451 = vld [vmem:[%s6403 + $0x260] sm:$0xff]
    %v6452 = vld [vmem:[%s6403 + $0x270] sm:$0xff]
    %v6453 = vld [vmem:[%s6403 + $0x278] sm:$0xff]
    %v6454 = vld [vmem:[%s6403 + $0x288] sm:$0xff]
    %v6455 = vld [vmem:[%s6403 + $0x290] sm:$0xff]
    %v6456 = vld [vmem:[%s6403 + $0x2a0] sm:$0xff]
    %v6457 = vld [vmem:[%s6403 + $0x2a8] sm:$0xff]
    %v6458 = vld [vmem:[%s6403 + $0x2b8] sm:$0xff]
    %v6459 = vld [vmem:[%s6403 + $0x2c0] sm:$0xff]
    %v6460 = vld [vmem:[%s6403 + $0x2d0] sm:$0xff]
    %v6461 = vld [vmem:[%s6403 + $0x2d8] sm:$0xff]
    %v6462 = vld [vmem:[%s6403 + $0x2e8] sm:$0xff]
    %v6463 = vld [vmem:[%s6403 + $0x2f0] sm:$0xff]
    %v6464 = vld [vmem:[%s6403 + $0x300] sm:$0xff]
    %v6465 = vld [vmem:[%s6403 + $0x308] sm:$0xff]
    %v6466 = vld [vmem:[%s6403 + $0x318] sm:$0xff]
    %v6467 = vld [vmem:[%s6403 + $0x320] sm:$0xff]
    %6532 = vrot.lane.b32.xlu0 %v6404, 64
    %v6533 = vpop.permute.xlu0 %6532
    %6534 = vrot.lane.b32.xlu0 %v6405, 64
    %v6535 = vpop.permute.xlu0 %6534
    %6536 = vrot.lane.b32.xlu0 %v6406, 64
    %v6537 = vpop.permute.xlu0 %6536
    %6538 = vrot.lane.b32.xlu0 %v6407, 64
    %v6539 = vpop.permute.xlu0 %6538
    %6540 = vrot.lane.b32.xlu0 %v6408, 64
    %v6541 = vpop.permute.xlu0 %6540
    %6542 = vrot.lane.b32.xlu0 %v6409, 64
    %v6543 = vpop.permute.xlu0 %6542
    %6544 = vrot.lane.b32.xlu0 %v6410, 64
    %v6545 = vpop.permute.xlu0 %6544
    %6546 = vrot.lane.b32.xlu0 %v6411, 64
    %v6547 = vpop.permute.xlu0 %6546
    %6548 = vrot.lane.b32.xlu0 %v6412, 64
    %v6549 = vpop.permute.xlu0 %6548
    %6550 = vrot.lane.b32.xlu0 %v6413, 64
    %v6551 = vpop.permute.xlu0 %6550
    %6552 = vrot.lane.b32.xlu0 %v6414, 64
    %v6553 = vpop.permute.xlu0 %6552
    %6554 = vrot.lane.b32.xlu0 %v6415, 64
    %v6555 = vpop.permute.xlu0 %6554
    %6556 = vrot.lane.b32.xlu0 %v6416, 64
    %v6557 = vpop.permute.xlu0 %6556
    %6558 = vrot.lane.b32.xlu0 %v6417, 64
    %v6559 = vpop.permute.xlu0 %6558
    %6560 = vrot.lane.b32.xlu0 %v6418, 64
    %v6561 = vpop.permute.xlu0 %6560
    %6562 = vrot.lane.b32.xlu0 %v6419, 64
    %v6563 = vpop.permute.xlu0 %6562
    %6564 = vrot.lane.b32.xlu0 %v6420, 64
    %v6565 = vpop.permute.xlu0 %6564
    %6566 = vrot.lane.b32.xlu0 %v6421, 64
    %v6567 = vpop.permute.xlu0 %6566
    %6568 = vrot.lane.b32.xlu0 %v6422, 64
    %v6569 = vpop.permute.xlu0 %6568
    %6570 = vrot.lane.b32.xlu0 %v6423, 64
    %v6571 = vpop.permute.xlu0 %6570
    %6572 = vrot.lane.b32.xlu0 %v6424, 64
    %v6573 = vpop.permute.xlu0 %6572
    %6574 = vrot.lane.b32.xlu0 %v6425, 64
    %v6575 = vpop.permute.xlu0 %6574
    %6576 = vrot.lane.b32.xlu0 %v6426, 64
    %v6577 = vpop.permute.xlu0 %6576
    %6578 = vrot.lane.b32.xlu0 %v6427, 64
    %v6579 = vpop.permute.xlu0 %6578
    %6580 = vrot.lane.b32.xlu0 %v6428, 64
    %v6581 = vpop.permute.xlu0 %6580
    %6582 = vrot.lane.b32.xlu0 %v6429, 64
    %v6583 = vpop.permute.xlu0 %6582
    %6584 = vrot.lane.b32.xlu0 %v6430, 64
    %v6585 = vpop.permute.xlu0 %6584
    %6586 = vrot.lane.b32.xlu0 %v6431, 64
    %v6587 = vpop.permute.xlu0 %6586
    %6588 = vrot.lane.b32.xlu0 %v6432, 64
    %v6589 = vpop.permute.xlu0 %6588
    %6590 = vrot.lane.b32.xlu0 %v6433, 64
    %v6591 = vpop.permute.xlu0 %6590
    %6592 = vrot.lane.b32.xlu0 %v6434, 64
    %v6593 = vpop.permute.xlu0 %6592
    %6594 = vrot.lane.b32.xlu0 %v6435, 64
    %v6595 = vpop.permute.xlu0 %6594
    %6596 = vrot.lane.b32.xlu0 %v6436, 64
    %v6597 = vpop.permute.xlu0 %6596
    %6598 = vrot.lane.b32.xlu0 %v6437, 64
    %v6599 = vpop.permute.xlu0 %6598
    %6600 = vrot.lane.b32.xlu0 %v6438, 64
    %v6601 = vpop.permute.xlu0 %6600
    %6602 = vrot.lane.b32.xlu0 %v6439, 64
    %v6603 = vpop.permute.xlu0 %6602
    %6604 = vrot.lane.b32.xlu0 %v6440, 64
    %v6605 = vpop.permute.xlu0 %6604
    %6606 = vrot.lane.b32.xlu0 %v6441, 64
    %v6607 = vpop.permute.xlu0 %6606
    %6608 = vrot.lane.b32.xlu0 %v6442, 64
    %v6609 = vpop.permute.xlu0 %6608
    %6610 = vrot.lane.b32.xlu0 %v6443, 64
    %v6611 = vpop.permute.xlu0 %6610
    %6612 = vrot.lane.b32.xlu0 %v6444, 64
    %v6613 = vpop.permute.xlu0 %6612
    %6614 = vrot.lane.b32.xlu0 %v6445, 64
    %v6615 = vpop.permute.xlu0 %6614
    %6616 = vrot.lane.b32.xlu0 %v6446, 64
    %v6617 = vpop.permute.xlu0 %6616
    %6618 = vrot.lane.b32.xlu0 %v6447, 64
    %v6619 = vpop.permute.xlu0 %6618
    %6620 = vrot.lane.b32.xlu0 %v6448, 64
    %v6621 = vpop.permute.xlu0 %6620
    %6622 = vrot.lane.b32.xlu0 %v6449, 64
    %v6623 = vpop.permute.xlu0 %6622
    %6624 = vrot.lane.b32.xlu0 %v6450, 64
    %v6625 = vpop.permute.xlu0 %6624
    %6626 = vrot.lane.b32.xlu0 %v6451, 64
    %v6627 = vpop.permute.xlu0 %6626
    %6628 = vrot.lane.b32.xlu0 %v6452, 64
    %v6629 = vpop.permute.xlu0 %6628
    %6630 = vrot.lane.b32.xlu0 %v6453, 64
    %v6631 = vpop.permute.xlu0 %6630
    %6632 = vrot.lane.b32.xlu0 %v6454, 64
    %v6633 = vpop.permute.xlu0 %6632
    %6634 = vrot.lane.b32.xlu0 %v6455, 64
    %v6635 = vpop.permute.xlu0 %6634
    %6636 = vrot.lane.b32.xlu0 %v6456, 64
    %v6637 = vpop.permute.xlu0 %6636
    %6638 = vrot.lane.b32.xlu0 %v6457, 64
    %v6639 = vpop.permute.xlu0 %6638
    %6640 = vrot.lane.b32.xlu0 %v6458, 64
    %v6641 = vpop.permute.xlu0 %6640
    %6642 = vrot.lane.b32.xlu0 %v6459, 64
    %v6643 = vpop.permute.xlu0 %6642
    %6644 = vrot.lane.b32.xlu0 %v6460, 64
    %v6645 = vpop.permute.xlu0 %6644
    %6646 = vrot.lane.b32.xlu0 %v6461, 64
    %v6647 = vpop.permute.xlu0 %6646
    %6648 = vrot.lane.b32.xlu0 %v6462, 64
    %v6649 = vpop.permute.xlu0 %6648
    %6650 = vrot.lane.b32.xlu0 %v6463, 64
    %v6651 = vpop.permute.xlu0 %6650
    %6652 = vrot.lane.b32.xlu0 %v6464, 64
    %v6653 = vpop.permute.xlu0 %6652
    %6654 = vrot.lane.b32.xlu0 %v6465, 64
    %v6655 = vpop.permute.xlu0 %6654
    %6656 = vrot.lane.b32.xlu0 %v6466, 64
    %v6657 = vpop.permute.xlu0 %6656
    %6658 = vrot.lane.b32.xlu0 %v6467, 64
    %v6659 = vpop.permute.xlu0 %6658
    %6724 = vst.msk [vmem:[#allocation2 + $0x8] sm:$0xff] %vm864, %v6533
    %6725 = vst.msk [vmem:[#allocation2 + $0x20] sm:$0xff] %vm864, %v6535
    %6726 = vst.msk [vmem:[#allocation2 + $0x38] sm:$0xff] %vm864, %v6537
    %6727 = vst.msk [vmem:[#allocation2 + $0x50] sm:$0xff] %vm864, %v6539
    %6728 = vst.msk [vmem:[#allocation2 + $0x68] sm:$0xff] %vm864, %v6541
    %6729 = vst.msk [vmem:[#allocation2 + $0x80] sm:$0xff] %vm864, %v6543
    %6730 = vst.msk [vmem:[#allocation2 + $0x98] sm:$0xff] %vm864, %v6545
    %6731 = vst.msk [vmem:[#allocation2 + $0xb0] sm:$0xff] %vm864, %v6547
    %6732 = vst.msk [vmem:[#allocation2 + $0xc8] sm:$0xff] %vm864, %v6549
    %6733 = vst.msk [vmem:[#allocation2 + $0xe0] sm:$0xff] %vm864, %v6551
    %6734 = vst.msk [vmem:[#allocation2 + $0xf8] sm:$0xff] %vm864, %v6553
    %6735 = vst.msk [vmem:[#allocation2 + $0x110] sm:$0xff] %vm864, %v6555
    %6736 = vst.msk [vmem:[#allocation2 + $0x128] sm:$0xff] %vm864, %v6557
    %6737 = vst.msk [vmem:[#allocation2 + $0x140] sm:$0xff] %vm864, %v6559
    %6738 = vst.msk [vmem:[#allocation2 + $0x158] sm:$0xff] %vm864, %v6561
    %6739 = vst.msk [vmem:[#allocation2 + $0x170] sm:$0xff] %vm864, %v6563
    %6740 = vst.msk [vmem:[#allocation2 + $0x188] sm:$0xff] %vm864, %v6565
    %6741 = vst.msk [vmem:[#allocation2 + $0x1a0] sm:$0xff] %vm864, %v6567
    %6742 = vst.msk [vmem:[#allocation2 + $0x1b8] sm:$0xff] %vm864, %v6569
    %6743 = vst.msk [vmem:[#allocation2 + $0x1d0] sm:$0xff] %vm864, %v6571
    %6744 = vst.msk [vmem:[#allocation2 + $0x1e8] sm:$0xff] %vm864, %v6573
    %6745 = vst.msk [vmem:[#allocation2 + $0x200] sm:$0xff] %vm864, %v6575
    %6746 = vst.msk [vmem:[#allocation2 + $0x218] sm:$0xff] %vm864, %v6577
    %6747 = vst.msk [vmem:[#allocation2 + $0x230] sm:$0xff] %vm864, %v6579
    %6748 = vst.msk [vmem:[#allocation2 + $0x248] sm:$0xff] %vm864, %v6581
    %6749 = vst.msk [vmem:[#allocation2 + $0x260] sm:$0xff] %vm864, %v6583
    %6750 = vst.msk [vmem:[#allocation2 + $0x278] sm:$0xff] %vm864, %v6585
    %6751 = vst.msk [vmem:[#allocation2 + $0x290] sm:$0xff] %vm864, %v6587
    %6752 = vst.msk [vmem:[#allocation2 + $0x2a8] sm:$0xff] %vm864, %v6589
    %6753 = vst.msk [vmem:[#allocation2 + $0x2c0] sm:$0xff] %vm864, %v6591
    %6754 = vst.msk [vmem:[#allocation2 + $0x2d8] sm:$0xff] %vm864, %v6593
    %6755 = vst.msk [vmem:[#allocation2 + $0x2f0] sm:$0xff] %vm864, %v6595
    %6756 = vst.msk [vmem:[#allocation2 + $0x308] sm:$0xff] %vm864, %v6597
    %6757 = vst.msk [vmem:[#allocation2 + $0x320] sm:$0xff] %vm864, %v6599
    %6758 = vst.msk [vmem:[#allocation2 + $0x338] sm:$0xff] %vm864, %v6601
    %6759 = vst.msk [vmem:[#allocation2 + $0x350] sm:$0xff] %vm864, %v6603
    %6760 = vst.msk [vmem:[#allocation2 + $0x368] sm:$0xff] %vm864, %v6605
    %6761 = vst.msk [vmem:[#allocation2 + $0x380] sm:$0xff] %vm864, %v6607
    %6762 = vst.msk [vmem:[#allocation2 + $0x398] sm:$0xff] %vm864, %v6609
    %6763 = vst.msk [vmem:[#allocation2 + $0x3b0] sm:$0xff] %vm864, %v6611
    %6764 = vst.msk [vmem:[#allocation2 + $0x3c8] sm:$0xff] %vm864, %v6613
    %6765 = vst.msk [vmem:[#allocation2 + $0x3e0] sm:$0xff] %vm864, %v6615
    %6766 = vst.msk [vmem:[#allocation2 + $0x3f8] sm:$0xff] %vm864, %v6617
    %6767 = vst.msk [vmem:[#allocation2 + $0x410] sm:$0xff] %vm864, %v6619
    %6768 = vst.msk [vmem:[#allocation2 + $0x428] sm:$0xff] %vm864, %v6621
    %6769 = vst.msk [vmem:[#allocation2 + $0x440] sm:$0xff] %vm864, %v6623
    %6770 = vst.msk [vmem:[#allocation2 + $0x458] sm:$0xff] %vm864, %v6625
    %6771 = vst.msk [vmem:[#allocation2 + $0x470] sm:$0xff] %vm864, %v6627
    %6772 = vst.msk [vmem:[#allocation2 + $0x488] sm:$0xff] %vm864, %v6629
    %6773 = vst.msk [vmem:[#allocation2 + $0x4a0] sm:$0xff] %vm864, %v6631
    %6774 = vst.msk [vmem:[#allocation2 + $0x4b8] sm:$0xff] %vm864, %v6633
    %6775 = vst.msk [vmem:[#allocation2 + $0x4d0] sm:$0xff] %vm864, %v6635
    %6776 = vst.msk [vmem:[#allocation2 + $0x4e8] sm:$0xff] %vm864, %v6637
    %6777 = vst.msk [vmem:[#allocation2 + $0x500] sm:$0xff] %vm864, %v6639
    %6778 = vst.msk [vmem:[#allocation2 + $0x518] sm:$0xff] %vm864, %v6641
    %6779 = vst.msk [vmem:[#allocation2 + $0x530] sm:$0xff] %vm864, %v6643
    %6780 = vst.msk [vmem:[#allocation2 + $0x548] sm:$0xff] %vm864, %v6645
    %6781 = vst.msk [vmem:[#allocation2 + $0x560] sm:$0xff] %vm864, %v6647
    %6782 = vst.msk [vmem:[#allocation2 + $0x578] sm:$0xff] %vm864, %v6649
    %6783 = vst.msk [vmem:[#allocation2 + $0x590] sm:$0xff] %vm864, %v6651
    %6784 = vst.msk [vmem:[#allocation2 + $0x5a8] sm:$0xff] %vm864, %v6653
    %6785 = vst.msk [vmem:[#allocation2 + $0x5c0] sm:$0xff] %vm864, %v6655
    %6786 = vst.msk [vmem:[#allocation2 + $0x5d8] sm:$0xff] %vm864, %v6657
    %6787 = vst.msk [vmem:[#allocation2 + $0x5f0] sm:$0xff] %vm864, %v6659
    %v6788 = vld [vmem:[%s6403 + $0x1] sm:$0xff]
    %v6789 = vld [vmem:[%s6403 + $0x9] sm:$0xff]
    %v6790 = vld [vmem:[%s6403 + $0x19] sm:$0xff]
    %v6791 = vld [vmem:[%s6403 + $0x21] sm:$0xff]
    %v6792 = vld [vmem:[%s6403 + $0x31] sm:$0xff]
    %v6793 = vld [vmem:[%s6403 + $0x39] sm:$0xff]
    %v6794 = vld [vmem:[%s6403 + $0x49] sm:$0xff]
    %v6795 = vld [vmem:[%s6403 + $0x51] sm:$0xff]
    %v6796 = vld [vmem:[%s6403 + $0x61] sm:$0xff]
    %v6797 = vld [vmem:[%s6403 + $0x69] sm:$0xff]
    %v6798 = vld [vmem:[%s6403 + $0x79] sm:$0xff]
    %v6799 = vld [vmem:[%s6403 + $0x81] sm:$0xff]
    %v6800 = vld [vmem:[%s6403 + $0x91] sm:$0xff]
    %v6801 = vld [vmem:[%s6403 + $0x99] sm:$0xff]
    %v6802 = vld [vmem:[%s6403 + $0xa9] sm:$0xff]
    %v6803 = vld [vmem:[%s6403 + $0xb1] sm:$0xff]
    %v6804 = vld [vmem:[%s6403 + $0xc1] sm:$0xff]
    %v6805 = vld [vmem:[%s6403 + $0xc9] sm:$0xff]
    %v6806 = vld [vmem:[%s6403 + $0xd9] sm:$0xff]
    %v6807 = vld [vmem:[%s6403 + $0xe1] sm:$0xff]
    %v6808 = vld [vmem:[%s6403 + $0xf1] sm:$0xff]
    %v6809 = vld [vmem:[%s6403 + $0xf9] sm:$0xff]
    %v6810 = vld [vmem:[%s6403 + $0x109] sm:$0xff]
    %v6811 = vld [vmem:[%s6403 + $0x111] sm:$0xff]
    %v6812 = vld [vmem:[%s6403 + $0x121] sm:$0xff]
    %v6813 = vld [vmem:[%s6403 + $0x129] sm:$0xff]
    %v6814 = vld [vmem:[%s6403 + $0x139] sm:$0xff]
    %v6815 = vld [vmem:[%s6403 + $0x141] sm:$0xff]
    %v6816 = vld [vmem:[%s6403 + $0x151] sm:$0xff]
    %v6817 = vld [vmem:[%s6403 + $0x159] sm:$0xff]
    %v6818 = vld [vmem:[%s6403 + $0x169] sm:$0xff]
    %v6819 = vld [vmem:[%s6403 + $0x171] sm:$0xff]
    %v6820 = vld [vmem:[%s6403 + $0x1b1] sm:$0xff]
    %v6821 = vld [vmem:[%s6403 + $0x1b9] sm:$0xff]
    %v6822 = vld [vmem:[%s6403 + $0x1c9] sm:$0xff]
    %v6823 = vld [vmem:[%s6403 + $0x1d1] sm:$0xff]
    %v6824 = vld [vmem:[%s6403 + $0x1e1] sm:$0xff]
    %v6825 = vld [vmem:[%s6403 + $0x1e9] sm:$0xff]
    %v6826 = vld [vmem:[%s6403 + $0x1f9] sm:$0xff]
    %v6827 = vld [vmem:[%s6403 + $0x201] sm:$0xff]
    %v6828 = vld [vmem:[%s6403 + $0x211] sm:$0xff]
    %v6829 = vld [vmem:[%s6403 + $0x219] sm:$0xff]
    %v6830 = vld [vmem:[%s6403 + $0x229] sm:$0xff]
    %v6831 = vld [vmem:[%s6403 + $0x231] sm:$0xff]
    %v6832 = vld [vmem:[%s6403 + $0x241] sm:$0xff]
    %v6833 = vld [vmem:[%s6403 + $0x249] sm:$0xff]
    %v6834 = vld [vmem:[%s6403 + $0x259] sm:$0xff]
    %v6835 = vld [vmem:[%s6403 + $0x261] sm:$0xff]
    %v6836 = vld [vmem:[%s6403 + $0x271] sm:$0xff]
    %v6837 = vld [vmem:[%s6403 + $0x279] sm:$0xff]
    %v6838 = vld [vmem:[%s6403 + $0x289] sm:$0xff]
    %v6839 = vld [vmem:[%s6403 + $0x291] sm:$0xff]
    %v6840 = vld [vmem:[%s6403 + $0x2a1] sm:$0xff]
    %v6841 = vld [vmem:[%s6403 + $0x2a9] sm:$0xff]
    %v6842 = vld [vmem:[%s6403 + $0x2b9] sm:$0xff]
    %v6843 = vld [vmem:[%s6403 + $0x2c1] sm:$0xff]
    %v6844 = vld [vmem:[%s6403 + $0x2d1] sm:$0xff]
    %v6845 = vld [vmem:[%s6403 + $0x2d9] sm:$0xff]
    %v6846 = vld [vmem:[%s6403 + $0x2e9] sm:$0xff]
    %v6847 = vld [vmem:[%s6403 + $0x2f1] sm:$0xff]
    %v6848 = vld [vmem:[%s6403 + $0x301] sm:$0xff]
    %v6849 = vld [vmem:[%s6403 + $0x309] sm:$0xff]
    %v6850 = vld [vmem:[%s6403 + $0x319] sm:$0xff]
    %v6851 = vld [vmem:[%s6403 + $0x321] sm:$0xff]
    %6916 = vrot.lane.b32.xlu0 %v6788, 96
    %v6917 = vpop.permute.xlu0 %6916
    %6918 = vrot.lane.b32.xlu0 %v6789, 96
    %v6919 = vpop.permute.xlu0 %6918
    %6920 = vrot.lane.b32.xlu0 %v6790, 96
    %v6921 = vpop.permute.xlu0 %6920
    %6922 = vrot.lane.b32.xlu0 %v6791, 96
    %v6923 = vpop.permute.xlu0 %6922
    %6924 = vrot.lane.b32.xlu0 %v6792, 96
    %v6925 = vpop.permute.xlu0 %6924
    %6926 = vrot.lane.b32.xlu0 %v6793, 96
    %v6927 = vpop.permute.xlu0 %6926
    %6928 = vrot.lane.b32.xlu0 %v6794, 96
    %v6929 = vpop.permute.xlu0 %6928
    %6930 = vrot.lane.b32.xlu0 %v6795, 96
    %v6931 = vpop.permute.xlu0 %6930
    %6932 = vrot.lane.b32.xlu0 %v6796, 96
    %v6933 = vpop.permute.xlu0 %6932
    %6934 = vrot.lane.b32.xlu0 %v6797, 96
    %v6935 = vpop.permute.xlu0 %6934
    %6936 = vrot.lane.b32.xlu0 %v6798, 96
    %v6937 = vpop.permute.xlu0 %6936
    %6938 = vrot.lane.b32.xlu0 %v6799, 96
    %v6939 = vpop.permute.xlu0 %6938
    %6940 = vrot.lane.b32.xlu0 %v6800, 96
    %v6941 = vpop.permute.xlu0 %6940
    %6942 = vrot.lane.b32.xlu0 %v6801, 96
    %v6943 = vpop.permute.xlu0 %6942
    %6944 = vrot.lane.b32.xlu0 %v6802, 96
    %v6945 = vpop.permute.xlu0 %6944
    %6946 = vrot.lane.b32.xlu0 %v6803, 96
    %v6947 = vpop.permute.xlu0 %6946
    %6948 = vrot.lane.b32.xlu0 %v6804, 96
    %v6949 = vpop.permute.xlu0 %6948
    %6950 = vrot.lane.b32.xlu0 %v6805, 96
    %v6951 = vpop.permute.xlu0 %6950
    %6952 = vrot.lane.b32.xlu0 %v6806, 96
    %v6953 = vpop.permute.xlu0 %6952
    %6954 = vrot.lane.b32.xlu0 %v6807, 96
    %v6955 = vpop.permute.xlu0 %6954
    %6956 = vrot.lane.b32.xlu0 %v6808, 96
    %v6957 = vpop.permute.xlu0 %6956
    %6958 = vrot.lane.b32.xlu0 %v6809, 96
    %v6959 = vpop.permute.xlu0 %6958
    %6960 = vrot.lane.b32.xlu0 %v6810, 96
    %v6961 = vpop.permute.xlu0 %6960
    %6962 = vrot.lane.b32.xlu0 %v6811, 96
    %v6963 = vpop.permute.xlu0 %6962
    %6964 = vrot.lane.b32.xlu0 %v6812, 96
    %v6965 = vpop.permute.xlu0 %6964
    %6966 = vrot.lane.b32.xlu0 %v6813, 96
    %v6967 = vpop.permute.xlu0 %6966
    %6968 = vrot.lane.b32.xlu0 %v6814, 96
    %v6969 = vpop.permute.xlu0 %6968
    %6970 = vrot.lane.b32.xlu0 %v6815, 96
    %v6971 = vpop.permute.xlu0 %6970
    %6972 = vrot.lane.b32.xlu0 %v6816, 96
    %v6973 = vpop.permute.xlu0 %6972
    %6974 = vrot.lane.b32.xlu0 %v6817, 96
    %v6975 = vpop.permute.xlu0 %6974
    %6976 = vrot.lane.b32.xlu0 %v6818, 96
    %v6977 = vpop.permute.xlu0 %6976
    %6978 = vrot.lane.b32.xlu0 %v6819, 96
    %v6979 = vpop.permute.xlu0 %6978
    %6980 = vrot.lane.b32.xlu0 %v6820, 96
    %v6981 = vpop.permute.xlu0 %6980
    %6982 = vrot.lane.b32.xlu0 %v6821, 96
    %v6983 = vpop.permute.xlu0 %6982
    %6984 = vrot.lane.b32.xlu0 %v6822, 96
    %v6985 = vpop.permute.xlu0 %6984
    %6986 = vrot.lane.b32.xlu0 %v6823, 96
    %v6987 = vpop.permute.xlu0 %6986
    %6988 = vrot.lane.b32.xlu0 %v6824, 96
    %v6989 = vpop.permute.xlu0 %6988
    %6990 = vrot.lane.b32.xlu0 %v6825, 96
    %v6991 = vpop.permute.xlu0 %6990
    %6992 = vrot.lane.b32.xlu0 %v6826, 96
    %v6993 = vpop.permute.xlu0 %6992
    %6994 = vrot.lane.b32.xlu0 %v6827, 96
    %v6995 = vpop.permute.xlu0 %6994
    %6996 = vrot.lane.b32.xlu0 %v6828, 96
    %v6997 = vpop.permute.xlu0 %6996
    %6998 = vrot.lane.b32.xlu0 %v6829, 96
    %v6999 = vpop.permute.xlu0 %6998
    %7000 = vrot.lane.b32.xlu0 %v6830, 96
    %v7001 = vpop.permute.xlu0 %7000
    %7002 = vrot.lane.b32.xlu0 %v6831, 96
    %v7003 = vpop.permute.xlu0 %7002
    %7004 = vrot.lane.b32.xlu0 %v6832, 96
    %v7005 = vpop.permute.xlu0 %7004
    %7006 = vrot.lane.b32.xlu0 %v6833, 96
    %v7007 = vpop.permute.xlu0 %7006
    %7008 = vrot.lane.b32.xlu0 %v6834, 96
    %v7009 = vpop.permute.xlu0 %7008
    %7010 = vrot.lane.b32.xlu0 %v6835, 96
    %v7011 = vpop.permute.xlu0 %7010
    %7012 = vrot.lane.b32.xlu0 %v6836, 96
    %v7013 = vpop.permute.xlu0 %7012
    %7014 = vrot.lane.b32.xlu0 %v6837, 96
    %v7015 = vpop.permute.xlu0 %7014
    %7016 = vrot.lane.b32.xlu0 %v6838, 96
    %v7017 = vpop.permute.xlu0 %7016
    %7018 = vrot.lane.b32.xlu0 %v6839, 96
    %v7019 = vpop.permute.xlu0 %7018
    %7020 = vrot.lane.b32.xlu0 %v6840, 96
    %v7021 = vpop.permute.xlu0 %7020
    %7022 = vrot.lane.b32.xlu0 %v6841, 96
    %v7023 = vpop.permute.xlu0 %7022
    %7024 = vrot.lane.b32.xlu0 %v6842, 96
    %v7025 = vpop.permute.xlu0 %7024
    %7026 = vrot.lane.b32.xlu0 %v6843, 96
    %v7027 = vpop.permute.xlu0 %7026
    %7028 = vrot.lane.b32.xlu0 %v6844, 96
    %v7029 = vpop.permute.xlu0 %7028
    %7030 = vrot.lane.b32.xlu0 %v6845, 96
    %v7031 = vpop.permute.xlu0 %7030
    %7032 = vrot.lane.b32.xlu0 %v6846, 96
    %v7033 = vpop.permute.xlu0 %7032
    %7034 = vrot.lane.b32.xlu0 %v6847, 96
    %v7035 = vpop.permute.xlu0 %7034
    %7036 = vrot.lane.b32.xlu0 %v6848, 96
    %v7037 = vpop.permute.xlu0 %7036
    %7038 = vrot.lane.b32.xlu0 %v6849, 96
    %v7039 = vpop.permute.xlu0 %7038
    %7040 = vrot.lane.b32.xlu0 %v6850, 96
    %v7041 = vpop.permute.xlu0 %7040
    %7042 = vrot.lane.b32.xlu0 %v6851, 96
    %v7043 = vpop.permute.xlu0 %7042
    %7108 = vst.msk [vmem:[#allocation2 + $0x8] sm:$0xff] %vm1250, %v6917
    %7109 = vst.msk [vmem:[#allocation2 + $0x20] sm:$0xff] %vm1250, %v6919
    %7110 = vst.msk [vmem:[#allocation2 + $0x38] sm:$0xff] %vm1250, %v6921
    %7111 = vst.msk [vmem:[#allocation2 + $0x50] sm:$0xff] %vm1250, %v6923
    %7112 = vst.msk [vmem:[#allocation2 + $0x68] sm:$0xff] %vm1250, %v6925
    %7113 = vst.msk [vmem:[#allocation2 + $0x80] sm:$0xff] %vm1250, %v6927
    %7114 = vst.msk [vmem:[#allocation2 + $0x98] sm:$0xff] %vm1250, %v6929
    %7115 = vst.msk [vmem:[#allocation2 + $0xb0] sm:$0xff] %vm1250, %v6931
    %7116 = vst.msk [vmem:[#allocation2 + $0xc8] sm:$0xff] %vm1250, %v6933
    %7117 = vst.msk [vmem:[#allocation2 + $0xe0] sm:$0xff] %vm1250, %v6935
    %7118 = vst.msk [vmem:[#allocation2 + $0xf8] sm:$0xff] %vm1250, %v6937
    %7119 = vst.msk [vmem:[#allocation2 + $0x110] sm:$0xff] %vm1250, %v6939
    %7120 = vst.msk [vmem:[#allocation2 + $0x128] sm:$0xff] %vm1250, %v6941
    %7121 = vst.msk [vmem:[#allocation2 + $0x140] sm:$0xff] %vm1250, %v6943
    %7122 = vst.msk [vmem:[#allocation2 + $0x158] sm:$0xff] %vm1250, %v6945
    %7123 = vst.msk [vmem:[#allocation2 + $0x170] sm:$0xff] %vm1250, %v6947
    %7124 = vst.msk [vmem:[#allocation2 + $0x188] sm:$0xff] %vm1250, %v6949
    %7125 = vst.msk [vmem:[#allocation2 + $0x1a0] sm:$0xff] %vm1250, %v6951
    %7126 = vst.msk [vmem:[#allocation2 + $0x1b8] sm:$0xff] %vm1250, %v6953
    %7127 = vst.msk [vmem:[#allocation2 + $0x1d0] sm:$0xff] %vm1250, %v6955
    %7128 = vst.msk [vmem:[#allocation2 + $0x1e8] sm:$0xff] %vm1250, %v6957
    %7129 = vst.msk [vmem:[#allocation2 + $0x200] sm:$0xff] %vm1250, %v6959
    %7130 = vst.msk [vmem:[#allocation2 + $0x218] sm:$0xff] %vm1250, %v6961
    %7131 = vst.msk [vmem:[#allocation2 + $0x230] sm:$0xff] %vm1250, %v6963
    %7132 = vst.msk [vmem:[#allocation2 + $0x248] sm:$0xff] %vm1250, %v6965
    %7133 = vst.msk [vmem:[#allocation2 + $0x260] sm:$0xff] %vm1250, %v6967
    %7134 = vst.msk [vmem:[#allocation2 + $0x278] sm:$0xff] %vm1250, %v6969
    %7135 = vst.msk [vmem:[#allocation2 + $0x290] sm:$0xff] %vm1250, %v6971
    %7136 = vst.msk [vmem:[#allocation2 + $0x2a8] sm:$0xff] %vm1250, %v6973
    %7137 = vst.msk [vmem:[#allocation2 + $0x2c0] sm:$0xff] %vm1250, %v6975
    %7138 = vst.msk [vmem:[#allocation2 + $0x2d8] sm:$0xff] %vm1250, %v6977
    %7139 = vst.msk [vmem:[#allocation2 + $0x2f0] sm:$0xff] %vm1250, %v6979
    %7140 = vst.msk [vmem:[#allocation2 + $0x308] sm:$0xff] %vm1250, %v6981
    %7141 = vst.msk [vmem:[#allocation2 + $0x320] sm:$0xff] %vm1250, %v6983
    %7142 = vst.msk [vmem:[#allocation2 + $0x338] sm:$0xff] %vm1250, %v6985
    %7143 = vst.msk [vmem:[#allocation2 + $0x350] sm:$0xff] %vm1250, %v6987
    %7144 = vst.msk [vmem:[#allocation2 + $0x368] sm:$0xff] %vm1250, %v6989
    %7145 = vst.msk [vmem:[#allocation2 + $0x380] sm:$0xff] %vm1250, %v6991
    %7146 = vst.msk [vmem:[#allocation2 + $0x398] sm:$0xff] %vm1250, %v6993
    %7147 = vst.msk [vmem:[#allocation2 + $0x3b0] sm:$0xff] %vm1250, %v6995
    %7148 = vst.msk [vmem:[#allocation2 + $0x3c8] sm:$0xff] %vm1250, %v6997
    %7149 = vst.msk [vmem:[#allocation2 + $0x3e0] sm:$0xff] %vm1250, %v6999
    %7150 = vst.msk [vmem:[#allocation2 + $0x3f8] sm:$0xff] %vm1250, %v7001
    %7151 = vst.msk [vmem:[#allocation2 + $0x410] sm:$0xff] %vm1250, %v7003
    %7152 = vst.msk [vmem:[#allocation2 + $0x428] sm:$0xff] %vm1250, %v7005
    %7153 = vst.msk [vmem:[#allocation2 + $0x440] sm:$0xff] %vm1250, %v7007
    %7154 = vst.msk [vmem:[#allocation2 + $0x458] sm:$0xff] %vm1250, %v7009
    %7155 = vst.msk [vmem:[#allocation2 + $0x470] sm:$0xff] %vm1250, %v7011
    %7156 = vst.msk [vmem:[#allocation2 + $0x488] sm:$0xff] %vm1250, %v7013
    %7157 = vst.msk [vmem:[#allocation2 + $0x4a0] sm:$0xff] %vm1250, %v7015
    %7158 = vst.msk [vmem:[#allocation2 + $0x4b8] sm:$0xff] %vm1250, %v7017
    %7159 = vst.msk [vmem:[#allocation2 + $0x4d0] sm:$0xff] %vm1250, %v7019
    %7160 = vst.msk [vmem:[#allocation2 + $0x4e8] sm:$0xff] %vm1250, %v7021
    %7161 = vst.msk [vmem:[#allocation2 + $0x500] sm:$0xff] %vm1250, %v7023
    %7162 = vst.msk [vmem:[#allocation2 + $0x518] sm:$0xff] %vm1250, %v7025
    %7163 = vst.msk [vmem:[#allocation2 + $0x530] sm:$0xff] %vm1250, %v7027
    %7164 = vst.msk [vmem:[#allocation2 + $0x548] sm:$0xff] %vm1250, %v7029
    %7165 = vst.msk [vmem:[#allocation2 + $0x560] sm:$0xff] %vm1250, %v7031
    %7166 = vst.msk [vmem:[#allocation2 + $0x578] sm:$0xff] %vm1250, %v7033
    %7167 = vst.msk [vmem:[#allocation2 + $0x590] sm:$0xff] %vm1250, %v7035
    %7168 = vst.msk [vmem:[#allocation2 + $0x5a8] sm:$0xff] %vm1250, %v7037
    %7169 = vst.msk [vmem:[#allocation2 + $0x5c0] sm:$0xff] %vm1250, %v7039
    %7170 = vst.msk [vmem:[#allocation2 + $0x5d8] sm:$0xff] %vm1250, %v7041
    %7171 = vst.msk [vmem:[#allocation2 + $0x5f0] sm:$0xff] %vm1250, %v7043
    %v7172 = vld [vmem:[%s6403 + $0x2] sm:$0xff]
    %v7173 = vld [vmem:[%s6403 + $0xa] sm:$0xff]
    %v7174 = vld [vmem:[%s6403 + $0x1a] sm:$0xff]
    %v7175 = vld [vmem:[%s6403 + $0x22] sm:$0xff]
    %v7176 = vld [vmem:[%s6403 + $0x32] sm:$0xff]
    %v7177 = vld [vmem:[%s6403 + $0x3a] sm:$0xff]
    %v7178 = vld [vmem:[%s6403 + $0x4a] sm:$0xff]
    %v7179 = vld [vmem:[%s6403 + $0x52] sm:$0xff]
    %v7180 = vld [vmem:[%s6403 + $0x62] sm:$0xff]
    %v7181 = vld [vmem:[%s6403 + $0x6a] sm:$0xff]
    %v7182 = vld [vmem:[%s6403 + $0x7a] sm:$0xff]
    %v7183 = vld [vmem:[%s6403 + $0x82] sm:$0xff]
    %v7184 = vld [vmem:[%s6403 + $0x92] sm:$0xff]
    %v7185 = vld [vmem:[%s6403 + $0x9a] sm:$0xff]
    %v7186 = vld [vmem:[%s6403 + $0xaa] sm:$0xff]
    %v7187 = vld [vmem:[%s6403 + $0xb2] sm:$0xff]
    %v7188 = vld [vmem:[%s6403 + $0xc2] sm:$0xff]
    %v7189 = vld [vmem:[%s6403 + $0xca] sm:$0xff]
    %v7190 = vld [vmem:[%s6403 + $0xda] sm:$0xff]
    %v7191 = vld [vmem:[%s6403 + $0xe2] sm:$0xff]
    %v7192 = vld [vmem:[%s6403 + $0xf2] sm:$0xff]
    %v7193 = vld [vmem:[%s6403 + $0xfa] sm:$0xff]
    %v7194 = vld [vmem:[%s6403 + $0x10a] sm:$0xff]
    %v7195 = vld [vmem:[%s6403 + $0x112] sm:$0xff]
    %v7196 = vld [vmem:[%s6403 + $0x122] sm:$0xff]
    %v7197 = vld [vmem:[%s6403 + $0x12a] sm:$0xff]
    %v7198 = vld [vmem:[%s6403 + $0x13a] sm:$0xff]
    %v7199 = vld [vmem:[%s6403 + $0x142] sm:$0xff]
    %v7200 = vld [vmem:[%s6403 + $0x152] sm:$0xff]
    %v7201 = vld [vmem:[%s6403 + $0x15a] sm:$0xff]
    %v7202 = vld [vmem:[%s6403 + $0x16a] sm:$0xff]
    %v7203 = vld [vmem:[%s6403 + $0x172] sm:$0xff]
    %v7204 = vld [vmem:[%s6403 + $0x1b2] sm:$0xff]
    %v7205 = vld [vmem:[%s6403 + $0x1ba] sm:$0xff]
    %v7206 = vld [vmem:[%s6403 + $0x1ca] sm:$0xff]
    %v7207 = vld [vmem:[%s6403 + $0x1d2] sm:$0xff]
    %v7208 = vld [vmem:[%s6403 + $0x1e2] sm:$0xff]
    %v7209 = vld [vmem:[%s6403 + $0x1ea] sm:$0xff]
    %v7210 = vld [vmem:[%s6403 + $0x1fa] sm:$0xff]
    %v7211 = vld [vmem:[%s6403 + $0x202] sm:$0xff]
    %v7212 = vld [vmem:[%s6403 + $0x212] sm:$0xff]
    %v7213 = vld [vmem:[%s6403 + $0x21a] sm:$0xff]
    %v7214 = vld [vmem:[%s6403 + $0x22a] sm:$0xff]
    %v7215 = vld [vmem:[%s6403 + $0x232] sm:$0xff]
    %v7216 = vld [vmem:[%s6403 + $0x242] sm:$0xff]
    %v7217 = vld [vmem:[%s6403 + $0x24a] sm:$0xff]
    %v7218 = vld [vmem:[%s6403 + $0x25a] sm:$0xff]
    %v7219 = vld [vmem:[%s6403 + $0x262] sm:$0xff]
    %v7220 = vld [vmem:[%s6403 + $0x272] sm:$0xff]
    %v7221 = vld [vmem:[%s6403 + $0x27a] sm:$0xff]
    %v7222 = vld [vmem:[%s6403 + $0x28a] sm:$0xff]
    %v7223 = vld [vmem:[%s6403 + $0x292] sm:$0xff]
    %v7224 = vld [vmem:[%s6403 + $0x2a2] sm:$0xff]
    %v7225 = vld [vmem:[%s6403 + $0x2aa] sm:$0xff]
    %v7226 = vld [vmem:[%s6403 + $0x2ba] sm:$0xff]
    %v7227 = vld [vmem:[%s6403 + $0x2c2] sm:$0xff]
    %v7228 = vld [vmem:[%s6403 + $0x2d2] sm:$0xff]
    %v7229 = vld [vmem:[%s6403 + $0x2da] sm:$0xff]
    %v7230 = vld [vmem:[%s6403 + $0x2ea] sm:$0xff]
    %v7231 = vld [vmem:[%s6403 + $0x2f2] sm:$0xff]
    %v7232 = vld [vmem:[%s6403 + $0x302] sm:$0xff]
    %v7233 = vld [vmem:[%s6403 + $0x30a] sm:$0xff]
    %v7234 = vld [vmem:[%s6403 + $0x31a] sm:$0xff]
    %v7235 = vld [vmem:[%s6403 + $0x322] sm:$0xff]
    %7236 = vst.msk [vmem:[#allocation2 + $0x10] sm:$0xff] %vm94, %v7172
    %7237 = vst.msk [vmem:[#allocation2 + $0x28] sm:$0xff] %vm94, %v7173
    %7238 = vst.msk [vmem:[#allocation2 + $0x40] sm:$0xff] %vm94, %v7174
    %7239 = vst.msk [vmem:[#allocation2 + $0x58] sm:$0xff] %vm94, %v7175
    %7240 = vst.msk [vmem:[#allocation2 + $0x70] sm:$0xff] %vm94, %v7176
    %7241 = vst.msk [vmem:[#allocation2 + $0x88] sm:$0xff] %vm94, %v7177
    %7242 = vst.msk [vmem:[#allocation2 + $0xa0] sm:$0xff] %vm94, %v7178
    %7243 = vst.msk [vmem:[#allocation2 + $0xb8] sm:$0xff] %vm94, %v7179
    %7244 = vst.msk [vmem:[#allocation2 + $0xd0] sm:$0xff] %vm94, %v7180
    %7245 = vst.msk [vmem:[#allocation2 + $0xe8] sm:$0xff] %vm94, %v7181
    %7246 = vst.msk [vmem:[#allocation2 + $0x100] sm:$0xff] %vm94, %v7182
    %7247 = vst.msk [vmem:[#allocation2 + $0x118] sm:$0xff] %vm94, %v7183
    %7248 = vst.msk [vmem:[#allocation2 + $0x130] sm:$0xff] %vm94, %v7184
    %7249 = vst.msk [vmem:[#allocation2 + $0x148] sm:$0xff] %vm94, %v7185
    %7250 = vst.msk [vmem:[#allocation2 + $0x160] sm:$0xff] %vm94, %v7186
    %7251 = vst.msk [vmem:[#allocation2 + $0x178] sm:$0xff] %vm94, %v7187
    %7252 = vst.msk [vmem:[#allocation2 + $0x190] sm:$0xff] %vm94, %v7188
    %7253 = vst.msk [vmem:[#allocation2 + $0x1a8] sm:$0xff] %vm94, %v7189
    %7254 = vst.msk [vmem:[#allocation2 + $0x1c0] sm:$0xff] %vm94, %v7190
    %7255 = vst.msk [vmem:[#allocation2 + $0x1d8] sm:$0xff] %vm94, %v7191
    %7256 = vst.msk [vmem:[#allocation2 + $0x1f0] sm:$0xff] %vm94, %v7192
    %7257 = vst.msk [vmem:[#allocation2 + $0x208] sm:$0xff] %vm94, %v7193
    %7258 = vst.msk [vmem:[#allocation2 + $0x220] sm:$0xff] %vm94, %v7194
    %7259 = vst.msk [vmem:[#allocation2 + $0x238] sm:$0xff] %vm94, %v7195
    %7260 = vst.msk [vmem:[#allocation2 + $0x250] sm:$0xff] %vm94, %v7196
    %7261 = vst.msk [vmem:[#allocation2 + $0x268] sm:$0xff] %vm94, %v7197
    %7262 = vst.msk [vmem:[#allocation2 + $0x280] sm:$0xff] %vm94, %v7198
    %7263 = vst.msk [vmem:[#allocation2 + $0x298] sm:$0xff] %vm94, %v7199
    %7264 = vst.msk [vmem:[#allocation2 + $0x2b0] sm:$0xff] %vm94, %v7200
    %7265 = vst.msk [vmem:[#allocation2 + $0x2c8] sm:$0xff] %vm94, %v7201
    %7266 = vst.msk [vmem:[#allocation2 + $0x2e0] sm:$0xff] %vm94, %v7202
    %7267 = vst.msk [vmem:[#allocation2 + $0x2f8] sm:$0xff] %vm94, %v7203
    %7268 = vst.msk [vmem:[#allocation2 + $0x310] sm:$0xff] %vm94, %v7204
    %7269 = vst.msk [vmem:[#allocation2 + $0x328] sm:$0xff] %vm94, %v7205
    %7270 = vst.msk [vmem:[#allocation2 + $0x340] sm:$0xff] %vm94, %v7206
    %7271 = vst.msk [vmem:[#allocation2 + $0x358] sm:$0xff] %vm94, %v7207
    %7272 = vst.msk [vmem:[#allocation2 + $0x370] sm:$0xff] %vm94, %v7208
    %7273 = vst.msk [vmem:[#allocation2 + $0x388] sm:$0xff] %vm94, %v7209
    %7274 = vst.msk [vmem:[#allocation2 + $0x3a0] sm:$0xff] %vm94, %v7210
    %7275 = vst.msk [vmem:[#allocation2 + $0x3b8] sm:$0xff] %vm94, %v7211
    %7276 = vst.msk [vmem:[#allocation2 + $0x3d0] sm:$0xff] %vm94, %v7212
    %7277 = vst.msk [vmem:[#allocation2 + $0x3e8] sm:$0xff] %vm94, %v7213
    %7278 = vst.msk [vmem:[#allocation2 + $0x400] sm:$0xff] %vm94, %v7214
    %7279 = vst.msk [vmem:[#allocation2 + $0x418] sm:$0xff] %vm94, %v7215
    %7280 = vst.msk [vmem:[#allocation2 + $0x430] sm:$0xff] %vm94, %v7216
    %7281 = vst.msk [vmem:[#allocation2 + $0x448] sm:$0xff] %vm94, %v7217
    %7282 = vst.msk [vmem:[#allocation2 + $0x460] sm:$0xff] %vm94, %v7218
    %7283 = vst.msk [vmem:[#allocation2 + $0x478] sm:$0xff] %vm94, %v7219
    %7284 = vst.msk [vmem:[#allocation2 + $0x490] sm:$0xff] %vm94, %v7220
    %7285 = vst.msk [vmem:[#allocation2 + $0x4a8] sm:$0xff] %vm94, %v7221
    %7286 = vst.msk [vmem:[#allocation2 + $0x4c0] sm:$0xff] %vm94, %v7222
    %7287 = vst.msk [vmem:[#allocation2 + $0x4d8] sm:$0xff] %vm94, %v7223
    %7288 = vst.msk [vmem:[#allocation2 + $0x4f0] sm:$0xff] %vm94, %v7224
    %7289 = vst.msk [vmem:[#allocation2 + $0x508] sm:$0xff] %vm94, %v7225
    %7290 = vst.msk [vmem:[#allocation2 + $0x520] sm:$0xff] %vm94, %v7226
    %7291 = vst.msk [vmem:[#allocation2 + $0x538] sm:$0xff] %vm94, %v7227
    %7292 = vst.msk [vmem:[#allocation2 + $0x550] sm:$0xff] %vm94, %v7228
    %7293 = vst.msk [vmem:[#allocation2 + $0x568] sm:$0xff] %vm94, %v7229
    %7294 = vst.msk [vmem:[#allocation2 + $0x580] sm:$0xff] %vm94, %v7230
    %7295 = vst.msk [vmem:[#allocation2 + $0x598] sm:$0xff] %vm94, %v7231
    %7296 = vst.msk [vmem:[#allocation2 + $0x5b0] sm:$0xff] %vm94, %v7232
    %7297 = vst.msk [vmem:[#allocation2 + $0x5c8] sm:$0xff] %vm94, %v7233
    %7298 = vst.msk [vmem:[#allocation2 + $0x5e0] sm:$0xff] %vm94, %v7234
    %7299 = vst.msk [vmem:[#allocation2 + $0x5f8] sm:$0xff] %vm94, %v7235
    %v7300 = vld [vmem:[#allocation2] sm:$0xff]
    %v7301 = vld [vmem:[#allocation2 + $0x8] sm:$0xff]
    %v7302 = vld [vmem:[#allocation2 + $0x10] sm:$0xff]
    %v7303 = vld [vmem:[#allocation2 + $0x18] sm:$0xff]
    %v7304 = vld [vmem:[#allocation2 + $0x20] sm:$0xff]
    %v7305 = vld [vmem:[#allocation2 + $0x28] sm:$0xff]
    %v7306 = vld [vmem:[#allocation2 + $0x30] sm:$0xff]
    %v7307 = vld [vmem:[#allocation2 + $0x38] sm:$0xff]
    %v7308 = vld [vmem:[#allocation2 + $0x40] sm:$0xff]
    %v7309 = vld [vmem:[#allocation2 + $0x48] sm:$0xff]
    %v7310 = vld [vmem:[#allocation2 + $0x50] sm:$0xff]
    %v7311 = vld [vmem:[#allocation2 + $0x58] sm:$0xff]
    %v7312 = vld [vmem:[#allocation2 + $0x60] sm:$0xff]
    %v7313 = vld [vmem:[#allocation2 + $0x68] sm:$0xff]
    %v7314 = vld [vmem:[#allocation2 + $0x70] sm:$0xff]
    %v7315 = vld [vmem:[#allocation2 + $0x78] sm:$0xff]
    %v7316 = vld [vmem:[#allocation2 + $0x80] sm:$0xff]
    %v7317 = vld [vmem:[#allocation2 + $0x88] sm:$0xff]
    %v7318 = vld [vmem:[#allocation2 + $0x90] sm:$0xff]
    %v7319 = vld [vmem:[#allocation2 + $0x98] sm:$0xff]
    %v7320 = vld [vmem:[#allocation2 + $0xa0] sm:$0xff]
    %v7321 = vld [vmem:[#allocation2 + $0xa8] sm:$0xff]
    %v7322 = vld [vmem:[#allocation2 + $0xb0] sm:$0xff]
    %v7323 = vld [vmem:[#allocation2 + $0xb8] sm:$0xff]
    %v7324 = vld [vmem:[#allocation2 + $0xc0] sm:$0xff]
    %v7325 = vld [vmem:[#allocation2 + $0xc8] sm:$0xff]
    %v7326 = vld [vmem:[#allocation2 + $0xd0] sm:$0xff]
    %v7327 = vld [vmem:[#allocation2 + $0xd8] sm:$0xff]
    %v7328 = vld [vmem:[#allocation2 + $0xe0] sm:$0xff]
    %v7329 = vld [vmem:[#allocation2 + $0xe8] sm:$0xff]
    %v7330 = vld [vmem:[#allocation2 + $0xf0] sm:$0xff]
    %v7331 = vld [vmem:[#allocation2 + $0xf8] sm:$0xff]
    %v7332 = vld [vmem:[#allocation2 + $0x100] sm:$0xff]
    %v7333 = vld [vmem:[#allocation2 + $0x108] sm:$0xff]
    %v7334 = vld [vmem:[#allocation2 + $0x110] sm:$0xff]
    %v7335 = vld [vmem:[#allocation2 + $0x118] sm:$0xff]
    %v7336 = vld [vmem:[#allocation2 + $0x120] sm:$0xff]
    %v7337 = vld [vmem:[#allocation2 + $0x128] sm:$0xff]
    %v7338 = vld [vmem:[#allocation2 + $0x130] sm:$0xff]
    %v7339 = vld [vmem:[#allocation2 + $0x138] sm:$0xff]
    %v7340 = vld [vmem:[#allocation2 + $0x140] sm:$0xff]
    %v7341 = vld [vmem:[#allocation2 + $0x148] sm:$0xff]
    %v7342 = vld [vmem:[#allocation2 + $0x150] sm:$0xff]
    %v7343 = vld [vmem:[#allocation2 + $0x158] sm:$0xff]
    %v7344 = vld [vmem:[#allocation2 + $0x160] sm:$0xff]
    %v7345 = vld [vmem:[#allocation2 + $0x168] sm:$0xff]
    %v7346 = vld [vmem:[#allocation2 + $0x170] sm:$0xff]
    %v7347 = vld [vmem:[#allocation2 + $0x178] sm:$0xff]
    %v7348 = vld [vmem:[#allocation2 + $0x180] sm:$0xff]
    %v7349 = vld [vmem:[#allocation2 + $0x188] sm:$0xff]
    %v7350 = vld [vmem:[#allocation2 + $0x190] sm:$0xff]
    %v7351 = vld [vmem:[#allocation2 + $0x198] sm:$0xff]
    %v7352 = vld [vmem:[#allocation2 + $0x1a0] sm:$0xff]
    %v7353 = vld [vmem:[#allocation2 + $0x1a8] sm:$0xff]
    %v7354 = vld [vmem:[#allocation2 + $0x1b0] sm:$0xff]
    %v7355 = vld [vmem:[#allocation2 + $0x1b8] sm:$0xff]
    %v7356 = vld [vmem:[#allocation2 + $0x1c0] sm:$0xff]
    %v7357 = vld [vmem:[#allocation2 + $0x1c8] sm:$0xff]
    %v7358 = vld [vmem:[#allocation2 + $0x1d0] sm:$0xff]
    %v7359 = vld [vmem:[#allocation2 + $0x1d8] sm:$0xff]
    %v7360 = vld [vmem:[#allocation2 + $0x1e0] sm:$0xff]
    %v7361 = vld [vmem:[#allocation2 + $0x1e8] sm:$0xff]
    %v7362 = vld [vmem:[#allocation2 + $0x1f0] sm:$0xff]
    %v7363 = vld [vmem:[#allocation2 + $0x1f8] sm:$0xff]
    %v7364 = vld [vmem:[#allocation2 + $0x200] sm:$0xff]
    %v7365 = vld [vmem:[#allocation2 + $0x208] sm:$0xff]
    %v7366 = vld [vmem:[#allocation2 + $0x210] sm:$0xff]
    %v7367 = vld [vmem:[#allocation2 + $0x218] sm:$0xff]
    %v7368 = vld [vmem:[#allocation2 + $0x220] sm:$0xff]
    %v7369 = vld [vmem:[#allocation2 + $0x228] sm:$0xff]
    %v7370 = vld [vmem:[#allocation2 + $0x230] sm:$0xff]
    %v7371 = vld [vmem:[#allocation2 + $0x238] sm:$0xff]
    %v7372 = vld [vmem:[#allocation2 + $0x240] sm:$0xff]
    %v7373 = vld [vmem:[#allocation2 + $0x248] sm:$0xff]
    %v7374 = vld [vmem:[#allocation2 + $0x250] sm:$0xff]
    %v7375 = vld [vmem:[#allocation2 + $0x258] sm:$0xff]
    %v7376 = vld [vmem:[#allocation2 + $0x260] sm:$0xff]
    %v7377 = vld [vmem:[#allocation2 + $0x268] sm:$0xff]
    %v7378 = vld [vmem:[#allocation2 + $0x270] sm:$0xff]
    %v7379 = vld [vmem:[#allocation2 + $0x278] sm:$0xff]
    %v7380 = vld [vmem:[#allocation2 + $0x280] sm:$0xff]
    %v7381 = vld [vmem:[#allocation2 + $0x288] sm:$0xff]
    %v7382 = vld [vmem:[#allocation2 + $0x290] sm:$0xff]
    %v7383 = vld [vmem:[#allocation2 + $0x298] sm:$0xff]
    %v7384 = vld [vmem:[#allocation2 + $0x2a0] sm:$0xff]
    %v7385 = vld [vmem:[#allocation2 + $0x2a8] sm:$0xff]
    %v7386 = vld [vmem:[#allocation2 + $0x2b0] sm:$0xff]
    %v7387 = vld [vmem:[#allocation2 + $0x2b8] sm:$0xff]
    %v7388 = vld [vmem:[#allocation2 + $0x2c0] sm:$0xff]
    %v7389 = vld [vmem:[#allocation2 + $0x2c8] sm:$0xff]
    %v7390 = vld [vmem:[#allocation2 + $0x2d0] sm:$0xff]
    %v7391 = vld [vmem:[#allocation2 + $0x2d8] sm:$0xff]
    %v7392 = vld [vmem:[#allocation2 + $0x2e0] sm:$0xff]
    %v7393 = vld [vmem:[#allocation2 + $0x2e8] sm:$0xff]
    %v7394 = vld [vmem:[#allocation2 + $0x2f0] sm:$0xff]
    %v7395 = vld [vmem:[#allocation2 + $0x2f8] sm:$0xff]
    %v7396 = vld [vmem:[#allocation2 + $0x300] sm:$0xff]
    %v7397 = vld [vmem:[#allocation2 + $0x308] sm:$0xff]
    %v7398 = vld [vmem:[#allocation2 + $0x310] sm:$0xff]
    %v7399 = vld [vmem:[#allocation2 + $0x318] sm:$0xff]
    %v7400 = vld [vmem:[#allocation2 + $0x320] sm:$0xff]
    %v7401 = vld [vmem:[#allocation2 + $0x328] sm:$0xff]
    %v7402 = vld [vmem:[#allocation2 + $0x330] sm:$0xff]
    %v7403 = vld [vmem:[#allocation2 + $0x338] sm:$0xff]
    %v7404 = vld [vmem:[#allocation2 + $0x340] sm:$0xff]
    %v7405 = vld [vmem:[#allocation2 + $0x348] sm:$0xff]
    %v7406 = vld [vmem:[#allocation2 + $0x350] sm:$0xff]
    %v7407 = vld [vmem:[#allocation2 + $0x358] sm:$0xff]
    %v7408 = vld [vmem:[#allocation2 + $0x360] sm:$0xff]
    %v7409 = vld [vmem:[#allocation2 + $0x368] sm:$0xff]
    %v7410 = vld [vmem:[#allocation2 + $0x370] sm:$0xff]
    %v7411 = vld [vmem:[#allocation2 + $0x378] sm:$0xff]
    %v7412 = vld [vmem:[#allocation2 + $0x380] sm:$0xff]
    %v7413 = vld [vmem:[#allocation2 + $0x388] sm:$0xff]
    %v7414 = vld [vmem:[#allocation2 + $0x390] sm:$0xff]
    %v7415 = vld [vmem:[#allocation2 + $0x398] sm:$0xff]
    %v7416 = vld [vmem:[#allocation2 + $0x3a0] sm:$0xff]
    %v7417 = vld [vmem:[#allocation2 + $0x3a8] sm:$0xff]
    %v7418 = vld [vmem:[#allocation2 + $0x3b0] sm:$0xff]
    %v7419 = vld [vmem:[#allocation2 + $0x3b8] sm:$0xff]
    %v7420 = vld [vmem:[#allocation2 + $0x3c0] sm:$0xff]
    %v7421 = vld [vmem:[#allocation2 + $0x3c8] sm:$0xff]
    %v7422 = vld [vmem:[#allocation2 + $0x3d0] sm:$0xff]
    %v7423 = vld [vmem:[#allocation2 + $0x3d8] sm:$0xff]
    %v7424 = vld [vmem:[#allocation2 + $0x3e0] sm:$0xff]
    %v7425 = vld [vmem:[#allocation2 + $0x3e8] sm:$0xff]
    %v7426 = vld [vmem:[#allocation2 + $0x3f0] sm:$0xff]
    %v7427 = vld [vmem:[#allocation2 + $0x3f8] sm:$0xff]
    %v7428 = vld [vmem:[#allocation2 + $0x400] sm:$0xff]
    %v7429 = vld [vmem:[#allocation2 + $0x408] sm:$0xff]
    %v7430 = vld [vmem:[#allocation2 + $0x410] sm:$0xff]
    %v7431 = vld [vmem:[#allocation2 + $0x418] sm:$0xff]
    %v7432 = vld [vmem:[#allocation2 + $0x420] sm:$0xff]
    %v7433 = vld [vmem:[#allocation2 + $0x428] sm:$0xff]
    %v7434 = vld [vmem:[#allocation2 + $0x430] sm:$0xff]
    %v7435 = vld [vmem:[#allocation2 + $0x438] sm:$0xff]
    %v7436 = vld [vmem:[#allocation2 + $0x440] sm:$0xff]
    %v7437 = vld [vmem:[#allocation2 + $0x448] sm:$0xff]
    %v7438 = vld [vmem:[#allocation2 + $0x450] sm:$0xff]
    %v7439 = vld [vmem:[#allocation2 + $0x458] sm:$0xff]
    %v7440 = vld [vmem:[#allocation2 + $0x460] sm:$0xff]
    %v7441 = vld [vmem:[#allocation2 + $0x468] sm:$0xff]
    %v7442 = vld [vmem:[#allocation2 + $0x470] sm:$0xff]
    %v7443 = vld [vmem:[#allocation2 + $0x478] sm:$0xff]
    %v7444 = vld [vmem:[#allocation2 + $0x480] sm:$0xff]
    %v7445 = vld [vmem:[#allocation2 + $0x488] sm:$0xff]
    %v7446 = vld [vmem:[#allocation2 + $0x490] sm:$0xff]
    %v7447 = vld [vmem:[#allocation2 + $0x498] sm:$0xff]
    %v7448 = vld [vmem:[#allocation2 + $0x4a0] sm:$0xff]
    %v7449 = vld [vmem:[#allocation2 + $0x4a8] sm:$0xff]
    %v7450 = vld [vmem:[#allocation2 + $0x4b0] sm:$0xff]
    %v7451 = vld [vmem:[#allocation2 + $0x4b8] sm:$0xff]
    %v7452 = vld [vmem:[#allocation2 + $0x4c0] sm:$0xff]
    %v7453 = vld [vmem:[#allocation2 + $0x4c8] sm:$0xff]
    %v7454 = vld [vmem:[#allocation2 + $0x4d0] sm:$0xff]
    %v7455 = vld [vmem:[#allocation2 + $0x4d8] sm:$0xff]
    %v7456 = vld [vmem:[#allocation2 + $0x4e0] sm:$0xff]
    %v7457 = vld [vmem:[#allocation2 + $0x4e8] sm:$0xff]
    %v7458 = vld [vmem:[#allocation2 + $0x4f0] sm:$0xff]
    %v7459 = vld [vmem:[#allocation2 + $0x4f8] sm:$0xff]
    %v7460 = vld [vmem:[#allocation2 + $0x500] sm:$0xff]
    %v7461 = vld [vmem:[#allocation2 + $0x508] sm:$0xff]
    %v7462 = vld [vmem:[#allocation2 + $0x510] sm:$0xff]
    %v7463 = vld [vmem:[#allocation2 + $0x518] sm:$0xff]
    %v7464 = vld [vmem:[#allocation2 + $0x520] sm:$0xff]
    %v7465 = vld [vmem:[#allocation2 + $0x528] sm:$0xff]
    %v7466 = vld [vmem:[#allocation2 + $0x530] sm:$0xff]
    %v7467 = vld [vmem:[#allocation2 + $0x538] sm:$0xff]
    %v7468 = vld [vmem:[#allocation2 + $0x540] sm:$0xff]
    %v7469 = vld [vmem:[#allocation2 + $0x548] sm:$0xff]
    %v7470 = vld [vmem:[#allocation2 + $0x550] sm:$0xff]
    %v7471 = vld [vmem:[#allocation2 + $0x558] sm:$0xff]
    %v7472 = vld [vmem:[#allocation2 + $0x560] sm:$0xff]
    %v7473 = vld [vmem:[#allocation2 + $0x568] sm:$0xff]
    %v7474 = vld [vmem:[#allocation2 + $0x570] sm:$0xff]
    %v7475 = vld [vmem:[#allocation2 + $0x578] sm:$0xff]
    %v7476 = vld [vmem:[#allocation2 + $0x580] sm:$0xff]
    %v7477 = vld [vmem:[#allocation2 + $0x588] sm:$0xff]
    %v7478 = vld [vmem:[#allocation2 + $0x590] sm:$0xff]
    %v7479 = vld [vmem:[#allocation2 + $0x598] sm:$0xff]
    %v7480 = vld [vmem:[#allocation2 + $0x5a0] sm:$0xff]
    %v7481 = vld [vmem:[#allocation2 + $0x5a8] sm:$0xff]
    %v7482 = vld [vmem:[#allocation2 + $0x5b0] sm:$0xff]
    %v7483 = vld [vmem:[#allocation2 + $0x5b8] sm:$0xff]
    %v7484 = vld [vmem:[#allocation2 + $0x5c0] sm:$0xff]
    %v7485 = vld [vmem:[#allocation2 + $0x5c8] sm:$0xff]
    %v7486 = vld [vmem:[#allocation2 + $0x5d0] sm:$0xff]
    %v7487 = vld [vmem:[#allocation2 + $0x5d8] sm:$0xff]
    %v7488 = vld [vmem:[#allocation2 + $0x5e0] sm:$0xff]
    %v7489 = vld [vmem:[#allocation2 + $0x5e8] sm:$0xff]
    %v7490 = vld [vmem:[#allocation2 + $0x5f0] sm:$0xff]
    %v7491 = vld [vmem:[#allocation2 + $0x5f8] sm:$0xff]
    %v7492 = vld [vmem:[%s5] sm:$0xff]
    %v7493 = vld [vmem:[%s5 + $0x8] sm:$0xff]
    %v7494 = vld [vmem:[%s5 + $0x10] sm:$0xff]
    %v7495 = vld [vmem:[%s5 + $0x18] sm:$0xff]
    %v7496 = vld [vmem:[%s5 + $0x20] sm:$0xff]
    %v7497 = vld [vmem:[%s5 + $0x28] sm:$0xff]
    %v7498 = vld [vmem:[%s5 + $0x30] sm:$0xff]
    %v7499 = vld [vmem:[%s5 + $0x38] sm:$0xff]
    %v7500 = vld [vmem:[%s5 + $0x40] sm:$0xff]
    %v7501 = vld [vmem:[%s5 + $0x48] sm:$0xff]
    %v7502 = vld [vmem:[%s5 + $0x50] sm:$0xff]
    %v7503 = vld [vmem:[%s5 + $0x58] sm:$0xff]
    %v7504 = vld [vmem:[%s5 + $0x60] sm:$0xff]
    %v7505 = vld [vmem:[%s5 + $0x68] sm:$0xff]
    %v7506 = vld [vmem:[%s5 + $0x70] sm:$0xff]
    %v7507 = vld [vmem:[%s5 + $0x78] sm:$0xff]
    %v7508 = vld [vmem:[%s5 + $0x80] sm:$0xff]
    %v7509 = vld [vmem:[%s5 + $0x88] sm:$0xff]
    %v7510 = vld [vmem:[%s5 + $0x90] sm:$0xff]
    %v7511 = vld [vmem:[%s5 + $0x98] sm:$0xff]
    %v7512 = vld [vmem:[%s5 + $0xa0] sm:$0xff]
    %v7513 = vld [vmem:[%s5 + $0xa8] sm:$0xff]
    %v7514 = vld [vmem:[%s5 + $0xb0] sm:$0xff]
    %v7515 = vld [vmem:[%s5 + $0xb8] sm:$0xff]
    %v7516 = vld [vmem:[%s5 + $0xc0] sm:$0xff]
    %v7517 = vld [vmem:[%s5 + $0xc8] sm:$0xff]
    %v7518 = vld [vmem:[%s5 + $0xd0] sm:$0xff]
    %v7519 = vld [vmem:[%s5 + $0xd8] sm:$0xff]
    %v7520 = vld [vmem:[%s5 + $0xe0] sm:$0xff]
    %v7521 = vld [vmem:[%s5 + $0xe8] sm:$0xff]
    %v7522 = vld [vmem:[%s5 + $0xf0] sm:$0xff]
    %v7523 = vld [vmem:[%s5 + $0xf8] sm:$0xff]
    %v7524 = vld [vmem:[%s5 + $0x100] sm:$0xff]
    %v7525 = vld [vmem:[%s5 + $0x108] sm:$0xff]
    %v7526 = vld [vmem:[%s5 + $0x110] sm:$0xff]
    %v7527 = vld [vmem:[%s5 + $0x118] sm:$0xff]
    %v7529 = vsel %vm94, %v7302, 0
    %v7532 = vsel %vm94, %v7305, 0
    %v7535 = vsel %vm94, %v7308, 0
    %v7538 = vsel %vm94, %v7311, 0
    %v7541 = vsel %vm94, %v7314, 0
    %v7544 = vsel %vm94, %v7317, 0
    %v7547 = vsel %vm94, %v7320, 0
    %v7550 = vsel %vm94, %v7323, 0
    %v7553 = vsel %vm94, %v7326, 0
    %v7556 = vsel %vm94, %v7329, 0
    %v7559 = vsel %vm94, %v7332, 0
    %v7562 = vsel %vm94, %v7335, 0
    %v7565 = vsel %vm94, %v7338, 0
    %v7568 = vsel %vm94, %v7341, 0
    %v7571 = vsel %vm94, %v7344, 0
    %v7574 = vsel %vm94, %v7347, 0
    %v7577 = vsel %vm94, %v7350, 0
    %v7580 = vsel %vm94, %v7353, 0
    %v7583 = vsel %vm94, %v7356, 0
    %v7586 = vsel %vm94, %v7359, 0
    %v7589 = vsel %vm94, %v7362, 0
    %v7592 = vsel %vm94, %v7365, 0
    %v7595 = vsel %vm94, %v7368, 0
    %v7598 = vsel %vm94, %v7371, 0
    %v7601 = vsel %vm94, %v7374, 0
    %v7604 = vsel %vm94, %v7377, 0
    %v7607 = vsel %vm94, %v7380, 0
    %v7610 = vsel %vm94, %v7383, 0
    %v7613 = vsel %vm94, %v7386, 0
    %v7616 = vsel %vm94, %v7389, 0
    %v7619 = vsel %vm94, %v7392, 0
    %v7622 = vsel %vm94, %v7395, 0
    %v7625 = vsel %vm94, %v7398, 0
    %v7628 = vsel %vm94, %v7401, 0
    %v7631 = vsel %vm94, %v7404, 0
    %v7634 = vsel %vm94, %v7407, 0
    %v7637 = vsel %vm94, %v7410, 0
    %v7640 = vsel %vm94, %v7413, 0
    %v7643 = vsel %vm94, %v7416, 0
    %v7646 = vsel %vm94, %v7419, 0
    %v7649 = vsel %vm94, %v7422, 0
    %v7652 = vsel %vm94, %v7425, 0
    %v7655 = vsel %vm94, %v7428, 0
    %v7658 = vsel %vm94, %v7431, 0
    %v7661 = vsel %vm94, %v7434, 0
    %v7664 = vsel %vm94, %v7437, 0
    %v7667 = vsel %vm94, %v7440, 0
    %v7670 = vsel %vm94, %v7443, 0
    %v7673 = vsel %vm94, %v7446, 0
    %v7676 = vsel %vm94, %v7449, 0
    %v7679 = vsel %vm94, %v7452, 0
    %v7682 = vsel %vm94, %v7455, 0
    %v7685 = vsel %vm94, %v7458, 0
    %v7688 = vsel %vm94, %v7461, 0
    %v7691 = vsel %vm94, %v7464, 0
    %v7694 = vsel %vm94, %v7467, 0
    %v7697 = vsel %vm94, %v7470, 0
    %v7700 = vsel %vm94, %v7473, 0
    %v7703 = vsel %vm94, %v7476, 0
    %v7706 = vsel %vm94, %v7479, 0
    %v7709 = vsel %vm94, %v7482, 0
    %v7712 = vsel %vm94, %v7485, 0
    %v7715 = vsel %vm94, %v7488, 0
    %v7718 = vsel %vm94, %v7491, 0
    %7720 = vmatprep.subr.mxu0 0.0
    %7721 = vmatpush1.msra.mxu0 %v7492
    %7722 = vmatprep.subr.mxu0 0.0
    %7723 = vmatpush1.msra.mxu0 %v7493
    %7724 = vmatprep.subr.mxu0 0.0
    %7725 = vmatpush1.msra.mxu0 %v7494
    %7726 = vmatprep.subr.mxu0 0.0
    %7727 = vmatpush1.msra.mxu0 %v7495
    %7728 = vmatprep.subr.mxu0 0.0
    %7729 = vmatpush1.msra.mxu0 %v7496
    %7730 = vmatprep.subr.mxu0 0.0
    %7731 = vmatpush1.msra.mxu0 %v7497
    %7732 = vmatprep.subr.mxu0 0.0
    %7733 = vmatpush1.msra.mxu0 %v7498
    %7734 = vmatprep.subr.mxu0 0.0
    %7735 = vmatpush1.msra.mxu0 %v7499
    %7736 = vmatprep.subr.mxu0 0.0
    %7737 = vmatpush1.msra.mxu0 %v7500
    %7738 = vmatprep.subr.mxu0 0.0
    %7739 = vmatpush1.msra.mxu0 %v7501
    %7740 = vmatprep.subr.mxu0 0.0
    %7741 = vmatpush1.msra.mxu0 %v7502
    %7742 = vmatprep.subr.mxu0 0.0
    %7743 = vmatpush1.msra.mxu0 %v7503
    %7744 = vmatprep.subr.mxu0 0.0
    %7745 = vmatpush1.msra.mxu0 %v7504
    %7746 = vmatprep.subr.mxu0 0.0
    %7747 = vmatpush1.msra.mxu0 %v7505
    %7748 = vmatprep.subr.mxu0 0.0
    %7749 = vmatpush1.msra.mxu0 %v7506
    %7750 = vmatprep.subr.mxu0 0.0
    %7751 = vmatpush1.msra.mxu0 %v7507
    %7752 = vmatprep.subr.mxu0 0.0
    %7753 = vmatpush1.msra.mxu0 %v7508
    %7754 = vmatprep.subr.mxu0 0.0
    %7755 = vmatpush1.msra.mxu0 %v7509
    %7756 = vmatprep.subr.mxu0 0.0
    %7757 = vmatpush1.msra.mxu0 %v7510
    %7758 = vmatprep.subr.mxu0 0.0
    %7759 = vmatpush1.msra.mxu0 %v7511
    %7760 = vmatprep.subr.mxu0 0.0
    %7761 = vmatpush1.msra.mxu0 %v7512
    %7762 = vmatprep.subr.mxu0 0.0
    %7763 = vmatpush1.msra.mxu0 %v7513
    %7764 = vmatprep.subr.mxu0 0.0
    %7765 = vmatpush1.msra.mxu0 %v7514
    %7766 = vmatprep.subr.mxu0 0.0
    %7767 = vmatpush1.msra.mxu0 %v7515
    %7768 = vmatprep.subr.mxu0 0.0
    %7769 = vmatpush1.msra.mxu0 %v7516
    %7770 = vmatprep.subr.mxu0 0.0
    %7771 = vmatpush1.msra.mxu0 %v7517
    %7772 = vmatprep.subr.mxu0 0.0
    %7773 = vmatpush1.msra.mxu0 %v7518
    %7774 = vmatprep.subr.mxu0 0.0
    %7775 = vmatpush1.msra.mxu0 %v7519
    %7776 = vmatprep.subr.mxu0 0.0
    %7777 = vmatpush1.msra.mxu0 %v7520
    %7778 = vmatprep.subr.mxu0 0.0
    %7779 = vmatpush1.msra.mxu0 %v7521
    %7780 = vmatprep.subr.mxu0 0.0
    %7781 = vmatpush1.msra.mxu0 %v7522
    %7782 = vmatprep.subr.mxu0 0.0
    %7783 = vmatpush1.msra.mxu0 %v7523
    %7784 = vmatprep.mubr.f32.mxu0 %v7301
    %7785 = vmatmul.mubr.f32.gmra.mrb[0].mxu0 %v7300
    %v7786 = vpop.f32.mrb[0].mxu0
    %v7787 = vadd.f32 0.0, %v7786
    %v7788 = vpop.f32.mrb[0].mxu0
    %7789 = vmatprep.mubr.f32.mxu0 %v7304
    %7790 = vmatmul.mubr.f32.gmra.mrb[0].mxu0 %v7303
    %v7791 = vpop.f32.mrb[0].mxu0
    %v7792 = vadd.f32 0.0, %v7791
    %v7793 = vpop.f32.mrb[0].mxu0
    %7794 = vmatprep.mubr.f32.mxu0 %v7307
    %7795 = vmatmul.mubr.f32.gmra.mrb[0].mxu0 %v7306
    %v7796 = vpop.f32.mrb[0].mxu0
    %v7797 = vadd.f32 0.0, %v7796
    %v7798 = vpop.f32.mrb[0].mxu0
    %7799 = vmatprep.mubr.f32.mxu0 %v7310
    %7800 = vmatmul.mubr.f32.gmra.mrb[0].mxu0 %v7309
    %v7801 = vpop.f32.mrb[0].mxu0
    %v7802 = vadd.f32 0.0, %v7801
    %v7803 = vpop.f32.mrb[0].mxu0
    %7804 = vmatprep.mubr.f32.mxu0 %v7313
    %7805 = vmatmul.mubr.f32.gmra.mrb[0].mxu0 %v7312
    %v7806 = vpop.f32.mrb[0].mxu0
    %v7807 = vadd.f32 0.0, %v7806
    %v7808 = vpop.f32.mrb[0].mxu0
    %7809 = vmatprep.mubr.f32.mxu0 %v7316
    %7810 = vmatmul.mubr.f32.gmra.mrb[0].mxu0 %v7315
    %v7811 = vpop.f32.mrb[0].mxu0
    %v7812 = vadd.f32 0.0, %v7811
    %v7813 = vpop.f32.mrb[0].mxu0
    %7814 = vmatprep.mubr.f32.mxu0 %v7319
    %7815 = vmatmul.mubr.f32.gmra.mrb[0].mxu0 %v7318
    %v7816 = vpop.f32.mrb[0].mxu0
    %v7817 = vadd.f32 0.0, %v7816
    %v7818 = vpop.f32.mrb[0].mxu0
    %7819 = vmatprep.mubr.f32.mxu0 %v7322
    %7820 = vmatmul.mubr.f32.gmra.mrb[0].mxu0 %v7321
    %v7821 = vpop.f32.mrb[0].mxu0
    %v7822 = vadd.f32 0.0, %v7821
    %v7823 = vpop.f32.mrb[0].mxu0
    %7824 = vmatprep.mubr.f32.mxu0 %v7325
    %7825 = vmatmul.mubr.f32.gmra.mrb[0].mxu0 %v7324
    %v7826 = vpop.f32.mrb[0].mxu0
    %v7827 = vadd.f32 0.0, %v7826
    %v7828 = vpop.f32.mrb[0].mxu0
    %7829 = vmatprep.mubr.f32.mxu0 %v7328
    %7830 = vmatmul.mubr.f32.gmra.mrb[0].mxu0 %v7327
    %v7831 = vpop.f32.mrb[0].mxu0
    %v7832 = vadd.f32 0.0, %v7831
    %v7833 = vpop.f32.mrb[0].mxu0
    %7834 = vmatprep.mubr.f32.mxu0 %v7331
    %7835 = vmatmul.mubr.f32.gmra.mrb[0].mxu0 %v7330
    %v7836 = vpop.f32.mrb[0].mxu0
    %v7837 = vadd.f32 0.0, %v7836
    %v7838 = vpop.f32.mrb[0].mxu0
    %7839 = vmatprep.mubr.f32.mxu0 %v7334
    %7840 = vmatmul.mubr.f32.gmra.mrb[0].mxu0 %v7333
    %v7841 = vpop.f32.mrb[0].mxu0
    %v7842 = vadd.f32 0.0, %v7841
    %v7843 = vpop.f32.mrb[0].mxu0
    %7844 = vmatprep.mubr.f32.mxu0 %v7337
    %7845 = vmatmul.mubr.f32.gmra.mrb[0].mxu0 %v7336
    %v7846 = vpop.f32.mrb[0].mxu0
    %v7847 = vadd.f32 0.0, %v7846
    %v7848 = vpop.f32.mrb[0].mxu0
    %7849 = vmatprep.mubr.f32.mxu0 %v7340
    %7850 = vmatmul.mubr.f32.gmra.mrb[0].mxu0 %v7339
    %v7851 = vpop.f32.mrb[0].mxu0
    %v7852 = vadd.f32 0.0, %v7851
    %v7853 = vpop.f32.mrb[0].mxu0
    %7854 = vmatprep.mubr.f32.mxu0 %v7343
    %7855 = vmatmul.mubr.f32.gmra.mrb[0].mxu0 %v7342
    %v7856 = vpop.f32.mrb[0].mxu0
    %v7857 = vadd.f32 0.0, %v7856
    %v7858 = vpop.f32.mrb[0].mxu0
    %7859 = vmatprep.mubr.f32.mxu0 %v7346
    %7860 = vmatmul.mubr.f32.gmra.mrb[0].mxu0 %v7345
    %v7861 = vpop.f32.mrb[0].mxu0
    %v7862 = vadd.f32 0.0, %v7861
    %v7863 = vpop.f32.mrb[0].mxu0
    %7864 = vmatprep.mubr.f32.mxu0 %v7349
    %7865 = vmatmul.mubr.f32.gmra.mrb[0].mxu0 %v7348
    %v7866 = vpop.f32.mrb[0].mxu0
    %v7867 = vadd.f32 0.0, %v7866
    %v7868 = vpop.f32.mrb[0].mxu0
    %7869 = vmatprep.mubr.f32.mxu0 %v7352
    %7870 = vmatmul.mubr.f32.gmra.mrb[0].mxu0 %v7351
    %v7871 = vpop.f32.mrb[0].mxu0
    %v7872 = vadd.f32 0.0, %v7871
    %v7873 = vpop.f32.mrb[0].mxu0
    %7874 = vmatprep.mubr.f32.mxu0 %v7355
    %7875 = vmatmul.mubr.f32.gmra.mrb[0].mxu0 %v7354
    %v7876 = vpop.f32.mrb[0].mxu0
    %v7877 = vadd.f32 0.0, %v7876
    %v7878 = vpop.f32.mrb[0].mxu0
    %7879 = vmatprep.mubr.f32.mxu0 %v7358
    %7880 = vmatmul.mubr.f32.gmra.mrb[0].mxu0 %v7357
    %v7881 = vpop.f32.mrb[0].mxu0
    %v7882 = vadd.f32 0.0, %v7881
    %v7883 = vpop.f32.mrb[0].mxu0
    %7884 = vmatprep.mubr.f32.mxu0 %v7361
    %7885 = vmatmul.mubr.f32.gmra.mrb[0].mxu0 %v7360
    %v7886 = vpop.f32.mrb[0].mxu0
    %v7887 = vadd.f32 0.0, %v7886
    %v7888 = vpop.f32.mrb[0].mxu0
    %7889 = vmatprep.mubr.f32.mxu0 %v7364
    %7890 = vmatmul.mubr.f32.gmra.mrb[0].mxu0 %v7363
    %v7891 = vpop.f32.mrb[0].mxu0
    %v7892 = vadd.f32 0.0, %v7891
    %v7893 = vpop.f32.mrb[0].mxu0
    %7894 = vmatprep.mubr.f32.mxu0 %v7367
    %7895 = vmatmul.mubr.f32.gmra.mrb[0].mxu0 %v7366
    %v7896 = vpop.f32.mrb[0].mxu0
    %v7897 = vadd.f32 0.0, %v7896
    %v7898 = vpop.f32.mrb[0].mxu0
    %7899 = vmatprep.mubr.f32.mxu0 %v7370
    %7900 = vmatmul.mubr.f32.gmra.mrb[0].mxu0 %v7369
    %v7901 = vpop.f32.mrb[0].mxu0
    %v7902 = vadd.f32 0.0, %v7901
    %v7903 = vpop.f32.mrb[0].mxu0
    %7904 = vmatprep.mubr.f32.mxu0 %v7373
    %7905 = vmatmul.mubr.f32.gmra.mrb[0].mxu0 %v7372
    %v7906 = vpop.f32.mrb[0].mxu0
    %v7907 = vadd.f32 0.0, %v7906
    %v7908 = vpop.f32.mrb[0].mxu0
    %7909 = vmatprep.mubr.f32.mxu0 %v7376
    %7910 = vmatmul.mubr.f32.gmra.mrb[0].mxu0 %v7375
    %v7911 = vpop.f32.mrb[0].mxu0
    %v7912 = vadd.f32 0.0, %v7911
    %v7913 = vpop.f32.mrb[0].mxu0
    %7914 = vmatprep.mubr.f32.mxu0 %v7379
    %7915 = vmatmul.mubr.f32.gmra.mrb[0].mxu0 %v7378
    %v7916 = vpop.f32.mrb[0].mxu0
    %v7917 = vadd.f32 0.0, %v7916
    %v7918 = vpop.f32.mrb[0].mxu0
    %7919 = vmatprep.mubr.f32.mxu0 %v7382
    %7920 = vmatmul.mubr.f32.gmra.mrb[0].mxu0 %v7381
    %v7921 = vpop.f32.mrb[0].mxu0
    %v7922 = vadd.f32 0.0, %v7921
    %v7923 = vpop.f32.mrb[0].mxu0
    %7924 = vmatprep.mubr.f32.mxu0 %v7385
    %7925 = vmatmul.mubr.f32.gmra.mrb[0].mxu0 %v7384
    %v7926 = vpop.f32.mrb[0].mxu0
    %v7927 = vadd.f32 0.0, %v7926
    %v7928 = vpop.f32.mrb[0].mxu0
    %7929 = vmatprep.mubr.f32.mxu0 %v7388
    %7930 = vmatmul.mubr.f32.gmra.mrb[0].mxu0 %v7387
    %v7931 = vpop.f32.mrb[0].mxu0
    %v7932 = vadd.f32 0.0, %v7931
    %v7933 = vpop.f32.mrb[0].mxu0
    %7934 = vmatprep.mubr.f32.mxu0 %v7391
    %7935 = vmatmul.mubr.f32.gmra.mrb[0].mxu0 %v7390
    %v7936 = vpop.f32.mrb[0].mxu0
    %v7937 = vadd.f32 0.0, %v7936
    %v7938 = vpop.f32.mrb[0].mxu0
    %7939 = vmatprep.mubr.f32.mxu0 %v7394
    %7940 = vmatmul.mubr.f32.gmra.mrb[0].mxu0 %v7393
    %v7941 = vpop.f32.mrb[0].mxu0
    %v7942 = vadd.f32 0.0, %v7941
    %v7943 = vpop.f32.mrb[0].mxu0
    %7944 = vmatprep.mubr.f32.mxu0 %v7397
    %7945 = vmatmul.mubr.f32.gmra.mrb[0].mxu0 %v7396
    %v7946 = vpop.f32.mrb[0].mxu0
    %v7947 = vadd.f32 0.0, %v7946
    %v7948 = vpop.f32.mrb[0].mxu0
    %7949 = vmatprep.mubr.f32.mxu0 %v7400
    %7950 = vmatmul.mubr.f32.gmra.mrb[0].mxu0 %v7399
    %v7951 = vpop.f32.mrb[0].mxu0
    %v7952 = vadd.f32 0.0, %v7951
    %v7953 = vpop.f32.mrb[0].mxu0
    %7954 = vmatprep.mubr.f32.mxu0 %v7403
    %7955 = vmatmul.mubr.f32.gmra.mrb[0].mxu0 %v7402
    %v7956 = vpop.f32.mrb[0].mxu0
    %v7957 = vadd.f32 0.0, %v7956
    %v7958 = vpop.f32.mrb[0].mxu0
    %7959 = vmatprep.mubr.f32.mxu0 %v7406
    %7960 = vmatmul.mubr.f32.gmra.mrb[0].mxu0 %v7405
    %v7961 = vpop.f32.mrb[0].mxu0
    %v7962 = vadd.f32 0.0, %v7961
    %v7963 = vpop.f32.mrb[0].mxu0
    %7964 = vmatprep.mubr.f32.mxu0 %v7409
    %7965 = vmatmul.mubr.f32.gmra.mrb[0].mxu0 %v7408
    %v7966 = vpop.f32.mrb[0].mxu0
    %v7967 = vadd.f32 0.0, %v7966
    %v7968 = vpop.f32.mrb[0].mxu0
    %7969 = vmatprep.mubr.f32.mxu0 %v7412
    %7970 = vmatmul.mubr.f32.gmra.mrb[0].mxu0 %v7411
    %v7971 = vpop.f32.mrb[0].mxu0
    %v7972 = vadd.f32 0.0, %v7971
    %v7973 = vpop.f32.mrb[0].mxu0
    %7974 = vmatprep.mubr.f32.mxu0 %v7415
    %7975 = vmatmul.mubr.f32.gmra.mrb[0].mxu0 %v7414
    %v7976 = vpop.f32.mrb[0].mxu0
    %v7977 = vadd.f32 0.0, %v7976
    %v7978 = vpop.f32.mrb[0].mxu0
    %7979 = vmatprep.mubr.f32.mxu0 %v7418
    %7980 = vmatmul.mubr.f32.gmra.mrb[0].mxu0 %v7417
    %v7981 = vpop.f32.mrb[0].mxu0
    %v7982 = vadd.f32 0.0, %v7981
    %v7983 = vpop.f32.mrb[0].mxu0
    %7984 = vmatprep.mubr.f32.mxu0 %v7421
    %7985 = vmatmul.mubr.f32.gmra.mrb[0].mxu0 %v7420
    %v7986 = vpop.f32.mrb[0].mxu0
    %v7987 = vadd.f32 0.0, %v7986
    %v7988 = vpop.f32.mrb[0].mxu0
    %7989 = vmatprep.mubr.f32.mxu0 %v7424
    %7990 = vmatmul.mubr.f32.gmra.mrb[0].mxu0 %v7423
    %v7991 = vpop.f32.mrb[0].mxu0
    %v7992 = vadd.f32 0.0, %v7991
    %v7993 = vpop.f32.mrb[0].mxu0
    %7994 = vmatprep.mubr.f32.mxu0 %v7427
    %7995 = vmatmul.mubr.f32.gmra.mrb[0].mxu0 %v7426
    %v7996 = vpop.f32.mrb[0].mxu0
    %v7997 = vadd.f32 0.0, %v7996
    %v7998 = vpop.f32.mrb[0].mxu0
    %7999 = vmatprep.mubr.f32.mxu0 %v7430
    %8000 = vmatmul.mubr.f32.gmra.mrb[0].mxu0 %v7429
    %v8001 = vpop.f32.mrb[0].mxu0
    %v8002 = vadd.f32 0.0, %v8001
    %v8003 = vpop.f32.mrb[0].mxu0
    %8004 = vmatprep.mubr.f32.mxu0 %v7433
    %8005 = vmatmul.mubr.f32.gmra.mrb[0].mxu0 %v7432
    %v8006 = vpop.f32.mrb[0].mxu0
    %v8007 = vadd.f32 0.0, %v8006
    %v8008 = vpop.f32.mrb[0].mxu0
    %8009 = vmatprep.mubr.f32.mxu0 %v7436
    %8010 = vmatmul.mubr.f32.gmra.mrb[0].mxu0 %v7435
    %v8011 = vpop.f32.mrb[0].mxu0
    %v8012 = vadd.f32 0.0, %v8011
    %v8013 = vpop.f32.mrb[0].mxu0
    %8014 = vmatprep.mubr.f32.mxu0 %v7439
    %8015 = vmatmul.mubr.f32.gmra.mrb[0].mxu0 %v7438
    %v8016 = vpop.f32.mrb[0].mxu0
    %v8017 = vadd.f32 0.0, %v8016
    %v8018 = vpop.f32.mrb[0].mxu0
    %8019 = vmatprep.mubr.f32.mxu0 %v7442
    %8020 = vmatmul.mubr.f32.gmra.mrb[0].mxu0 %v7441
    %v8021 = vpop.f32.mrb[0].mxu0
    %v8022 = vadd.f32 0.0, %v8021
    %v8023 = vpop.f32.mrb[0].mxu0
    %8024 = vmatprep.mubr.f32.mxu0 %v7445
    %8025 = vmatmul.mubr.f32.gmra.mrb[0].mxu0 %v7444
    %v8026 = vpop.f32.mrb[0].mxu0
    %v8027 = vadd.f32 0.0, %v8026
    %v8028 = vpop.f32.mrb[0].mxu0
    %8029 = vmatprep.mubr.f32.mxu0 %v7448
    %8030 = vmatmul.mubr.f32.gmra.mrb[0].mxu0 %v7447
    %v8031 = vpop.f32.mrb[0].mxu0
    %v8032 = vadd.f32 0.0, %v8031
    %v8033 = vpop.f32.mrb[0].mxu0
    %8034 = vmatprep.mubr.f32.mxu0 %v7451
    %8035 = vmatmul.mubr.f32.gmra.mrb[0].mxu0 %v7450
    %v8036 = vpop.f32.mrb[0].mxu0
    %v8037 = vadd.f32 0.0, %v8036
    %v8038 = vpop.f32.mrb[0].mxu0
    %8039 = vmatprep.mubr.f32.mxu0 %v7454
    %8040 = vmatmul.mubr.f32.gmra.mrb[0].mxu0 %v7453
    %v8041 = vpop.f32.mrb[0].mxu0
    %v8042 = vadd.f32 0.0, %v8041
    %v8043 = vpop.f32.mrb[0].mxu0
    %8044 = vmatprep.mubr.f32.mxu0 %v7457
    %8045 = vmatmul.mubr.f32.gmra.mrb[0].mxu0 %v7456
    %v8046 = vpop.f32.mrb[0].mxu0
    %v8047 = vadd.f32 0.0, %v8046
    %v8048 = vpop.f32.mrb[0].mxu0
    %8049 = vmatprep.mubr.f32.mxu0 %v7460
    %8050 = vmatmul.mubr.f32.gmra.mrb[0].mxu0 %v7459
    %v8051 = vpop.f32.mrb[0].mxu0
    %v8052 = vadd.f32 0.0, %v8051
    %v8053 = vpop.f32.mrb[0].mxu0
    %8054 = vmatprep.mubr.f32.mxu0 %v7463
    %8055 = vmatmul.mubr.f32.gmra.mrb[0].mxu0 %v7462
    %v8056 = vpop.f32.mrb[0].mxu0
    %v8057 = vadd.f32 0.0, %v8056
    %v8058 = vpop.f32.mrb[0].mxu0
    %8059 = vmatprep.mubr.f32.mxu0 %v7466
    %8060 = vmatmul.mubr.f32.gmra.mrb[0].mxu0 %v7465
    %v8061 = vpop.f32.mrb[0].mxu0
    %v8062 = vadd.f32 0.0, %v8061
    %v8063 = vpop.f32.mrb[0].mxu0
    %8064 = vmatprep.mubr.f32.mxu0 %v7469
    %8065 = vmatmul.mubr.f32.gmra.mrb[0].mxu0 %v7468
    %v8066 = vpop.f32.mrb[0].mxu0
    %v8067 = vadd.f32 0.0, %v8066
    %v8068 = vpop.f32.mrb[0].mxu0
    %8069 = vmatprep.mubr.f32.mxu0 %v7472
    %8070 = vmatmul.mubr.f32.gmra.mrb[0].mxu0 %v7471
    %v8071 = vpop.f32.mrb[0].mxu0
    %v8072 = vadd.f32 0.0, %v8071
    %v8073 = vpop.f32.mrb[0].mxu0
    %8074 = vmatprep.mubr.f32.mxu0 %v7475
    %8075 = vmatmul.mubr.f32.gmra.mrb[0].mxu0 %v7474
    %v8076 = vpop.f32.mrb[0].mxu0
    %v8077 = vadd.f32 0.0, %v8076
    %v8078 = vpop.f32.mrb[0].mxu0
    %8079 = vmatprep.mubr.f32.mxu0 %v7478
    %8080 = vmatmul.mubr.f32.gmra.mrb[0].mxu0 %v7477
    %v8081 = vpop.f32.mrb[0].mxu0
    %v8082 = vadd.f32 0.0, %v8081
    %v8083 = vpop.f32.mrb[0].mxu0
    %8084 = vmatprep.mubr.f32.mxu0 %v7481
    %8085 = vmatmul.mubr.f32.gmra.mrb[0].mxu0 %v7480
    %v8086 = vpop.f32.mrb[0].mxu0
    %v8087 = vadd.f32 0.0, %v8086
    %v8088 = vpop.f32.mrb[0].mxu0
    %8089 = vmatprep.mubr.f32.mxu0 %v7484
    %8090 = vmatmul.mubr.f32.gmra.mrb[0].mxu0 %v7483
    %v8091 = vpop.f32.mrb[0].mxu0
    %v8092 = vadd.f32 0.0, %v8091
    %v8093 = vpop.f32.mrb[0].mxu0
    %8094 = vmatprep.mubr.f32.mxu0 %v7487
    %8095 = vmatmul.mubr.f32.gmra.mrb[0].mxu0 %v7486
    %v8096 = vpop.f32.mrb[0].mxu0
    %v8097 = vadd.f32 0.0, %v8096
    %v8098 = vpop.f32.mrb[0].mxu0
    %8099 = vmatprep.mubr.f32.mxu0 %v7490
    %8100 = vmatmul.mubr.f32.gmra.mrb[0].mxu0 %v7489
    %v8101 = vpop.f32.mrb[0].mxu0
    %v8102 = vadd.f32 0.0, %v8101
    %v8103 = vpop.f32.mrb[0].mxu0
    %8104 = vdwg.mxu0
    %8105 = vmatprep.subr.mxu0 0.0
    %8106 = vmatpush1.msra.mxu0 %v7524
    %8107 = vmatprep.subr.mxu0 0.0
    %8108 = vmatpush1.msra.mxu0 %v7525
    %8109 = vmatprep.subr.mxu0 0.0
    %8110 = vmatpush1.msra.mxu0 %v7526
    %8111 = vmatprep.subr.mxu0 0.0
    %8112 = vmatpush1.msra.mxu0 %v7527
    %8113 = vmatprep.subr.mxu0 0.0
    %8114 = vmatpush1.msra.mxu0 0.0
    %8115 = vmatprep.subr.mxu0 0.0
    %8116 = vmatpush1.msra.mxu0 0.0
    %8117 = vmatprep.subr.mxu0 0.0
    %8118 = vmatpush1.msra.mxu0 0.0
    %8119 = vmatprep.subr.mxu0 0.0
    %8120 = vmatpush1.msra.mxu0 0.0
    %8121 = vmatprep.subr.mxu0 0.0
    %8122 = vmatpush1.msra.mxu0 0.0
    %8123 = vmatprep.subr.mxu0 0.0
    %8124 = vmatpush1.msra.mxu0 0.0
    %8125 = vmatprep.subr.mxu0 0.0
    %8126 = vmatpush1.msra.mxu0 0.0
    %8127 = vmatprep.subr.mxu0 0.0
    %8128 = vmatpush1.msra.mxu0 0.0
    %8129 = vmatprep.subr.mxu0 0.0
    %8130 = vmatpush1.msra.mxu0 0.0
    %8131 = vmatprep.subr.mxu0 0.0
    %8132 = vmatpush1.msra.mxu0 0.0
    %8133 = vmatprep.subr.mxu0 0.0
    %8134 = vmatpush1.msra.mxu0 0.0
    %8135 = vmatprep.subr.mxu0 0.0
    %8136 = vmatpush1.msra.mxu0 0.0
    %8137 = vmatprep.subr.mxu0 0.0
    %8138 = vmatpush1.msra.mxu0 0.0
    %8139 = vmatprep.subr.mxu0 0.0
    %8140 = vmatpush1.msra.mxu0 0.0
    %8141 = vmatprep.subr.mxu0 0.0
    %8142 = vmatpush1.msra.mxu0 0.0
    %8143 = vmatprep.subr.mxu0 0.0
    %8144 = vmatpush1.msra.mxu0 0.0
    %8145 = vmatprep.subr.mxu0 0.0
    %8146 = vmatpush1.msra.mxu0 0.0
    %8147 = vmatprep.subr.mxu0 0.0
    %8148 = vmatpush1.msra.mxu0 0.0
    %8149 = vmatprep.subr.mxu0 0.0
    %8150 = vmatpush1.msra.mxu0 0.0
    %8151 = vmatprep.subr.mxu0 0.0
    %8152 = vmatpush1.msra.mxu0 0.0
    %8153 = vmatprep.subr.mxu0 0.0
    %8154 = vmatpush1.msra.mxu0 0.0
    %8155 = vmatprep.subr.mxu0 0.0
    %8156 = vmatpush1.msra.mxu0 0.0
    %8157 = vmatprep.subr.mxu0 0.0
    %8158 = vmatpush1.msra.mxu0 0.0
    %8159 = vmatprep.subr.mxu0 0.0
    %8160 = vmatpush1.msra.mxu0 0.0
    %8161 = vmatprep.subr.mxu0 0.0
    %8162 = vmatpush1.msra.mxu0 0.0
    %8163 = vmatprep.subr.mxu0 0.0
    %8164 = vmatpush1.msra.mxu0 0.0
    %8165 = vmatprep.subr.mxu0 0.0
    %8166 = vmatpush1.msra.mxu0 0.0
    %8167 = vmatprep.subr.mxu0 0.0
    %8168 = vmatpush1.msra.mxu0 0.0
    %8169 = vmatprep.mubr.f32.mxu0 0.0
    %8170 = vmatmul.mubr.f32.gmra.mrb[0].mxu0 %v7529
    %v8171 = vpop.f32.mrb[0].mxu0
    %v8172 = vadd.f32 %v7787, %v8171
    %v8173 = vpop.f32.mrb[0].mxu0
    %8174 = vmatprep.mubr.f32.mxu0 0.0
    %8175 = vmatmul.mubr.f32.gmra.mrb[0].mxu0 %v7532
    %v8176 = vpop.f32.mrb[0].mxu0
    %v8177 = vadd.f32 %v7792, %v8176
    %v8178 = vpop.f32.mrb[0].mxu0
    %8179 = vmatprep.mubr.f32.mxu0 0.0
    %8180 = vmatmul.mubr.f32.gmra.mrb[0].mxu0 %v7535
    %v8181 = vpop.f32.mrb[0].mxu0
    %v8182 = vadd.f32 %v7797, %v8181
    %v8183 = vpop.f32.mrb[0].mxu0
    %8184 = vmatprep.mubr.f32.mxu0 0.0
    %8185 = vmatmul.mubr.f32.gmra.mrb[0].mxu0 %v7538
    %v8186 = vpop.f32.mrb[0].mxu0
    %v8187 = vadd.f32 %v7802, %v8186
    %v8188 = vpop.f32.mrb[0].mxu0
    %8189 = vmatprep.mubr.f32.mxu0 0.0
    %8190 = vmatmul.mubr.f32.gmra.mrb[0].mxu0 %v7541
    %v8191 = vpop.f32.mrb[0].mxu0
    %v8192 = vadd.f32 %v7807, %v8191
    %v8193 = vpop.f32.mrb[0].mxu0
    %8194 = vmatprep.mubr.f32.mxu0 0.0
    %8195 = vmatmul.mubr.f32.gmra.mrb[0].mxu0 %v7544
    %v8196 = vpop.f32.mrb[0].mxu0
    %v8197 = vadd.f32 %v7812, %v8196
    %v8198 = vpop.f32.mrb[0].mxu0
    %8199 = vmatprep.mubr.f32.mxu0 0.0
    %8200 = vmatmul.mubr.f32.gmra.mrb[0].mxu0 %v7547
    %v8201 = vpop.f32.mrb[0].mxu0
    %v8202 = vadd.f32 %v7817, %v8201
    %v8203 = vpop.f32.mrb[0].mxu0
    %8204 = vmatprep.mubr.f32.mxu0 0.0
    %8205 = vmatmul.mubr.f32.gmra.mrb[0].mxu0 %v7550
    %v8206 = vpop.f32.mrb[0].mxu0
    %v8207 = vadd.f32 %v7822, %v8206
    %v8208 = vpop.f32.mrb[0].mxu0
    %8209 = vmatprep.mubr.f32.mxu0 0.0
    %8210 = vmatmul.mubr.f32.gmra.mrb[0].mxu0 %v7553
    %v8211 = vpop.f32.mrb[0].mxu0
    %v8212 = vadd.f32 %v7827, %v8211
    %v8213 = vpop.f32.mrb[0].mxu0
    %8214 = vmatprep.mubr.f32.mxu0 0.0
    %8215 = vmatmul.mubr.f32.gmra.mrb[0].mxu0 %v7556
    %v8216 = vpop.f32.mrb[0].mxu0
    %v8217 = vadd.f32 %v7832, %v8216
    %v8218 = vpop.f32.mrb[0].mxu0
    %8219 = vmatprep.mubr.f32.mxu0 0.0
    %8220 = vmatmul.mubr.f32.gmra.mrb[0].mxu0 %v7559
    %v8221 = vpop.f32.mrb[0].mxu0
    %v8222 = vadd.f32 %v7837, %v8221
    %v8223 = vpop.f32.mrb[0].mxu0
    %8224 = vmatprep.mubr.f32.mxu0 0.0
    %8225 = vmatmul.mubr.f32.gmra.mrb[0].mxu0 %v7562
    %v8226 = vpop.f32.mrb[0].mxu0
    %v8227 = vadd.f32 %v7842, %v8226
    %v8228 = vpop.f32.mrb[0].mxu0
    %8229 = vmatprep.mubr.f32.mxu0 0.0
    %8230 = vmatmul.mubr.f32.gmra.mrb[0].mxu0 %v7565
    %v8231 = vpop.f32.mrb[0].mxu0
    %v8232 = vadd.f32 %v7847, %v8231
    %v8233 = vpop.f32.mrb[0].mxu0
    %8234 = vmatprep.mubr.f32.mxu0 0.0
    %8235 = vmatmul.mubr.f32.gmra.mrb[0].mxu0 %v7568
    %v8236 = vpop.f32.mrb[0].mxu0
    %v8237 = vadd.f32 %v7852, %v8236
    %v8238 = vpop.f32.mrb[0].mxu0
    %8239 = vmatprep.mubr.f32.mxu0 0.0
    %8240 = vmatmul.mubr.f32.gmra.mrb[0].mxu0 %v7571
    %v8241 = vpop.f32.mrb[0].mxu0
    %v8242 = vadd.f32 %v7857, %v8241
    %v8243 = vpop.f32.mrb[0].mxu0
    %8244 = vmatprep.mubr.f32.mxu0 0.0
    %8245 = vmatmul.mubr.f32.gmra.mrb[0].mxu0 %v7574
    %v8246 = vpop.f32.mrb[0].mxu0
    %v8247 = vadd.f32 %v7862, %v8246
    %v8248 = vpop.f32.mrb[0].mxu0
    %8249 = vmatprep.mubr.f32.mxu0 0.0
    %8250 = vmatmul.mubr.f32.gmra.mrb[0].mxu0 %v7577
    %v8251 = vpop.f32.mrb[0].mxu0
    %v8252 = vadd.f32 %v7867, %v8251
    %v8253 = vpop.f32.mrb[0].mxu0
    %8254 = vmatprep.mubr.f32.mxu0 0.0
    %8255 = vmatmul.mubr.f32.gmra.mrb[0].mxu0 %v7580
    %v8256 = vpop.f32.mrb[0].mxu0
    %v8257 = vadd.f32 %v7872, %v8256
    %v8258 = vpop.f32.mrb[0].mxu0
    %8259 = vmatprep.mubr.f32.mxu0 0.0
    %8260 = vmatmul.mubr.f32.gmra.mrb[0].mxu0 %v7583
    %v8261 = vpop.f32.mrb[0].mxu0
    %v8262 = vadd.f32 %v7877, %v8261
    %v8263 = vpop.f32.mrb[0].mxu0
    %8264 = vmatprep.mubr.f32.mxu0 0.0
    %8265 = vmatmul.mubr.f32.gmra.mrb[0].mxu0 %v7586
    %v8266 = vpop.f32.mrb[0].mxu0
    %v8267 = vadd.f32 %v7882, %v8266
    %v8268 = vpop.f32.mrb[0].mxu0
    %8269 = vmatprep.mubr.f32.mxu0 0.0
    %8270 = vmatmul.mubr.f32.gmra.mrb[0].mxu0 %v7589
    %v8271 = vpop.f32.mrb[0].mxu0
    %v8272 = vadd.f32 %v7887, %v8271
    %v8273 = vpop.f32.mrb[0].mxu0
    %8274 = vmatprep.mubr.f32.mxu0 0.0
    %8275 = vmatmul.mubr.f32.gmra.mrb[0].mxu0 %v7592
    %v8276 = vpop.f32.mrb[0].mxu0
    %v8277 = vadd.f32 %v7892, %v8276
    %v8278 = vpop.f32.mrb[0].mxu0
    %8279 = vmatprep.mubr.f32.mxu0 0.0
    %8280 = vmatmul.mubr.f32.gmra.mrb[0].mxu0 %v7595
    %v8281 = vpop.f32.mrb[0].mxu0
    %v8282 = vadd.f32 %v7897, %v8281
    %v8283 = vpop.f32.mrb[0].mxu0
    %8284 = vmatprep.mubr.f32.mxu0 0.0
    %8285 = vmatmul.mubr.f32.gmra.mrb[0].mxu0 %v7598
    %v8286 = vpop.f32.mrb[0].mxu0
    %v8287 = vadd.f32 %v7902, %v8286
    %v8288 = vpop.f32.mrb[0].mxu0
    %8289 = vmatprep.mubr.f32.mxu0 0.0
    %8290 = vmatmul.mubr.f32.gmra.mrb[0].mxu0 %v7601
    %v8291 = vpop.f32.mrb[0].mxu0
    %v8292 = vadd.f32 %v7907, %v8291
    %v8293 = vpop.f32.mrb[0].mxu0
    %8294 = vmatprep.mubr.f32.mxu0 0.0
    %8295 = vmatmul.mubr.f32.gmra.mrb[0].mxu0 %v7604
    %v8296 = vpop.f32.mrb[0].mxu0
    %v8297 = vadd.f32 %v7912, %v8296
    %v8298 = vpop.f32.mrb[0].mxu0
    %8299 = vmatprep.mubr.f32.mxu0 0.0
    %8300 = vmatmul.mubr.f32.gmra.mrb[0].mxu0 %v7607
    %v8301 = vpop.f32.mrb[0].mxu0
    %v8302 = vadd.f32 %v7917, %v8301
    %v8303 = vpop.f32.mrb[0].mxu0
    %8304 = vmatprep.mubr.f32.mxu0 0.0
    %8305 = vmatmul.mubr.f32.gmra.mrb[0].mxu0 %v7610
    %v8306 = vpop.f32.mrb[0].mxu0
    %v8307 = vadd.f32 %v7922, %v8306
    %v8308 = vpop.f32.mrb[0].mxu0
    %8309 = vmatprep.mubr.f32.mxu0 0.0
    %8310 = vmatmul.mubr.f32.gmra.mrb[0].mxu0 %v7613
    %v8311 = vpop.f32.mrb[0].mxu0
    %v8312 = vadd.f32 %v7927, %v8311
    %v8313 = vpop.f32.mrb[0].mxu0
    %8314 = vmatprep.mubr.f32.mxu0 0.0
    %8315 = vmatmul.mubr.f32.gmra.mrb[0].mxu0 %v7616
    %v8316 = vpop.f32.mrb[0].mxu0
    %v8317 = vadd.f32 %v7932, %v8316
    %v8318 = vpop.f32.mrb[0].mxu0
    %8319 = vmatprep.mubr.f32.mxu0 0.0
    %8320 = vmatmul.mubr.f32.gmra.mrb[0].mxu0 %v7619
    %v8321 = vpop.f32.mrb[0].mxu0
    %v8322 = vadd.f32 %v7937, %v8321
    %v8323 = vpop.f32.mrb[0].mxu0
    %8324 = vmatprep.mubr.f32.mxu0 0.0
    %8325 = vmatmul.mubr.f32.gmra.mrb[0].mxu0 %v7622
    %v8326 = vpop.f32.mrb[0].mxu0
    %v8327 = vadd.f32 %v7942, %v8326
    %v8328 = vpop.f32.mrb[0].mxu0
    %8329 = vmatprep.mubr.f32.mxu0 0.0
    %8330 = vmatmul.mubr.f32.gmra.mrb[0].mxu0 %v7625
    %v8331 = vpop.f32.mrb[0].mxu0
    %v8332 = vadd.f32 %v7947, %v8331
    %v8333 = vpop.f32.mrb[0].mxu0
    %8334 = vmatprep.mubr.f32.mxu0 0.0
    %8335 = vmatmul.mubr.f32.gmra.mrb[0].mxu0 %v7628
    %v8336 = vpop.f32.mrb[0].mxu0
    %v8337 = vadd.f32 %v7952, %v8336
    %v8338 = vpop.f32.mrb[0].mxu0
    %8339 = vmatprep.mubr.f32.mxu0 0.0
    %8340 = vmatmul.mubr.f32.gmra.mrb[0].mxu0 %v7631
    %v8341 = vpop.f32.mrb[0].mxu0
    %v8342 = vadd.f32 %v7957, %v8341
    %v8343 = vpop.f32.mrb[0].mxu0
    %8344 = vmatprep.mubr.f32.mxu0 0.0
    %8345 = vmatmul.mubr.f32.gmra.mrb[0].mxu0 %v7634
    %v8346 = vpop.f32.mrb[0].mxu0
    %v8347 = vadd.f32 %v7962, %v8346
    %v8348 = vpop.f32.mrb[0].mxu0
    %8349 = vmatprep.mubr.f32.mxu0 0.0
    %8350 = vmatmul.mubr.f32.gmra.mrb[0].mxu0 %v7637
    %v8351 = vpop.f32.mrb[0].mxu0
    %v8352 = vadd.f32 %v7967, %v8351
    %v8353 = vpop.f32.mrb[0].mxu0
    %8354 = vmatprep.mubr.f32.mxu0 0.0
    %8355 = vmatmul.mubr.f32.gmra.mrb[0].mxu0 %v7640
    %v8356 = vpop.f32.mrb[0].mxu0
    %v8357 = vadd.f32 %v7972, %v8356
    %v8358 = vpop.f32.mrb[0].mxu0
    %8359 = vmatprep.mubr.f32.mxu0 0.0
    %8360 = vmatmul.mubr.f32.gmra.mrb[0].mxu0 %v7643
    %v8361 = vpop.f32.mrb[0].mxu0
    %v8362 = vadd.f32 %v7977, %v8361
    %v8363 = vpop.f32.mrb[0].mxu0
    %8364 = vmatprep.mubr.f32.mxu0 0.0
    %8365 = vmatmul.mubr.f32.gmra.mrb[0].mxu0 %v7646
    %v8366 = vpop.f32.mrb[0].mxu0
    %v8367 = vadd.f32 %v7982, %v8366
    %v8368 = vpop.f32.mrb[0].mxu0
    %8369 = vmatprep.mubr.f32.mxu0 0.0
    %8370 = vmatmul.mubr.f32.gmra.mrb[0].mxu0 %v7649
    %v8371 = vpop.f32.mrb[0].mxu0
    %v8372 = vadd.f32 %v7987, %v8371
    %v8373 = vpop.f32.mrb[0].mxu0
    %8374 = vmatprep.mubr.f32.mxu0 0.0
    %8375 = vmatmul.mubr.f32.gmra.mrb[0].mxu0 %v7652
    %v8376 = vpop.f32.mrb[0].mxu0
    %v8377 = vadd.f32 %v7992, %v8376
    %v8378 = vpop.f32.mrb[0].mxu0
    %8379 = vmatprep.mubr.f32.mxu0 0.0
    %8380 = vmatmul.mubr.f32.gmra.mrb[0].mxu0 %v7655
    %v8381 = vpop.f32.mrb[0].mxu0
    %v8382 = vadd.f32 %v7997, %v8381
    %v8383 = vpop.f32.mrb[0].mxu0
    %8384 = vmatprep.mubr.f32.mxu0 0.0
    %8385 = vmatmul.mubr.f32.gmra.mrb[0].mxu0 %v7658
    %v8386 = vpop.f32.mrb[0].mxu0
    %v8387 = vadd.f32 %v8002, %v8386
    %v8388 = vpop.f32.mrb[0].mxu0
    %8389 = vmatprep.mubr.f32.mxu0 0.0
    %8390 = vmatmul.mubr.f32.gmra.mrb[0].mxu0 %v7661
    %v8391 = vpop.f32.mrb[0].mxu0
    %v8392 = vadd.f32 %v8007, %v8391
    %v8393 = vpop.f32.mrb[0].mxu0
    %8394 = vmatprep.mubr.f32.mxu0 0.0
    %8395 = vmatmul.mubr.f32.gmra.mrb[0].mxu0 %v7664
    %v8396 = vpop.f32.mrb[0].mxu0
    %v8397 = vadd.f32 %v8012, %v8396
    %v8398 = vpop.f32.mrb[0].mxu0
    %8399 = vmatprep.mubr.f32.mxu0 0.0
    %8400 = vmatmul.mubr.f32.gmra.mrb[0].mxu0 %v7667
    %v8401 = vpop.f32.mrb[0].mxu0
    %v8402 = vadd.f32 %v8017, %v8401
    %v8403 = vpop.f32.mrb[0].mxu0
    %8404 = vmatprep.mubr.f32.mxu0 0.0
    %8405 = vmatmul.mubr.f32.gmra.mrb[0].mxu0 %v7670
    %v8406 = vpop.f32.mrb[0].mxu0
    %v8407 = vadd.f32 %v8022, %v8406
    %v8408 = vpop.f32.mrb[0].mxu0
    %8409 = vmatprep.mubr.f32.mxu0 0.0
    %8410 = vmatmul.mubr.f32.gmra.mrb[0].mxu0 %v7673
    %v8411 = vpop.f32.mrb[0].mxu0
    %v8412 = vadd.f32 %v8027, %v8411
    %v8413 = vpop.f32.mrb[0].mxu0
    %8414 = vmatprep.mubr.f32.mxu0 0.0
    %8415 = vmatmul.mubr.f32.gmra.mrb[0].mxu0 %v7676
    %v8416 = vpop.f32.mrb[0].mxu0
    %v8417 = vadd.f32 %v8032, %v8416
    %v8418 = vpop.f32.mrb[0].mxu0
    %8419 = vmatprep.mubr.f32.mxu0 0.0
    %8420 = vmatmul.mubr.f32.gmra.mrb[0].mxu0 %v7679
    %v8421 = vpop.f32.mrb[0].mxu0
    %v8422 = vadd.f32 %v8037, %v8421
    %v8423 = vpop.f32.mrb[0].mxu0
    %8424 = vmatprep.mubr.f32.mxu0 0.0
    %8425 = vmatmul.mubr.f32.gmra.mrb[0].mxu0 %v7682
    %v8426 = vpop.f32.mrb[0].mxu0
    %v8427 = vadd.f32 %v8042, %v8426
    %v8428 = vpop.f32.mrb[0].mxu0
    %8429 = vmatprep.mubr.f32.mxu0 0.0
    %8430 = vmatmul.mubr.f32.gmra.mrb[0].mxu0 %v7685
    %v8431 = vpop.f32.mrb[0].mxu0
    %v8432 = vadd.f32 %v8047, %v8431
    %v8433 = vpop.f32.mrb[0].mxu0
    %8434 = vmatprep.mubr.f32.mxu0 0.0
    %8435 = vmatmul.mubr.f32.gmra.mrb[0].mxu0 %v7688
    %v8436 = vpop.f32.mrb[0].mxu0
    %v8437 = vadd.f32 %v8052, %v8436
    %v8438 = vpop.f32.mrb[0].mxu0
    %8439 = vmatprep.mubr.f32.mxu0 0.0
    %8440 = vmatmul.mubr.f32.gmra.mrb[0].mxu0 %v7691
    %v8441 = vpop.f32.mrb[0].mxu0
    %v8442 = vadd.f32 %v8057, %v8441
    %v8443 = vpop.f32.mrb[0].mxu0
    %8444 = vmatprep.mubr.f32.mxu0 0.0
    %8445 = vmatmul.mubr.f32.gmra.mrb[0].mxu0 %v7694
    %v8446 = vpop.f32.mrb[0].mxu0
    %v8447 = vadd.f32 %v8062, %v8446
    %v8448 = vpop.f32.mrb[0].mxu0
    %8449 = vmatprep.mubr.f32.mxu0 0.0
    %8450 = vmatmul.mubr.f32.gmra.mrb[0].mxu0 %v7697
    %v8451 = vpop.f32.mrb[0].mxu0
    %v8452 = vadd.f32 %v8067, %v8451
    %v8453 = vpop.f32.mrb[0].mxu0
    %8454 = vmatprep.mubr.f32.mxu0 0.0
    %8455 = vmatmul.mubr.f32.gmra.mrb[0].mxu0 %v7700
    %v8456 = vpop.f32.mrb[0].mxu0
    %v8457 = vadd.f32 %v8072, %v8456
    %v8458 = vpop.f32.mrb[0].mxu0
    %8459 = vmatprep.mubr.f32.mxu0 0.0
    %8460 = vmatmul.mubr.f32.gmra.mrb[0].mxu0 %v7703
    %v8461 = vpop.f32.mrb[0].mxu0
    %v8462 = vadd.f32 %v8077, %v8461
    %v8463 = vpop.f32.mrb[0].mxu0
    %8464 = vmatprep.mubr.f32.mxu0 0.0
    %8465 = vmatmul.mubr.f32.gmra.mrb[0].mxu0 %v7706
    %v8466 = vpop.f32.mrb[0].mxu0
    %v8467 = vadd.f32 %v8082, %v8466
    %v8468 = vpop.f32.mrb[0].mxu0
    %8469 = vmatprep.mubr.f32.mxu0 0.0
    %8470 = vmatmul.mubr.f32.gmra.mrb[0].mxu0 %v7709
    %v8471 = vpop.f32.mrb[0].mxu0
    %v8472 = vadd.f32 %v8087, %v8471
    %v8473 = vpop.f32.mrb[0].mxu0
    %8474 = vmatprep.mubr.f32.mxu0 0.0
    %8475 = vmatmul.mubr.f32.gmra.mrb[0].mxu0 %v7712
    %v8476 = vpop.f32.mrb[0].mxu0
    %v8477 = vadd.f32 %v8092, %v8476
    %v8478 = vpop.f32.mrb[0].mxu0
    %8479 = vmatprep.mubr.f32.mxu0 0.0
    %8480 = vmatmul.mubr.f32.gmra.mrb[0].mxu0 %v7715
    %v8481 = vpop.f32.mrb[0].mxu0
    %v8482 = vadd.f32 %v8097, %v8481
    %v8483 = vpop.f32.mrb[0].mxu0
    %8484 = vmatprep.mubr.f32.mxu0 0.0
    %8485 = vmatmul.mubr.f32.gmra.mrb[0].mxu0 %v7718
    %v8486 = vpop.f32.mrb[0].mxu0
    %v8487 = vadd.f32 %v8102, %v8486
    %v8488 = vpop.f32.mrb[0].mxu0
    %8489 = vdwg.mxu0
    %v8490 = vld [vmem:[%s6] sm:$0x1]
    %v8491 = vld [vmem:[%s7] sm:$0x1]
    %v8492 = vsel %vm94, %v8172, 0.0
    %v8493 = vsel %vm94, %v8177, 0.0
    %v8494 = vadd.f32 %v8492, %v8493
    %v8495 = vsel %vm94, %v8182, 0.0
    %v8496 = vadd.f32 %v8494, %v8495
    %v8497 = vsel %vm94, %v8187, 0.0
    %v8498 = vadd.f32 %v8496, %v8497
    %v8499 = vsel %vm94, %v8192, 0.0
    %v8500 = vadd.f32 %v8498, %v8499
    %v8501 = vsel %vm94, %v8197, 0.0
    %v8502 = vadd.f32 %v8500, %v8501
    %v8503 = vsel %vm94, %v8202, 0.0
    %v8504 = vadd.f32 %v8502, %v8503
    %v8505 = vsel %vm94, %v8207, 0.0
    %v8506 = vadd.f32 %v8504, %v8505
    %v8507 = vsel %vm94, %v8212, 0.0
    %v8508 = vadd.f32 %v8506, %v8507
    %v8509 = vsel %vm94, %v8217, 0.0
    %v8510 = vadd.f32 %v8508, %v8509
    %v8511 = vsel %vm94, %v8222, 0.0
    %v8512 = vadd.f32 %v8510, %v8511
    %v8513 = vsel %vm94, %v8227, 0.0
    %v8514 = vadd.f32 %v8512, %v8513
    %v8515 = vsel %vm94, %v8232, 0.0
    %v8516 = vadd.f32 %v8514, %v8515
    %v8517 = vsel %vm94, %v8237, 0.0
    %v8518 = vadd.f32 %v8516, %v8517
    %v8519 = vsel %vm94, %v8242, 0.0
    %v8520 = vadd.f32 %v8518, %v8519
    %v8521 = vsel %vm94, %v8247, 0.0
    %v8522 = vadd.f32 %v8520, %v8521
    %v8523 = vsel %vm94, %v8252, 0.0
    %v8524 = vadd.f32 %v8522, %v8523
    %v8525 = vsel %vm94, %v8257, 0.0
    %v8526 = vadd.f32 %v8524, %v8525
    %v8527 = vsel %vm94, %v8262, 0.0
    %v8528 = vadd.f32 %v8526, %v8527
    %v8529 = vsel %vm94, %v8267, 0.0
    %v8530 = vadd.f32 %v8528, %v8529
    %v8531 = vsel %vm94, %v8272, 0.0
    %v8532 = vadd.f32 %v8530, %v8531
    %v8533 = vsel %vm94, %v8277, 0.0
    %v8534 = vadd.f32 %v8532, %v8533
    %v8535 = vsel %vm94, %v8282, 0.0
    %v8536 = vadd.f32 %v8534, %v8535
    %v8537 = vsel %vm94, %v8287, 0.0
    %v8538 = vadd.f32 %v8536, %v8537
    %v8539 = vsel %vm94, %v8292, 0.0
    %v8540 = vadd.f32 %v8538, %v8539
    %v8541 = vsel %vm94, %v8297, 0.0
    %v8542 = vadd.f32 %v8540, %v8541
    %v8543 = vsel %vm94, %v8302, 0.0
    %v8544 = vadd.f32 %v8542, %v8543
    %v8545 = vsel %vm94, %v8307, 0.0
    %v8546 = vadd.f32 %v8544, %v8545
    %v8547 = vsel %vm94, %v8312, 0.0
    %v8548 = vadd.f32 %v8546, %v8547
    %v8549 = vsel %vm94, %v8317, 0.0
    %v8550 = vadd.f32 %v8548, %v8549
    %v8551 = vsel %vm94, %v8322, 0.0
    %v8552 = vadd.f32 %v8550, %v8551
    %v8553 = vsel %vm94, %v8327, 0.0
    %v8554 = vadd.f32 %v8552, %v8553
    %v8555 = vsel %vm94, %v8332, 0.0
    %v8556 = vadd.f32 %v8554, %v8555
    %v8557 = vsel %vm94, %v8337, 0.0
    %v8558 = vadd.f32 %v8556, %v8557
    %v8559 = vsel %vm94, %v8342, 0.0
    %v8560 = vadd.f32 %v8558, %v8559
    %v8561 = vsel %vm94, %v8347, 0.0
    %v8562 = vadd.f32 %v8560, %v8561
    %v8563 = vsel %vm94, %v8352, 0.0
    %v8564 = vadd.f32 %v8562, %v8563
    %v8565 = vsel %vm94, %v8357, 0.0
    %v8566 = vadd.f32 %v8564, %v8565
    %v8567 = vsel %vm94, %v8362, 0.0
    %v8568 = vadd.f32 %v8566, %v8567
    %v8569 = vsel %vm94, %v8367, 0.0
    %v8570 = vadd.f32 %v8568, %v8569
    %v8571 = vsel %vm94, %v8372, 0.0
    %v8572 = vadd.f32 %v8570, %v8571
    %v8573 = vsel %vm94, %v8377, 0.0
    %v8574 = vadd.f32 %v8572, %v8573
    %v8575 = vsel %vm94, %v8382, 0.0
    %v8576 = vadd.f32 %v8574, %v8575
    %v8577 = vsel %vm94, %v8387, 0.0
    %v8578 = vadd.f32 %v8576, %v8577
    %v8579 = vsel %vm94, %v8392, 0.0
    %v8580 = vadd.f32 %v8578, %v8579
    %v8581 = vsel %vm94, %v8397, 0.0
    %v8582 = vadd.f32 %v8580, %v8581
    %v8583 = vsel %vm94, %v8402, 0.0
    %v8584 = vadd.f32 %v8582, %v8583
    %v8585 = vsel %vm94, %v8407, 0.0
    %v8586 = vadd.f32 %v8584, %v8585
    %v8587 = vsel %vm94, %v8412, 0.0
    %v8588 = vadd.f32 %v8586, %v8587
    %v8589 = vsel %vm94, %v8417, 0.0
    %v8590 = vadd.f32 %v8588, %v8589
    %v8591 = vsel %vm94, %v8422, 0.0
    %v8592 = vadd.f32 %v8590, %v8591
    %v8593 = vsel %vm94, %v8427, 0.0
    %v8594 = vadd.f32 %v8592, %v8593
    %v8595 = vsel %vm94, %v8432, 0.0
    %v8596 = vadd.f32 %v8594, %v8595
    %v8597 = vsel %vm94, %v8437, 0.0
    %v8598 = vadd.f32 %v8596, %v8597
    %v8599 = vsel %vm94, %v8442, 0.0
    %v8600 = vadd.f32 %v8598, %v8599
    %v8601 = vsel %vm94, %v8447, 0.0
    %v8602 = vadd.f32 %v8600, %v8601
    %v8603 = vsel %vm94, %v8452, 0.0
    %v8604 = vadd.f32 %v8602, %v8603
    %v8605 = vsel %vm94, %v8457, 0.0
    %v8606 = vadd.f32 %v8604, %v8605
    %v8607 = vsel %vm94, %v8462, 0.0
    %v8608 = vadd.f32 %v8606, %v8607
    %v8609 = vsel %vm94, %v8467, 0.0
    %v8610 = vadd.f32 %v8608, %v8609
    %v8611 = vsel %vm94, %v8472, 0.0
    %v8612 = vadd.f32 %v8610, %v8611
    %v8613 = vsel %vm94, %v8477, 0.0
    %v8614 = vadd.f32 %v8612, %v8613
    %v8615 = vsel %vm94, %v8482, 0.0
    %v8616 = vadd.f32 %v8614, %v8615
    %v8617 = vsel %vm94, %v8487, 0.0
    %v8618 = vadd.f32 %v8616, %v8617
    %v8619 = vrot.slane %v8618, 4
    %v8620 = vadd.f32 %v8618, %v8619
    %v8621 = vrot.slane %v8620, 2
    %v8622 = vadd.f32 %v8620, %v8621
    %v8623 = vrot.slane %v8622, 1
    %v8624 = vadd.f32 %v8622, %v8623
    %v8625 = vmul.f32 %v8172, %v8172
    %v8626 = vmul.f32 %v8177, %v8177
    %v8627 = vmul.f32 %v8182, %v8182
    %v8628 = vmul.f32 %v8187, %v8187
    %v8629 = vmul.f32 %v8192, %v8192
    %v8630 = vmul.f32 %v8197, %v8197
    %v8631 = vmul.f32 %v8202, %v8202
    %v8632 = vmul.f32 %v8207, %v8207
    %v8633 = vmul.f32 %v8212, %v8212
    %v8634 = vmul.f32 %v8217, %v8217
    %v8635 = vmul.f32 %v8222, %v8222
    %v8636 = vmul.f32 %v8227, %v8227
    %v8637 = vmul.f32 %v8232, %v8232
    %v8638 = vmul.f32 %v8237, %v8237
    %v8639 = vmul.f32 %v8242, %v8242
    %v8640 = vmul.f32 %v8247, %v8247
    %v8641 = vmul.f32 %v8252, %v8252
    %v8642 = vmul.f32 %v8257, %v8257
    %v8643 = vmul.f32 %v8262, %v8262
    %v8644 = vmul.f32 %v8267, %v8267
    %v8645 = vmul.f32 %v8272, %v8272
    %v8646 = vmul.f32 %v8277, %v8277
    %v8647 = vmul.f32 %v8282, %v8282
    %v8648 = vmul.f32 %v8287, %v8287
    %v8649 = vmul.f32 %v8292, %v8292
    %v8650 = vmul.f32 %v8297, %v8297
    %v8651 = vmul.f32 %v8302, %v8302
    %v8652 = vmul.f32 %v8307, %v8307
    %v8653 = vmul.f32 %v8312, %v8312
    %v8654 = vmul.f32 %v8317, %v8317
    %v8655 = vmul.f32 %v8322, %v8322
    %v8656 = vmul.f32 %v8327, %v8327
    %v8657 = vmul.f32 %v8332, %v8332
    %v8658 = vmul.f32 %v8337, %v8337
    %v8659 = vmul.f32 %v8342, %v8342
    %v8660 = vmul.f32 %v8347, %v8347
    %v8661 = vmul.f32 %v8352, %v8352
    %v8662 = vmul.f32 %v8357, %v8357
    %v8663 = vmul.f32 %v8362, %v8362
    %v8664 = vmul.f32 %v8367, %v8367
    %v8665 = vmul.f32 %v8372, %v8372
    %v8666 = vmul.f32 %v8377, %v8377
    %v8667 = vmul.f32 %v8382, %v8382
    %v8668 = vmul.f32 %v8387, %v8387
    %v8669 = vmul.f32 %v8392, %v8392
    %v8670 = vmul.f32 %v8397, %v8397
    %v8671 = vmul.f32 %v8402, %v8402
    %v8672 = vmul.f32 %v8407, %v8407
    %v8673 = vmul.f32 %v8412, %v8412
    %v8674 = vmul.f32 %v8417, %v8417
    %v8675 = vmul.f32 %v8422, %v8422
    %v8676 = vmul.f32 %v8427, %v8427
    %v8677 = vmul.f32 %v8432, %v8432
    %v8678 = vmul.f32 %v8437, %v8437
    %v8679 = vmul.f32 %v8442, %v8442
    %v8680 = vmul.f32 %v8447, %v8447
    %v8681 = vmul.f32 %v8452, %v8452
    %v8682 = vmul.f32 %v8457, %v8457
    %v8683 = vmul.f32 %v8462, %v8462
    %v8684 = vmul.f32 %v8467, %v8467
    %v8685 = vmul.f32 %v8472, %v8472
    %v8686 = vmul.f32 %v8477, %v8477
    %v8687 = vmul.f32 %v8482, %v8482
    %v8688 = vmul.f32 %v8487, %v8487
    %v8689 = vsel %vm94, %v8625, 0.0
    %v8690 = vsel %vm94, %v8626, 0.0
    %v8691 = vadd.f32 %v8689, %v8690
    %v8692 = vsel %vm94, %v8627, 0.0
    %v8693 = vadd.f32 %v8691, %v8692
    %v8694 = vsel %vm94, %v8628, 0.0
    %v8695 = vadd.f32 %v8693, %v8694
    %v8696 = vsel %vm94, %v8629, 0.0
    %v8697 = vadd.f32 %v8695, %v8696
    %v8698 = vsel %vm94, %v8630, 0.0
    %v8699 = vadd.f32 %v8697, %v8698
    %v8700 = vsel %vm94, %v8631, 0.0
    %v8701 = vadd.f32 %v8699, %v8700
    %v8702 = vsel %vm94, %v8632, 0.0
    %v8703 = vadd.f32 %v8701, %v8702
    %v8704 = vsel %vm94, %v8633, 0.0
    %v8705 = vadd.f32 %v8703, %v8704
    %v8706 = vsel %vm94, %v8634, 0.0
    %v8707 = vadd.f32 %v8705, %v8706
    %v8708 = vsel %vm94, %v8635, 0.0
    %v8709 = vadd.f32 %v8707, %v8708
    %v8710 = vsel %vm94, %v8636, 0.0
    %v8711 = vadd.f32 %v8709, %v8710
    %v8712 = vsel %vm94, %v8637, 0.0
    %v8713 = vadd.f32 %v8711, %v8712
    %v8714 = vsel %vm94, %v8638, 0.0
    %v8715 = vadd.f32 %v8713, %v8714
    %v8716 = vsel %vm94, %v8639, 0.0
    %v8717 = vadd.f32 %v8715, %v8716
    %v8718 = vsel %vm94, %v8640, 0.0
    %v8719 = vadd.f32 %v8717, %v8718
    %v8720 = vsel %vm94, %v8641, 0.0
    %v8721 = vadd.f32 %v8719, %v8720
    %v8722 = vsel %vm94, %v8642, 0.0
    %v8723 = vadd.f32 %v8721, %v8722
    %v8724 = vsel %vm94, %v8643, 0.0
    %v8725 = vadd.f32 %v8723, %v8724
    %v8726 = vsel %vm94, %v8644, 0.0
    %v8727 = vadd.f32 %v8725, %v8726
    %v8728 = vsel %vm94, %v8645, 0.0
    %v8729 = vadd.f32 %v8727, %v8728
    %v8730 = vsel %vm94, %v8646, 0.0
    %v8731 = vadd.f32 %v8729, %v8730
    %v8732 = vsel %vm94, %v8647, 0.0
    %v8733 = vadd.f32 %v8731, %v8732
    %v8734 = vsel %vm94, %v8648, 0.0
    %v8735 = vadd.f32 %v8733, %v8734
    %v8736 = vsel %vm94, %v8649, 0.0
    %v8737 = vadd.f32 %v8735, %v8736
    %v8738 = vsel %vm94, %v8650, 0.0
    %v8739 = vadd.f32 %v8737, %v8738
    %v8740 = vsel %vm94, %v8651, 0.0
    %v8741 = vadd.f32 %v8739, %v8740
    %v8742 = vsel %vm94, %v8652, 0.0
    %v8743 = vadd.f32 %v8741, %v8742
    %v8744 = vsel %vm94, %v8653, 0.0
    %v8745 = vadd.f32 %v8743, %v8744
    %v8746 = vsel %vm94, %v8654, 0.0
    %v8747 = vadd.f32 %v8745, %v8746
    %v8748 = vsel %vm94, %v8655, 0.0
    %v8749 = vadd.f32 %v8747, %v8748
    %v8750 = vsel %vm94, %v8656, 0.0
    %v8751 = vadd.f32 %v8749, %v8750
    %v8752 = vsel %vm94, %v8657, 0.0
    %v8753 = vadd.f32 %v8751, %v8752
    %v8754 = vsel %vm94, %v8658, 0.0
    %v8755 = vadd.f32 %v8753, %v8754
    %v8756 = vsel %vm94, %v8659, 0.0
    %v8757 = vadd.f32 %v8755, %v8756
    %v8758 = vsel %vm94, %v8660, 0.0
    %v8759 = vadd.f32 %v8757, %v8758
    %v8760 = vsel %vm94, %v8661, 0.0
    %v8761 = vadd.f32 %v8759, %v8760
    %v8762 = vsel %vm94, %v8662, 0.0
    %v8763 = vadd.f32 %v8761, %v8762
    %v8764 = vsel %vm94, %v8663, 0.0
    %v8765 = vadd.f32 %v8763, %v8764
    %v8766 = vsel %vm94, %v8664, 0.0
    %v8767 = vadd.f32 %v8765, %v8766
    %v8768 = vsel %vm94, %v8665, 0.0
    %v8769 = vadd.f32 %v8767, %v8768
    %v8770 = vsel %vm94, %v8666, 0.0
    %v8771 = vadd.f32 %v8769, %v8770
    %v8772 = vsel %vm94, %v8667, 0.0
    %v8773 = vadd.f32 %v8771, %v8772
    %v8774 = vsel %vm94, %v8668, 0.0
    %v8775 = vadd.f32 %v8773, %v8774
    %v8776 = vsel %vm94, %v8669, 0.0
    %v8777 = vadd.f32 %v8775, %v8776
    %v8778 = vsel %vm94, %v8670, 0.0
    %v8779 = vadd.f32 %v8777, %v8778
    %v8780 = vsel %vm94, %v8671, 0.0
    %v8781 = vadd.f32 %v8779, %v8780
    %v8782 = vsel %vm94, %v8672, 0.0
    %v8783 = vadd.f32 %v8781, %v8782
    %v8784 = vsel %vm94, %v8673, 0.0
    %v8785 = vadd.f32 %v8783, %v8784
    %v8786 = vsel %vm94, %v8674, 0.0
    %v8787 = vadd.f32 %v8785, %v8786
    %v8788 = vsel %vm94, %v8675, 0.0
    %v8789 = vadd.f32 %v8787, %v8788
    %v8790 = vsel %vm94, %v8676, 0.0
    %v8791 = vadd.f32 %v8789, %v8790
    %v8792 = vsel %vm94, %v8677, 0.0
    %v8793 = vadd.f32 %v8791, %v8792
    %v8794 = vsel %vm94, %v8678, 0.0
    %v8795 = vadd.f32 %v8793, %v8794
    %v8796 = vsel %vm94, %v8679, 0.0
    %v8797 = vadd.f32 %v8795, %v8796
    %v8798 = vsel %vm94, %v8680, 0.0
    %v8799 = vadd.f32 %v8797, %v8798
    %v8800 = vsel %vm94, %v8681, 0.0
    %v8801 = vadd.f32 %v8799, %v8800
    %v8802 = vsel %vm94, %v8682, 0.0
    %v8803 = vadd.f32 %v8801, %v8802
    %v8804 = vsel %vm94, %v8683, 0.0
    %v8805 = vadd.f32 %v8803, %v8804
    %v8806 = vsel %vm94, %v8684, 0.0
    %v8807 = vadd.f32 %v8805, %v8806
    %v8808 = vsel %vm94, %v8685, 0.0
    %v8809 = vadd.f32 %v8807, %v8808
    %v8810 = vsel %vm94, %v8686, 0.0
    %v8811 = vadd.f32 %v8809, %v8810
    %v8812 = vsel %vm94, %v8687, 0.0
    %v8813 = vadd.f32 %v8811, %v8812
    %v8814 = vsel %vm94, %v8688, 0.0
    %v8815 = vadd.f32 %v8813, %v8814
    %v8816 = vrot.slane %v8815, 4
    %v8817 = vadd.f32 %v8815, %v8816
    %v8818 = vrot.slane %v8817, 2
    %v8819 = vadd.f32 %v8817, %v8818
    %v8820 = vrot.slane %v8819, 1
    %v8821 = vadd.f32 %v8819, %v8820
    %v8822 = vmul.f32 %v8624, 0.001953125
    %v8823 = vmul.f32 %v8821, 0.001953125
    %v8824 = vmul.f32 %v8822, %v8822
    %v8825 = vsub.f32 %v8823, %v8824
    %v8826 = vadd.f32 %v8825, 1e-05
    %v8827 = vrsqrt.pop %v8826
    %v8828 = vmul.f32 %v8490, %v8827
    %v8829 = vmul.f32 %v8822, %v8828
    %v8830 = vsub.f32 %v8491, %v8829
    %v8832 = vlaneseq
    %v8833 = vshrl.u32 %v8832, 7
    %v8834 = vsub.s32 0, %v8833
    %v8835 = vrot.slane %v8828, %v8834
    %v8837 = vmul.f32 %v8172, %v8835
    %v8838 = vmul.f32 %v8177, %v8835
    %v8839 = vmul.f32 %v8182, %v8835
    %v8840 = vmul.f32 %v8187, %v8835
    %v8841 = vmul.f32 %v8192, %v8835
    %v8842 = vmul.f32 %v8197, %v8835
    %v8843 = vmul.f32 %v8202, %v8835
    %v8844 = vmul.f32 %v8207, %v8835
    %v8845 = vmul.f32 %v8212, %v8835
    %v8846 = vmul.f32 %v8217, %v8835
    %v8847 = vmul.f32 %v8222, %v8835
    %v8848 = vmul.f32 %v8227, %v8835
    %v8849 = vmul.f32 %v8232, %v8835
    %v8850 = vmul.f32 %v8237, %v8835
    %v8851 = vmul.f32 %v8242, %v8835
    %v8852 = vmul.f32 %v8247, %v8835
    %v8853 = vmul.f32 %v8252, %v8835
    %v8854 = vmul.f32 %v8257, %v8835
    %v8855 = vmul.f32 %v8262, %v8835
    %v8856 = vmul.f32 %v8267, %v8835
    %v8857 = vmul.f32 %v8272, %v8835
    %v8858 = vmul.f32 %v8277, %v8835
    %v8859 = vmul.f32 %v8282, %v8835
    %v8860 = vmul.f32 %v8287, %v8835
    %v8861 = vmul.f32 %v8292, %v8835
    %v8862 = vmul.f32 %v8297, %v8835
    %v8863 = vmul.f32 %v8302, %v8835
    %v8864 = vmul.f32 %v8307, %v8835
    %v8865 = vmul.f32 %v8312, %v8835
    %v8866 = vmul.f32 %v8317, %v8835
    %v8867 = vmul.f32 %v8322, %v8835
    %v8868 = vmul.f32 %v8327, %v8835
    %v8869 = vmul.f32 %v8332, %v8835
    %v8870 = vmul.f32 %v8337, %v8835
    %v8871 = vmul.f32 %v8342, %v8835
    %v8872 = vmul.f32 %v8347, %v8835
    %v8873 = vmul.f32 %v8352, %v8835
    %v8874 = vmul.f32 %v8357, %v8835
    %v8875 = vmul.f32 %v8362, %v8835
    %v8876 = vmul.f32 %v8367, %v8835
    %v8877 = vmul.f32 %v8372, %v8835
    %v8878 = vmul.f32 %v8377, %v8835
    %v8879 = vmul.f32 %v8382, %v8835
    %v8880 = vmul.f32 %v8387, %v8835
    %v8881 = vmul.f32 %v8392, %v8835
    %v8882 = vmul.f32 %v8397, %v8835
    %v8883 = vmul.f32 %v8402, %v8835
    %v8884 = vmul.f32 %v8407, %v8835
    %v8885 = vmul.f32 %v8412, %v8835
    %v8886 = vmul.f32 %v8417, %v8835
    %v8887 = vmul.f32 %v8422, %v8835
    %v8888 = vmul.f32 %v8427, %v8835
    %v8889 = vmul.f32 %v8432, %v8835
    %v8890 = vmul.f32 %v8437, %v8835
    %v8891 = vmul.f32 %v8442, %v8835
    %v8892 = vmul.f32 %v8447, %v8835
    %v8893 = vmul.f32 %v8452, %v8835
    %v8894 = vmul.f32 %v8457, %v8835
    %v8895 = vmul.f32 %v8462, %v8835
    %v8896 = vmul.f32 %v8467, %v8835
    %v8897 = vmul.f32 %v8472, %v8835
    %v8898 = vmul.f32 %v8477, %v8835
    %v8899 = vmul.f32 %v8482, %v8835
    %v8900 = vmul.f32 %v8487, %v8835
    %v8902 = vlaneseq
    %v8903 = vshrl.u32 %v8902, 7
    %v8904 = vsub.s32 0, %v8903
    %v8905 = vrot.slane %v8830, %v8904
    %v8907 = vadd.f32 %v8837, %v8905
    %v8908 = vadd.f32 %v8838, %v8905
    %v8909 = vadd.f32 %v8839, %v8905
    %v8910 = vadd.f32 %v8840, %v8905
    %v8911 = vadd.f32 %v8841, %v8905
    %v8912 = vadd.f32 %v8842, %v8905
    %v8913 = vadd.f32 %v8843, %v8905
    %v8914 = vadd.f32 %v8844, %v8905
    %v8915 = vadd.f32 %v8845, %v8905
    %v8916 = vadd.f32 %v8846, %v8905
    %v8917 = vadd.f32 %v8847, %v8905
    %v8918 = vadd.f32 %v8848, %v8905
    %v8919 = vadd.f32 %v8849, %v8905
    %v8920 = vadd.f32 %v8850, %v8905
    %v8921 = vadd.f32 %v8851, %v8905
    %v8922 = vadd.f32 %v8852, %v8905
    %v8923 = vadd.f32 %v8853, %v8905
    %v8924 = vadd.f32 %v8854, %v8905
    %v8925 = vadd.f32 %v8855, %v8905
    %v8926 = vadd.f32 %v8856, %v8905
    %v8927 = vadd.f32 %v8857, %v8905
    %v8928 = vadd.f32 %v8858, %v8905
    %v8929 = vadd.f32 %v8859, %v8905
    %v8930 = vadd.f32 %v8860, %v8905
    %v8931 = vadd.f32 %v8861, %v8905
    %v8932 = vadd.f32 %v8862, %v8905
    %v8933 = vadd.f32 %v8863, %v8905
    %v8934 = vadd.f32 %v8864, %v8905
    %v8935 = vadd.f32 %v8865, %v8905
    %v8936 = vadd.f32 %v8866, %v8905
    %v8937 = vadd.f32 %v8867, %v8905
    %v8938 = vadd.f32 %v8868, %v8905
    %v8939 = vadd.f32 %v8869, %v8905
    %v8940 = vadd.f32 %v8870, %v8905
    %v8941 = vadd.f32 %v8871, %v8905
    %v8942 = vadd.f32 %v8872, %v8905
    %v8943 = vadd.f32 %v8873, %v8905
    %v8944 = vadd.f32 %v8874, %v8905
    %v8945 = vadd.f32 %v8875, %v8905
    %v8946 = vadd.f32 %v8876, %v8905
    %v8947 = vadd.f32 %v8877, %v8905
    %v8948 = vadd.f32 %v8878, %v8905
    %v8949 = vadd.f32 %v8879, %v8905
    %v8950 = vadd.f32 %v8880, %v8905
    %v8951 = vadd.f32 %v8881, %v8905
    %v8952 = vadd.f32 %v8882, %v8905
    %v8953 = vadd.f32 %v8883, %v8905
    %v8954 = vadd.f32 %v8884, %v8905
    %v8955 = vadd.f32 %v8885, %v8905
    %v8956 = vadd.f32 %v8886, %v8905
    %v8957 = vadd.f32 %v8887, %v8905
    %v8958 = vadd.f32 %v8888, %v8905
    %v8959 = vadd.f32 %v8889, %v8905
    %v8960 = vadd.f32 %v8890, %v8905
    %v8961 = vadd.f32 %v8891, %v8905
    %v8962 = vadd.f32 %v8892, %v8905
    %v8963 = vadd.f32 %v8893, %v8905
    %v8964 = vadd.f32 %v8894, %v8905
    %v8965 = vadd.f32 %v8895, %v8905
    %v8966 = vadd.f32 %v8896, %v8905
    %v8967 = vadd.f32 %v8897, %v8905
    %v8968 = vadd.f32 %v8898, %v8905
    %v8969 = vadd.f32 %v8899, %v8905
    %v8970 = vadd.f32 %v8900, %v8905
    %v8971 = vld [vmem:[%s1] sm:$0xff]
    %v8972 = vld [vmem:[%s1 + $0x8] sm:$0xff]
    %v8973 = vld [vmem:[%s1 + $0x10] sm:$0xff]
    %v8974 = vld [vmem:[%s1 + $0x18] sm:$0xff]
    %v8975 = vld [vmem:[%s1 + $0x20] sm:$0xff]
    %v8976 = vld [vmem:[%s1 + $0x28] sm:$0xff]
    %v8977 = vld [vmem:[%s1 + $0x30] sm:$0xff]
    %v8978 = vld [vmem:[%s1 + $0x38] sm:$0xff]
    %v8979 = vld [vmem:[%s1 + $0x40] sm:$0xff]
    %v8980 = vld [vmem:[%s1 + $0x48] sm:$0xff]
    %v8981 = vld [vmem:[%s1 + $0x50] sm:$0xff]
    %v8982 = vld [vmem:[%s1 + $0x58] sm:$0xff]
    %v8983 = vld [vmem:[%s1 + $0x60] sm:$0xff]
    %v8984 = vld [vmem:[%s1 + $0x68] sm:$0xff]
    %v8985 = vld [vmem:[%s1 + $0x70] sm:$0xff]
    %v8986 = vld [vmem:[%s1 + $0x78] sm:$0xff]
    %v8987 = vld [vmem:[%s1 + $0x80] sm:$0xff]
    %v8988 = vld [vmem:[%s1 + $0x88] sm:$0xff]
    %v8989 = vld [vmem:[%s1 + $0x90] sm:$0xff]
    %v8990 = vld [vmem:[%s1 + $0x98] sm:$0xff]
    %v8991 = vld [vmem:[%s1 + $0xa0] sm:$0xff]
    %v8992 = vld [vmem:[%s1 + $0xa8] sm:$0xff]
    %v8993 = vld [vmem:[%s1 + $0xb0] sm:$0xff]
    %v8994 = vld [vmem:[%s1 + $0xb8] sm:$0xff]
    %v8995 = vld [vmem:[%s1 + $0xc0] sm:$0xff]
    %v8996 = vld [vmem:[%s1 + $0xc8] sm:$0xff]
    %v8997 = vld [vmem:[%s1 + $0xd0] sm:$0xff]
    %v8998 = vld [vmem:[%s1 + $0xd8] sm:$0xff]
    %v8999 = vld [vmem:[%s1 + $0xe0] sm:$0xff]
    %v9000 = vld [vmem:[%s1 + $0xe8] sm:$0xff]
    %v9001 = vld [vmem:[%s1 + $0xf0] sm:$0xff]
    %v9002 = vld [vmem:[%s1 + $0xf8] sm:$0xff]
    %v9003 = vld [vmem:[%s1 + $0x100] sm:$0xff]
    %v9004 = vld [vmem:[%s1 + $0x108] sm:$0xff]
    %v9005 = vld [vmem:[%s1 + $0x110] sm:$0xff]
    %v9006 = vld [vmem:[%s1 + $0x118] sm:$0xff]
    %v9007 = vld [vmem:[%s1 + $0x120] sm:$0xff]
    %v9008 = vld [vmem:[%s1 + $0x128] sm:$0xff]
    %v9009 = vld [vmem:[%s1 + $0x130] sm:$0xff]
    %v9010 = vld [vmem:[%s1 + $0x138] sm:$0xff]
    %v9011 = vld [vmem:[%s1 + $0x140] sm:$0xff]
    %v9012 = vld [vmem:[%s1 + $0x148] sm:$0xff]
    %v9013 = vld [vmem:[%s1 + $0x150] sm:$0xff]
    %v9014 = vld [vmem:[%s1 + $0x158] sm:$0xff]
    %v9015 = vld [vmem:[%s1 + $0x160] sm:$0xff]
    %v9016 = vld [vmem:[%s1 + $0x168] sm:$0xff]
    %v9017 = vld [vmem:[%s1 + $0x170] sm:$0xff]
    %v9018 = vld [vmem:[%s1 + $0x178] sm:$0xff]
    %v9019 = vld [vmem:[%s1 + $0x180] sm:$0xff]
    %v9020 = vld [vmem:[%s1 + $0x188] sm:$0xff]
    %v9021 = vld [vmem:[%s1 + $0x190] sm:$0xff]
    %v9022 = vld [vmem:[%s1 + $0x198] sm:$0xff]
    %v9023 = vld [vmem:[%s1 + $0x1a0] sm:$0xff]
    %v9024 = vld [vmem:[%s1 + $0x1a8] sm:$0xff]
    %v9025 = vld [vmem:[%s1 + $0x1b0] sm:$0xff]
    %v9026 = vld [vmem:[%s1 + $0x1b8] sm:$0xff]
    %v9027 = vld [vmem:[%s1 + $0x1c0] sm:$0xff]
    %v9028 = vld [vmem:[%s1 + $0x1c8] sm:$0xff]
    %v9029 = vld [vmem:[%s1 + $0x1d0] sm:$0xff]
    %v9030 = vld [vmem:[%s1 + $0x1d8] sm:$0xff]
    %v9031 = vld [vmem:[%s1 + $0x1e0] sm:$0xff]
    %v9032 = vld [vmem:[%s1 + $0x1e8] sm:$0xff]
    %v9033 = vld [vmem:[%s1 + $0x1f0] sm:$0xff]
    %v9034 = vld [vmem:[%s1 + $0x1f8] sm:$0xff]
    %v9035 = vadd.f32 %v8907, %v8971
    %v9036 = vadd.f32 %v8908, %v8972
    %v9037 = vadd.f32 %v8909, %v8973
    %v9038 = vadd.f32 %v8910, %v8974
    %v9039 = vadd.f32 %v8911, %v8975
    %v9040 = vadd.f32 %v8912, %v8976
    %v9041 = vadd.f32 %v8913, %v8977
    %v9042 = vadd.f32 %v8914, %v8978
    %v9043 = vadd.f32 %v8915, %v8979
    %v9044 = vadd.f32 %v8916, %v8980
    %v9045 = vadd.f32 %v8917, %v8981
    %v9046 = vadd.f32 %v8918, %v8982
    %v9047 = vadd.f32 %v8919, %v8983
    %v9048 = vadd.f32 %v8920, %v8984
    %v9049 = vadd.f32 %v8921, %v8985
    %v9050 = vadd.f32 %v8922, %v8986
    %v9051 = vadd.f32 %v8923, %v8987
    %v9052 = vadd.f32 %v8924, %v8988
    %v9053 = vadd.f32 %v8925, %v8989
    %v9054 = vadd.f32 %v8926, %v8990
    %v9055 = vadd.f32 %v8927, %v8991
    %v9056 = vadd.f32 %v8928, %v8992
    %v9057 = vadd.f32 %v8929, %v8993
    %v9058 = vadd.f32 %v8930, %v8994
    %v9059 = vadd.f32 %v8931, %v8995
    %v9060 = vadd.f32 %v8932, %v8996
    %v9061 = vadd.f32 %v8933, %v8997
    %v9062 = vadd.f32 %v8934, %v8998
    %v9063 = vadd.f32 %v8935, %v8999
    %v9064 = vadd.f32 %v8936, %v9000
    %v9065 = vadd.f32 %v8937, %v9001
    %v9066 = vadd.f32 %v8938, %v9002
    %v9067 = vadd.f32 %v8939, %v9003
    %v9068 = vadd.f32 %v8940, %v9004
    %v9069 = vadd.f32 %v8941, %v9005
    %v9070 = vadd.f32 %v8942, %v9006
    %v9071 = vadd.f32 %v8943, %v9007
    %v9072 = vadd.f32 %v8944, %v9008
    %v9073 = vadd.f32 %v8945, %v9009
    %v9074 = vadd.f32 %v8946, %v9010
    %v9075 = vadd.f32 %v8947, %v9011
    %v9076 = vadd.f32 %v8948, %v9012
    %v9077 = vadd.f32 %v8949, %v9013
    %v9078 = vadd.f32 %v8950, %v9014
    %v9079 = vadd.f32 %v8951, %v9015
    %v9080 = vadd.f32 %v8952, %v9016
    %v9081 = vadd.f32 %v8953, %v9017
    %v9082 = vadd.f32 %v8954, %v9018
    %v9083 = vadd.f32 %v8955, %v9019
    %v9084 = vadd.f32 %v8956, %v9020
    %v9085 = vadd.f32 %v8957, %v9021
    %v9086 = vadd.f32 %v8958, %v9022
    %v9087 = vadd.f32 %v8959, %v9023
    %v9088 = vadd.f32 %v8960, %v9024
    %v9089 = vadd.f32 %v8961, %v9025
    %v9090 = vadd.f32 %v8962, %v9026
    %v9091 = vadd.f32 %v8963, %v9027
    %v9092 = vadd.f32 %v8964, %v9028
    %v9093 = vadd.f32 %v8965, %v9029
    %v9094 = vadd.f32 %v8966, %v9030
    %v9095 = vadd.f32 %v8967, %v9031
    %v9096 = vadd.f32 %v8968, %v9032
    %v9097 = vadd.f32 %v8969, %v9033
    %v9098 = vadd.f32 %v8970, %v9034
    %v9099 = vmax.f32 %v9035, 0.0
    %v9100 = vmax.f32 %v9036, 0.0
    %v9101 = vmax.f32 %v9037, 0.0
    %v9102 = vmax.f32 %v9038, 0.0
    %v9103 = vmax.f32 %v9039, 0.0
    %v9104 = vmax.f32 %v9040, 0.0
    %v9105 = vmax.f32 %v9041, 0.0
    %v9106 = vmax.f32 %v9042, 0.0
    %v9107 = vmax.f32 %v9043, 0.0
    %v9108 = vmax.f32 %v9044, 0.0
    %v9109 = vmax.f32 %v9045, 0.0
    %v9110 = vmax.f32 %v9046, 0.0
    %v9111 = vmax.f32 %v9047, 0.0
    %v9112 = vmax.f32 %v9048, 0.0
    %v9113 = vmax.f32 %v9049, 0.0
    %v9114 = vmax.f32 %v9050, 0.0
    %v9115 = vmax.f32 %v9051, 0.0
    %v9116 = vmax.f32 %v9052, 0.0
    %v9117 = vmax.f32 %v9053, 0.0
    %v9118 = vmax.f32 %v9054, 0.0
    %v9119 = vmax.f32 %v9055, 0.0
    %v9120 = vmax.f32 %v9056, 0.0
    %v9121 = vmax.f32 %v9057, 0.0
    %v9122 = vmax.f32 %v9058, 0.0
    %v9123 = vmax.f32 %v9059, 0.0
    %v9124 = vmax.f32 %v9060, 0.0
    %v9125 = vmax.f32 %v9061, 0.0
    %v9126 = vmax.f32 %v9062, 0.0
    %v9127 = vmax.f32 %v9063, 0.0
    %v9128 = vmax.f32 %v9064, 0.0
    %v9129 = vmax.f32 %v9065, 0.0
    %v9130 = vmax.f32 %v9066, 0.0
    %v9131 = vmax.f32 %v9067, 0.0
    %v9132 = vmax.f32 %v9068, 0.0
    %v9133 = vmax.f32 %v9069, 0.0
    %v9134 = vmax.f32 %v9070, 0.0
    %v9135 = vmax.f32 %v9071, 0.0
    %v9136 = vmax.f32 %v9072, 0.0
    %v9137 = vmax.f32 %v9073, 0.0
    %v9138 = vmax.f32 %v9074, 0.0
    %v9139 = vmax.f32 %v9075, 0.0
    %v9140 = vmax.f32 %v9076, 0.0
    %v9141 = vmax.f32 %v9077, 0.0
    %v9142 = vmax.f32 %v9078, 0.0
    %v9143 = vmax.f32 %v9079, 0.0
    %v9144 = vmax.f32 %v9080, 0.0
    %v9145 = vmax.f32 %v9081, 0.0
    %v9146 = vmax.f32 %v9082, 0.0
    %v9147 = vmax.f32 %v9083, 0.0
    %v9148 = vmax.f32 %v9084, 0.0
    %v9149 = vmax.f32 %v9085, 0.0
    %v9150 = vmax.f32 %v9086, 0.0
    %v9151 = vmax.f32 %v9087, 0.0
    %v9152 = vmax.f32 %v9088, 0.0
    %v9153 = vmax.f32 %v9089, 0.0
    %v9154 = vmax.f32 %v9090, 0.0
    %v9155 = vmax.f32 %v9091, 0.0
    %v9156 = vmax.f32 %v9092, 0.0
    %v9157 = vmax.f32 %v9093, 0.0
    %v9158 = vmax.f32 %v9094, 0.0
    %v9159 = vmax.f32 %v9095, 0.0
    %v9160 = vmax.f32 %v9096, 0.0
    %v9161 = vmax.f32 %v9097, 0.0
    %v9162 = vmax.f32 %v9098, 0.0
    %9163 = vst.msk [vmem:[#allocation4] sm:$0xff] %vm94, %v9099
    %9164 = vst.msk [vmem:[#allocation4 + $0x8] sm:$0xff] %vm94, %v9100
    %9165 = vst.msk [vmem:[#allocation4 + $0x10] sm:$0xff] %vm94, %v9101
    %9166 = vst.msk [vmem:[#allocation4 + $0x18] sm:$0xff] %vm94, %v9102
    %9167 = vst.msk [vmem:[#allocation4 + $0x20] sm:$0xff] %vm94, %v9103
    %9168 = vst.msk [vmem:[#allocation4 + $0x28] sm:$0xff] %vm94, %v9104
    %9169 = vst.msk [vmem:[#allocation4 + $0x30] sm:$0xff] %vm94, %v9105
    %9170 = vst.msk [vmem:[#allocation4 + $0x38] sm:$0xff] %vm94, %v9106
    %9171 = vst.msk [vmem:[#allocation4 + $0x40] sm:$0xff] %vm94, %v9107
    %9172 = vst.msk [vmem:[#allocation4 + $0x48] sm:$0xff] %vm94, %v9108
    %9173 = vst.msk [vmem:[#allocation4 + $0x50] sm:$0xff] %vm94, %v9109
    %9174 = vst.msk [vmem:[#allocation4 + $0x58] sm:$0xff] %vm94, %v9110
    %9175 = vst.msk [vmem:[#allocation4 + $0x60] sm:$0xff] %vm94, %v9111
    %9176 = vst.msk [vmem:[#allocation4 + $0x68] sm:$0xff] %vm94, %v9112
    %9177 = vst.msk [vmem:[#allocation4 + $0x70] sm:$0xff] %vm94, %v9113
    %9178 = vst.msk [vmem:[#allocation4 + $0x78] sm:$0xff] %vm94, %v9114
    %9179 = vst.msk [vmem:[#allocation4 + $0x80] sm:$0xff] %vm94, %v9115
    %9180 = vst.msk [vmem:[#allocation4 + $0x88] sm:$0xff] %vm94, %v9116
    %9181 = vst.msk [vmem:[#allocation4 + $0x90] sm:$0xff] %vm94, %v9117
    %9182 = vst.msk [vmem:[#allocation4 + $0x98] sm:$0xff] %vm94, %v9118
    %9183 = vst.msk [vmem:[#allocation4 + $0xa0] sm:$0xff] %vm94, %v9119
    %9184 = vst.msk [vmem:[#allocation4 + $0xa8] sm:$0xff] %vm94, %v9120
    %9185 = vst.msk [vmem:[#allocation4 + $0xb0] sm:$0xff] %vm94, %v9121
    %9186 = vst.msk [vmem:[#allocation4 + $0xb8] sm:$0xff] %vm94, %v9122
    %9187 = vst.msk [vmem:[#allocation4 + $0xc0] sm:$0xff] %vm94, %v9123
    %9188 = vst.msk [vmem:[#allocation4 + $0xc8] sm:$0xff] %vm94, %v9124
    %9189 = vst.msk [vmem:[#allocation4 + $0xd0] sm:$0xff] %vm94, %v9125
    %9190 = vst.msk [vmem:[#allocation4 + $0xd8] sm:$0xff] %vm94, %v9126
    %9191 = vst.msk [vmem:[#allocation4 + $0xe0] sm:$0xff] %vm94, %v9127
    %9192 = vst.msk [vmem:[#allocation4 + $0xe8] sm:$0xff] %vm94, %v9128
    %9193 = vst.msk [vmem:[#allocation4 + $0xf0] sm:$0xff] %vm94, %v9129
    %9194 = vst.msk [vmem:[#allocation4 + $0xf8] sm:$0xff] %vm94, %v9130
    %9195 = vst.msk [vmem:[#allocation4 + $0x100] sm:$0xff] %vm94, %v9131
    %9196 = vst.msk [vmem:[#allocation4 + $0x108] sm:$0xff] %vm94, %v9132
    %9197 = vst.msk [vmem:[#allocation4 + $0x110] sm:$0xff] %vm94, %v9133
    %9198 = vst.msk [vmem:[#allocation4 + $0x118] sm:$0xff] %vm94, %v9134
    %9199 = vst.msk [vmem:[#allocation4 + $0x120] sm:$0xff] %vm94, %v9135
    %9200 = vst.msk [vmem:[#allocation4 + $0x128] sm:$0xff] %vm94, %v9136
    %9201 = vst.msk [vmem:[#allocation4 + $0x130] sm:$0xff] %vm94, %v9137
    %9202 = vst.msk [vmem:[#allocation4 + $0x138] sm:$0xff] %vm94, %v9138
    %9203 = vst.msk [vmem:[#allocation4 + $0x140] sm:$0xff] %vm94, %v9139
    %9204 = vst.msk [vmem:[#allocation4 + $0x148] sm:$0xff] %vm94, %v9140
    %9205 = vst.msk [vmem:[#allocation4 + $0x150] sm:$0xff] %vm94, %v9141
    %9206 = vst.msk [vmem:[#allocation4 + $0x158] sm:$0xff] %vm94, %v9142
    %9207 = vst.msk [vmem:[#allocation4 + $0x160] sm:$0xff] %vm94, %v9143
    %9208 = vst.msk [vmem:[#allocation4 + $0x168] sm:$0xff] %vm94, %v9144
    %9209 = vst.msk [vmem:[#allocation4 + $0x170] sm:$0xff] %vm94, %v9145
    %9210 = vst.msk [vmem:[#allocation4 + $0x178] sm:$0xff] %vm94, %v9146
    %9211 = vst.msk [vmem:[#allocation4 + $0x180] sm:$0xff] %vm94, %v9147
    %9212 = vst.msk [vmem:[#allocation4 + $0x188] sm:$0xff] %vm94, %v9148
    %9213 = vst.msk [vmem:[#allocation4 + $0x190] sm:$0xff] %vm94, %v9149
    %9214 = vst.msk [vmem:[#allocation4 + $0x198] sm:$0xff] %vm94, %v9150
    %9215 = vst.msk [vmem:[#allocation4 + $0x1a0] sm:$0xff] %vm94, %v9151
    %9216 = vst.msk [vmem:[#allocation4 + $0x1a8] sm:$0xff] %vm94, %v9152
    %9217 = vst.msk [vmem:[#allocation4 + $0x1b0] sm:$0xff] %vm94, %v9153
    %9218 = vst.msk [vmem:[#allocation4 + $0x1b8] sm:$0xff] %vm94, %v9154
    %9219 = vst.msk [vmem:[#allocation4 + $0x1c0] sm:$0xff] %vm94, %v9155
    %9220 = vst.msk [vmem:[#allocation4 + $0x1c8] sm:$0xff] %vm94, %v9156
    %9221 = vst.msk [vmem:[#allocation4 + $0x1d0] sm:$0xff] %vm94, %v9157
    %9222 = vst.msk [vmem:[#allocation4 + $0x1d8] sm:$0xff] %vm94, %v9158
    %9223 = vst.msk [vmem:[#allocation4 + $0x1e0] sm:$0xff] %vm94, %v9159
    %9224 = vst.msk [vmem:[#allocation4 + $0x1e8] sm:$0xff] %vm94, %v9160
    %9225 = vst.msk [vmem:[#allocation4 + $0x1f0] sm:$0xff] %vm94, %v9161
    %9226 = vst.msk [vmem:[#allocation4 + $0x1f8] sm:$0xff] %vm94, %v9162
    // Predicated region
    $region34: #{basic_block.1} parent=1 // pred_check
      _
    $region35: #{basic_block.1} parent=1 // pred_check_branch
      %9228 = sbr.rel (0) target = $region37
    $region36: #{basic_block.1} parent=1 // pred_region
      %s9230 = ssub.s32 8192, 8192
      %9231 = vsyncadd [#allocation5], %s9230
      %s9232 = sshll.u32 [#allocation4], 4
      %s9233 = int_to_ptr.vmem [resolvable:$true] %s9232
      %9238 = dma.vmem_to_hbm [thread:$0]  %s9233, 8192, %s8, [#allocation5], 128, 128, 8
    $region37: #{basic_block.1} parent=1 // pred_fallthru
      _
    // Predicated region
    $region38: #{basic_block.1} parent=1 // pred_check
      _
    $region39: #{basic_block.1} parent=1 // pred_check_branch
      %9240 = sbr.rel (0) target = $region41
    $region40: #{basic_block.1} parent=1 // pred_region
      %9241 = dma.done [#allocation5], 8192
    $region41: #{basic_block.1} parent=1 // pred_fallthru
      _
    %9242 = vsyncpa [#allocation5], 1

</llo_original>
